<compile_context>
chip_gen: v6e
topology: v6e:2x2x1
jax: 0.10.0
libtpu: 0.0.40
codegen_flags: <defaults>
</compile_context>

<pallas_src>
import functools
import math

import jax
import jax.numpy as jnp
from jax.experimental import pallas as pl
from jax.experimental.pallas import tpu as pltpu

# ----------------------------- config -----------------------------
VOCAB = 32
D_MODEL = 32
NUM_HEADS = 4
D_HEAD = D_MODEL // NUM_HEADS
D_FF = 64
N_ENC = 2
N_DEC = 2
LORA_RANK = 4
LN_EPS = 1e-5
NEG = -1e9
LANES = 128
CDT = jnp.bfloat16            # MXU operand dtype (accumulation stays f32)


def _round_up(x, m):
    return (x + m - 1) // m * m


# ----------------------------- static slab layout -----------------------------
def _build_layout():
    # weights: (name, slice_rows, slice_cols) ; vectors: (name, slice_cols)
    weights = [
        ("emb", VOCAB, D_MODEL),
        ("lora_down", D_MODEL, 2 * LORA_RANK),   # rank cols zero-padded
        ("lora_up", 2 * LORA_RANK, D_MODEL),     # rank rows zero-padded
        ("gen_w", D_MODEL, LANES),               # vocab cols zero-padded (lane-dense out)
    ]
    vectors = [("gen_b", LANES)]
    for i in range(N_ENC):
        p = f"enc{i}_"
        weights += [(p + "wqkv", D_MODEL, 3 * D_MODEL),
                    (p + "wo", D_MODEL, D_MODEL),
                    (p + "w1", D_MODEL, D_FF),
                    (p + "w2", D_FF, D_MODEL)]
        vectors += [(p + "bqkv", 3 * D_MODEL), (p + "bo", D_MODEL),
                    (p + "ln1_g", D_MODEL), (p + "ln1_b", D_MODEL),
                    (p + "b1", D_FF), (p + "b2", D_MODEL),
                    (p + "ln2_g", D_MODEL), (p + "ln2_b", D_MODEL)]
    for i in range(N_DEC):
        p = f"dec{i}_"
        weights += [(p + "s_wqkv", D_MODEL, 3 * D_MODEL),
                    (p + "s_wo", D_MODEL, D_MODEL),
                    (p + "c_wq", D_MODEL, D_MODEL),
                    (p + "c_wkv", D_MODEL, 2 * D_MODEL),
                    (p + "c_wo", D_MODEL, D_MODEL),
                    (p + "w1", D_MODEL, D_FF),
                    (p + "w2", D_FF, D_MODEL)]
        vectors += [(p + "s_bqkv", 3 * D_MODEL), (p + "s_bo", D_MODEL),
                    (p + "ln1_g", D_MODEL), (p + "ln1_b", D_MODEL),
                    (p + "c_bq", D_MODEL), (p + "c_bkv", 2 * D_MODEL),
                    (p + "c_bo", D_MODEL),
                    (p + "ln2_g", D_MODEL), (p + "ln2_b", D_MODEL),
                    (p + "b1", D_FF), (p + "b2", D_MODEL),
                    (p + "ln3_g", D_MODEL), (p + "ln3_b", D_MODEL)]
    w_layout, off = {}, 0
    for name, r, c in weights:
        w_layout[name] = (off, r, c)
        off += _round_up(r, 16)          # 16-row alignment (bf16 sublane packing)
    v_layout = {name: (row, c) for row, (name, c) in enumerate(vectors)}
    return w_layout, off, v_layout, _round_up(len(vectors), 8)


W_LAYOUT, W_ROWS, V_LAYOUT, V_ROWS = _build_layout()


# ----------------------------- in-kernel helpers -----------------------------
def _softmax(s):
    m = jnp.max(s, axis=-1, keepdims=True)
    p = jnp.exp(s - m)
    # denominator reciprocal -> EUP slot, keeps VALU free
    return p * pl.reciprocal(jnp.sum(p, axis=-1, keepdims=True), approx=True)


def _layernorm(y, g, b):
    mu = jnp.mean(y, axis=-1, keepdims=True)
    d = y - mu
    var = jnp.mean(d * d, axis=-1, keepdims=True)
    return d * jax.lax.rsqrt(var + LN_EPS) * g + b


# ----------------------------- fused whole-model kernel -----------------------------
def fused_transformer_kernel(ids_ref, mask_ref, w_ref, v_ref, out_ref, *,
                             B, Ss, St, mr,
                             use_enc_mask, use_dec_mask, use_cross_mask):
    Ns, Nt = B * Ss, B * St
    N = Ns + Nt
    D = D_MODEL

    def W(name):                         # bf16 weight slice (loaded at use site)
        off, r, c = W_LAYOUT[name]
        return w_ref[off:off + r, :c]

    def V(name):                         # f32 (1, c) bias / LN vector
        row, c = V_LAYOUT[name]
        return v_ref[row:row + 1, :c]

    def lin(x, wname, bname):            # x @ W + b, f32 MXU accumulation
        return jnp.dot(x.astype(CDT), W(wname),
                       preferred_element_type=jnp.float32) + V(bname)

    def attend(q, k, v, mask):
        # q:(Nq,D) k,v:(Nk,D) f32; mask:(Nq,Nk) additive f32 or None.
        # All batches handled by one 2-D matmul per head: batch separation and
        # user masks are already folded into `mask` (block-diagonal additive),
        # so there are no per-head broadcasts / batched dots. The attention
        # scale is folded into Wq at pack time.
        qc, kc, vc = q.astype(CDT), k.astype(CDT), v.astype(CDT)
        outs = []
        for h in range(NUM_HEADS):
            lo, hi = h * D_HEAD, (h + 1) * D_HEAD
            s = jax.lax.dot_general(
                qc[:, lo:hi], kc[:, lo:hi],
                dimension_numbers=(((1,), (1,)), ((), ())),
                preferred_element_type=jnp.float32)
            if mask is not None:
                s = s + mask
            p = _softmax(s)
            outs.append(jnp.dot(p.astype(CDT), vc[:, lo:hi],
                                preferred_element_type=jnp.float32))
        return jnp.concatenate(outs, axis=-1)      # heads adjacent in D -> free concat

    # ---- embedding gather (one-hot matmul) + LoRA, fused over src & tgt ----
    ids = ids_ref[...]                                           # (N, 1) int32
    onehot = (ids == jax.lax.broadcasted_iota(jnp.int32, (N, VOCAB), 1))
    onehot = onehot.astype(jnp.float32).astype(CDT)
    x_all = jnp.dot(onehot, W("emb"), preferred_element_type=jnp.float32)
    t = jnp.dot(x_all.astype(CDT), W("lora_down"),
                preferred_element_type=jnp.float32)
    x_all = x_all + jnp.dot(t.astype(CDT), W("lora_up"),
                            preferred_element_type=jnp.float32)
    memory = x_all[:Ns, :]
    x = x_all[Ns:, :]

    enc_mask = mask_ref[0:Ns, 0:Ns] if use_enc_mask else None
    dec_mask = mask_ref[mr:mr + Nt, 0:Nt] if use_dec_mask else None
    crs_mask = mask_ref[2 * mr:2 * mr + Nt, 0:Ns] if use_cross_mask else None

    # ---- encoder stack ----
    for i in range(N_ENC):
        p = f"enc{i}_"
        qkv = lin(memory, p + "wqkv", p + "bqkv")       # (Ns, 3D) single wide matmul
        a = attend(qkv[:, :D], qkv[:, D:2 * D], qkv[:, 2 * D:], enc_mask)
        a = jnp.dot(a.astype(CDT), W(p + "wo"),
                    preferred_element_type=jnp.float32) + V(p + "bo")
        memory = _layernorm(memory + a, V(p + "ln1_g"), V(p + "ln1_b"))
        h = jnp.maximum(lin(memory, p + "w1", p + "b1"), 0.0)
        f = lin(h, p + "w2", p + "b2")
        memory = _layernorm(memory + f, V(p + "ln2_g"), V(p + "ln2_b"))

    # ---- decoder stack ----
    for i in range(N_DEC):
        p = f"dec{i}_"
        qkv = lin(x, p + "s_wqkv", p + "s_bqkv")
        a = attend(qkv[:, :D], qkv[:, D:2 * D], qkv[:, 2 * D:], dec_mask)
        a = jnp.dot(a.astype(CDT), W(p + "s_wo"),
                    preferred_element_type=jnp.float32) + V(p + "s_bo")
        x = _layernorm(x + a, V(p + "ln1_g"), V(p + "ln1_b"))

        q = lin(x, p + "c_wq", p + "c_bq")
        kv = lin(memory, p + "c_wkv", p + "c_bkv")      # (Ns, 2D) single wide matmul
        c = attend(q, kv[:, :D], kv[:, D:], crs_mask)
        c = jnp.dot(c.astype(CDT), W(p + "c_wo"),
                    preferred_element_type=jnp.float32) + V(p + "c_bo")
        x = _layernorm(x + c, V(p + "ln2_g"), V(p + "ln2_b"))

        h = jnp.maximum(lin(x, p + "w1", p + "b1"), 0.0)
        f = lin(h, p + "w2", p + "b2")
        x = _layernorm(x + f, V(p + "ln3_g"), V(p + "ln3_b"))

    # ---- generator: lane-dense 128-wide store (wrapper slices VOCAB cols) ----
    out_ref[...] = jnp.dot(x.astype(CDT), W("gen_w"),
                           preferred_element_type=jnp.float32) + V("gen_b")


# ----------------------------- wrapper: packing -----------------------------
def pack_params(params):
    """Pack weights into one bf16 (W_ROWS,128) slab and bias/LN vectors into one
    f32 (V_ROWS,128) slab. The 1/sqrt(d_head) attention scale is folded into the
    Q projection weights & biases here."""
    scale = 1.0 / math.sqrt(D_HEAD)
    wts, vecs = {}, {}
    wts["emb"] = params["embedding"]
    wts["lora_down"] = params["lora_down"]
    wts["lora_up"] = params["lora_up"]
    wts["gen_w"] = params["gen_w"]
    vecs["gen_b"] = params["gen_b"]
    for i, lp in enumerate(params["encoder"]):
        p = f"enc{i}_"
        wts[p + "wqkv"] = lp["wqkv"].at[:, :D_MODEL].multiply(scale)
        vecs[p + "bqkv"] = lp["bqkv"].at[:, :D_MODEL].multiply(scale)
        wts[p + "wo"] = lp["wo"]; vecs[p + "bo"] = lp["bo"]
        wts[p + "w1"] = lp["w1"]; vecs[p + "b1"] = lp["b1"]
        wts[p + "w2"] = lp["w2"]; vecs[p + "b2"] = lp["b2"]
        for n in ("ln1_g", "ln1_b", "ln2_g", "ln2_b"):
            vecs[p + n] = lp[n]
    for i, lp in enumerate(params["decoder"]):
        p = f"dec{i}_"
        wts[p + "s_wqkv"] = lp["s_wqkv"].at[:, :D_MODEL].multiply(scale)
        vecs[p + "s_bqkv"] = lp["s_bqkv"].at[:, :D_MODEL].multiply(scale)
        wts[p + "s_wo"] = lp["s_wo"]; vecs[p + "s_bo"] = lp["s_bo"]
        wts[p + "c_wq"] = lp["c_wq"] * scale
        vecs[p + "c_bq"] = lp["c_bq"] * scale
        wts[p + "c_wkv"] = lp["c_wkv"]; vecs[p + "c_bkv"] = lp["c_bkv"]
        wts[p + "c_wo"] = lp["c_wo"]; vecs[p + "c_bo"] = lp["c_bo"]
        wts[p + "w1"] = lp["w1"]; vecs[p + "b1"] = lp["b1"]
        wts[p + "w2"] = lp["w2"]; vecs[p + "b2"] = lp["b2"]
        for n in ("ln1_g", "ln1_b", "ln2_g", "ln2_b", "ln3_g", "ln3_b"):
            vecs[p + n] = lp[n]

    w_slab = jnp.zeros((W_ROWS, LANES), CDT)
    for name, arr in wts.items():
        off = W_LAYOUT[name][0]
        r, c = arr.shape
        w_slab = w_slab.at[off:off + r, :c].set(arr.astype(CDT))
    v_slab = jnp.zeros((V_ROWS, LANES), jnp.float32)
    for name, arr in vecs.items():
        row = V_LAYOUT[name][0]
        c = arr.shape[1]
        v_slab = v_slab.at[row:row + 1, :c].set(arr.astype(jnp.float32))
    return w_slab, v_slab


def _make_masks(B, Ss, St, src_mask, tgt_mask):
    """One lane-dense mask slab holding enc-self / dec-self / cross additive
    masks with the batch block-diagonal structure folded in."""
    mr = _round_up(max(B * Ss, B * St), 8)

    def block(Sq, Sk):
        bi = (jnp.arange(B * Sq) // Sq)[:, None]
        bj = (jnp.arange(B * Sk) // Sk)[None, :]
        return jnp.where(bi == bj, 0.0, NEG).astype(jnp.float32)

    enc = block(Ss, Ss)
    if src_mask is not None:
        enc = enc + jnp.tile(src_mask.astype(jnp.float32), (B, B))
    dec = block(St, St)
    if tgt_mask is not None:
        dec = dec + jnp.tile(tgt_mask.astype(jnp.float32), (B, B))
    crs = block(St, Ss)

    slab = jnp.zeros((3 * mr, LANES), jnp.float32)
    slab = slab.at[0:B * Ss, 0:B * Ss].set(enc)
    slab = slab.at[mr:mr + B * St, 0:B * St].set(dec)
    slab = slab.at[2 * mr:2 * mr + B * St, 0:B * Ss].set(crs)
    return slab, mr


def _estimate_cost(B, Ss, St):
    Ns, Nt = B * Ss, B * St
    N = Ns + Nt
    D, F, H, dh = D_MODEL, D_FF, NUM_HEADS, D_HEAD
    fl = 2 * N * VOCAB * D + 4 * N * D * 2 * LORA_RANK

    def attn(Nq, Nk):
        return 2 * Nq * D * 3 * D + 4 * H * Nq * Nk * dh + 2 * Nq * D * D

    fl += N_ENC * (attn(Ns, Ns) + 4 * Ns * D * F)
    fl += N_DEC * (attn(Nt, Nt)
                   + 2 * Nt * D * D + 2 * Ns * D * 2 * D
                   + 4 * H * Nt * Ns * dh + 2 * Nt * D * D
                   + 4 * Nt * D * F)
    fl += 2 * Nt * D * LANES
    trans = N_ENC * H * Ns * Ns + N_DEC * H * (Nt * Nt + Nt * Ns)
    mr = _round_up(max(Ns, Nt), 8)
    bytes_acc = (N * 4 + 3 * mr * LANES * 4
                 + W_ROWS * LANES * 2 + V_ROWS * LANES * 4
                 + Nt * LANES * 4)
    return pl.CostEstimate(flops=int(fl), transcendentals=int(trans),
                           bytes_accessed=int(bytes_acc))


def forward(packed_params, src, tgt, src_mask=None, tgt_mask=None):
    w_slab, v_slab = packed_params
    B, Ss = src.shape
    St = tgt.shape[1]
    ids = jnp.concatenate(
        [src.reshape(B * Ss), tgt.reshape(B * St)]).astype(jnp.int32)[:, None]
    mask_slab, mr = _make_masks(B, Ss, St, src_mask, tgt_mask)

    kernel = functools.partial(
        fused_transformer_kernel, B=B, Ss=Ss, St=St, mr=mr,
        use_enc_mask=(B > 1) or (src_mask is not None),
        use_dec_mask=(B > 1) or (tgt_mask is not None),
        use_cross_mask=(B > 1))

    out = pl.pallas_call(
        kernel,
        out_shape=jax.ShapeDtypeStruct((B * St, LANES), jnp.float32),
        in_specs=[pl.BlockSpec(memory_space=pltpu.MemorySpace.VMEM)] * 4,
        out_specs=pl.BlockSpec(memory_space=pltpu.MemorySpace.VMEM),
        cost_estimate=_estimate_cost(B, Ss, St),
    )(ids, mask_slab, w_slab, v_slab)
    return out[:, :VOCAB].reshape(B, St, VOCAB)


# ----------------------------- deterministic init -----------------------------
def _dense(key, shape, scale=0.02):
    return (scale * jax.random.normal(key, shape)).astype(jnp.float32)


def _ones(n):
    return jnp.ones((1, n), jnp.float32)


def _zeros(n):
    return jnp.zeros((1, n), jnp.float32)


def _init_enc_layer(key):
    k = jax.random.split(key, 4)
    return dict(
        wqkv=_dense(k[0], (D_MODEL, 3 * D_MODEL)), bqkv=_zeros(3 * D_MODEL),
        wo=_dense(k[1], (D_MODEL, D_MODEL)), bo=_zeros(D_MODEL),
        ln1_g=_ones(D_MODEL), ln1_b=_zeros(D_MODEL),
        w1=_dense(k[2], (D_MODEL, D_FF)), b1=_zeros(D_FF),
        w2=_dense(k[3], (D_FF, D_MODEL)), b2=_zeros(D_MODEL),
        ln2_g=_ones(D_MODEL), ln2_b=_zeros(D_MODEL),
    )


def _init_dec_layer(key):
    k = jax.random.split(key, 7)
    return dict(
        s_wqkv=_dense(k[0], (D_MODEL, 3 * D_MODEL)), s_bqkv=_zeros(3 * D_MODEL),
        s_wo=_dense(k[1], (D_MODEL, D_MODEL)), s_bo=_zeros(D_MODEL),
        ln1_g=_ones(D_MODEL), ln1_b=_zeros(D_MODEL),
        c_wq=_dense(k[2], (D_MODEL, D_MODEL)), c_bq=_zeros(D_MODEL),
        c_wkv=_dense(k[3], (D_MODEL, 2 * D_MODEL)), c_bkv=_zeros(2 * D_MODEL),
        c_wo=_dense(k[4], (D_MODEL, D_MODEL)), c_bo=_zeros(D_MODEL),
        ln2_g=_ones(D_MODEL), ln2_b=_zeros(D_MODEL),
        w1=_dense(k[5], (D_MODEL, D_FF)), b1=_zeros(D_FF),
        w2=_dense(k[6], (D_FF, D_MODEL)), b2=_zeros(D_MODEL),
        ln3_g=_ones(D_MODEL), ln3_b=_zeros(D_MODEL),
    )


def init_params(key):
    keys = jax.random.split(key, 6)
    enc = [_init_enc_layer(jax.random.fold_in(keys[0], i)) for i in range(N_ENC)]
    dec = [_init_dec_layer(jax.random.fold_in(keys[1], i)) for i in range(N_DEC)]
    return dict(
        embedding=_dense(keys[2], (VOCAB, D_MODEL), scale=1.0),  # Embedding.from_pretrained
        lora_down=_dense(keys[3], (D_MODEL, LORA_RANK)),
        lora_up=_dense(keys[4], (LORA_RANK, D_MODEL)),
        encoder=enc,
        decoder=dec,
        gen_w=_dense(keys[5], (D_MODEL, VOCAB)),
        gen_b=_zeros(VOCAB),
    )


def causal_mask(S):
    i = jnp.arange(S)[:, None]
    j = jnp.arange(S)[None, :]
    return jnp.where(j <= i, 0.0, NEG).astype(jnp.float32)


# ----------------------------- main -----------------------------
if __name__ == "__main__":
    key = jax.random.PRNGKey(0)
    kp, ks, kt = jax.random.split(key, 3)

    params = init_params(kp)
    packed = pack_params(params)          # one-time host-side packing

    B, S = 2, 8
    src = jax.random.randint(ks, (B, S), 0, VOCAB)
    tgt = jax.random.randint(kt, (B, S), 0, VOCAB)
    tgt_mask = causal_mask(S)             # additive causal mask for decoder self-attn

    fwd = jax.jit(forward)
    out = fwd(packed, src, tgt, None, tgt_mask)
    jax.block_until_ready(out)

    assert out.shape == (B, S, VOCAB)
    assert bool(jnp.all(jnp.isfinite(out)))
    print("KERNEL_OK")
</pallas_src>

<mosaic_0001>
module attributes {stable_mosaic.version = 11 : i64} {
  func.func @fused_transformer_kernel(%arg0: memref<32x1xi32, #tpu.memory_space<vmem>>, %arg1: memref<48x128xf32, #tpu.memory_space<vmem>>, %arg2: memref<944x128xbf16, #tpu.memory_space<vmem>>, %arg3: memref<48x128xf32, #tpu.memory_space<vmem>>, %arg4: memref<16x128xf32, #tpu.memory_space<vmem>>) attributes {dimension_semantics = [], scalar_prefetch = 0 : i64, scratch_operands = 0 : i64, tpu.core_type = #tpu.core_type<tc>} {
    %c0 = arith.constant 0 : index
    %c0_0 = arith.constant 0 : index
    %0 = vector.load %arg0[%c0, %c0_0] : memref<32x1xi32, #tpu.memory_space<vmem>>, vector<32x1xi32>
    %1 = tpu.iota {dimensions = array<i32: 1>} : vector<32x32xi32>
    %2 = vector.broadcast %0 : vector<32x1xi32> to vector<32x32xi32>
    %3 = arith.cmpi eq, %2, %1 : vector<32x32xi32>
    %4 = arith.extui %3 : vector<32x32xi1> to vector<32x32xi32>
    %5 = arith.sitofp %4 : vector<32x32xi32> to vector<32x32xf32>
    %6 = arith.truncf %5 : vector<32x32xf32> to vector<32x32xbf16>
    %c0_1 = arith.constant 0 : index
    %c0_2 = arith.constant 0 : index
    %7 = vector.load %arg2[%c0_1, %c0_2] : memref<944x128xbf16, #tpu.memory_space<vmem>>, vector<32x32xbf16>
    %cst = arith.constant dense<0.000000e+00> : vector<32x32xf32>
    %8 = tpu.matmul %6, %7, %cst {dimension_numbers = #tpu.dot_dimension_numbers<[1], [0], [0], [1], [0, 0, 1, 1], [], []>} : vector<32x32xbf16>, vector<32x32xbf16>, vector<32x32xf32> -> vector<32x32xf32>
    %9 = arith.truncf %8 : vector<32x32xf32> to vector<32x32xbf16>
    %c32 = arith.constant 32 : index
    %c0_3 = arith.constant 0 : index
    %10 = vector.load %arg2[%c32, %c0_3] : memref<944x128xbf16, #tpu.memory_space<vmem>>, vector<32x8xbf16>
    %cst_4 = arith.constant dense<0.000000e+00> : vector<32x8xf32>
    %11 = tpu.matmul %9, %10, %cst_4 {dimension_numbers = #tpu.dot_dimension_numbers<[1], [0], [0], [1], [0, 0, 1, 1], [], []>} : vector<32x32xbf16>, vector<32x8xbf16>, vector<32x8xf32> -> vector<32x8xf32>
    %12 = arith.truncf %11 : vector<32x8xf32> to vector<32x8xbf16>
    %c64 = arith.constant 64 : index
    %c0_5 = arith.constant 0 : index
    %13 = vector.load %arg2[%c64, %c0_5] : memref<944x128xbf16, #tpu.memory_space<vmem>>, vector<8x32xbf16>
    %cst_6 = arith.constant dense<0.000000e+00> : vector<32x32xf32>
    %14 = tpu.matmul %12, %13, %cst_6 {dimension_numbers = #tpu.dot_dimension_numbers<[1], [0], [0], [1], [0, 0, 1, 1], [], []>} : vector<32x8xbf16>, vector<8x32xbf16>, vector<32x32xf32> -> vector<32x32xf32>
    %15 = arith.addf %8, %14 : vector<32x32xf32>
    %16 = vector.extract_strided_slice %15 {offsets = [0, 0], sizes = [16, 32], strides = [1, 1]} : vector<32x32xf32> to vector<16x32xf32>
    %17 = vector.extract_strided_slice %15 {offsets = [16, 0], sizes = [16, 32], strides = [1, 1]} : vector<32x32xf32> to vector<16x32xf32>
    %c0_7 = arith.constant 0 : index
    %c0_8 = arith.constant 0 : index
    %18 = vector.load %arg1[%c0_7, %c0_8] : memref<48x128xf32, #tpu.memory_space<vmem>>, vector<16x16xf32>
    %c16 = arith.constant 16 : index
    %c0_9 = arith.constant 0 : index
    %19 = vector.load %arg1[%c16, %c0_9] : memref<48x128xf32, #tpu.memory_space<vmem>>, vector<16x16xf32>
    %c32_10 = arith.constant 32 : index
    %c0_11 = arith.constant 0 : index
    %20 = vector.load %arg1[%c32_10, %c0_11] : memref<48x128xf32, #tpu.memory_space<vmem>>, vector<16x16xf32>
    %21 = arith.truncf %16 : vector<16x32xf32> to vector<16x32xbf16>
    %c112 = arith.constant 112 : index
    %c0_12 = arith.constant 0 : index
    %22 = vector.load %arg2[%c112, %c0_12] : memref<944x128xbf16, #tpu.memory_space<vmem>>, vector<32x96xbf16>
    %cst_13 = arith.constant dense<0.000000e+00> : vector<16x96xf32>
    %23 = tpu.matmul %21, %22, %cst_13 {dimension_numbers = #tpu.dot_dimension_numbers<[1], [0], [0], [1], [0, 0, 1, 1], [], []>} : vector<16x32xbf16>, vector<32x96xbf16>, vector<16x96xf32> -> vector<16x96xf32>
    %c1 = arith.constant 1 : index
    %c0_14 = arith.constant 0 : index
    %24 = vector.load %arg3[%c1, %c0_14] : memref<48x128xf32, #tpu.memory_space<vmem>>, vector<1x96xf32>
    %25 = vector.broadcast %24 : vector<1x96xf32> to vector<16x96xf32>
    %26 = arith.addf %23, %25 : vector<16x96xf32>
    %27 = vector.extract_strided_slice %26 {offsets = [0, 0], sizes = [16, 32], strides = [1, 1]} : vector<16x96xf32> to vector<16x32xf32>
    %28 = vector.extract_strided_slice %26 {offsets = [0, 32], sizes = [16, 32], strides = [1, 1]} : vector<16x96xf32> to vector<16x32xf32>
    %29 = vector.extract_strided_slice %26 {offsets = [0, 64], sizes = [16, 32], strides = [1, 1]} : vector<16x96xf32> to vector<16x32xf32>
    %30 = arith.truncf %27 : vector<16x32xf32> to vector<16x32xbf16>
    %31 = arith.truncf %28 : vector<16x32xf32> to vector<16x32xbf16>
    %32 = arith.truncf %29 : vector<16x32xf32> to vector<16x32xbf16>
    %33 = vector.extract_strided_slice %30 {offsets = [0, 0], sizes = [16, 8], strides = [1, 1]} : vector<16x32xbf16> to vector<16x8xbf16>
    %34 = vector.extract_strided_slice %31 {offsets = [0, 0], sizes = [16, 8], strides = [1, 1]} : vector<16x32xbf16> to vector<16x8xbf16>
    %cst_15 = arith.constant dense<0.000000e+00> : vector<16x16xf32>
    %35 = tpu.matmul %33, %34, %cst_15 {dimension_numbers = #tpu.dot_dimension_numbers<[1], [1], [0], [0], [0, 0, 1, 0], [], []>} : vector<16x8xbf16>, vector<16x8xbf16>, vector<16x16xf32> -> vector<16x16xf32>
    %36 = arith.addf %35, %18 : vector<16x16xf32>
    %cst_16 = arith.constant dense<0xFF800000> : vector<16xf32>
    %37 = vector.multi_reduction <maximumf>, %36, %cst_16 [1] : vector<16x16xf32> to vector<16xf32>
    %38 = vector.shape_cast %37 : vector<16xf32> to vector<16x1xf32>
    %39 = vector.broadcast %38 : vector<16x1xf32> to vector<16x16xf32>
    %40 = arith.subf %36, %39 : vector<16x16xf32>
    %41 = math.exp %40 : vector<16x16xf32>
    %cst_17 = arith.constant dense<0.000000e+00> : vector<16xf32>
    %42 = vector.multi_reduction <add>, %41, %cst_17 [1] : vector<16x16xf32> to vector<16xf32>
    %43 = vector.shape_cast %42 : vector<16xf32> to vector<16x1xf32>
    %44 = tpu.reciprocal %43 {approx = true} : vector<16x1xf32> -> vector<16x1xf32>
    %45 = vector.broadcast %44 : vector<16x1xf32> to vector<16x16xf32>
    %46 = arith.mulf %41, %45 : vector<16x16xf32>
    %47 = arith.truncf %46 : vector<16x16xf32> to vector<16x16xbf16>
    %48 = vector.extract_strided_slice %32 {offsets = [0, 0], sizes = [16, 8], strides = [1, 1]} : vector<16x32xbf16> to vector<16x8xbf16>
    %cst_18 = arith.constant dense<0.000000e+00> : vector<16x8xf32>
    %49 = tpu.matmul %47, %48, %cst_18 {dimension_numbers = #tpu.dot_dimension_numbers<[1], [0], [0], [1], [0, 0, 1, 1], [], []>} : vector<16x16xbf16>, vector<16x8xbf16>, vector<16x8xf32> -> vector<16x8xf32>
    %50 = vector.extract_strided_slice %30 {offsets = [0, 8], sizes = [16, 8], strides = [1, 1]} : vector<16x32xbf16> to vector<16x8xbf16>
    %51 = vector.extract_strided_slice %31 {offsets = [0, 8], sizes = [16, 8], strides = [1, 1]} : vector<16x32xbf16> to vector<16x8xbf16>
    %cst_19 = arith.constant dense<0.000000e+00> : vector<16x16xf32>
    %52 = tpu.matmul %50, %51, %cst_19 {dimension_numbers = #tpu.dot_dimension_numbers<[1], [1], [0], [0], [0, 0, 1, 0], [], []>} : vector<16x8xbf16>, vector<16x8xbf16>, vector<16x16xf32> -> vector<16x16xf32>
    %53 = arith.addf %52, %18 : vector<16x16xf32>
    %cst_20 = arith.constant dense<0xFF800000> : vector<16xf32>
    %54 = vector.multi_reduction <maximumf>, %53, %cst_20 [1] : vector<16x16xf32> to vector<16xf32>
    %55 = vector.shape_cast %54 : vector<16xf32> to vector<16x1xf32>
    %56 = vector.broadcast %55 : vector<16x1xf32> to vector<16x16xf32>
    %57 = arith.subf %53, %56 : vector<16x16xf32>
    %58 = math.exp %57 : vector<16x16xf32>
    %cst_21 = arith.constant dense<0.000000e+00> : vector<16xf32>
    %59 = vector.multi_reduction <add>, %58, %cst_21 [1] : vector<16x16xf32> to vector<16xf32>
    %60 = vector.shape_cast %59 : vector<16xf32> to vector<16x1xf32>
    %61 = tpu.reciprocal %60 {approx = true} : vector<16x1xf32> -> vector<16x1xf32>
    %62 = vector.broadcast %61 : vector<16x1xf32> to vector<16x16xf32>
    %63 = arith.mulf %58, %62 : vector<16x16xf32>
    %64 = arith.truncf %63 : vector<16x16xf32> to vector<16x16xbf16>
    %65 = vector.extract_strided_slice %32 {offsets = [0, 8], sizes = [16, 8], strides = [1, 1]} : vector<16x32xbf16> to vector<16x8xbf16>
    %cst_22 = arith.constant dense<0.000000e+00> : vector<16x8xf32>
    %66 = tpu.matmul %64, %65, %cst_22 {dimension_numbers = #tpu.dot_dimension_numbers<[1], [0], [0], [1], [0, 0, 1, 1], [], []>} : vector<16x16xbf16>, vector<16x8xbf16>, vector<16x8xf32> -> vector<16x8xf32>
    %67 = vector.extract_strided_slice %30 {offsets = [0, 16], sizes = [16, 8], strides = [1, 1]} : vector<16x32xbf16> to vector<16x8xbf16>
    %68 = vector.extract_strided_slice %31 {offsets = [0, 16], sizes = [16, 8], strides = [1, 1]} : vector<16x32xbf16> to vector<16x8xbf16>
    %cst_23 = arith.constant dense<0.000000e+00> : vector<16x16xf32>
    %69 = tpu.matmul %67, %68, %cst_23 {dimension_numbers = #tpu.dot_dimension_numbers<[1], [1], [0], [0], [0, 0, 1, 0], [], []>} : vector<16x8xbf16>, vector<16x8xbf16>, vector<16x16xf32> -> vector<16x16xf32>
    %70 = arith.addf %69, %18 : vector<16x16xf32>
    %cst_24 = arith.constant dense<0xFF800000> : vector<16xf32>
    %71 = vector.multi_reduction <maximumf>, %70, %cst_24 [1] : vector<16x16xf32> to vector<16xf32>
    %72 = vector.shape_cast %71 : vector<16xf32> to vector<16x1xf32>
    %73 = vector.broadcast %72 : vector<16x1xf32> to vector<16x16xf32>
    %74 = arith.subf %70, %73 : vector<16x16xf32>
    %75 = math.exp %74 : vector<16x16xf32>
    %cst_25 = arith.constant dense<0.000000e+00> : vector<16xf32>
    %76 = vector.multi_reduction <add>, %75, %cst_25 [1] : vector<16x16xf32> to vector<16xf32>
    %77 = vector.shape_cast %76 : vector<16xf32> to vector<16x1xf32>
    %78 = tpu.reciprocal %77 {approx = true} : vector<16x1xf32> -> vector<16x1xf32>
    %79 = vector.broadcast %78 : vector<16x1xf32> to vector<16x16xf32>
    %80 = arith.mulf %75, %79 : vector<16x16xf32>
    %81 = arith.truncf %80 : vector<16x16xf32> to vector<16x16xbf16>
    %82 = vector.extract_strided_slice %32 {offsets = [0, 16], sizes = [16, 8], strides = [1, 1]} : vector<16x32xbf16> to vector<16x8xbf16>
    %cst_26 = arith.constant dense<0.000000e+00> : vector<16x8xf32>
    %83 = tpu.matmul %81, %82, %cst_26 {dimension_numbers = #tpu.dot_dimension_numbers<[1], [0], [0], [1], [0, 0, 1, 1], [], []>} : vector<16x16xbf16>, vector<16x8xbf16>, vector<16x8xf32> -> vector<16x8xf32>
    %84 = vector.extract_strided_slice %30 {offsets = [0, 24], sizes = [16, 8], strides = [1, 1]} : vector<16x32xbf16> to vector<16x8xbf16>
    %85 = vector.extract_strided_slice %31 {offsets = [0, 24], sizes = [16, 8], strides = [1, 1]} : vector<16x32xbf16> to vector<16x8xbf16>
    %cst_27 = arith.constant dense<0.000000e+00> : vector<16x16xf32>
    %86 = tpu.matmul %84, %85, %cst_27 {dimension_numbers = #tpu.dot_dimension_numbers<[1], [1], [0], [0], [0, 0, 1, 0], [], []>} : vector<16x8xbf16>, vector<16x8xbf16>, vector<16x16xf32> -> vector<16x16xf32>
    %87 = arith.addf %86, %18 : vector<16x16xf32>
    %cst_28 = arith.constant dense<0xFF800000> : vector<16xf32>
    %88 = vector.multi_reduction <maximumf>, %87, %cst_28 [1] : vector<16x16xf32> to vector<16xf32>
    %89 = vector.shape_cast %88 : vector<16xf32> to vector<16x1xf32>
    %90 = vector.broadcast %89 : vector<16x1xf32> to vector<16x16xf32>
    %91 = arith.subf %87, %90 : vector<16x16xf32>
    %92 = math.exp %91 : vector<16x16xf32>
    %cst_29 = arith.constant dense<0.000000e+00> : vector<16xf32>
    %93 = vector.multi_reduction <add>, %92, %cst_29 [1] : vector<16x16xf32> to vector<16xf32>
    %94 = vector.shape_cast %93 : vector<16xf32> to vector<16x1xf32>
    %95 = tpu.reciprocal %94 {approx = true} : vector<16x1xf32> -> vector<16x1xf32>
    %96 = vector.broadcast %95 : vector<16x1xf32> to vector<16x16xf32>
    %97 = arith.mulf %92, %96 : vector<16x16xf32>
    %98 = arith.truncf %97 : vector<16x16xf32> to vector<16x16xbf16>
    %99 = vector.extract_strided_slice %32 {offsets = [0, 24], sizes = [16, 8], strides = [1, 1]} : vector<16x32xbf16> to vector<16x8xbf16>
    %cst_30 = arith.constant dense<0.000000e+00> : vector<16x8xf32>
    %100 = tpu.matmul %98, %99, %cst_30 {dimension_numbers = #tpu.dot_dimension_numbers<[1], [0], [0], [1], [0, 0, 1, 1], [], []>} : vector<16x16xbf16>, vector<16x8xbf16>, vector<16x8xf32> -> vector<16x8xf32>
    %101 = tpu.concatenate %49, %66, %83, %100 in 1 : vector<16x8xf32>, vector<16x8xf32>, vector<16x8xf32>, vector<16x8xf32> -> vector<16x32xf32>
    %102 = arith.truncf %101 : vector<16x32xf32> to vector<16x32xbf16>
    %c144 = arith.constant 144 : index
    %c0_31 = arith.constant 0 : index
    %103 = vector.load %arg2[%c144, %c0_31] : memref<944x128xbf16, #tpu.memory_space<vmem>>, vector<32x32xbf16>
    %cst_32 = arith.constant dense<0.000000e+00> : vector<16x32xf32>
    %104 = tpu.matmul %102, %103, %cst_32 {dimension_numbers = #tpu.dot_dimension_numbers<[1], [0], [0], [1], [0, 0, 1, 1], [], []>} : vector<16x32xbf16>, vector<32x32xbf16>, vector<16x32xf32> -> vector<16x32xf32>
    %c2 = arith.constant 2 : index
    %c0_33 = arith.constant 0 : index
    %105 = vector.load %arg3[%c2, %c0_33] : memref<48x128xf32, #tpu.memory_space<vmem>>, vector<1x32xf32>
    %106 = vector.broadcast %105 : vector<1x32xf32> to vector<16x32xf32>
    %107 = arith.addf %104, %106 : vector<16x32xf32>
    %108 = arith.addf %16, %107 : vector<16x32xf32>
    %c3 = arith.constant 3 : index
    %c0_34 = arith.constant 0 : index
    %109 = vector.load %arg3[%c3, %c0_34] : memref<48x128xf32, #tpu.memory_space<vmem>>, vector<1x32xf32>
    %c4 = arith.constant 4 : index
    %c0_35 = arith.constant 0 : index
    %110 = vector.load %arg3[%c4, %c0_35] : memref<48x128xf32, #tpu.memory_space<vmem>>, vector<1x32xf32>
    %cst_36 = arith.constant dense<0.000000e+00> : vector<16xf32>
    %111 = vector.multi_reduction <add>, %108, %cst_36 [1] : vector<16x32xf32> to vector<16xf32>
    %112 = vector.shape_cast %111 : vector<16xf32> to vector<16x1xf32>
    %cst_37 = arith.constant 3.200000e+01 : f32
    %113 = vector.broadcast %cst_37 : f32 to vector<16x1xf32>
    %114 = arith.divf %112, %113 : vector<16x1xf32>
    %115 = vector.broadcast %114 : vector<16x1xf32> to vector<16x32xf32>
    %116 = arith.subf %108, %115 : vector<16x32xf32>
    %117 = arith.mulf %116, %116 : vector<16x32xf32>
    %cst_38 = arith.constant dense<0.000000e+00> : vector<16xf32>
    %118 = vector.multi_reduction <add>, %117, %cst_38 [1] : vector<16x32xf32> to vector<16xf32>
    %119 = vector.shape_cast %118 : vector<16xf32> to vector<16x1xf32>
    %cst_39 = arith.constant 3.200000e+01 : f32
    %120 = vector.broadcast %cst_39 : f32 to vector<16x1xf32>
    %121 = arith.divf %119, %120 : vector<16x1xf32>
    %cst_40 = arith.constant 9.99999974E-6 : f32
    %122 = vector.broadcast %cst_40 : f32 to vector<16x1xf32>
    %123 = arith.addf %121, %122 : vector<16x1xf32>
    %124 = math.rsqrt %123 : vector<16x1xf32>
    %125 = vector.broadcast %124 : vector<16x1xf32> to vector<16x32xf32>
    %126 = arith.mulf %116, %125 : vector<16x32xf32>
    %127 = vector.broadcast %109 : vector<1x32xf32> to vector<16x32xf32>
    %128 = arith.mulf %126, %127 : vector<16x32xf32>
    %129 = vector.broadcast %110 : vector<1x32xf32> to vector<16x32xf32>
    %130 = arith.addf %128, %129 : vector<16x32xf32>
    %131 = arith.truncf %130 : vector<16x32xf32> to vector<16x32xbf16>
    %c176 = arith.constant 176 : index
    %c0_41 = arith.constant 0 : index
    %132 = vector.load %arg2[%c176, %c0_41] : memref<944x128xbf16, #tpu.memory_space<vmem>>, vector<32x64xbf16>
    %cst_42 = arith.constant dense<0.000000e+00> : vector<16x64xf32>
    %133 = tpu.matmul %131, %132, %cst_42 {dimension_numbers = #tpu.dot_dimension_numbers<[1], [0], [0], [1], [0, 0, 1, 1], [], []>} : vector<16x32xbf16>, vector<32x64xbf16>, vector<16x64xf32> -> vector<16x64xf32>
    %c5 = arith.constant 5 : index
    %c0_43 = arith.constant 0 : index
    %134 = vector.load %arg3[%c5, %c0_43] : memref<48x128xf32, #tpu.memory_space<vmem>>, vector<1x64xf32>
    %135 = vector.broadcast %134 : vector<1x64xf32> to vector<16x64xf32>
    %136 = arith.addf %133, %135 : vector<16x64xf32>
    %cst_44 = arith.constant 0.000000e+00 : f32
    %137 = vector.broadcast %cst_44 : f32 to vector<16x64xf32>
    %138 = arith.maximumf %136, %137 : vector<16x64xf32>
    %139 = arith.truncf %138 : vector<16x64xf32> to vector<16x64xbf16>
    %c208 = arith.constant 208 : index
    %c0_45 = arith.constant 0 : index
    %140 = vector.load %arg2[%c208, %c0_45] : memref<944x128xbf16, #tpu.memory_space<vmem>>, vector<64x32xbf16>
    %cst_46 = arith.constant dense<0.000000e+00> : vector<16x32xf32>
    %141 = tpu.matmul %139, %140, %cst_46 {dimension_numbers = #tpu.dot_dimension_numbers<[1], [0], [0], [1], [0, 0, 1, 1], [], []>} : vector<16x64xbf16>, vector<64x32xbf16>, vector<16x32xf32> -> vector<16x32xf32>
    %c6 = arith.constant 6 : index
    %c0_47 = arith.constant 0 : index
    %142 = vector.load %arg3[%c6, %c0_47] : memref<48x128xf32, #tpu.memory_space<vmem>>, vector<1x32xf32>
    %143 = vector.broadcast %142 : vector<1x32xf32> to vector<16x32xf32>
    %144 = arith.addf %141, %143 : vector<16x32xf32>
    %145 = arith.addf %130, %144 : vector<16x32xf32>
    %c7 = arith.constant 7 : index
    %c0_48 = arith.constant 0 : index
    %146 = vector.load %arg3[%c7, %c0_48] : memref<48x128xf32, #tpu.memory_space<vmem>>, vector<1x32xf32>
    %c8 = arith.constant 8 : index
    %c0_49 = arith.constant 0 : index
    %147 = vector.load %arg3[%c8, %c0_49] : memref<48x128xf32, #tpu.memory_space<vmem>>, vector<1x32xf32>
    %cst_50 = arith.constant dense<0.000000e+00> : vector<16xf32>
    %148 = vector.multi_reduction <add>, %145, %cst_50 [1] : vector<16x32xf32> to vector<16xf32>
    %149 = vector.shape_cast %148 : vector<16xf32> to vector<16x1xf32>
    %cst_51 = arith.constant 3.200000e+01 : f32
    %150 = vector.broadcast %cst_51 : f32 to vector<16x1xf32>
    %151 = arith.divf %149, %150 : vector<16x1xf32>
    %152 = vector.broadcast %151 : vector<16x1xf32> to vector<16x32xf32>
    %153 = arith.subf %145, %152 : vector<16x32xf32>
    %154 = arith.mulf %153, %153 : vector<16x32xf32>
    %cst_52 = arith.constant dense<0.000000e+00> : vector<16xf32>
    %155 = vector.multi_reduction <add>, %154, %cst_52 [1] : vector<16x32xf32> to vector<16xf32>
    %156 = vector.shape_cast %155 : vector<16xf32> to vector<16x1xf32>
    %cst_53 = arith.constant 3.200000e+01 : f32
    %157 = vector.broadcast %cst_53 : f32 to vector<16x1xf32>
    %158 = arith.divf %156, %157 : vector<16x1xf32>
    %cst_54 = arith.constant 9.99999974E-6 : f32
    %159 = vector.broadcast %cst_54 : f32 to vector<16x1xf32>
    %160 = arith.addf %158, %159 : vector<16x1xf32>
    %161 = math.rsqrt %160 : vector<16x1xf32>
    %162 = vector.broadcast %161 : vector<16x1xf32> to vector<16x32xf32>
    %163 = arith.mulf %153, %162 : vector<16x32xf32>
    %164 = vector.broadcast %146 : vector<1x32xf32> to vector<16x32xf32>
    %165 = arith.mulf %163, %164 : vector<16x32xf32>
    %166 = vector.broadcast %147 : vector<1x32xf32> to vector<16x32xf32>
    %167 = arith.addf %165, %166 : vector<16x32xf32>
    %168 = arith.truncf %167 : vector<16x32xf32> to vector<16x32xbf16>
    %c272 = arith.constant 272 : index
    %c0_55 = arith.constant 0 : index
    %169 = vector.load %arg2[%c272, %c0_55] : memref<944x128xbf16, #tpu.memory_space<vmem>>, vector<32x96xbf16>
    %cst_56 = arith.constant dense<0.000000e+00> : vector<16x96xf32>
    %170 = tpu.matmul %168, %169, %cst_56 {dimension_numbers = #tpu.dot_dimension_numbers<[1], [0], [0], [1], [0, 0, 1, 1], [], []>} : vector<16x32xbf16>, vector<32x96xbf16>, vector<16x96xf32> -> vector<16x96xf32>
    %c9 = arith.constant 9 : index
    %c0_57 = arith.constant 0 : index
    %171 = vector.load %arg3[%c9, %c0_57] : memref<48x128xf32, #tpu.memory_space<vmem>>, vector<1x96xf32>
    %172 = vector.broadcast %171 : vector<1x96xf32> to vector<16x96xf32>
    %173 = arith.addf %170, %172 : vector<16x96xf32>
    %174 = vector.extract_strided_slice %173 {offsets = [0, 0], sizes = [16, 32], strides = [1, 1]} : vector<16x96xf32> to vector<16x32xf32>
    %175 = vector.extract_strided_slice %173 {offsets = [0, 32], sizes = [16, 32], strides = [1, 1]} : vector<16x96xf32> to vector<16x32xf32>
    %176 = vector.extract_strided_slice %173 {offsets = [0, 64], sizes = [16, 32], strides = [1, 1]} : vector<16x96xf32> to vector<16x32xf32>
    %177 = arith.truncf %174 : vector<16x32xf32> to vector<16x32xbf16>
    %178 = arith.truncf %175 : vector<16x32xf32> to vector<16x32xbf16>
    %179 = arith.truncf %176 : vector<16x32xf32> to vector<16x32xbf16>
    %180 = vector.extract_strided_slice %177 {offsets = [0, 0], sizes = [16, 8], strides = [1, 1]} : vector<16x32xbf16> to vector<16x8xbf16>
    %181 = vector.extract_strided_slice %178 {offsets = [0, 0], sizes = [16, 8], strides = [1, 1]} : vector<16x32xbf16> to vector<16x8xbf16>
    %cst_58 = arith.constant dense<0.000000e+00> : vector<16x16xf32>
    %182 = tpu.matmul %180, %181, %cst_58 {dimension_numbers = #tpu.dot_dimension_numbers<[1], [1], [0], [0], [0, 0, 1, 0], [], []>} : vector<16x8xbf16>, vector<16x8xbf16>, vector<16x16xf32> -> vector<16x16xf32>
    %183 = arith.addf %182, %18 : vector<16x16xf32>
    %cst_59 = arith.constant dense<0xFF800000> : vector<16xf32>
    %184 = vector.multi_reduction <maximumf>, %183, %cst_59 [1] : vector<16x16xf32> to vector<16xf32>
    %185 = vector.shape_cast %184 : vector<16xf32> to vector<16x1xf32>
    %186 = vector.broadcast %185 : vector<16x1xf32> to vector<16x16xf32>
    %187 = arith.subf %183, %186 : vector<16x16xf32>
    %188 = math.exp %187 : vector<16x16xf32>
    %cst_60 = arith.constant dense<0.000000e+00> : vector<16xf32>
    %189 = vector.multi_reduction <add>, %188, %cst_60 [1] : vector<16x16xf32> to vector<16xf32>
    %190 = vector.shape_cast %189 : vector<16xf32> to vector<16x1xf32>
    %191 = tpu.reciprocal %190 {approx = true} : vector<16x1xf32> -> vector<16x1xf32>
    %192 = vector.broadcast %191 : vector<16x1xf32> to vector<16x16xf32>
    %193 = arith.mulf %188, %192 : vector<16x16xf32>
    %194 = arith.truncf %193 : vector<16x16xf32> to vector<16x16xbf16>
    %195 = vector.extract_strided_slice %179 {offsets = [0, 0], sizes = [16, 8], strides = [1, 1]} : vector<16x32xbf16> to vector<16x8xbf16>
    %cst_61 = arith.constant dense<0.000000e+00> : vector<16x8xf32>
    %196 = tpu.matmul %194, %195, %cst_61 {dimension_numbers = #tpu.dot_dimension_numbers<[1], [0], [0], [1], [0, 0, 1, 1], [], []>} : vector<16x16xbf16>, vector<16x8xbf16>, vector<16x8xf32> -> vector<16x8xf32>
    %197 = vector.extract_strided_slice %177 {offsets = [0, 8], sizes = [16, 8], strides = [1, 1]} : vector<16x32xbf16> to vector<16x8xbf16>
    %198 = vector.extract_strided_slice %178 {offsets = [0, 8], sizes = [16, 8], strides = [1, 1]} : vector<16x32xbf16> to vector<16x8xbf16>
    %cst_62 = arith.constant dense<0.000000e+00> : vector<16x16xf32>
    %199 = tpu.matmul %197, %198, %cst_62 {dimension_numbers = #tpu.dot_dimension_numbers<[1], [1], [0], [0], [0, 0, 1, 0], [], []>} : vector<16x8xbf16>, vector<16x8xbf16>, vector<16x16xf32> -> vector<16x16xf32>
    %200 = arith.addf %199, %18 : vector<16x16xf32>
    %cst_63 = arith.constant dense<0xFF800000> : vector<16xf32>
    %201 = vector.multi_reduction <maximumf>, %200, %cst_63 [1] : vector<16x16xf32> to vector<16xf32>
    %202 = vector.shape_cast %201 : vector<16xf32> to vector<16x1xf32>
    %203 = vector.broadcast %202 : vector<16x1xf32> to vector<16x16xf32>
    %204 = arith.subf %200, %203 : vector<16x16xf32>
    %205 = math.exp %204 : vector<16x16xf32>
    %cst_64 = arith.constant dense<0.000000e+00> : vector<16xf32>
    %206 = vector.multi_reduction <add>, %205, %cst_64 [1] : vector<16x16xf32> to vector<16xf32>
    %207 = vector.shape_cast %206 : vector<16xf32> to vector<16x1xf32>
    %208 = tpu.reciprocal %207 {approx = true} : vector<16x1xf32> -> vector<16x1xf32>
    %209 = vector.broadcast %208 : vector<16x1xf32> to vector<16x16xf32>
    %210 = arith.mulf %205, %209 : vector<16x16xf32>
    %211 = arith.truncf %210 : vector<16x16xf32> to vector<16x16xbf16>
    %212 = vector.extract_strided_slice %179 {offsets = [0, 8], sizes = [16, 8], strides = [1, 1]} : vector<16x32xbf16> to vector<16x8xbf16>
    %cst_65 = arith.constant dense<0.000000e+00> : vector<16x8xf32>
    %213 = tpu.matmul %211, %212, %cst_65 {dimension_numbers = #tpu.dot_dimension_numbers<[1], [0], [0], [1], [0, 0, 1, 1], [], []>} : vector<16x16xbf16>, vector<16x8xbf16>, vector<16x8xf32> -> vector<16x8xf32>
    %214 = vector.extract_strided_slice %177 {offsets = [0, 16], sizes = [16, 8], strides = [1, 1]} : vector<16x32xbf16> to vector<16x8xbf16>
    %215 = vector.extract_strided_slice %178 {offsets = [0, 16], sizes = [16, 8], strides = [1, 1]} : vector<16x32xbf16> to vector<16x8xbf16>
    %cst_66 = arith.constant dense<0.000000e+00> : vector<16x16xf32>
    %216 = tpu.matmul %214, %215, %cst_66 {dimension_numbers = #tpu.dot_dimension_numbers<[1], [1], [0], [0], [0, 0, 1, 0], [], []>} : vector<16x8xbf16>, vector<16x8xbf16>, vector<16x16xf32> -> vector<16x16xf32>
    %217 = arith.addf %216, %18 : vector<16x16xf32>
    %cst_67 = arith.constant dense<0xFF800000> : vector<16xf32>
    %218 = vector.multi_reduction <maximumf>, %217, %cst_67 [1] : vector<16x16xf32> to vector<16xf32>
    %219 = vector.shape_cast %218 : vector<16xf32> to vector<16x1xf32>
    %220 = vector.broadcast %219 : vector<16x1xf32> to vector<16x16xf32>
    %221 = arith.subf %217, %220 : vector<16x16xf32>
    %222 = math.exp %221 : vector<16x16xf32>
    %cst_68 = arith.constant dense<0.000000e+00> : vector<16xf32>
    %223 = vector.multi_reduction <add>, %222, %cst_68 [1] : vector<16x16xf32> to vector<16xf32>
    %224 = vector.shape_cast %223 : vector<16xf32> to vector<16x1xf32>
    %225 = tpu.reciprocal %224 {approx = true} : vector<16x1xf32> -> vector<16x1xf32>
    %226 = vector.broadcast %225 : vector<16x1xf32> to vector<16x16xf32>
    %227 = arith.mulf %222, %226 : vector<16x16xf32>
    %228 = arith.truncf %227 : vector<16x16xf32> to vector<16x16xbf16>
    %229 = vector.extract_strided_slice %179 {offsets = [0, 16], sizes = [16, 8], strides = [1, 1]} : vector<16x32xbf16> to vector<16x8xbf16>
    %cst_69 = arith.constant dense<0.000000e+00> : vector<16x8xf32>
    %230 = tpu.matmul %228, %229, %cst_69 {dimension_numbers = #tpu.dot_dimension_numbers<[1], [0], [0], [1], [0, 0, 1, 1], [], []>} : vector<16x16xbf16>, vector<16x8xbf16>, vector<16x8xf32> -> vector<16x8xf32>
    %231 = vector.extract_strided_slice %177 {offsets = [0, 24], sizes = [16, 8], strides = [1, 1]} : vector<16x32xbf16> to vector<16x8xbf16>
    %232 = vector.extract_strided_slice %178 {offsets = [0, 24], sizes = [16, 8], strides = [1, 1]} : vector<16x32xbf16> to vector<16x8xbf16>
    %cst_70 = arith.constant dense<0.000000e+00> : vector<16x16xf32>
    %233 = tpu.matmul %231, %232, %cst_70 {dimension_numbers = #tpu.dot_dimension_numbers<[1], [1], [0], [0], [0, 0, 1, 0], [], []>} : vector<16x8xbf16>, vector<16x8xbf16>, vector<16x16xf32> -> vector<16x16xf32>
    %234 = arith.addf %233, %18 : vector<16x16xf32>
    %cst_71 = arith.constant dense<0xFF800000> : vector<16xf32>
    %235 = vector.multi_reduction <maximumf>, %234, %cst_71 [1] : vector<16x16xf32> to vector<16xf32>
    %236 = vector.shape_cast %235 : vector<16xf32> to vector<16x1xf32>
    %237 = vector.broadcast %236 : vector<16x1xf32> to vector<16x16xf32>
    %238 = arith.subf %234, %237 : vector<16x16xf32>
    %239 = math.exp %238 : vector<16x16xf32>
    %cst_72 = arith.constant dense<0.000000e+00> : vector<16xf32>
    %240 = vector.multi_reduction <add>, %239, %cst_72 [1] : vector<16x16xf32> to vector<16xf32>
    %241 = vector.shape_cast %240 : vector<16xf32> to vector<16x1xf32>
    %242 = tpu.reciprocal %241 {approx = true} : vector<16x1xf32> -> vector<16x1xf32>
    %243 = vector.broadcast %242 : vector<16x1xf32> to vector<16x16xf32>
    %244 = arith.mulf %239, %243 : vector<16x16xf32>
    %245 = arith.truncf %244 : vector<16x16xf32> to vector<16x16xbf16>
    %246 = vector.extract_strided_slice %179 {offsets = [0, 24], sizes = [16, 8], strides = [1, 1]} : vector<16x32xbf16> to vector<16x8xbf16>
    %cst_73 = arith.constant dense<0.000000e+00> : vector<16x8xf32>
    %247 = tpu.matmul %245, %246, %cst_73 {dimension_numbers = #tpu.dot_dimension_numbers<[1], [0], [0], [1], [0, 0, 1, 1], [], []>} : vector<16x16xbf16>, vector<16x8xbf16>, vector<16x8xf32> -> vector<16x8xf32>
    %248 = tpu.concatenate %196, %213, %230, %247 in 1 : vector<16x8xf32>, vector<16x8xf32>, vector<16x8xf32>, vector<16x8xf32> -> vector<16x32xf32>
    %249 = arith.truncf %248 : vector<16x32xf32> to vector<16x32xbf16>
    %c304 = arith.constant 304 : index
    %c0_74 = arith.constant 0 : index
    %250 = vector.load %arg2[%c304, %c0_74] : memref<944x128xbf16, #tpu.memory_space<vmem>>, vector<32x32xbf16>
    %cst_75 = arith.constant dense<0.000000e+00> : vector<16x32xf32>
    %251 = tpu.matmul %249, %250, %cst_75 {dimension_numbers = #tpu.dot_dimension_numbers<[1], [0], [0], [1], [0, 0, 1, 1], [], []>} : vector<16x32xbf16>, vector<32x32xbf16>, vector<16x32xf32> -> vector<16x32xf32>
    %c10 = arith.constant 10 : index
    %c0_76 = arith.constant 0 : index
    %252 = vector.load %arg3[%c10, %c0_76] : memref<48x128xf32, #tpu.memory_space<vmem>>, vector<1x32xf32>
    %253 = vector.broadcast %252 : vector<1x32xf32> to vector<16x32xf32>
    %254 = arith.addf %251, %253 : vector<16x32xf32>
    %255 = arith.addf %167, %254 : vector<16x32xf32>
    %c11 = arith.constant 11 : index
    %c0_77 = arith.constant 0 : index
    %256 = vector.load %arg3[%c11, %c0_77] : memref<48x128xf32, #tpu.memory_space<vmem>>, vector<1x32xf32>
    %c12 = arith.constant 12 : index
    %c0_78 = arith.constant 0 : index
    %257 = vector.load %arg3[%c12, %c0_78] : memref<48x128xf32, #tpu.memory_space<vmem>>, vector<1x32xf32>
    %cst_79 = arith.constant dense<0.000000e+00> : vector<16xf32>
    %258 = vector.multi_reduction <add>, %255, %cst_79 [1] : vector<16x32xf32> to vector<16xf32>
    %259 = vector.shape_cast %258 : vector<16xf32> to vector<16x1xf32>
    %cst_80 = arith.constant 3.200000e+01 : f32
    %260 = vector.broadcast %cst_80 : f32 to vector<16x1xf32>
    %261 = arith.divf %259, %260 : vector<16x1xf32>
    %262 = vector.broadcast %261 : vector<16x1xf32> to vector<16x32xf32>
    %263 = arith.subf %255, %262 : vector<16x32xf32>
    %264 = arith.mulf %263, %263 : vector<16x32xf32>
    %cst_81 = arith.constant dense<0.000000e+00> : vector<16xf32>
    %265 = vector.multi_reduction <add>, %264, %cst_81 [1] : vector<16x32xf32> to vector<16xf32>
    %266 = vector.shape_cast %265 : vector<16xf32> to vector<16x1xf32>
    %cst_82 = arith.constant 3.200000e+01 : f32
    %267 = vector.broadcast %cst_82 : f32 to vector<16x1xf32>
    %268 = arith.divf %266, %267 : vector<16x1xf32>
    %cst_83 = arith.constant 9.99999974E-6 : f32
    %269 = vector.broadcast %cst_83 : f32 to vector<16x1xf32>
    %270 = arith.addf %268, %269 : vector<16x1xf32>
    %271 = math.rsqrt %270 : vector<16x1xf32>
    %272 = vector.broadcast %271 : vector<16x1xf32> to vector<16x32xf32>
    %273 = arith.mulf %263, %272 : vector<16x32xf32>
    %274 = vector.broadcast %256 : vector<1x32xf32> to vector<16x32xf32>
    %275 = arith.mulf %273, %274 : vector<16x32xf32>
    %276 = vector.broadcast %257 : vector<1x32xf32> to vector<16x32xf32>
    %277 = arith.addf %275, %276 : vector<16x32xf32>
    %278 = arith.truncf %277 : vector<16x32xf32> to vector<16x32xbf16>
    %c336 = arith.constant 336 : index
    %c0_84 = arith.constant 0 : index
    %279 = vector.load %arg2[%c336, %c0_84] : memref<944x128xbf16, #tpu.memory_space<vmem>>, vector<32x64xbf16>
    %cst_85 = arith.constant dense<0.000000e+00> : vector<16x64xf32>
    %280 = tpu.matmul %278, %279, %cst_85 {dimension_numbers = #tpu.dot_dimension_numbers<[1], [0], [0], [1], [0, 0, 1, 1], [], []>} : vector<16x32xbf16>, vector<32x64xbf16>, vector<16x64xf32> -> vector<16x64xf32>
    %c13 = arith.constant 13 : index
    %c0_86 = arith.constant 0 : index
    %281 = vector.load %arg3[%c13, %c0_86] : memref<48x128xf32, #tpu.memory_space<vmem>>, vector<1x64xf32>
    %282 = vector.broadcast %281 : vector<1x64xf32> to vector<16x64xf32>
    %283 = arith.addf %280, %282 : vector<16x64xf32>
    %cst_87 = arith.constant 0.000000e+00 : f32
    %284 = vector.broadcast %cst_87 : f32 to vector<16x64xf32>
    %285 = arith.maximumf %283, %284 : vector<16x64xf32>
    %286 = arith.truncf %285 : vector<16x64xf32> to vector<16x64xbf16>
    %c368 = arith.constant 368 : index
    %c0_88 = arith.constant 0 : index
    %287 = vector.load %arg2[%c368, %c0_88] : memref<944x128xbf16, #tpu.memory_space<vmem>>, vector<64x32xbf16>
    %cst_89 = arith.constant dense<0.000000e+00> : vector<16x32xf32>
    %288 = tpu.matmul %286, %287, %cst_89 {dimension_numbers = #tpu.dot_dimension_numbers<[1], [0], [0], [1], [0, 0, 1, 1], [], []>} : vector<16x64xbf16>, vector<64x32xbf16>, vector<16x32xf32> -> vector<16x32xf32>
    %c14 = arith.constant 14 : index
    %c0_90 = arith.constant 0 : index
    %289 = vector.load %arg3[%c14, %c0_90] : memref<48x128xf32, #tpu.memory_space<vmem>>, vector<1x32xf32>
    %290 = vector.broadcast %289 : vector<1x32xf32> to vector<16x32xf32>
    %291 = arith.addf %288, %290 : vector<16x32xf32>
    %292 = arith.addf %277, %291 : vector<16x32xf32>
    %c15 = arith.constant 15 : index
    %c0_91 = arith.constant 0 : index
    %293 = vector.load %arg3[%c15, %c0_91] : memref<48x128xf32, #tpu.memory_space<vmem>>, vector<1x32xf32>
    %c16_92 = arith.constant 16 : index
    %c0_93 = arith.constant 0 : index
    %294 = vector.load %arg3[%c16_92, %c0_93] : memref<48x128xf32, #tpu.memory_space<vmem>>, vector<1x32xf32>
    %cst_94 = arith.constant dense<0.000000e+00> : vector<16xf32>
    %295 = vector.multi_reduction <add>, %292, %cst_94 [1] : vector<16x32xf32> to vector<16xf32>
    %296 = vector.shape_cast %295 : vector<16xf32> to vector<16x1xf32>
    %cst_95 = arith.constant 3.200000e+01 : f32
    %297 = vector.broadcast %cst_95 : f32 to vector<16x1xf32>
    %298 = arith.divf %296, %297 : vector<16x1xf32>
    %299 = vector.broadcast %298 : vector<16x1xf32> to vector<16x32xf32>
    %300 = arith.subf %292, %299 : vector<16x32xf32>
    %301 = arith.mulf %300, %300 : vector<16x32xf32>
    %cst_96 = arith.constant dense<0.000000e+00> : vector<16xf32>
    %302 = vector.multi_reduction <add>, %301, %cst_96 [1] : vector<16x32xf32> to vector<16xf32>
    %303 = vector.shape_cast %302 : vector<16xf32> to vector<16x1xf32>
    %cst_97 = arith.constant 3.200000e+01 : f32
    %304 = vector.broadcast %cst_97 : f32 to vector<16x1xf32>
    %305 = arith.divf %303, %304 : vector<16x1xf32>
    %cst_98 = arith.constant 9.99999974E-6 : f32
    %306 = vector.broadcast %cst_98 : f32 to vector<16x1xf32>
    %307 = arith.addf %305, %306 : vector<16x1xf32>
    %308 = math.rsqrt %307 : vector<16x1xf32>
    %309 = vector.broadcast %308 : vector<16x1xf32> to vector<16x32xf32>
    %310 = arith.mulf %300, %309 : vector<16x32xf32>
    %311 = vector.broadcast %293 : vector<1x32xf32> to vector<16x32xf32>
    %312 = arith.mulf %310, %311 : vector<16x32xf32>
    %313 = vector.broadcast %294 : vector<1x32xf32> to vector<16x32xf32>
    %314 = arith.addf %312, %313 : vector<16x32xf32>
    %315 = arith.truncf %17 : vector<16x32xf32> to vector<16x32xbf16>
    %c432 = arith.constant 432 : index
    %c0_99 = arith.constant 0 : index
    %316 = vector.load %arg2[%c432, %c0_99] : memref<944x128xbf16, #tpu.memory_space<vmem>>, vector<32x96xbf16>
    %cst_100 = arith.constant dense<0.000000e+00> : vector<16x96xf32>
    %317 = tpu.matmul %315, %316, %cst_100 {dimension_numbers = #tpu.dot_dimension_numbers<[1], [0], [0], [1], [0, 0, 1, 1], [], []>} : vector<16x32xbf16>, vector<32x96xbf16>, vector<16x96xf32> -> vector<16x96xf32>
    %c17 = arith.constant 17 : index
    %c0_101 = arith.constant 0 : index
    %318 = vector.load %arg3[%c17, %c0_101] : memref<48x128xf32, #tpu.memory_space<vmem>>, vector<1x96xf32>
    %319 = vector.broadcast %318 : vector<1x96xf32> to vector<16x96xf32>
    %320 = arith.addf %317, %319 : vector<16x96xf32>
    %321 = vector.extract_strided_slice %320 {offsets = [0, 0], sizes = [16, 32], strides = [1, 1]} : vector<16x96xf32> to vector<16x32xf32>
    %322 = vector.extract_strided_slice %320 {offsets = [0, 32], sizes = [16, 32], strides = [1, 1]} : vector<16x96xf32> to vector<16x32xf32>
    %323 = vector.extract_strided_slice %320 {offsets = [0, 64], sizes = [16, 32], strides = [1, 1]} : vector<16x96xf32> to vector<16x32xf32>
    %324 = arith.truncf %321 : vector<16x32xf32> to vector<16x32xbf16>
    %325 = arith.truncf %322 : vector<16x32xf32> to vector<16x32xbf16>
    %326 = arith.truncf %323 : vector<16x32xf32> to vector<16x32xbf16>
    %327 = vector.extract_strided_slice %324 {offsets = [0, 0], sizes = [16, 8], strides = [1, 1]} : vector<16x32xbf16> to vector<16x8xbf16>
    %328 = vector.extract_strided_slice %325 {offsets = [0, 0], sizes = [16, 8], strides = [1, 1]} : vector<16x32xbf16> to vector<16x8xbf16>
    %cst_102 = arith.constant dense<0.000000e+00> : vector<16x16xf32>
    %329 = tpu.matmul %327, %328, %cst_102 {dimension_numbers = #tpu.dot_dimension_numbers<[1], [1], [0], [0], [0, 0, 1, 0], [], []>} : vector<16x8xbf16>, vector<16x8xbf16>, vector<16x16xf32> -> vector<16x16xf32>
    %330 = arith.addf %329, %19 : vector<16x16xf32>
    %cst_103 = arith.constant dense<0xFF800000> : vector<16xf32>
    %331 = vector.multi_reduction <maximumf>, %330, %cst_103 [1] : vector<16x16xf32> to vector<16xf32>
    %332 = vector.shape_cast %331 : vector<16xf32> to vector<16x1xf32>
    %333 = vector.broadcast %332 : vector<16x1xf32> to vector<16x16xf32>
    %334 = arith.subf %330, %333 : vector<16x16xf32>
    %335 = math.exp %334 : vector<16x16xf32>
    %cst_104 = arith.constant dense<0.000000e+00> : vector<16xf32>
    %336 = vector.multi_reduction <add>, %335, %cst_104 [1] : vector<16x16xf32> to vector<16xf32>
    %337 = vector.shape_cast %336 : vector<16xf32> to vector<16x1xf32>
    %338 = tpu.reciprocal %337 {approx = true} : vector<16x1xf32> -> vector<16x1xf32>
    %339 = vector.broadcast %338 : vector<16x1xf32> to vector<16x16xf32>
    %340 = arith.mulf %335, %339 : vector<16x16xf32>
    %341 = arith.truncf %340 : vector<16x16xf32> to vector<16x16xbf16>
    %342 = vector.extract_strided_slice %326 {offsets = [0, 0], sizes = [16, 8], strides = [1, 1]} : vector<16x32xbf16> to vector<16x8xbf16>
    %cst_105 = arith.constant dense<0.000000e+00> : vector<16x8xf32>
    %343 = tpu.matmul %341, %342, %cst_105 {dimension_numbers = #tpu.dot_dimension_numbers<[1], [0], [0], [1], [0, 0, 1, 1], [], []>} : vector<16x16xbf16>, vector<16x8xbf16>, vector<16x8xf32> -> vector<16x8xf32>
    %344 = vector.extract_strided_slice %324 {offsets = [0, 8], sizes = [16, 8], strides = [1, 1]} : vector<16x32xbf16> to vector<16x8xbf16>
    %345 = vector.extract_strided_slice %325 {offsets = [0, 8], sizes = [16, 8], strides = [1, 1]} : vector<16x32xbf16> to vector<16x8xbf16>
    %cst_106 = arith.constant dense<0.000000e+00> : vector<16x16xf32>
    %346 = tpu.matmul %344, %345, %cst_106 {dimension_numbers = #tpu.dot_dimension_numbers<[1], [1], [0], [0], [0, 0, 1, 0], [], []>} : vector<16x8xbf16>, vector<16x8xbf16>, vector<16x16xf32> -> vector<16x16xf32>
    %347 = arith.addf %346, %19 : vector<16x16xf32>
    %cst_107 = arith.constant dense<0xFF800000> : vector<16xf32>
    %348 = vector.multi_reduction <maximumf>, %347, %cst_107 [1] : vector<16x16xf32> to vector<16xf32>
    %349 = vector.shape_cast %348 : vector<16xf32> to vector<16x1xf32>
    %350 = vector.broadcast %349 : vector<16x1xf32> to vector<16x16xf32>
    %351 = arith.subf %347, %350 : vector<16x16xf32>
    %352 = math.exp %351 : vector<16x16xf32>
    %cst_108 = arith.constant dense<0.000000e+00> : vector<16xf32>
    %353 = vector.multi_reduction <add>, %352, %cst_108 [1] : vector<16x16xf32> to vector<16xf32>
    %354 = vector.shape_cast %353 : vector<16xf32> to vector<16x1xf32>
    %355 = tpu.reciprocal %354 {approx = true} : vector<16x1xf32> -> vector<16x1xf32>
    %356 = vector.broadcast %355 : vector<16x1xf32> to vector<16x16xf32>
    %357 = arith.mulf %352, %356 : vector<16x16xf32>
    %358 = arith.truncf %357 : vector<16x16xf32> to vector<16x16xbf16>
    %359 = vector.extract_strided_slice %326 {offsets = [0, 8], sizes = [16, 8], strides = [1, 1]} : vector<16x32xbf16> to vector<16x8xbf16>
    %cst_109 = arith.constant dense<0.000000e+00> : vector<16x8xf32>
    %360 = tpu.matmul %358, %359, %cst_109 {dimension_numbers = #tpu.dot_dimension_numbers<[1], [0], [0], [1], [0, 0, 1, 1], [], []>} : vector<16x16xbf16>, vector<16x8xbf16>, vector<16x8xf32> -> vector<16x8xf32>
    %361 = vector.extract_strided_slice %324 {offsets = [0, 16], sizes = [16, 8], strides = [1, 1]} : vector<16x32xbf16> to vector<16x8xbf16>
    %362 = vector.extract_strided_slice %325 {offsets = [0, 16], sizes = [16, 8], strides = [1, 1]} : vector<16x32xbf16> to vector<16x8xbf16>
    %cst_110 = arith.constant dense<0.000000e+00> : vector<16x16xf32>
    %363 = tpu.matmul %361, %362, %cst_110 {dimension_numbers = #tpu.dot_dimension_numbers<[1], [1], [0], [0], [0, 0, 1, 0], [], []>} : vector<16x8xbf16>, vector<16x8xbf16>, vector<16x16xf32> -> vector<16x16xf32>
    %364 = arith.addf %363, %19 : vector<16x16xf32>
    %cst_111 = arith.constant dense<0xFF800000> : vector<16xf32>
    %365 = vector.multi_reduction <maximumf>, %364, %cst_111 [1] : vector<16x16xf32> to vector<16xf32>
    %366 = vector.shape_cast %365 : vector<16xf32> to vector<16x1xf32>
    %367 = vector.broadcast %366 : vector<16x1xf32> to vector<16x16xf32>
    %368 = arith.subf %364, %367 : vector<16x16xf32>
    %369 = math.exp %368 : vector<16x16xf32>
    %cst_112 = arith.constant dense<0.000000e+00> : vector<16xf32>
    %370 = vector.multi_reduction <add>, %369, %cst_112 [1] : vector<16x16xf32> to vector<16xf32>
    %371 = vector.shape_cast %370 : vector<16xf32> to vector<16x1xf32>
    %372 = tpu.reciprocal %371 {approx = true} : vector<16x1xf32> -> vector<16x1xf32>
    %373 = vector.broadcast %372 : vector<16x1xf32> to vector<16x16xf32>
    %374 = arith.mulf %369, %373 : vector<16x16xf32>
    %375 = arith.truncf %374 : vector<16x16xf32> to vector<16x16xbf16>
    %376 = vector.extract_strided_slice %326 {offsets = [0, 16], sizes = [16, 8], strides = [1, 1]} : vector<16x32xbf16> to vector<16x8xbf16>
    %cst_113 = arith.constant dense<0.000000e+00> : vector<16x8xf32>
    %377 = tpu.matmul %375, %376, %cst_113 {dimension_numbers = #tpu.dot_dimension_numbers<[1], [0], [0], [1], [0, 0, 1, 1], [], []>} : vector<16x16xbf16>, vector<16x8xbf16>, vector<16x8xf32> -> vector<16x8xf32>
    %378 = vector.extract_strided_slice %324 {offsets = [0, 24], sizes = [16, 8], strides = [1, 1]} : vector<16x32xbf16> to vector<16x8xbf16>
    %379 = vector.extract_strided_slice %325 {offsets = [0, 24], sizes = [16, 8], strides = [1, 1]} : vector<16x32xbf16> to vector<16x8xbf16>
    %cst_114 = arith.constant dense<0.000000e+00> : vector<16x16xf32>
    %380 = tpu.matmul %378, %379, %cst_114 {dimension_numbers = #tpu.dot_dimension_numbers<[1], [1], [0], [0], [0, 0, 1, 0], [], []>} : vector<16x8xbf16>, vector<16x8xbf16>, vector<16x16xf32> -> vector<16x16xf32>
    %381 = arith.addf %380, %19 : vector<16x16xf32>
    %cst_115 = arith.constant dense<0xFF800000> : vector<16xf32>
    %382 = vector.multi_reduction <maximumf>, %381, %cst_115 [1] : vector<16x16xf32> to vector<16xf32>
    %383 = vector.shape_cast %382 : vector<16xf32> to vector<16x1xf32>
    %384 = vector.broadcast %383 : vector<16x1xf32> to vector<16x16xf32>
    %385 = arith.subf %381, %384 : vector<16x16xf32>
    %386 = math.exp %385 : vector<16x16xf32>
    %cst_116 = arith.constant dense<0.000000e+00> : vector<16xf32>
    %387 = vector.multi_reduction <add>, %386, %cst_116 [1] : vector<16x16xf32> to vector<16xf32>
    %388 = vector.shape_cast %387 : vector<16xf32> to vector<16x1xf32>
    %389 = tpu.reciprocal %388 {approx = true} : vector<16x1xf32> -> vector<16x1xf32>
    %390 = vector.broadcast %389 : vector<16x1xf32> to vector<16x16xf32>
    %391 = arith.mulf %386, %390 : vector<16x16xf32>
    %392 = arith.truncf %391 : vector<16x16xf32> to vector<16x16xbf16>
    %393 = vector.extract_strided_slice %326 {offsets = [0, 24], sizes = [16, 8], strides = [1, 1]} : vector<16x32xbf16> to vector<16x8xbf16>
    %cst_117 = arith.constant dense<0.000000e+00> : vector<16x8xf32>
    %394 = tpu.matmul %392, %393, %cst_117 {dimension_numbers = #tpu.dot_dimension_numbers<[1], [0], [0], [1], [0, 0, 1, 1], [], []>} : vector<16x16xbf16>, vector<16x8xbf16>, vector<16x8xf32> -> vector<16x8xf32>
    %395 = tpu.concatenate %343, %360, %377, %394 in 1 : vector<16x8xf32>, vector<16x8xf32>, vector<16x8xf32>, vector<16x8xf32> -> vector<16x32xf32>
    %396 = arith.truncf %395 : vector<16x32xf32> to vector<16x32xbf16>
    %c464 = arith.constant 464 : index
    %c0_118 = arith.constant 0 : index
    %397 = vector.load %arg2[%c464, %c0_118] : memref<944x128xbf16, #tpu.memory_space<vmem>>, vector<32x32xbf16>
    %cst_119 = arith.constant dense<0.000000e+00> : vector<16x32xf32>
    %398 = tpu.matmul %396, %397, %cst_119 {dimension_numbers = #tpu.dot_dimension_numbers<[1], [0], [0], [1], [0, 0, 1, 1], [], []>} : vector<16x32xbf16>, vector<32x32xbf16>, vector<16x32xf32> -> vector<16x32xf32>
    %c18 = arith.constant 18 : index
    %c0_120 = arith.constant 0 : index
    %399 = vector.load %arg3[%c18, %c0_120] : memref<48x128xf32, #tpu.memory_space<vmem>>, vector<1x32xf32>
    %400 = vector.broadcast %399 : vector<1x32xf32> to vector<16x32xf32>
    %401 = arith.addf %398, %400 : vector<16x32xf32>
    %402 = arith.addf %17, %401 : vector<16x32xf32>
    %c19 = arith.constant 19 : index
    %c0_121 = arith.constant 0 : index
    %403 = vector.load %arg3[%c19, %c0_121] : memref<48x128xf32, #tpu.memory_space<vmem>>, vector<1x32xf32>
    %c20 = arith.constant 20 : index
    %c0_122 = arith.constant 0 : index
    %404 = vector.load %arg3[%c20, %c0_122] : memref<48x128xf32, #tpu.memory_space<vmem>>, vector<1x32xf32>
    %cst_123 = arith.constant dense<0.000000e+00> : vector<16xf32>
    %405 = vector.multi_reduction <add>, %402, %cst_123 [1] : vector<16x32xf32> to vector<16xf32>
    %406 = vector.shape_cast %405 : vector<16xf32> to vector<16x1xf32>
    %cst_124 = arith.constant 3.200000e+01 : f32
    %407 = vector.broadcast %cst_124 : f32 to vector<16x1xf32>
    %408 = arith.divf %406, %407 : vector<16x1xf32>
    %409 = vector.broadcast %408 : vector<16x1xf32> to vector<16x32xf32>
    %410 = arith.subf %402, %409 : vector<16x32xf32>
    %411 = arith.mulf %410, %410 : vector<16x32xf32>
    %cst_125 = arith.constant dense<0.000000e+00> : vector<16xf32>
    %412 = vector.multi_reduction <add>, %411, %cst_125 [1] : vector<16x32xf32> to vector<16xf32>
    %413 = vector.shape_cast %412 : vector<16xf32> to vector<16x1xf32>
    %cst_126 = arith.constant 3.200000e+01 : f32
    %414 = vector.broadcast %cst_126 : f32 to vector<16x1xf32>
    %415 = arith.divf %413, %414 : vector<16x1xf32>
    %cst_127 = arith.constant 9.99999974E-6 : f32
    %416 = vector.broadcast %cst_127 : f32 to vector<16x1xf32>
    %417 = arith.addf %415, %416 : vector<16x1xf32>
    %418 = math.rsqrt %417 : vector<16x1xf32>
    %419 = vector.broadcast %418 : vector<16x1xf32> to vector<16x32xf32>
    %420 = arith.mulf %410, %419 : vector<16x32xf32>
    %421 = vector.broadcast %403 : vector<1x32xf32> to vector<16x32xf32>
    %422 = arith.mulf %420, %421 : vector<16x32xf32>
    %423 = vector.broadcast %404 : vector<1x32xf32> to vector<16x32xf32>
    %424 = arith.addf %422, %423 : vector<16x32xf32>
    %425 = arith.truncf %424 : vector<16x32xf32> to vector<16x32xbf16>
    %c496 = arith.constant 496 : index
    %c0_128 = arith.constant 0 : index
    %426 = vector.load %arg2[%c496, %c0_128] : memref<944x128xbf16, #tpu.memory_space<vmem>>, vector<32x32xbf16>
    %cst_129 = arith.constant dense<0.000000e+00> : vector<16x32xf32>
    %427 = tpu.matmul %425, %426, %cst_129 {dimension_numbers = #tpu.dot_dimension_numbers<[1], [0], [0], [1], [0, 0, 1, 1], [], []>} : vector<16x32xbf16>, vector<32x32xbf16>, vector<16x32xf32> -> vector<16x32xf32>
    %c21 = arith.constant 21 : index
    %c0_130 = arith.constant 0 : index
    %428 = vector.load %arg3[%c21, %c0_130] : memref<48x128xf32, #tpu.memory_space<vmem>>, vector<1x32xf32>
    %429 = vector.broadcast %428 : vector<1x32xf32> to vector<16x32xf32>
    %430 = arith.addf %427, %429 : vector<16x32xf32>
    %431 = arith.truncf %314 : vector<16x32xf32> to vector<16x32xbf16>
    %c528 = arith.constant 528 : index
    %c0_131 = arith.constant 0 : index
    %432 = vector.load %arg2[%c528, %c0_131] : memref<944x128xbf16, #tpu.memory_space<vmem>>, vector<32x64xbf16>
    %cst_132 = arith.constant dense<0.000000e+00> : vector<16x64xf32>
    %433 = tpu.matmul %431, %432, %cst_132 {dimension_numbers = #tpu.dot_dimension_numbers<[1], [0], [0], [1], [0, 0, 1, 1], [], []>} : vector<16x32xbf16>, vector<32x64xbf16>, vector<16x64xf32> -> vector<16x64xf32>
    %c22 = arith.constant 22 : index
    %c0_133 = arith.constant 0 : index
    %434 = vector.load %arg3[%c22, %c0_133] : memref<48x128xf32, #tpu.memory_space<vmem>>, vector<1x64xf32>
    %435 = vector.broadcast %434 : vector<1x64xf32> to vector<16x64xf32>
    %436 = arith.addf %433, %435 : vector<16x64xf32>
    %437 = vector.extract_strided_slice %436 {offsets = [0, 0], sizes = [16, 32], strides = [1, 1]} : vector<16x64xf32> to vector<16x32xf32>
    %438 = vector.extract_strided_slice %436 {offsets = [0, 32], sizes = [16, 32], strides = [1, 1]} : vector<16x64xf32> to vector<16x32xf32>
    %439 = arith.truncf %430 : vector<16x32xf32> to vector<16x32xbf16>
    %440 = arith.truncf %437 : vector<16x32xf32> to vector<16x32xbf16>
    %441 = arith.truncf %438 : vector<16x32xf32> to vector<16x32xbf16>
    %442 = vector.extract_strided_slice %439 {offsets = [0, 0], sizes = [16, 8], strides = [1, 1]} : vector<16x32xbf16> to vector<16x8xbf16>
    %443 = vector.extract_strided_slice %440 {offsets = [0, 0], sizes = [16, 8], strides = [1, 1]} : vector<16x32xbf16> to vector<16x8xbf16>
    %cst_134 = arith.constant dense<0.000000e+00> : vector<16x16xf32>
    %444 = tpu.matmul %442, %443, %cst_134 {dimension_numbers = #tpu.dot_dimension_numbers<[1], [1], [0], [0], [0, 0, 1, 0], [], []>} : vector<16x8xbf16>, vector<16x8xbf16>, vector<16x16xf32> -> vector<16x16xf32>
    %445 = arith.addf %444, %20 : vector<16x16xf32>
    %cst_135 = arith.constant dense<0xFF800000> : vector<16xf32>
    %446 = vector.multi_reduction <maximumf>, %445, %cst_135 [1] : vector<16x16xf32> to vector<16xf32>
    %447 = vector.shape_cast %446 : vector<16xf32> to vector<16x1xf32>
    %448 = vector.broadcast %447 : vector<16x1xf32> to vector<16x16xf32>
    %449 = arith.subf %445, %448 : vector<16x16xf32>
    %450 = math.exp %449 : vector<16x16xf32>
    %cst_136 = arith.constant dense<0.000000e+00> : vector<16xf32>
    %451 = vector.multi_reduction <add>, %450, %cst_136 [1] : vector<16x16xf32> to vector<16xf32>
    %452 = vector.shape_cast %451 : vector<16xf32> to vector<16x1xf32>
    %453 = tpu.reciprocal %452 {approx = true} : vector<16x1xf32> -> vector<16x1xf32>
    %454 = vector.broadcast %453 : vector<16x1xf32> to vector<16x16xf32>
    %455 = arith.mulf %450, %454 : vector<16x16xf32>
    %456 = arith.truncf %455 : vector<16x16xf32> to vector<16x16xbf16>
    %457 = vector.extract_strided_slice %441 {offsets = [0, 0], sizes = [16, 8], strides = [1, 1]} : vector<16x32xbf16> to vector<16x8xbf16>
    %cst_137 = arith.constant dense<0.000000e+00> : vector<16x8xf32>
    %458 = tpu.matmul %456, %457, %cst_137 {dimension_numbers = #tpu.dot_dimension_numbers<[1], [0], [0], [1], [0, 0, 1, 1], [], []>} : vector<16x16xbf16>, vector<16x8xbf16>, vector<16x8xf32> -> vector<16x8xf32>
    %459 = vector.extract_strided_slice %439 {offsets = [0, 8], sizes = [16, 8], strides = [1, 1]} : vector<16x32xbf16> to vector<16x8xbf16>
    %460 = vector.extract_strided_slice %440 {offsets = [0, 8], sizes = [16, 8], strides = [1, 1]} : vector<16x32xbf16> to vector<16x8xbf16>
    %cst_138 = arith.constant dense<0.000000e+00> : vector<16x16xf32>
    %461 = tpu.matmul %459, %460, %cst_138 {dimension_numbers = #tpu.dot_dimension_numbers<[1], [1], [0], [0], [0, 0, 1, 0], [], []>} : vector<16x8xbf16>, vector<16x8xbf16>, vector<16x16xf32> -> vector<16x16xf32>
    %462 = arith.addf %461, %20 : vector<16x16xf32>
    %cst_139 = arith.constant dense<0xFF800000> : vector<16xf32>
    %463 = vector.multi_reduction <maximumf>, %462, %cst_139 [1] : vector<16x16xf32> to vector<16xf32>
    %464 = vector.shape_cast %463 : vector<16xf32> to vector<16x1xf32>
    %465 = vector.broadcast %464 : vector<16x1xf32> to vector<16x16xf32>
    %466 = arith.subf %462, %465 : vector<16x16xf32>
    %467 = math.exp %466 : vector<16x16xf32>
    %cst_140 = arith.constant dense<0.000000e+00> : vector<16xf32>
    %468 = vector.multi_reduction <add>, %467, %cst_140 [1] : vector<16x16xf32> to vector<16xf32>
    %469 = vector.shape_cast %468 : vector<16xf32> to vector<16x1xf32>
    %470 = tpu.reciprocal %469 {approx = true} : vector<16x1xf32> -> vector<16x1xf32>
    %471 = vector.broadcast %470 : vector<16x1xf32> to vector<16x16xf32>
    %472 = arith.mulf %467, %471 : vector<16x16xf32>
    %473 = arith.truncf %472 : vector<16x16xf32> to vector<16x16xbf16>
    %474 = vector.extract_strided_slice %441 {offsets = [0, 8], sizes = [16, 8], strides = [1, 1]} : vector<16x32xbf16> to vector<16x8xbf16>
    %cst_141 = arith.constant dense<0.000000e+00> : vector<16x8xf32>
    %475 = tpu.matmul %473, %474, %cst_141 {dimension_numbers = #tpu.dot_dimension_numbers<[1], [0], [0], [1], [0, 0, 1, 1], [], []>} : vector<16x16xbf16>, vector<16x8xbf16>, vector<16x8xf32> -> vector<16x8xf32>
    %476 = vector.extract_strided_slice %439 {offsets = [0, 16], sizes = [16, 8], strides = [1, 1]} : vector<16x32xbf16> to vector<16x8xbf16>
    %477 = vector.extract_strided_slice %440 {offsets = [0, 16], sizes = [16, 8], strides = [1, 1]} : vector<16x32xbf16> to vector<16x8xbf16>
    %cst_142 = arith.constant dense<0.000000e+00> : vector<16x16xf32>
    %478 = tpu.matmul %476, %477, %cst_142 {dimension_numbers = #tpu.dot_dimension_numbers<[1], [1], [0], [0], [0, 0, 1, 0], [], []>} : vector<16x8xbf16>, vector<16x8xbf16>, vector<16x16xf32> -> vector<16x16xf32>
    %479 = arith.addf %478, %20 : vector<16x16xf32>
    %cst_143 = arith.constant dense<0xFF800000> : vector<16xf32>
    %480 = vector.multi_reduction <maximumf>, %479, %cst_143 [1] : vector<16x16xf32> to vector<16xf32>
    %481 = vector.shape_cast %480 : vector<16xf32> to vector<16x1xf32>
    %482 = vector.broadcast %481 : vector<16x1xf32> to vector<16x16xf32>
    %483 = arith.subf %479, %482 : vector<16x16xf32>
    %484 = math.exp %483 : vector<16x16xf32>
    %cst_144 = arith.constant dense<0.000000e+00> : vector<16xf32>
    %485 = vector.multi_reduction <add>, %484, %cst_144 [1] : vector<16x16xf32> to vector<16xf32>
    %486 = vector.shape_cast %485 : vector<16xf32> to vector<16x1xf32>
    %487 = tpu.reciprocal %486 {approx = true} : vector<16x1xf32> -> vector<16x1xf32>
    %488 = vector.broadcast %487 : vector<16x1xf32> to vector<16x16xf32>
    %489 = arith.mulf %484, %488 : vector<16x16xf32>
    %490 = arith.truncf %489 : vector<16x16xf32> to vector<16x16xbf16>
    %491 = vector.extract_strided_slice %441 {offsets = [0, 16], sizes = [16, 8], strides = [1, 1]} : vector<16x32xbf16> to vector<16x8xbf16>
    %cst_145 = arith.constant dense<0.000000e+00> : vector<16x8xf32>
    %492 = tpu.matmul %490, %491, %cst_145 {dimension_numbers = #tpu.dot_dimension_numbers<[1], [0], [0], [1], [0, 0, 1, 1], [], []>} : vector<16x16xbf16>, vector<16x8xbf16>, vector<16x8xf32> -> vector<16x8xf32>
    %493 = vector.extract_strided_slice %439 {offsets = [0, 24], sizes = [16, 8], strides = [1, 1]} : vector<16x32xbf16> to vector<16x8xbf16>
    %494 = vector.extract_strided_slice %440 {offsets = [0, 24], sizes = [16, 8], strides = [1, 1]} : vector<16x32xbf16> to vector<16x8xbf16>
    %cst_146 = arith.constant dense<0.000000e+00> : vector<16x16xf32>
    %495 = tpu.matmul %493, %494, %cst_146 {dimension_numbers = #tpu.dot_dimension_numbers<[1], [1], [0], [0], [0, 0, 1, 0], [], []>} : vector<16x8xbf16>, vector<16x8xbf16>, vector<16x16xf32> -> vector<16x16xf32>
    %496 = arith.addf %495, %20 : vector<16x16xf32>
    %cst_147 = arith.constant dense<0xFF800000> : vector<16xf32>
    %497 = vector.multi_reduction <maximumf>, %496, %cst_147 [1] : vector<16x16xf32> to vector<16xf32>
    %498 = vector.shape_cast %497 : vector<16xf32> to vector<16x1xf32>
    %499 = vector.broadcast %498 : vector<16x1xf32> to vector<16x16xf32>
    %500 = arith.subf %496, %499 : vector<16x16xf32>
    %501 = math.exp %500 : vector<16x16xf32>
    %cst_148 = arith.constant dense<0.000000e+00> : vector<16xf32>
    %502 = vector.multi_reduction <add>, %501, %cst_148 [1] : vector<16x16xf32> to vector<16xf32>
    %503 = vector.shape_cast %502 : vector<16xf32> to vector<16x1xf32>
    %504 = tpu.reciprocal %503 {approx = true} : vector<16x1xf32> -> vector<16x1xf32>
    %505 = vector.broadcast %504 : vector<16x1xf32> to vector<16x16xf32>
    %506 = arith.mulf %501, %505 : vector<16x16xf32>
    %507 = arith.truncf %506 : vector<16x16xf32> to vector<16x16xbf16>
    %508 = vector.extract_strided_slice %441 {offsets = [0, 24], sizes = [16, 8], strides = [1, 1]} : vector<16x32xbf16> to vector<16x8xbf16>
    %cst_149 = arith.constant dense<0.000000e+00> : vector<16x8xf32>
    %509 = tpu.matmul %507, %508, %cst_149 {dimension_numbers = #tpu.dot_dimension_numbers<[1], [0], [0], [1], [0, 0, 1, 1], [], []>} : vector<16x16xbf16>, vector<16x8xbf16>, vector<16x8xf32> -> vector<16x8xf32>
    %510 = tpu.concatenate %458, %475, %492, %509 in 1 : vector<16x8xf32>, vector<16x8xf32>, vector<16x8xf32>, vector<16x8xf32> -> vector<16x32xf32>
    %511 = arith.truncf %510 : vector<16x32xf32> to vector<16x32xbf16>
    %c560 = arith.constant 560 : index
    %c0_150 = arith.constant 0 : index
    %512 = vector.load %arg2[%c560, %c0_150] : memref<944x128xbf16, #tpu.memory_space<vmem>>, vector<32x32xbf16>
    %cst_151 = arith.constant dense<0.000000e+00> : vector<16x32xf32>
    %513 = tpu.matmul %511, %512, %cst_151 {dimension_numbers = #tpu.dot_dimension_numbers<[1], [0], [0], [1], [0, 0, 1, 1], [], []>} : vector<16x32xbf16>, vector<32x32xbf16>, vector<16x32xf32> -> vector<16x32xf32>
    %c23 = arith.constant 23 : index
    %c0_152 = arith.constant 0 : index
    %514 = vector.load %arg3[%c23, %c0_152] : memref<48x128xf32, #tpu.memory_space<vmem>>, vector<1x32xf32>
    %515 = vector.broadcast %514 : vector<1x32xf32> to vector<16x32xf32>
    %516 = arith.addf %513, %515 : vector<16x32xf32>
    %517 = arith.addf %424, %516 : vector<16x32xf32>
    %c24 = arith.constant 24 : index
    %c0_153 = arith.constant 0 : index
    %518 = vector.load %arg3[%c24, %c0_153] : memref<48x128xf32, #tpu.memory_space<vmem>>, vector<1x32xf32>
    %c25 = arith.constant 25 : index
    %c0_154 = arith.constant 0 : index
    %519 = vector.load %arg3[%c25, %c0_154] : memref<48x128xf32, #tpu.memory_space<vmem>>, vector<1x32xf32>
    %cst_155 = arith.constant dense<0.000000e+00> : vector<16xf32>
    %520 = vector.multi_reduction <add>, %517, %cst_155 [1] : vector<16x32xf32> to vector<16xf32>
    %521 = vector.shape_cast %520 : vector<16xf32> to vector<16x1xf32>
    %cst_156 = arith.constant 3.200000e+01 : f32
    %522 = vector.broadcast %cst_156 : f32 to vector<16x1xf32>
    %523 = arith.divf %521, %522 : vector<16x1xf32>
    %524 = vector.broadcast %523 : vector<16x1xf32> to vector<16x32xf32>
    %525 = arith.subf %517, %524 : vector<16x32xf32>
    %526 = arith.mulf %525, %525 : vector<16x32xf32>
    %cst_157 = arith.constant dense<0.000000e+00> : vector<16xf32>
    %527 = vector.multi_reduction <add>, %526, %cst_157 [1] : vector<16x32xf32> to vector<16xf32>
    %528 = vector.shape_cast %527 : vector<16xf32> to vector<16x1xf32>
    %cst_158 = arith.constant 3.200000e+01 : f32
    %529 = vector.broadcast %cst_158 : f32 to vector<16x1xf32>
    %530 = arith.divf %528, %529 : vector<16x1xf32>
    %cst_159 = arith.constant 9.99999974E-6 : f32
    %531 = vector.broadcast %cst_159 : f32 to vector<16x1xf32>
    %532 = arith.addf %530, %531 : vector<16x1xf32>
    %533 = math.rsqrt %532 : vector<16x1xf32>
    %534 = vector.broadcast %533 : vector<16x1xf32> to vector<16x32xf32>
    %535 = arith.mulf %525, %534 : vector<16x32xf32>
    %536 = vector.broadcast %518 : vector<1x32xf32> to vector<16x32xf32>
    %537 = arith.mulf %535, %536 : vector<16x32xf32>
    %538 = vector.broadcast %519 : vector<1x32xf32> to vector<16x32xf32>
    %539 = arith.addf %537, %538 : vector<16x32xf32>
    %540 = arith.truncf %539 : vector<16x32xf32> to vector<16x32xbf16>
    %c592 = arith.constant 592 : index
    %c0_160 = arith.constant 0 : index
    %541 = vector.load %arg2[%c592, %c0_160] : memref<944x128xbf16, #tpu.memory_space<vmem>>, vector<32x64xbf16>
    %cst_161 = arith.constant dense<0.000000e+00> : vector<16x64xf32>
    %542 = tpu.matmul %540, %541, %cst_161 {dimension_numbers = #tpu.dot_dimension_numbers<[1], [0], [0], [1], [0, 0, 1, 1], [], []>} : vector<16x32xbf16>, vector<32x64xbf16>, vector<16x64xf32> -> vector<16x64xf32>
    %c26 = arith.constant 26 : index
    %c0_162 = arith.constant 0 : index
    %543 = vector.load %arg3[%c26, %c0_162] : memref<48x128xf32, #tpu.memory_space<vmem>>, vector<1x64xf32>
    %544 = vector.broadcast %543 : vector<1x64xf32> to vector<16x64xf32>
    %545 = arith.addf %542, %544 : vector<16x64xf32>
    %cst_163 = arith.constant 0.000000e+00 : f32
    %546 = vector.broadcast %cst_163 : f32 to vector<16x64xf32>
    %547 = arith.maximumf %545, %546 : vector<16x64xf32>
    %548 = arith.truncf %547 : vector<16x64xf32> to vector<16x64xbf16>
    %c624 = arith.constant 624 : index
    %c0_164 = arith.constant 0 : index
    %549 = vector.load %arg2[%c624, %c0_164] : memref<944x128xbf16, #tpu.memory_space<vmem>>, vector<64x32xbf16>
    %cst_165 = arith.constant dense<0.000000e+00> : vector<16x32xf32>
    %550 = tpu.matmul %548, %549, %cst_165 {dimension_numbers = #tpu.dot_dimension_numbers<[1], [0], [0], [1], [0, 0, 1, 1], [], []>} : vector<16x64xbf16>, vector<64x32xbf16>, vector<16x32xf32> -> vector<16x32xf32>
    %c27 = arith.constant 27 : index
    %c0_166 = arith.constant 0 : index
    %551 = vector.load %arg3[%c27, %c0_166] : memref<48x128xf32, #tpu.memory_space<vmem>>, vector<1x32xf32>
    %552 = vector.broadcast %551 : vector<1x32xf32> to vector<16x32xf32>
    %553 = arith.addf %550, %552 : vector<16x32xf32>
    %554 = arith.addf %539, %553 : vector<16x32xf32>
    %c28 = arith.constant 28 : index
    %c0_167 = arith.constant 0 : index
    %555 = vector.load %arg3[%c28, %c0_167] : memref<48x128xf32, #tpu.memory_space<vmem>>, vector<1x32xf32>
    %c29 = arith.constant 29 : index
    %c0_168 = arith.constant 0 : index
    %556 = vector.load %arg3[%c29, %c0_168] : memref<48x128xf32, #tpu.memory_space<vmem>>, vector<1x32xf32>
    %cst_169 = arith.constant dense<0.000000e+00> : vector<16xf32>
    %557 = vector.multi_reduction <add>, %554, %cst_169 [1] : vector<16x32xf32> to vector<16xf32>
    %558 = vector.shape_cast %557 : vector<16xf32> to vector<16x1xf32>
    %cst_170 = arith.constant 3.200000e+01 : f32
    %559 = vector.broadcast %cst_170 : f32 to vector<16x1xf32>
    %560 = arith.divf %558, %559 : vector<16x1xf32>
    %561 = vector.broadcast %560 : vector<16x1xf32> to vector<16x32xf32>
    %562 = arith.subf %554, %561 : vector<16x32xf32>
    %563 = arith.mulf %562, %562 : vector<16x32xf32>
    %cst_171 = arith.constant dense<0.000000e+00> : vector<16xf32>
    %564 = vector.multi_reduction <add>, %563, %cst_171 [1] : vector<16x32xf32> to vector<16xf32>
    %565 = vector.shape_cast %564 : vector<16xf32> to vector<16x1xf32>
    %cst_172 = arith.constant 3.200000e+01 : f32
    %566 = vector.broadcast %cst_172 : f32 to vector<16x1xf32>
    %567 = arith.divf %565, %566 : vector<16x1xf32>
    %cst_173 = arith.constant 9.99999974E-6 : f32
    %568 = vector.broadcast %cst_173 : f32 to vector<16x1xf32>
    %569 = arith.addf %567, %568 : vector<16x1xf32>
    %570 = math.rsqrt %569 : vector<16x1xf32>
    %571 = vector.broadcast %570 : vector<16x1xf32> to vector<16x32xf32>
    %572 = arith.mulf %562, %571 : vector<16x32xf32>
    %573 = vector.broadcast %555 : vector<1x32xf32> to vector<16x32xf32>
    %574 = arith.mulf %572, %573 : vector<16x32xf32>
    %575 = vector.broadcast %556 : vector<1x32xf32> to vector<16x32xf32>
    %576 = arith.addf %574, %575 : vector<16x32xf32>
    %577 = arith.truncf %576 : vector<16x32xf32> to vector<16x32xbf16>
    %c688 = arith.constant 688 : index
    %c0_174 = arith.constant 0 : index
    %578 = vector.load %arg2[%c688, %c0_174] : memref<944x128xbf16, #tpu.memory_space<vmem>>, vector<32x96xbf16>
    %cst_175 = arith.constant dense<0.000000e+00> : vector<16x96xf32>
    %579 = tpu.matmul %577, %578, %cst_175 {dimension_numbers = #tpu.dot_dimension_numbers<[1], [0], [0], [1], [0, 0, 1, 1], [], []>} : vector<16x32xbf16>, vector<32x96xbf16>, vector<16x96xf32> -> vector<16x96xf32>
    %c30 = arith.constant 30 : index
    %c0_176 = arith.constant 0 : index
    %580 = vector.load %arg3[%c30, %c0_176] : memref<48x128xf32, #tpu.memory_space<vmem>>, vector<1x96xf32>
    %581 = vector.broadcast %580 : vector<1x96xf32> to vector<16x96xf32>
    %582 = arith.addf %579, %581 : vector<16x96xf32>
    %583 = vector.extract_strided_slice %582 {offsets = [0, 0], sizes = [16, 32], strides = [1, 1]} : vector<16x96xf32> to vector<16x32xf32>
    %584 = vector.extract_strided_slice %582 {offsets = [0, 32], sizes = [16, 32], strides = [1, 1]} : vector<16x96xf32> to vector<16x32xf32>
    %585 = vector.extract_strided_slice %582 {offsets = [0, 64], sizes = [16, 32], strides = [1, 1]} : vector<16x96xf32> to vector<16x32xf32>
    %586 = arith.truncf %583 : vector<16x32xf32> to vector<16x32xbf16>
    %587 = arith.truncf %584 : vector<16x32xf32> to vector<16x32xbf16>
    %588 = arith.truncf %585 : vector<16x32xf32> to vector<16x32xbf16>
    %589 = vector.extract_strided_slice %586 {offsets = [0, 0], sizes = [16, 8], strides = [1, 1]} : vector<16x32xbf16> to vector<16x8xbf16>
    %590 = vector.extract_strided_slice %587 {offsets = [0, 0], sizes = [16, 8], strides = [1, 1]} : vector<16x32xbf16> to vector<16x8xbf16>
    %cst_177 = arith.constant dense<0.000000e+00> : vector<16x16xf32>
    %591 = tpu.matmul %589, %590, %cst_177 {dimension_numbers = #tpu.dot_dimension_numbers<[1], [1], [0], [0], [0, 0, 1, 0], [], []>} : vector<16x8xbf16>, vector<16x8xbf16>, vector<16x16xf32> -> vector<16x16xf32>
    %592 = arith.addf %591, %19 : vector<16x16xf32>
    %cst_178 = arith.constant dense<0xFF800000> : vector<16xf32>
    %593 = vector.multi_reduction <maximumf>, %592, %cst_178 [1] : vector<16x16xf32> to vector<16xf32>
    %594 = vector.shape_cast %593 : vector<16xf32> to vector<16x1xf32>
    %595 = vector.broadcast %594 : vector<16x1xf32> to vector<16x16xf32>
    %596 = arith.subf %592, %595 : vector<16x16xf32>
    %597 = math.exp %596 : vector<16x16xf32>
    %cst_179 = arith.constant dense<0.000000e+00> : vector<16xf32>
    %598 = vector.multi_reduction <add>, %597, %cst_179 [1] : vector<16x16xf32> to vector<16xf32>
    %599 = vector.shape_cast %598 : vector<16xf32> to vector<16x1xf32>
    %600 = tpu.reciprocal %599 {approx = true} : vector<16x1xf32> -> vector<16x1xf32>
    %601 = vector.broadcast %600 : vector<16x1xf32> to vector<16x16xf32>
    %602 = arith.mulf %597, %601 : vector<16x16xf32>
    %603 = arith.truncf %602 : vector<16x16xf32> to vector<16x16xbf16>
    %604 = vector.extract_strided_slice %588 {offsets = [0, 0], sizes = [16, 8], strides = [1, 1]} : vector<16x32xbf16> to vector<16x8xbf16>
    %cst_180 = arith.constant dense<0.000000e+00> : vector<16x8xf32>
    %605 = tpu.matmul %603, %604, %cst_180 {dimension_numbers = #tpu.dot_dimension_numbers<[1], [0], [0], [1], [0, 0, 1, 1], [], []>} : vector<16x16xbf16>, vector<16x8xbf16>, vector<16x8xf32> -> vector<16x8xf32>
    %606 = vector.extract_strided_slice %586 {offsets = [0, 8], sizes = [16, 8], strides = [1, 1]} : vector<16x32xbf16> to vector<16x8xbf16>
    %607 = vector.extract_strided_slice %587 {offsets = [0, 8], sizes = [16, 8], strides = [1, 1]} : vector<16x32xbf16> to vector<16x8xbf16>
    %cst_181 = arith.constant dense<0.000000e+00> : vector<16x16xf32>
    %608 = tpu.matmul %606, %607, %cst_181 {dimension_numbers = #tpu.dot_dimension_numbers<[1], [1], [0], [0], [0, 0, 1, 0], [], []>} : vector<16x8xbf16>, vector<16x8xbf16>, vector<16x16xf32> -> vector<16x16xf32>
    %609 = arith.addf %608, %19 : vector<16x16xf32>
    %cst_182 = arith.constant dense<0xFF800000> : vector<16xf32>
    %610 = vector.multi_reduction <maximumf>, %609, %cst_182 [1] : vector<16x16xf32> to vector<16xf32>
    %611 = vector.shape_cast %610 : vector<16xf32> to vector<16x1xf32>
    %612 = vector.broadcast %611 : vector<16x1xf32> to vector<16x16xf32>
    %613 = arith.subf %609, %612 : vector<16x16xf32>
    %614 = math.exp %613 : vector<16x16xf32>
    %cst_183 = arith.constant dense<0.000000e+00> : vector<16xf32>
    %615 = vector.multi_reduction <add>, %614, %cst_183 [1] : vector<16x16xf32> to vector<16xf32>
    %616 = vector.shape_cast %615 : vector<16xf32> to vector<16x1xf32>
    %617 = tpu.reciprocal %616 {approx = true} : vector<16x1xf32> -> vector<16x1xf32>
    %618 = vector.broadcast %617 : vector<16x1xf32> to vector<16x16xf32>
    %619 = arith.mulf %614, %618 : vector<16x16xf32>
    %620 = arith.truncf %619 : vector<16x16xf32> to vector<16x16xbf16>
    %621 = vector.extract_strided_slice %588 {offsets = [0, 8], sizes = [16, 8], strides = [1, 1]} : vector<16x32xbf16> to vector<16x8xbf16>
    %cst_184 = arith.constant dense<0.000000e+00> : vector<16x8xf32>
    %622 = tpu.matmul %620, %621, %cst_184 {dimension_numbers = #tpu.dot_dimension_numbers<[1], [0], [0], [1], [0, 0, 1, 1], [], []>} : vector<16x16xbf16>, vector<16x8xbf16>, vector<16x8xf32> -> vector<16x8xf32>
    %623 = vector.extract_strided_slice %586 {offsets = [0, 16], sizes = [16, 8], strides = [1, 1]} : vector<16x32xbf16> to vector<16x8xbf16>
    %624 = vector.extract_strided_slice %587 {offsets = [0, 16], sizes = [16, 8], strides = [1, 1]} : vector<16x32xbf16> to vector<16x8xbf16>
    %cst_185 = arith.constant dense<0.000000e+00> : vector<16x16xf32>
    %625 = tpu.matmul %623, %624, %cst_185 {dimension_numbers = #tpu.dot_dimension_numbers<[1], [1], [0], [0], [0, 0, 1, 0], [], []>} : vector<16x8xbf16>, vector<16x8xbf16>, vector<16x16xf32> -> vector<16x16xf32>
    %626 = arith.addf %625, %19 : vector<16x16xf32>
    %cst_186 = arith.constant dense<0xFF800000> : vector<16xf32>
    %627 = vector.multi_reduction <maximumf>, %626, %cst_186 [1] : vector<16x16xf32> to vector<16xf32>
    %628 = vector.shape_cast %627 : vector<16xf32> to vector<16x1xf32>
    %629 = vector.broadcast %628 : vector<16x1xf32> to vector<16x16xf32>
    %630 = arith.subf %626, %629 : vector<16x16xf32>
    %631 = math.exp %630 : vector<16x16xf32>
    %cst_187 = arith.constant dense<0.000000e+00> : vector<16xf32>
    %632 = vector.multi_reduction <add>, %631, %cst_187 [1] : vector<16x16xf32> to vector<16xf32>
    %633 = vector.shape_cast %632 : vector<16xf32> to vector<16x1xf32>
    %634 = tpu.reciprocal %633 {approx = true} : vector<16x1xf32> -> vector<16x1xf32>
    %635 = vector.broadcast %634 : vector<16x1xf32> to vector<16x16xf32>
    %636 = arith.mulf %631, %635 : vector<16x16xf32>
    %637 = arith.truncf %636 : vector<16x16xf32> to vector<16x16xbf16>
    %638 = vector.extract_strided_slice %588 {offsets = [0, 16], sizes = [16, 8], strides = [1, 1]} : vector<16x32xbf16> to vector<16x8xbf16>
    %cst_188 = arith.constant dense<0.000000e+00> : vector<16x8xf32>
    %639 = tpu.matmul %637, %638, %cst_188 {dimension_numbers = #tpu.dot_dimension_numbers<[1], [0], [0], [1], [0, 0, 1, 1], [], []>} : vector<16x16xbf16>, vector<16x8xbf16>, vector<16x8xf32> -> vector<16x8xf32>
    %640 = vector.extract_strided_slice %586 {offsets = [0, 24], sizes = [16, 8], strides = [1, 1]} : vector<16x32xbf16> to vector<16x8xbf16>
    %641 = vector.extract_strided_slice %587 {offsets = [0, 24], sizes = [16, 8], strides = [1, 1]} : vector<16x32xbf16> to vector<16x8xbf16>
    %cst_189 = arith.constant dense<0.000000e+00> : vector<16x16xf32>
    %642 = tpu.matmul %640, %641, %cst_189 {dimension_numbers = #tpu.dot_dimension_numbers<[1], [1], [0], [0], [0, 0, 1, 0], [], []>} : vector<16x8xbf16>, vector<16x8xbf16>, vector<16x16xf32> -> vector<16x16xf32>
    %643 = arith.addf %642, %19 : vector<16x16xf32>
    %cst_190 = arith.constant dense<0xFF800000> : vector<16xf32>
    %644 = vector.multi_reduction <maximumf>, %643, %cst_190 [1] : vector<16x16xf32> to vector<16xf32>
    %645 = vector.shape_cast %644 : vector<16xf32> to vector<16x1xf32>
    %646 = vector.broadcast %645 : vector<16x1xf32> to vector<16x16xf32>
    %647 = arith.subf %643, %646 : vector<16x16xf32>
    %648 = math.exp %647 : vector<16x16xf32>
    %cst_191 = arith.constant dense<0.000000e+00> : vector<16xf32>
    %649 = vector.multi_reduction <add>, %648, %cst_191 [1] : vector<16x16xf32> to vector<16xf32>
    %650 = vector.shape_cast %649 : vector<16xf32> to vector<16x1xf32>
    %651 = tpu.reciprocal %650 {approx = true} : vector<16x1xf32> -> vector<16x1xf32>
    %652 = vector.broadcast %651 : vector<16x1xf32> to vector<16x16xf32>
    %653 = arith.mulf %648, %652 : vector<16x16xf32>
    %654 = arith.truncf %653 : vector<16x16xf32> to vector<16x16xbf16>
    %655 = vector.extract_strided_slice %588 {offsets = [0, 24], sizes = [16, 8], strides = [1, 1]} : vector<16x32xbf16> to vector<16x8xbf16>
    %cst_192 = arith.constant dense<0.000000e+00> : vector<16x8xf32>
    %656 = tpu.matmul %654, %655, %cst_192 {dimension_numbers = #tpu.dot_dimension_numbers<[1], [0], [0], [1], [0, 0, 1, 1], [], []>} : vector<16x16xbf16>, vector<16x8xbf16>, vector<16x8xf32> -> vector<16x8xf32>
    %657 = tpu.concatenate %605, %622, %639, %656 in 1 : vector<16x8xf32>, vector<16x8xf32>, vector<16x8xf32>, vector<16x8xf32> -> vector<16x32xf32>
    %658 = arith.truncf %657 : vector<16x32xf32> to vector<16x32xbf16>
    %c720 = arith.constant 720 : index
    %c0_193 = arith.constant 0 : index
    %659 = vector.load %arg2[%c720, %c0_193] : memref<944x128xbf16, #tpu.memory_space<vmem>>, vector<32x32xbf16>
    %cst_194 = arith.constant dense<0.000000e+00> : vector<16x32xf32>
    %660 = tpu.matmul %658, %659, %cst_194 {dimension_numbers = #tpu.dot_dimension_numbers<[1], [0], [0], [1], [0, 0, 1, 1], [], []>} : vector<16x32xbf16>, vector<32x32xbf16>, vector<16x32xf32> -> vector<16x32xf32>
    %c31 = arith.constant 31 : index
    %c0_195 = arith.constant 0 : index
    %661 = vector.load %arg3[%c31, %c0_195] : memref<48x128xf32, #tpu.memory_space<vmem>>, vector<1x32xf32>
    %662 = vector.broadcast %661 : vector<1x32xf32> to vector<16x32xf32>
    %663 = arith.addf %660, %662 : vector<16x32xf32>
    %664 = arith.addf %576, %663 : vector<16x32xf32>
    %c32_196 = arith.constant 32 : index
    %c0_197 = arith.constant 0 : index
    %665 = vector.load %arg3[%c32_196, %c0_197] : memref<48x128xf32, #tpu.memory_space<vmem>>, vector<1x32xf32>
    %c33 = arith.constant 33 : index
    %c0_198 = arith.constant 0 : index
    %666 = vector.load %arg3[%c33, %c0_198] : memref<48x128xf32, #tpu.memory_space<vmem>>, vector<1x32xf32>
    %cst_199 = arith.constant dense<0.000000e+00> : vector<16xf32>
    %667 = vector.multi_reduction <add>, %664, %cst_199 [1] : vector<16x32xf32> to vector<16xf32>
    %668 = vector.shape_cast %667 : vector<16xf32> to vector<16x1xf32>
    %cst_200 = arith.constant 3.200000e+01 : f32
    %669 = vector.broadcast %cst_200 : f32 to vector<16x1xf32>
    %670 = arith.divf %668, %669 : vector<16x1xf32>
    %671 = vector.broadcast %670 : vector<16x1xf32> to vector<16x32xf32>
    %672 = arith.subf %664, %671 : vector<16x32xf32>
    %673 = arith.mulf %672, %672 : vector<16x32xf32>
    %cst_201 = arith.constant dense<0.000000e+00> : vector<16xf32>
    %674 = vector.multi_reduction <add>, %673, %cst_201 [1] : vector<16x32xf32> to vector<16xf32>
    %675 = vector.shape_cast %674 : vector<16xf32> to vector<16x1xf32>
    %cst_202 = arith.constant 3.200000e+01 : f32
    %676 = vector.broadcast %cst_202 : f32 to vector<16x1xf32>
    %677 = arith.divf %675, %676 : vector<16x1xf32>
    %cst_203 = arith.constant 9.99999974E-6 : f32
    %678 = vector.broadcast %cst_203 : f32 to vector<16x1xf32>
    %679 = arith.addf %677, %678 : vector<16x1xf32>
    %680 = math.rsqrt %679 : vector<16x1xf32>
    %681 = vector.broadcast %680 : vector<16x1xf32> to vector<16x32xf32>
    %682 = arith.mulf %672, %681 : vector<16x32xf32>
    %683 = vector.broadcast %665 : vector<1x32xf32> to vector<16x32xf32>
    %684 = arith.mulf %682, %683 : vector<16x32xf32>
    %685 = vector.broadcast %666 : vector<1x32xf32> to vector<16x32xf32>
    %686 = arith.addf %684, %685 : vector<16x32xf32>
    %687 = arith.truncf %686 : vector<16x32xf32> to vector<16x32xbf16>
    %c752 = arith.constant 752 : index
    %c0_204 = arith.constant 0 : index
    %688 = vector.load %arg2[%c752, %c0_204] : memref<944x128xbf16, #tpu.memory_space<vmem>>, vector<32x32xbf16>
    %cst_205 = arith.constant dense<0.000000e+00> : vector<16x32xf32>
    %689 = tpu.matmul %687, %688, %cst_205 {dimension_numbers = #tpu.dot_dimension_numbers<[1], [0], [0], [1], [0, 0, 1, 1], [], []>} : vector<16x32xbf16>, vector<32x32xbf16>, vector<16x32xf32> -> vector<16x32xf32>
    %c34 = arith.constant 34 : index
    %c0_206 = arith.constant 0 : index
    %690 = vector.load %arg3[%c34, %c0_206] : memref<48x128xf32, #tpu.memory_space<vmem>>, vector<1x32xf32>
    %691 = vector.broadcast %690 : vector<1x32xf32> to vector<16x32xf32>
    %692 = arith.addf %689, %691 : vector<16x32xf32>
    %693 = arith.truncf %314 : vector<16x32xf32> to vector<16x32xbf16>
    %c784 = arith.constant 784 : index
    %c0_207 = arith.constant 0 : index
    %694 = vector.load %arg2[%c784, %c0_207] : memref<944x128xbf16, #tpu.memory_space<vmem>>, vector<32x64xbf16>
    %cst_208 = arith.constant dense<0.000000e+00> : vector<16x64xf32>
    %695 = tpu.matmul %693, %694, %cst_208 {dimension_numbers = #tpu.dot_dimension_numbers<[1], [0], [0], [1], [0, 0, 1, 1], [], []>} : vector<16x32xbf16>, vector<32x64xbf16>, vector<16x64xf32> -> vector<16x64xf32>
    %c35 = arith.constant 35 : index
    %c0_209 = arith.constant 0 : index
    %696 = vector.load %arg3[%c35, %c0_209] : memref<48x128xf32, #tpu.memory_space<vmem>>, vector<1x64xf32>
    %697 = vector.broadcast %696 : vector<1x64xf32> to vector<16x64xf32>
    %698 = arith.addf %695, %697 : vector<16x64xf32>
    %699 = vector.extract_strided_slice %698 {offsets = [0, 0], sizes = [16, 32], strides = [1, 1]} : vector<16x64xf32> to vector<16x32xf32>
    %700 = vector.extract_strided_slice %698 {offsets = [0, 32], sizes = [16, 32], strides = [1, 1]} : vector<16x64xf32> to vector<16x32xf32>
    %701 = arith.truncf %692 : vector<16x32xf32> to vector<16x32xbf16>
    %702 = arith.truncf %699 : vector<16x32xf32> to vector<16x32xbf16>
    %703 = arith.truncf %700 : vector<16x32xf32> to vector<16x32xbf16>
    %704 = vector.extract_strided_slice %701 {offsets = [0, 0], sizes = [16, 8], strides = [1, 1]} : vector<16x32xbf16> to vector<16x8xbf16>
    %705 = vector.extract_strided_slice %702 {offsets = [0, 0], sizes = [16, 8], strides = [1, 1]} : vector<16x32xbf16> to vector<16x8xbf16>
    %cst_210 = arith.constant dense<0.000000e+00> : vector<16x16xf32>
    %706 = tpu.matmul %704, %705, %cst_210 {dimension_numbers = #tpu.dot_dimension_numbers<[1], [1], [0], [0], [0, 0, 1, 0], [], []>} : vector<16x8xbf16>, vector<16x8xbf16>, vector<16x16xf32> -> vector<16x16xf32>
    %707 = arith.addf %706, %20 : vector<16x16xf32>
    %cst_211 = arith.constant dense<0xFF800000> : vector<16xf32>
    %708 = vector.multi_reduction <maximumf>, %707, %cst_211 [1] : vector<16x16xf32> to vector<16xf32>
    %709 = vector.shape_cast %708 : vector<16xf32> to vector<16x1xf32>
    %710 = vector.broadcast %709 : vector<16x1xf32> to vector<16x16xf32>
    %711 = arith.subf %707, %710 : vector<16x16xf32>
    %712 = math.exp %711 : vector<16x16xf32>
    %cst_212 = arith.constant dense<0.000000e+00> : vector<16xf32>
    %713 = vector.multi_reduction <add>, %712, %cst_212 [1] : vector<16x16xf32> to vector<16xf32>
    %714 = vector.shape_cast %713 : vector<16xf32> to vector<16x1xf32>
    %715 = tpu.reciprocal %714 {approx = true} : vector<16x1xf32> -> vector<16x1xf32>
    %716 = vector.broadcast %715 : vector<16x1xf32> to vector<16x16xf32>
    %717 = arith.mulf %712, %716 : vector<16x16xf32>
    %718 = arith.truncf %717 : vector<16x16xf32> to vector<16x16xbf16>
    %719 = vector.extract_strided_slice %703 {offsets = [0, 0], sizes = [16, 8], strides = [1, 1]} : vector<16x32xbf16> to vector<16x8xbf16>
    %cst_213 = arith.constant dense<0.000000e+00> : vector<16x8xf32>
    %720 = tpu.matmul %718, %719, %cst_213 {dimension_numbers = #tpu.dot_dimension_numbers<[1], [0], [0], [1], [0, 0, 1, 1], [], []>} : vector<16x16xbf16>, vector<16x8xbf16>, vector<16x8xf32> -> vector<16x8xf32>
    %721 = vector.extract_strided_slice %701 {offsets = [0, 8], sizes = [16, 8], strides = [1, 1]} : vector<16x32xbf16> to vector<16x8xbf16>
    %722 = vector.extract_strided_slice %702 {offsets = [0, 8], sizes = [16, 8], strides = [1, 1]} : vector<16x32xbf16> to vector<16x8xbf16>
    %cst_214 = arith.constant dense<0.000000e+00> : vector<16x16xf32>
    %723 = tpu.matmul %721, %722, %cst_214 {dimension_numbers = #tpu.dot_dimension_numbers<[1], [1], [0], [0], [0, 0, 1, 0], [], []>} : vector<16x8xbf16>, vector<16x8xbf16>, vector<16x16xf32> -> vector<16x16xf32>
    %724 = arith.addf %723, %20 : vector<16x16xf32>
    %cst_215 = arith.constant dense<0xFF800000> : vector<16xf32>
    %725 = vector.multi_reduction <maximumf>, %724, %cst_215 [1] : vector<16x16xf32> to vector<16xf32>
    %726 = vector.shape_cast %725 : vector<16xf32> to vector<16x1xf32>
    %727 = vector.broadcast %726 : vector<16x1xf32> to vector<16x16xf32>
    %728 = arith.subf %724, %727 : vector<16x16xf32>
    %729 = math.exp %728 : vector<16x16xf32>
    %cst_216 = arith.constant dense<0.000000e+00> : vector<16xf32>
    %730 = vector.multi_reduction <add>, %729, %cst_216 [1] : vector<16x16xf32> to vector<16xf32>
    %731 = vector.shape_cast %730 : vector<16xf32> to vector<16x1xf32>
    %732 = tpu.reciprocal %731 {approx = true} : vector<16x1xf32> -> vector<16x1xf32>
    %733 = vector.broadcast %732 : vector<16x1xf32> to vector<16x16xf32>
    %734 = arith.mulf %729, %733 : vector<16x16xf32>
    %735 = arith.truncf %734 : vector<16x16xf32> to vector<16x16xbf16>
    %736 = vector.extract_strided_slice %703 {offsets = [0, 8], sizes = [16, 8], strides = [1, 1]} : vector<16x32xbf16> to vector<16x8xbf16>
    %cst_217 = arith.constant dense<0.000000e+00> : vector<16x8xf32>
    %737 = tpu.matmul %735, %736, %cst_217 {dimension_numbers = #tpu.dot_dimension_numbers<[1], [0], [0], [1], [0, 0, 1, 1], [], []>} : vector<16x16xbf16>, vector<16x8xbf16>, vector<16x8xf32> -> vector<16x8xf32>
    %738 = vector.extract_strided_slice %701 {offsets = [0, 16], sizes = [16, 8], strides = [1, 1]} : vector<16x32xbf16> to vector<16x8xbf16>
    %739 = vector.extract_strided_slice %702 {offsets = [0, 16], sizes = [16, 8], strides = [1, 1]} : vector<16x32xbf16> to vector<16x8xbf16>
    %cst_218 = arith.constant dense<0.000000e+00> : vector<16x16xf32>
    %740 = tpu.matmul %738, %739, %cst_218 {dimension_numbers = #tpu.dot_dimension_numbers<[1], [1], [0], [0], [0, 0, 1, 0], [], []>} : vector<16x8xbf16>, vector<16x8xbf16>, vector<16x16xf32> -> vector<16x16xf32>
    %741 = arith.addf %740, %20 : vector<16x16xf32>
    %cst_219 = arith.constant dense<0xFF800000> : vector<16xf32>
    %742 = vector.multi_reduction <maximumf>, %741, %cst_219 [1] : vector<16x16xf32> to vector<16xf32>
    %743 = vector.shape_cast %742 : vector<16xf32> to vector<16x1xf32>
    %744 = vector.broadcast %743 : vector<16x1xf32> to vector<16x16xf32>
    %745 = arith.subf %741, %744 : vector<16x16xf32>
    %746 = math.exp %745 : vector<16x16xf32>
    %cst_220 = arith.constant dense<0.000000e+00> : vector<16xf32>
    %747 = vector.multi_reduction <add>, %746, %cst_220 [1] : vector<16x16xf32> to vector<16xf32>
    %748 = vector.shape_cast %747 : vector<16xf32> to vector<16x1xf32>
    %749 = tpu.reciprocal %748 {approx = true} : vector<16x1xf32> -> vector<16x1xf32>
    %750 = vector.broadcast %749 : vector<16x1xf32> to vector<16x16xf32>
    %751 = arith.mulf %746, %750 : vector<16x16xf32>
    %752 = arith.truncf %751 : vector<16x16xf32> to vector<16x16xbf16>
    %753 = vector.extract_strided_slice %703 {offsets = [0, 16], sizes = [16, 8], strides = [1, 1]} : vector<16x32xbf16> to vector<16x8xbf16>
    %cst_221 = arith.constant dense<0.000000e+00> : vector<16x8xf32>
    %754 = tpu.matmul %752, %753, %cst_221 {dimension_numbers = #tpu.dot_dimension_numbers<[1], [0], [0], [1], [0, 0, 1, 1], [], []>} : vector<16x16xbf16>, vector<16x8xbf16>, vector<16x8xf32> -> vector<16x8xf32>
    %755 = vector.extract_strided_slice %701 {offsets = [0, 24], sizes = [16, 8], strides = [1, 1]} : vector<16x32xbf16> to vector<16x8xbf16>
    %756 = vector.extract_strided_slice %702 {offsets = [0, 24], sizes = [16, 8], strides = [1, 1]} : vector<16x32xbf16> to vector<16x8xbf16>
    %cst_222 = arith.constant dense<0.000000e+00> : vector<16x16xf32>
    %757 = tpu.matmul %755, %756, %cst_222 {dimension_numbers = #tpu.dot_dimension_numbers<[1], [1], [0], [0], [0, 0, 1, 0], [], []>} : vector<16x8xbf16>, vector<16x8xbf16>, vector<16x16xf32> -> vector<16x16xf32>
    %758 = arith.addf %757, %20 : vector<16x16xf32>
    %cst_223 = arith.constant dense<0xFF800000> : vector<16xf32>
    %759 = vector.multi_reduction <maximumf>, %758, %cst_223 [1] : vector<16x16xf32> to vector<16xf32>
    %760 = vector.shape_cast %759 : vector<16xf32> to vector<16x1xf32>
    %761 = vector.broadcast %760 : vector<16x1xf32> to vector<16x16xf32>
    %762 = arith.subf %758, %761 : vector<16x16xf32>
    %763 = math.exp %762 : vector<16x16xf32>
    %cst_224 = arith.constant dense<0.000000e+00> : vector<16xf32>
    %764 = vector.multi_reduction <add>, %763, %cst_224 [1] : vector<16x16xf32> to vector<16xf32>
    %765 = vector.shape_cast %764 : vector<16xf32> to vector<16x1xf32>
    %766 = tpu.reciprocal %765 {approx = true} : vector<16x1xf32> -> vector<16x1xf32>
    %767 = vector.broadcast %766 : vector<16x1xf32> to vector<16x16xf32>
    %768 = arith.mulf %763, %767 : vector<16x16xf32>
    %769 = arith.truncf %768 : vector<16x16xf32> to vector<16x16xbf16>
    %770 = vector.extract_strided_slice %703 {offsets = [0, 24], sizes = [16, 8], strides = [1, 1]} : vector<16x32xbf16> to vector<16x8xbf16>
    %cst_225 = arith.constant dense<0.000000e+00> : vector<16x8xf32>
    %771 = tpu.matmul %769, %770, %cst_225 {dimension_numbers = #tpu.dot_dimension_numbers<[1], [0], [0], [1], [0, 0, 1, 1], [], []>} : vector<16x16xbf16>, vector<16x8xbf16>, vector<16x8xf32> -> vector<16x8xf32>
    %772 = tpu.concatenate %720, %737, %754, %771 in 1 : vector<16x8xf32>, vector<16x8xf32>, vector<16x8xf32>, vector<16x8xf32> -> vector<16x32xf32>
    %773 = arith.truncf %772 : vector<16x32xf32> to vector<16x32xbf16>
    %c816 = arith.constant 816 : index
    %c0_226 = arith.constant 0 : index
    %774 = vector.load %arg2[%c816, %c0_226] : memref<944x128xbf16, #tpu.memory_space<vmem>>, vector<32x32xbf16>
    %cst_227 = arith.constant dense<0.000000e+00> : vector<16x32xf32>
    %775 = tpu.matmul %773, %774, %cst_227 {dimension_numbers = #tpu.dot_dimension_numbers<[1], [0], [0], [1], [0, 0, 1, 1], [], []>} : vector<16x32xbf16>, vector<32x32xbf16>, vector<16x32xf32> -> vector<16x32xf32>
    %c36 = arith.constant 36 : index
    %c0_228 = arith.constant 0 : index
    %776 = vector.load %arg3[%c36, %c0_228] : memref<48x128xf32, #tpu.memory_space<vmem>>, vector<1x32xf32>
    %777 = vector.broadcast %776 : vector<1x32xf32> to vector<16x32xf32>
    %778 = arith.addf %775, %777 : vector<16x32xf32>
    %779 = arith.addf %686, %778 : vector<16x32xf32>
    %c37 = arith.constant 37 : index
    %c0_229 = arith.constant 0 : index
    %780 = vector.load %arg3[%c37, %c0_229] : memref<48x128xf32, #tpu.memory_space<vmem>>, vector<1x32xf32>
    %c38 = arith.constant 38 : index
    %c0_230 = arith.constant 0 : index
    %781 = vector.load %arg3[%c38, %c0_230] : memref<48x128xf32, #tpu.memory_space<vmem>>, vector<1x32xf32>
    %cst_231 = arith.constant dense<0.000000e+00> : vector<16xf32>
    %782 = vector.multi_reduction <add>, %779, %cst_231 [1] : vector<16x32xf32> to vector<16xf32>
    %783 = vector.shape_cast %782 : vector<16xf32> to vector<16x1xf32>
    %cst_232 = arith.constant 3.200000e+01 : f32
    %784 = vector.broadcast %cst_232 : f32 to vector<16x1xf32>
    %785 = arith.divf %783, %784 : vector<16x1xf32>
    %786 = vector.broadcast %785 : vector<16x1xf32> to vector<16x32xf32>
    %787 = arith.subf %779, %786 : vector<16x32xf32>
    %788 = arith.mulf %787, %787 : vector<16x32xf32>
    %cst_233 = arith.constant dense<0.000000e+00> : vector<16xf32>
    %789 = vector.multi_reduction <add>, %788, %cst_233 [1] : vector<16x32xf32> to vector<16xf32>
    %790 = vector.shape_cast %789 : vector<16xf32> to vector<16x1xf32>
    %cst_234 = arith.constant 3.200000e+01 : f32
    %791 = vector.broadcast %cst_234 : f32 to vector<16x1xf32>
    %792 = arith.divf %790, %791 : vector<16x1xf32>
    %cst_235 = arith.constant 9.99999974E-6 : f32
    %793 = vector.broadcast %cst_235 : f32 to vector<16x1xf32>
    %794 = arith.addf %792, %793 : vector<16x1xf32>
    %795 = math.rsqrt %794 : vector<16x1xf32>
    %796 = vector.broadcast %795 : vector<16x1xf32> to vector<16x32xf32>
    %797 = arith.mulf %787, %796 : vector<16x32xf32>
    %798 = vector.broadcast %780 : vector<1x32xf32> to vector<16x32xf32>
    %799 = arith.mulf %797, %798 : vector<16x32xf32>
    %800 = vector.broadcast %781 : vector<1x32xf32> to vector<16x32xf32>
    %801 = arith.addf %799, %800 : vector<16x32xf32>
    %802 = arith.truncf %801 : vector<16x32xf32> to vector<16x32xbf16>
    %c848 = arith.constant 848 : index
    %c0_236 = arith.constant 0 : index
    %803 = vector.load %arg2[%c848, %c0_236] : memref<944x128xbf16, #tpu.memory_space<vmem>>, vector<32x64xbf16>
    %cst_237 = arith.constant dense<0.000000e+00> : vector<16x64xf32>
    %804 = tpu.matmul %802, %803, %cst_237 {dimension_numbers = #tpu.dot_dimension_numbers<[1], [0], [0], [1], [0, 0, 1, 1], [], []>} : vector<16x32xbf16>, vector<32x64xbf16>, vector<16x64xf32> -> vector<16x64xf32>
    %c39 = arith.constant 39 : index
    %c0_238 = arith.constant 0 : index
    %805 = vector.load %arg3[%c39, %c0_238] : memref<48x128xf32, #tpu.memory_space<vmem>>, vector<1x64xf32>
    %806 = vector.broadcast %805 : vector<1x64xf32> to vector<16x64xf32>
    %807 = arith.addf %804, %806 : vector<16x64xf32>
    %cst_239 = arith.constant 0.000000e+00 : f32
    %808 = vector.broadcast %cst_239 : f32 to vector<16x64xf32>
    %809 = arith.maximumf %807, %808 : vector<16x64xf32>
    %810 = arith.truncf %809 : vector<16x64xf32> to vector<16x64xbf16>
    %c880 = arith.constant 880 : index
    %c0_240 = arith.constant 0 : index
    %811 = vector.load %arg2[%c880, %c0_240] : memref<944x128xbf16, #tpu.memory_space<vmem>>, vector<64x32xbf16>
    %cst_241 = arith.constant dense<0.000000e+00> : vector<16x32xf32>
    %812 = tpu.matmul %810, %811, %cst_241 {dimension_numbers = #tpu.dot_dimension_numbers<[1], [0], [0], [1], [0, 0, 1, 1], [], []>} : vector<16x64xbf16>, vector<64x32xbf16>, vector<16x32xf32> -> vector<16x32xf32>
    %c40 = arith.constant 40 : index
    %c0_242 = arith.constant 0 : index
    %813 = vector.load %arg3[%c40, %c0_242] : memref<48x128xf32, #tpu.memory_space<vmem>>, vector<1x32xf32>
    %814 = vector.broadcast %813 : vector<1x32xf32> to vector<16x32xf32>
    %815 = arith.addf %812, %814 : vector<16x32xf32>
    %816 = arith.addf %801, %815 : vector<16x32xf32>
    %c41 = arith.constant 41 : index
    %c0_243 = arith.constant 0 : index
    %817 = vector.load %arg3[%c41, %c0_243] : memref<48x128xf32, #tpu.memory_space<vmem>>, vector<1x32xf32>
    %c42 = arith.constant 42 : index
    %c0_244 = arith.constant 0 : index
    %818 = vector.load %arg3[%c42, %c0_244] : memref<48x128xf32, #tpu.memory_space<vmem>>, vector<1x32xf32>
    %cst_245 = arith.constant dense<0.000000e+00> : vector<16xf32>
    %819 = vector.multi_reduction <add>, %816, %cst_245 [1] : vector<16x32xf32> to vector<16xf32>
    %820 = vector.shape_cast %819 : vector<16xf32> to vector<16x1xf32>
    %cst_246 = arith.constant 3.200000e+01 : f32
    %821 = vector.broadcast %cst_246 : f32 to vector<16x1xf32>
    %822 = arith.divf %820, %821 : vector<16x1xf32>
    %823 = vector.broadcast %822 : vector<16x1xf32> to vector<16x32xf32>
    %824 = arith.subf %816, %823 : vector<16x32xf32>
    %825 = arith.mulf %824, %824 : vector<16x32xf32>
    %cst_247 = arith.constant dense<0.000000e+00> : vector<16xf32>
    %826 = vector.multi_reduction <add>, %825, %cst_247 [1] : vector<16x32xf32> to vector<16xf32>
    %827 = vector.shape_cast %826 : vector<16xf32> to vector<16x1xf32>
    %cst_248 = arith.constant 3.200000e+01 : f32
    %828 = vector.broadcast %cst_248 : f32 to vector<16x1xf32>
    %829 = arith.divf %827, %828 : vector<16x1xf32>
    %cst_249 = arith.constant 9.99999974E-6 : f32
    %830 = vector.broadcast %cst_249 : f32 to vector<16x1xf32>
    %831 = arith.addf %829, %830 : vector<16x1xf32>
    %832 = math.rsqrt %831 : vector<16x1xf32>
    %833 = vector.broadcast %832 : vector<16x1xf32> to vector<16x32xf32>
    %834 = arith.mulf %824, %833 : vector<16x32xf32>
    %835 = vector.broadcast %817 : vector<1x32xf32> to vector<16x32xf32>
    %836 = arith.mulf %834, %835 : vector<16x32xf32>
    %837 = vector.broadcast %818 : vector<1x32xf32> to vector<16x32xf32>
    %838 = arith.addf %836, %837 : vector<16x32xf32>
    %839 = arith.truncf %838 : vector<16x32xf32> to vector<16x32xbf16>
    %c80 = arith.constant 80 : index
    %c0_250 = arith.constant 0 : index
    %840 = vector.load %arg2[%c80, %c0_250] : memref<944x128xbf16, #tpu.memory_space<vmem>>, vector<32x128xbf16>
    %cst_251 = arith.constant dense<0.000000e+00> : vector<16x128xf32>
    %841 = tpu.matmul %839, %840, %cst_251 {dimension_numbers = #tpu.dot_dimension_numbers<[1], [0], [0], [1], [0, 0, 1, 1], [], []>} : vector<16x32xbf16>, vector<32x128xbf16>, vector<16x128xf32> -> vector<16x128xf32>
    %c0_252 = arith.constant 0 : index
    %c0_253 = arith.constant 0 : index
    %842 = vector.load %arg3[%c0_252, %c0_253] : memref<48x128xf32, #tpu.memory_space<vmem>>, vector<1x128xf32>
    %843 = vector.broadcast %842 : vector<1x128xf32> to vector<16x128xf32>
    %844 = arith.addf %841, %843 : vector<16x128xf32>
    %c0_254 = arith.constant 0 : index
    %c0_255 = arith.constant 0 : index
    %845 = vector.load %arg4[%c0_254, %c0_255] : memref<16x128xf32, #tpu.memory_space<vmem>>, vector<16x128xf32>
    tpu.vector_store %arg4[%c0_254, %c0_255], %844 {strides = array<i32>} : memref<16x128xf32, #tpu.memory_space<vmem>>, vector<16x128xf32>,
    return
  }
}

</mosaic_0001>

<llo_original>
// kernel: tile.8
$region0: #{tile.8}
  #allocation2 [shape = 's32[1]{0}', space=sflag, size = 0x4, scoped, tag = 'scoped memory for tile.8']
  %s0 = inlined_call_operand.hbm [shape: f32[8,8], index: 0, kind: input, shape index: {}]
  %s1 = inlined_call_operand.vmem [shape: f32[2,8,2,8], index: 1, kind: output, shape index: {}]
  $region1: #{tile.8} parent=0
    #allocation0 [shape = 'u8[4096]{0}', space=vmem, size = 0x1000, scoped, tag = 'operand span for operand 0']
    #allocation1 [shape = 's32[1]{0}', space=sflag, size = 0x4, scoped, tag = 'scoped memory for tile.8']
    %2 = vsyncpa [#allocation1], 0
    // Predicated region
    $region2: #{tile.8} parent=1 // pred_check
      _
    $region3: #{tile.8} parent=1 // pred_check_branch
      %4 = sbr.rel (0) target = $region5
    $region4: #{tile.8} parent=1 // pred_region
      %s6 = ssub.s32 128, 128
      %7 = vsyncadd [#allocation1], %s6
      %s9 = sshll.u32 [#allocation0], 4
      %s10 = int_to_ptr.vmem [resolvable:$true] %s9
      %12 = dma.hbm_to_vmem [thread:$0]  %s0, 128, %s10, [#allocation1]
    $region5: #{tile.8} parent=1 // pred_fallthru
      _
    // Predicated region
    $region6: #{tile.8} parent=1 // pred_check
      _
    $region7: #{tile.8} parent=1 // pred_check_branch
      %14 = sbr.rel (0) target = $region9
    $region8: #{tile.8} parent=1 // pred_region
      %15 = dma.done [#allocation1], 128
    $region9: #{tile.8} parent=1 // pred_fallthru
      _
    %v16 = vld [vmem:[#allocation0] ss:$0 sm:$0xff]
    %17 = vst [vmem:[%s1] sm:$0x3] %v16
    %s18 = scalar_lea.vmem %s1, 16
    %19 = vst [vmem:[%s18] sm:$0x3] %v16
    %s20 = scalar_lea.vmem [#allocation0], 1
    %v21 = vld [vmem:[%s20] ss:$0 sm:$0xff]
    %s22 = scalar_lea.vmem %s1, 2
    %23 = vst [vmem:[%s22] sm:$0x3] %v21
    %s24 = scalar_lea.vmem %s1, 18
    %25 = vst [vmem:[%s24] sm:$0x3] %v21
    %s26 = scalar_lea.vmem [#allocation0], 2
    %v27 = vld [vmem:[%s26] ss:$0 sm:$0xff]
    %s28 = scalar_lea.vmem %s1, 4
    %29 = vst [vmem:[%s28] sm:$0x3] %v27
    %s30 = scalar_lea.vmem %s1, 20
    %31 = vst [vmem:[%s30] sm:$0x3] %v27
    %s32 = scalar_lea.vmem [#allocation0], 3
    %v33 = vld [vmem:[%s32] ss:$0 sm:$0xff]
    %s34 = scalar_lea.vmem %s1, 6
    %35 = vst [vmem:[%s34] sm:$0x3] %v33
    %s36 = scalar_lea.vmem %s1, 22
    %37 = vst [vmem:[%s36] sm:$0x3] %v33
    %s38 = scalar_lea.vmem [#allocation0], 4
    %v39 = vld [vmem:[%s38] ss:$0 sm:$0xff]
    %s40 = scalar_lea.vmem %s1, 8
    %41 = vst [vmem:[%s40] sm:$0x3] %v39
    %s42 = scalar_lea.vmem %s1, 24
    %43 = vst [vmem:[%s42] sm:$0x3] %v39
    %s44 = scalar_lea.vmem [#allocation0], 5
    %v45 = vld [vmem:[%s44] ss:$0 sm:$0xff]
    %s46 = scalar_lea.vmem %s1, 10
    %47 = vst [vmem:[%s46] sm:$0x3] %v45
    %s48 = scalar_lea.vmem %s1, 26
    %49 = vst [vmem:[%s48] sm:$0x3] %v45
    %s50 = scalar_lea.vmem [#allocation0], 6
    %v51 = vld [vmem:[%s50] ss:$0 sm:$0xff]
    %s52 = scalar_lea.vmem %s1, 12
    %53 = vst [vmem:[%s52] sm:$0x3] %v51
    %s54 = scalar_lea.vmem %s1, 28
    %55 = vst [vmem:[%s54] sm:$0x3] %v51
    %s56 = scalar_lea.vmem [#allocation0], 7
    %v57 = vld [vmem:[%s56] ss:$0 sm:$0xff]
    %s58 = scalar_lea.vmem %s1, 14
    %59 = vst [vmem:[%s58] sm:$0x3] %v57
    %s60 = scalar_lea.vmem %s1, 30
    %61 = vst [vmem:[%s60] sm:$0x3] %v57
    %62 = vsyncpa [#allocation1], 1

// kernel: tile.9
$region0: #{tile.9}
  %s0 = inlined_call_operand.vmem [shape: f32[2,8,2,8], index: 0, kind: input, shape index: {}]
  %s1 = inlined_call_operand.vmem [shape: f32[16,16], index: 1, kind: output, shape index: {}]
  $region1: #{tile.9} parent=0
    #allocation0 [shape = 'u8[65536]{0}', space=vmem, size = 0x10000, scoped, tag = 'scoped mem for input reshape']
    %s3 = sshll.u32 1, 2
    %s4 = ssub.s32 %s3, 1
    %s5 = smul.addr 2, 15
    %s6 = scalar_lea.vmem %s0, %s5
    %v7 = vld [vmem:[%s6] sm:%s4]
    %s8 = scalar_lea.vmem [#allocation0], 120
    %9 = vst [vmem:[%s8] sm:%s4] %v7
    %s10 = smul.addr 2, 14
    %s11 = scalar_lea.vmem %s0, %s10
    %v12 = vld [vmem:[%s11] sm:%s4]
    %s13 = scalar_lea.vmem [#allocation0], 112
    %14 = vst [vmem:[%s13] sm:%s4] %v12
    %s15 = smul.addr 2, 13
    %s16 = scalar_lea.vmem %s0, %s15
    %v17 = vld [vmem:[%s16] sm:%s4]
    %s18 = scalar_lea.vmem [#allocation0], 104
    %19 = vst [vmem:[%s18] sm:%s4] %v17
    %s20 = smul.addr 2, 12
    %s21 = scalar_lea.vmem %s0, %s20
    %v22 = vld [vmem:[%s21] sm:%s4]
    %s23 = scalar_lea.vmem [#allocation0], 96
    %24 = vst [vmem:[%s23] sm:%s4] %v22
    %s25 = smul.addr 2, 11
    %s26 = scalar_lea.vmem %s0, %s25
    %v27 = vld [vmem:[%s26] sm:%s4]
    %s28 = scalar_lea.vmem [#allocation0], 88
    %29 = vst [vmem:[%s28] sm:%s4] %v27
    %s30 = smul.addr 2, 10
    %s31 = scalar_lea.vmem %s0, %s30
    %v32 = vld [vmem:[%s31] sm:%s4]
    %s33 = scalar_lea.vmem [#allocation0], 80
    %34 = vst [vmem:[%s33] sm:%s4] %v32
    %s35 = smul.addr 2, 9
    %s36 = scalar_lea.vmem %s0, %s35
    %v37 = vld [vmem:[%s36] sm:%s4]
    %s38 = scalar_lea.vmem [#allocation0], 72
    %39 = vst [vmem:[%s38] sm:%s4] %v37
    %s40 = smul.addr 2, 8
    %s41 = scalar_lea.vmem %s0, %s40
    %v42 = vld [vmem:[%s41] sm:%s4]
    %s43 = scalar_lea.vmem [#allocation0], 64
    %44 = vst [vmem:[%s43] sm:%s4] %v42
    %s45 = smul.addr 2, 7
    %s46 = scalar_lea.vmem %s0, %s45
    %v47 = vld [vmem:[%s46] sm:%s4]
    %s48 = scalar_lea.vmem [#allocation0], 56
    %49 = vst [vmem:[%s48] sm:%s4] %v47
    %s50 = smul.addr 2, 6
    %s51 = scalar_lea.vmem %s0, %s50
    %v52 = vld [vmem:[%s51] sm:%s4]
    %s53 = scalar_lea.vmem [#allocation0], 48
    %54 = vst [vmem:[%s53] sm:%s4] %v52
    %s55 = smul.addr 2, 5
    %s56 = scalar_lea.vmem %s0, %s55
    %v57 = vld [vmem:[%s56] sm:%s4]
    %s58 = scalar_lea.vmem [#allocation0], 40
    %59 = vst [vmem:[%s58] sm:%s4] %v57
    %s60 = smul.addr 2, 4
    %s61 = scalar_lea.vmem %s0, %s60
    %v62 = vld [vmem:[%s61] sm:%s4]
    %s63 = scalar_lea.vmem [#allocation0], 32
    %64 = vst [vmem:[%s63] sm:%s4] %v62
    %s65 = smul.addr 2, 3
    %s66 = scalar_lea.vmem %s0, %s65
    %v67 = vld [vmem:[%s66] sm:%s4]
    %s68 = scalar_lea.vmem [#allocation0], 24
    %69 = vst [vmem:[%s68] sm:%s4] %v67
    %s70 = smul.addr 2, 2
    %s71 = scalar_lea.vmem %s0, %s70
    %v72 = vld [vmem:[%s71] sm:%s4]
    %s73 = scalar_lea.vmem [#allocation0], 16
    %74 = vst [vmem:[%s73] sm:%s4] %v72
    %s75 = scalar_lea.vmem %s0, 2
    %v76 = vld [vmem:[%s75] sm:%s4]
    %s77 = scalar_lea.vmem [#allocation0], 8
    %78 = vst [vmem:[%s77] sm:%s4] %v76
    %v79 = vld [vmem:[%s0] sm:%s4]
    %80 = vst [vmem:[#allocation0] sm:%s4] %v79
    %v81 = vld [vmem:[#allocation0] ss:$8 sm:$0xf]
    %v82 = vld [vmem:[#allocation0] ss:$8 sm:$0xf0]
    %vm83 = vcmask 1047556
    %v84 = vsel %vm83, %v82, %v81
    %vm85 = vcmask 64512
    %86 = vst.msk [vmem:[%s1] sm:$0xff] %vm85, %v84
    %s87 = scalar_lea.vmem [#allocation0], 64
    %v88 = vld [vmem:[%s87] ss:$8 sm:$0xf]
    %s89 = scalar_lea.vmem [#allocation0], 64
    %v90 = vld [vmem:[%s89] ss:$8 sm:$0xf0]
    %vm91 = vcmask 1047556
    %v92 = vsel %vm91, %v90, %v88
    %vm93 = vcmask 64512
    %s94 = scalar_lea.vmem %s1, 8
    %95 = vst.msk [vmem:[%s94] sm:$0xff] %vm93, %v92
    %s96 = scalar_lea.vmem [#allocation0], 1
    %v97 = vld [vmem:[%s96] ss:$8 sm:$0xf]
    %s98 = scalar_lea.vmem [#allocation0], 1
    %v99 = vld [vmem:[%s98] ss:$8 sm:$0xf0]
    %vm100 = vcmask 1047556
    %v101 = vsel %vm100, %v99, %v97
    %102 = vrot.lane.b32.xlu0 %v101, 8
    %v103 = vpop.permute.xlu0 %102
    %vm104 = vcmask 130112
    %105 = vst.msk [vmem:[%s1] sm:$0xff] %vm104, %v103
    %s106 = scalar_lea.vmem [#allocation0], 65
    %v107 = vld [vmem:[%s106] ss:$8 sm:$0xf]
    %s108 = scalar_lea.vmem [#allocation0], 65
    %v109 = vld [vmem:[%s108] ss:$8 sm:$0xf0]
    %vm110 = vcmask 1047556
    %v111 = vsel %vm110, %v109, %v107
    %112 = vrot.lane.b32.xlu0 %v111, 8
    %v113 = vpop.permute.xlu0 %112
    %vm114 = vcmask 130112
    %s115 = scalar_lea.vmem %s1, 8
    %116 = vst.msk [vmem:[%s115] sm:$0xff] %vm114, %v113

// kernel: forward.1
$region0: #{forward.1}
  #allocation0 [shape = 'u32[]', space=smem, size = 0x4, offset = 0x4, fixed_abs, tag = 'smem constant byte address 0x4 - core index']
  #allocation1 [shape = 'u32[144,128]{1,0:T(1,128)}', space=vmem, size = 0x12000, scoped, tag = 'internal scratch']
  %s0 = inlined_call_operand.vmem [shape: s32[32,1], index: 0, kind: input, shape index: {}]
  %s1 = inlined_call_operand.vmem [shape: f32[48,128], index: 1, kind: input, shape index: {}]
  %s2 = inlined_call_operand.hbm [shape: bf16[944,128], index: 2, kind: input, shape index: {}]
  %s3 = inlined_call_operand.vmem [shape: f32[48,128], index: 3, kind: input, shape index: {}]
  %s4 = inlined_call_operand.vmem [shape: f32[16,128], index: 4, kind: output, shape index: {}]
  %s5 = sld [smem:[#allocation0]]
  $region30: #{forward.1} parent=0
    _
  %s7 = ssub.s32 1, %s5
  %s8 = scalar_select 0, %s7, %s5
  $region1: #{forward.1} parent=0
    #allocation2 [shape = 'u8[241664]{0}', space=vmem, size = 0x3b000, scoped, tag = 'input window, operand 2, single buffered']
    #allocation3 [shape = 's32[1]{0}', space=sflag, size = 0x4, scoped, tag = 'scoped memory for forward.1']
    %9 = vsyncpa [#allocation3], 0
    // Predicated region
    $region2: #{forward.1} parent=1 // pred_check
      _
    $region3: #{forward.1} parent=1 // pred_check_branch
      %11 = sbr.rel (0) target = $region5
    $region4: #{forward.1} parent=1 // pred_region
      _
    $region5: #{forward.1} parent=1 // pred_fallthru
      _
    // Predicated region
    $region6: #{forward.1} parent=1 // pred_check
      _
    $region7: #{forward.1} parent=1 // pred_check_branch
      %13 = sbr.rel (0) target = $region9
    $region8: #{forward.1} parent=1 // pred_region
      _
    $region9: #{forward.1} parent=1 // pred_fallthru
      _
    // Predicated region
    $region10: #{forward.1} parent=1 // pred_check
      _
    $region11: #{forward.1} parent=1 // pred_check_branch
      %15 = sbr.rel (0) target = $region13
    $region12: #{forward.1} parent=1 // pred_region
      %s17 = ssub.s32 7552, 7552
      %18 = vsyncadd [#allocation3], %s17
      %s19 = sshll.u32 [#allocation2], 4
      %s20 = int_to_ptr.vmem [resolvable:$true] %s19
      %25 = dma.hbm_to_vmem [thread:$0]  %s2, 7552, %s20, [#allocation3], 64, 64, 4
    $region13: #{forward.1} parent=1 // pred_fallthru
      _
    // Predicated region
    $region14: #{forward.1} parent=1 // pred_check
      _
    $region15: #{forward.1} parent=1 // pred_check_branch
      %27 = sbr.rel (0) target = $region17
    $region16: #{forward.1} parent=1 // pred_region
      _
    $region17: #{forward.1} parent=1 // pred_fallthru
      _
    // Predicated region
    $region18: #{forward.1} parent=1 // pred_check
      _
    $region19: #{forward.1} parent=1 // pred_check_branch
      %29 = sbr.rel (0) target = $region21
    $region20: #{forward.1} parent=1 // pred_region
      %30 = dma.done [#allocation3], 7552
    $region21: #{forward.1} parent=1 // pred_fallthru
      _
    %v32 = vld [vmem:[%s0] sm:$0xff]
    %v33 = vld [vmem:[%s0 + $0x8] sm:$0xff]
    %v34 = vld [vmem:[%s0 + $0x10] sm:$0xff]
    %v35 = vld [vmem:[%s0 + $0x18] sm:$0xff]
    %v36 = vlaneseq
    %v37 = vand.u32 %v36, 127
    %38 = vset.pattern.permute.xlu0 0
    %39 = vperm.xlu0 %38, %v32
    %v40 = vpop.permute.xlu0 %39
    %41 = vset.pattern.permute.xlu0 0
    %42 = vperm.xlu0 %41, %v33
    %v43 = vpop.permute.xlu0 %42
    %44 = vset.pattern.permute.xlu0 0
    %45 = vperm.xlu0 %44, %v34
    %v46 = vpop.permute.xlu0 %45
    %47 = vset.pattern.permute.xlu0 0
    %48 = vperm.xlu0 %47, %v35
    %v49 = vpop.permute.xlu0 %48
    %vm50 = vcmp.eq.s32.totalorder %v40, %v37
    %vm51 = vcmp.eq.s32.totalorder %v43, %v37
    %vm52 = vcmp.eq.s32.totalorder %v46, %v37
    %vm53 = vcmp.eq.s32.totalorder %v49, %v37
    %v54 = vsel %vm50, 1, 0
    %v55 = vsel %vm51, 1, 0
    %v56 = vsel %vm52, 1, 0
    %v57 = vsel %vm53, 1, 0
    %v58 = vcvt.s32.f32 %v54
    %v59 = vcvt.s32.f32 %v55
    %v60 = vcvt.s32.f32 %v56
    %v61 = vcvt.s32.f32 %v57
    %v62 = vpack.c.bf16 %v59, %v58
    %v63 = vpack.c.bf16 %v61, %v60
    %v64 = vld [vmem:[#allocation2] sm:$0xf]
    %v65 = vld [vmem:[#allocation2 + $0x4] sm:$0xf]
    %v66 = vld [vmem:[#allocation2 + $0x8] sm:$0xf]
    %v67 = vld [vmem:[#allocation2 + $0xc] sm:$0xf]
    %v72 = vunpack.c.l.b16 %v64
    %v73 = vunpack.c.l.b16 %v65
    %v74 = vunpack.c.l.b16 %v66
    %v75 = vunpack.c.l.b16 %v67
    %v76 = vpack.c.b16 %v73, %v72
    %v77 = vpack.c.b16 %v75, %v74
    %vm80 = vcmask 261120
    %v82 = vsel %vm80, %v62, 0
    %v85 = vsel %vm80, %v63, 0
    %87 = vmatprep.subr.bf16.mxu0 0
    %88 = vmatpush1.bf16.msra.mxu0 0
    %89 = vmatprep.subr.bf16.mxu0 0
    %90 = vmatpush1.bf16.msra.mxu0 0
    %91 = vmatprep.subr.bf16.mxu0 0
    %92 = vmatpush1.bf16.msra.mxu0 0
    %93 = vmatprep.subr.bf16.mxu0 0
    %94 = vmatpush1.bf16.msra.mxu0 0
    %95 = vmatprep.subr.bf16.mxu0 0
    %96 = vmatpush1.bf16.msra.mxu0 0
    %97 = vmatprep.subr.bf16.mxu0 0
    %98 = vmatpush1.bf16.msra.mxu0 0
    %99 = vmatprep.subr.bf16.mxu0 0
    %100 = vmatpush1.bf16.msra.mxu0 %v77
    %101 = vmatprep.subr.bf16.mxu0 0
    %102 = vmatpush1.bf16.msra.mxu0 %v76
    %103 = vmatprep.subr.bf16.mxu0 0
    %104 = vmatpush2.bf16.msra.mxu0 0
    %105 = vmatprep.subr.bf16.mxu0 0
    %106 = vmatpush2.bf16.msra.mxu0 0
    %107 = vmatprep.subr.bf16.mxu0 0
    %108 = vmatpush2.bf16.msra.mxu0 0
    %109 = vmatprep.subr.bf16.mxu0 0
    %110 = vmatpush2.bf16.msra.mxu0 0
    %111 = vmatprep.subr.bf16.mxu0 0
    %112 = vmatpush2.bf16.msra.mxu0 0
    %113 = vmatprep.subr.bf16.mxu0 0
    %114 = vmatpush2.bf16.msra.mxu0 0
    %115 = vmatprep.subr.bf16.mxu0 0
    %116 = vmatpush2.bf16.msra.mxu0 0
    %117 = vmatprep.subr.bf16.mxu0 0
    %118 = vmatpush2.bf16.msra.mxu0 0
    %119 = vmatprep.mubr.bf16.mxu0 0
    %120 = vmatmul.mubr.bf16.gmra.mxu0 %v82
    %v121 = vpop.f32.mrf.mxu0
    %v122 = vadd.f32 0.0, %v121
    %v123 = vpop.f32.mrf.mxu0
    %v124 = vpop.f32.mrf.mxu0
    %v125 = vadd.f32 0.0, %v124
    %v126 = vpop.f32.mrf.mxu0
    %127 = vmatprep.mubr.bf16.mxu0 0
    %128 = vmatmul.mubr.bf16.gmra.mxu0 %v85
    %v129 = vpop.f32.mrf.mxu0
    %v130 = vadd.f32 0.0, %v129
    %v131 = vpop.f32.mrf.mxu0
    %v132 = vpop.f32.mrf.mxu0
    %v133 = vadd.f32 0.0, %v132
    %v134 = vpop.f32.mrf.mxu0
    %135 = vdwg.mxu0
    %v136 = vpack.c.bf16 %v125, %v122
    %v137 = vpack.c.bf16 %v133, %v130
    %v138 = vld [vmem:[#allocation2 + $0x10] sm:$0xf]
    %v139 = vld [vmem:[#allocation2 + $0x14] sm:$0xf]
    %v140 = vld [vmem:[#allocation2 + $0x18] sm:$0xf]
    %v141 = vld [vmem:[#allocation2 + $0x1c] sm:$0xf]
    %v146 = vunpack.c.l.b16 %v138
    %v147 = vunpack.c.l.b16 %v139
    %v148 = vunpack.c.l.b16 %v140
    %v149 = vunpack.c.l.b16 %v141
    %v150 = vpack.c.b16 %v147, %v146
    %v151 = vpack.c.b16 %v149, %v148
    %v155 = vsel %vm80, %v136, 0
    %v158 = vsel %vm80, %v137, 0
    %160 = vmatprep.subr.bf16.mxu0 0
    %161 = vmatpush1.bf16.msra.mxu0 0
    %162 = vmatprep.subr.bf16.mxu0 0
    %163 = vmatpush1.bf16.msra.mxu0 0
    %164 = vmatprep.subr.bf16.mxu0 0
    %165 = vmatpush1.bf16.msra.mxu0 0
    %166 = vmatprep.subr.bf16.mxu0 0
    %167 = vmatpush1.bf16.msra.mxu0 0
    %168 = vmatprep.subr.bf16.mxu0 0
    %169 = vmatpush1.bf16.msra.mxu0 0
    %170 = vmatprep.subr.bf16.mxu0 0
    %171 = vmatpush1.bf16.msra.mxu0 0
    %172 = vmatprep.subr.bf16.mxu0 0
    %173 = vmatpush1.bf16.msra.mxu0 %v151
    %174 = vmatprep.subr.bf16.mxu0 0
    %175 = vmatpush1.bf16.msra.mxu0 %v150
    %176 = vmatprep.subr.bf16.mxu0 0
    %177 = vmatpush2.bf16.msra.mxu0 0
    %178 = vmatprep.subr.bf16.mxu0 0
    %179 = vmatpush2.bf16.msra.mxu0 0
    %180 = vmatprep.subr.bf16.mxu0 0
    %181 = vmatpush2.bf16.msra.mxu0 0
    %182 = vmatprep.subr.bf16.mxu0 0
    %183 = vmatpush2.bf16.msra.mxu0 0
    %184 = vmatprep.subr.bf16.mxu0 0
    %185 = vmatpush2.bf16.msra.mxu0 0
    %186 = vmatprep.subr.bf16.mxu0 0
    %187 = vmatpush2.bf16.msra.mxu0 0
    %188 = vmatprep.subr.bf16.mxu0 0
    %189 = vmatpush2.bf16.msra.mxu0 0
    %190 = vmatprep.subr.bf16.mxu0 0
    %191 = vmatpush2.bf16.msra.mxu0 0
    %192 = vmatprep.mubr.bf16.mxu0 0
    %193 = vmatmul.mubr.bf16.gmra.mxu0 %v155
    %v194 = vpop.f32.mrf.mxu0
    %v195 = vadd.f32 0.0, %v194
    %v196 = vpop.f32.mrf.mxu0
    %v197 = vpop.f32.mrf.mxu0
    %v198 = vadd.f32 0.0, %v197
    %v199 = vpop.f32.mrf.mxu0
    %200 = vmatprep.mubr.bf16.mxu0 0
    %201 = vmatmul.mubr.bf16.gmra.mxu0 %v158
    %v202 = vpop.f32.mrf.mxu0
    %v203 = vadd.f32 0.0, %v202
    %v204 = vpop.f32.mrf.mxu0
    %v205 = vpop.f32.mrf.mxu0
    %v206 = vadd.f32 0.0, %v205
    %v207 = vpop.f32.mrf.mxu0
    %208 = vdwg.mxu0
    %v209 = vpack.c.bf16 %v198, %v195
    %v210 = vpack.c.bf16 %v206, %v203
    %v211 = vld [vmem:[#allocation2 + $0x20] sm:$0xf]
    %vm212 = vcmask 64512
    %v214 = vsel %vm212, %v209, 0
    %v217 = vsel %vm212, %v210, 0
    %vm219 = vcmask 1043456
    %v221 = vsel %vm219, %v211, 0
    %223 = vmatprep.subr.bf16.mxu0 0
    %224 = vmatpush1.bf16.msra.mxu0 0
    %225 = vmatprep.subr.bf16.mxu0 0
    %226 = vmatpush1.bf16.msra.mxu0 0
    %227 = vmatprep.subr.bf16.mxu0 0
    %228 = vmatpush1.bf16.msra.mxu0 0
    %229 = vmatprep.subr.bf16.mxu0 0
    %230 = vmatpush1.bf16.msra.mxu0 0
    %231 = vmatprep.subr.bf16.mxu0 0
    %232 = vmatpush1.bf16.msra.mxu0 0
    %233 = vmatprep.subr.bf16.mxu0 0
    %234 = vmatpush1.bf16.msra.mxu0 0
    %235 = vmatprep.subr.bf16.mxu0 0
    %236 = vmatpush1.bf16.msra.mxu0 0
    %237 = vmatprep.subr.bf16.mxu0 0
    %238 = vmatpush1.bf16.msra.mxu0 %v221
    %239 = vmatprep.subr.bf16.mxu0 0
    %240 = vmatpush2.bf16.msra.mxu0 0
    %241 = vmatprep.subr.bf16.mxu0 0
    %242 = vmatpush2.bf16.msra.mxu0 0
    %243 = vmatprep.subr.bf16.mxu0 0
    %244 = vmatpush2.bf16.msra.mxu0 0
    %245 = vmatprep.subr.bf16.mxu0 0
    %246 = vmatpush2.bf16.msra.mxu0 0
    %247 = vmatprep.subr.bf16.mxu0 0
    %248 = vmatpush2.bf16.msra.mxu0 0
    %249 = vmatprep.subr.bf16.mxu0 0
    %250 = vmatpush2.bf16.msra.mxu0 0
    %251 = vmatprep.subr.bf16.mxu0 0
    %252 = vmatpush2.bf16.msra.mxu0 0
    %253 = vmatprep.subr.bf16.mxu0 0
    %254 = vmatpush2.bf16.msra.mxu0 0
    %255 = vmatprep.mubr.bf16.mxu0 0
    %256 = vmatmul.mubr.bf16.gmra.mxu0 %v214
    %v257 = vpop.f32.mrf.mxu0
    %v258 = vadd.f32 0.0, %v257
    %v259 = vpop.f32.mrf.mxu0
    %v260 = vpop.f32.mrf.mxu0
    %v261 = vadd.f32 0.0, %v260
    %v262 = vpop.f32.mrf.mxu0
    %263 = vmatprep.mubr.bf16.mxu0 0
    %264 = vmatmul.mubr.bf16.gmra.mxu0 %v217
    %v265 = vpop.f32.mrf.mxu0
    %v266 = vadd.f32 0.0, %v265
    %v267 = vpop.f32.mrf.mxu0
    %v268 = vpop.f32.mrf.mxu0
    %v269 = vadd.f32 0.0, %v268
    %v270 = vpop.f32.mrf.mxu0
    %271 = vdwg.mxu0
    %v272 = vadd.f32 %v122, %v258
    %v273 = vadd.f32 %v125, %v261
    %v274 = vadd.f32 %v130, %v266
    %v275 = vadd.f32 %v133, %v269
    %v276 = vld [vmem:[%s1] sm:$0xff]
    %v277 = vld [vmem:[%s1 + $0x8] sm:$0xff]
    %v278 = vld [vmem:[%s1 + $0x10] sm:$0xff]
    %v279 = vld [vmem:[%s1 + $0x18] sm:$0xff]
    %v280 = vld [vmem:[%s1 + $0x20] sm:$0xff]
    %v281 = vld [vmem:[%s1 + $0x28] sm:$0xff]
    %v282 = vpack.c.bf16 %v273, %v272
    %v283 = vld [vmem:[#allocation2 + $0x38] sm:$0xf]
    %v284 = vld [vmem:[#allocation2 + $0x3c] sm:$0xf]
    %v285 = vld [vmem:[#allocation2 + $0x40] sm:$0xf]
    %v286 = vld [vmem:[#allocation2 + $0x44] sm:$0xf]
    %v287 = vld [vmem:[%s3 + $0x1] sm:$0x1]
    %v288 = vlaneseq
    %v289 = vshrl.u32 %v288, 7
    %v290 = vsub.s32 0, %v289
    %v291 = vrot.slane %v287, %v290
    %v296 = vunpack.c.l.b16 %v283
    %v297 = vunpack.c.l.b16 %v284
    %v298 = vunpack.c.l.b16 %v285
    %v299 = vunpack.c.l.b16 %v286
    %v300 = vpack.c.b16 %v297, %v296
    %v301 = vpack.c.b16 %v299, %v298
    %v305 = vsel %vm80, %v282, 0
    %307 = vmatprep.subr.bf16.mxu0 0
    %308 = vmatpush1.bf16.msra.mxu0 0
    %309 = vmatprep.subr.bf16.mxu0 0
    %310 = vmatpush1.bf16.msra.mxu0 0
    %311 = vmatprep.subr.bf16.mxu0 0
    %312 = vmatpush1.bf16.msra.mxu0 0
    %313 = vmatprep.subr.bf16.mxu0 0
    %314 = vmatpush1.bf16.msra.mxu0 0
    %315 = vmatprep.subr.bf16.mxu0 0
    %316 = vmatpush1.bf16.msra.mxu0 0
    %317 = vmatprep.subr.bf16.mxu0 0
    %318 = vmatpush1.bf16.msra.mxu0 0
    %319 = vmatprep.subr.bf16.mxu0 0
    %320 = vmatpush1.bf16.msra.mxu0 %v301
    %321 = vmatprep.subr.bf16.mxu0 0
    %322 = vmatpush1.bf16.msra.mxu0 %v300
    %323 = vmatprep.subr.bf16.mxu0 0
    %324 = vmatpush2.bf16.msra.mxu0 0
    %325 = vmatprep.subr.bf16.mxu0 0
    %326 = vmatpush2.bf16.msra.mxu0 0
    %327 = vmatprep.subr.bf16.mxu0 0
    %328 = vmatpush2.bf16.msra.mxu0 0
    %329 = vmatprep.subr.bf16.mxu0 0
    %330 = vmatpush2.bf16.msra.mxu0 0
    %331 = vmatprep.subr.bf16.mxu0 0
    %332 = vmatpush2.bf16.msra.mxu0 0
    %333 = vmatprep.subr.bf16.mxu0 0
    %334 = vmatpush2.bf16.msra.mxu0 0
    %335 = vmatprep.subr.bf16.mxu0 0
    %336 = vmatpush2.bf16.msra.mxu0 0
    %337 = vmatprep.subr.bf16.mxu0 0
    %338 = vmatpush2.bf16.msra.mxu0 0
    %339 = vmatprep.mubr.bf16.mxu0 0
    %340 = vmatmul.mubr.bf16.gmra.mxu0 %v305
    %v341 = vpop.f32.mrf.mxu0
    %v342 = vadd.f32 %v291, %v341
    %v343 = vpop.f32.mrf.mxu0
    %v344 = vpop.f32.mrf.mxu0
    %v345 = vadd.f32 %v291, %v344
    %v346 = vpop.f32.mrf.mxu0
    %347 = vdwg.mxu0
    %v348 = vpack.c.bf16 %v345, %v342
    %350 = vrot.lane.b32.xlu0 %v348, 96
    %v351 = vpop.permute.xlu0 %350
    %v353 = vsel %vm212, %v348, 0
    %v356 = vsel %vm212, %v351, 0
    %358 = vmatprep.subr.bf16.mxu0 0
    %359 = vmatpush1.bf16.xpose.msra.mxu0 0
    %360 = vmatprep.subr.bf16.mxu0 0
    %361 = vmatpush1.bf16.xpose.msra.mxu0 0
    %362 = vmatprep.subr.bf16.mxu0 0
    %363 = vmatpush1.bf16.xpose.msra.mxu0 0
    %364 = vmatprep.subr.bf16.mxu0 0
    %365 = vmatpush1.bf16.xpose.msra.mxu0 0
    %366 = vmatprep.subr.bf16.mxu0 0
    %367 = vmatpush1.bf16.xpose.msra.mxu0 0
    %368 = vmatprep.subr.bf16.mxu0 0
    %369 = vmatpush1.bf16.xpose.msra.mxu0 0
    %370 = vmatprep.subr.bf16.mxu0 0
    %371 = vmatpush1.bf16.xpose.msra.mxu0 0
    %372 = vmatprep.subr.bf16.mxu0 0
    %373 = vmatpush1.bf16.xpose.msra.mxu0 %v356
    %374 = vmatprep.subr.bf16.mxu0 0
    %375 = vmatpush2.bf16.xpose.msra.mxu0 0
    %376 = vmatprep.subr.bf16.mxu0 0
    %377 = vmatpush2.bf16.xpose.msra.mxu0 0
    %378 = vmatprep.subr.bf16.mxu0 0
    %379 = vmatpush2.bf16.xpose.msra.mxu0 0
    %380 = vmatprep.subr.bf16.mxu0 0
    %381 = vmatpush2.bf16.xpose.msra.mxu0 0
    %382 = vmatprep.subr.bf16.mxu0 0
    %383 = vmatpush2.bf16.xpose.msra.mxu0 0
    %384 = vmatprep.subr.bf16.mxu0 0
    %385 = vmatpush2.bf16.xpose.msra.mxu0 0
    %386 = vmatprep.subr.bf16.mxu0 0
    %387 = vmatpush2.bf16.xpose.msra.mxu0 0
    %388 = vmatprep.subr.bf16.mxu0 0
    %389 = vmatpush2.bf16.xpose.msra.mxu0 0
    %390 = vmatprep.mubr.bf16.mxu0 0
    %391 = vmatmul.mubr.bf16.gmra.mxu0 %v353
    %v392 = vpop.f32.mrf.mxu0
    %v393 = vadd.f32 %v276, %v392
    %v394 = vpop.f32.mrf.mxu0
    %v395 = vpop.f32.mrf.mxu0
    %v396 = vadd.f32 %v277, %v395
    %v397 = vpop.f32.mrf.mxu0
    %398 = vdwg.mxu0
    %vm399 = vcmask 130048
    %v400 = vsel %vm399, %v393, -inf
    %401 = vmax.xlane.f32.xlu0 %v400
    %v402 = vpop.xlane.xlu0 %401
    %v403 = vsel %vm399, %v396, -inf
    %404 = vmax.xlane.f32.xlu0 %v403
    %v405 = vpop.xlane.xlu0 %404
    %v406 = vsub.f32 %v393, %v402
    %v407 = vsub.f32 %v396, %v405
    %v408 = vmul.f32 %v406, 1.442695
    %v409 = vpow.pop %v408
    %v410 = vmul.f32 %v407, 1.442695
    %v411 = vpow.pop %v410
    %v412 = vsel %vm399, %v409, 0.0
    %413 = vadd.xlane.f32.xlu0 %v412
    %v414 = vpop.xlane.xlu0 %413
    %v415 = vsel %vm399, %v411, 0.0
    %416 = vadd.xlane.f32.xlu0 %v415
    %v417 = vpop.xlane.xlu0 %416
    %v418 = vrcp.pop %v414
    %v419 = vrcp.pop %v417
    %v420 = vmul.f32 %v409, %v418
    %v421 = vmul.f32 %v411, %v419
    %v422 = vpack.c.bf16 %v421, %v420
    %423 = vrot.lane.b32.xlu0 %v348, 64
    %v424 = vpop.permute.xlu0 %423
    %v427 = vsel %vm399, %v422, 0
    %429 = vmatprep.subr.bf16.mxu0 0
    %430 = vmatpush1.bf16.msra.mxu0 0
    %431 = vmatprep.subr.bf16.mxu0 0
    %432 = vmatpush1.bf16.msra.mxu0 0
    %433 = vmatprep.subr.bf16.mxu0 0
    %434 = vmatpush1.bf16.msra.mxu0 0
    %435 = vmatprep.subr.bf16.mxu0 0
    %436 = vmatpush1.bf16.msra.mxu0 0
    %437 = vmatprep.subr.bf16.mxu0 0
    %438 = vmatpush1.bf16.msra.mxu0 0
    %439 = vmatprep.subr.bf16.mxu0 0
    %440 = vmatpush1.bf16.msra.mxu0 0
    %441 = vmatprep.subr.bf16.mxu0 0
    %442 = vmatpush1.bf16.msra.mxu0 0
    %443 = vmatprep.subr.bf16.mxu0 0
    %444 = vmatpush1.bf16.msra.mxu0 %v424
    %445 = vmatprep.subr.bf16.mxu0 0
    %446 = vmatpush2.bf16.msra.mxu0 0
    %447 = vmatprep.subr.bf16.mxu0 0
    %448 = vmatpush2.bf16.msra.mxu0 0
    %449 = vmatprep.subr.bf16.mxu0 0
    %450 = vmatpush2.bf16.msra.mxu0 0
    %451 = vmatprep.subr.bf16.mxu0 0
    %452 = vmatpush2.bf16.msra.mxu0 0
    %453 = vmatprep.subr.bf16.mxu0 0
    %454 = vmatpush2.bf16.msra.mxu0 0
    %455 = vmatprep.subr.bf16.mxu0 0
    %456 = vmatpush2.bf16.msra.mxu0 0
    %457 = vmatprep.subr.bf16.mxu0 0
    %458 = vmatpush2.bf16.msra.mxu0 0
    %459 = vmatprep.subr.bf16.mxu0 0
    %460 = vmatpush2.bf16.msra.mxu0 0
    %461 = vmatprep.mubr.bf16.mxu0 0
    %462 = vmatmul.mubr.bf16.gmra.mxu0 %v427
    %v463 = vpop.f32.mrf.mxu0
    %v464 = vadd.f32 0.0, %v463
    %v465 = vpop.f32.mrf.mxu0
    %v466 = vpop.f32.mrf.mxu0
    %v467 = vadd.f32 0.0, %v466
    %v468 = vpop.f32.mrf.mxu0
    %469 = vdwg.mxu0
    %470 = vrot.lane.b32.xlu0 %v348, 120
    %v471 = vpop.permute.xlu0 %470
    %472 = vrot.lane.b32.xlu0 %v348, 88
    %v473 = vpop.permute.xlu0 %472
    %v475 = vsel %vm212, %v471, 0
    %v478 = vsel %vm212, %v473, 0
    %480 = vmatprep.subr.bf16.mxu0 0
    %481 = vmatpush1.bf16.xpose.msra.mxu0 0
    %482 = vmatprep.subr.bf16.mxu0 0
    %483 = vmatpush1.bf16.xpose.msra.mxu0 0
    %484 = vmatprep.subr.bf16.mxu0 0
    %485 = vmatpush1.bf16.xpose.msra.mxu0 0
    %486 = vmatprep.subr.bf16.mxu0 0
    %487 = vmatpush1.bf16.xpose.msra.mxu0 0
    %488 = vmatprep.subr.bf16.mxu0 0
    %489 = vmatpush1.bf16.xpose.msra.mxu0 0
    %490 = vmatprep.subr.bf16.mxu0 0
    %491 = vmatpush1.bf16.xpose.msra.mxu0 0
    %492 = vmatprep.subr.bf16.mxu0 0
    %493 = vmatpush1.bf16.xpose.msra.mxu0 0
    %494 = vmatprep.subr.bf16.mxu0 0
    %495 = vmatpush1.bf16.xpose.msra.mxu0 %v478
    %496 = vmatprep.subr.bf16.mxu0 0
    %497 = vmatpush2.bf16.xpose.msra.mxu0 0
    %498 = vmatprep.subr.bf16.mxu0 0
    %499 = vmatpush2.bf16.xpose.msra.mxu0 0
    %500 = vmatprep.subr.bf16.mxu0 0
    %501 = vmatpush2.bf16.xpose.msra.mxu0 0
    %502 = vmatprep.subr.bf16.mxu0 0
    %503 = vmatpush2.bf16.xpose.msra.mxu0 0
    %504 = vmatprep.subr.bf16.mxu0 0
    %505 = vmatpush2.bf16.xpose.msra.mxu0 0
    %506 = vmatprep.subr.bf16.mxu0 0
    %507 = vmatpush2.bf16.xpose.msra.mxu0 0
    %508 = vmatprep.subr.bf16.mxu0 0
    %509 = vmatpush2.bf16.xpose.msra.mxu0 0
    %510 = vmatprep.subr.bf16.mxu0 0
    %511 = vmatpush2.bf16.xpose.msra.mxu0 0
    %512 = vmatprep.mubr.bf16.mxu0 0
    %513 = vmatmul.mubr.bf16.gmra.mxu0 %v475
    %v514 = vpop.f32.mrf.mxu0
    %v515 = vadd.f32 %v276, %v514
    %v516 = vpop.f32.mrf.mxu0
    %v517 = vpop.f32.mrf.mxu0
    %v518 = vadd.f32 %v277, %v517
    %v519 = vpop.f32.mrf.mxu0
    %520 = vdwg.mxu0
    %v521 = vsel %vm399, %v515, -inf
    %522 = vmax.xlane.f32.xlu0 %v521
    %v523 = vpop.xlane.xlu0 %522
    %v524 = vsel %vm399, %v518, -inf
    %525 = vmax.xlane.f32.xlu0 %v524
    %v526 = vpop.xlane.xlu0 %525
    %v527 = vsub.f32 %v515, %v523
    %v528 = vsub.f32 %v518, %v526
    %v529 = vmul.f32 %v527, 1.442695
    %v530 = vpow.pop %v529
    %v531 = vmul.f32 %v528, 1.442695
    %v532 = vpow.pop %v531
    %v533 = vsel %vm399, %v530, 0.0
    %534 = vadd.xlane.f32.xlu0 %v533
    %v535 = vpop.xlane.xlu0 %534
    %v536 = vsel %vm399, %v532, 0.0
    %537 = vadd.xlane.f32.xlu0 %v536
    %v538 = vpop.xlane.xlu0 %537
    %v539 = vrcp.pop %v535
    %v540 = vrcp.pop %v538
    %v541 = vmul.f32 %v530, %v539
    %v542 = vmul.f32 %v532, %v540
    %v543 = vpack.c.bf16 %v542, %v541
    %544 = vrot.lane.b32.xlu0 %v348, 56
    %v545 = vpop.permute.xlu0 %544
    %v548 = vsel %vm399, %v543, 0
    %550 = vmatprep.subr.bf16.mxu0 0
    %551 = vmatpush1.bf16.msra.mxu0 0
    %552 = vmatprep.subr.bf16.mxu0 0
    %553 = vmatpush1.bf16.msra.mxu0 0
    %554 = vmatprep.subr.bf16.mxu0 0
    %555 = vmatpush1.bf16.msra.mxu0 0
    %556 = vmatprep.subr.bf16.mxu0 0
    %557 = vmatpush1.bf16.msra.mxu0 0
    %558 = vmatprep.subr.bf16.mxu0 0
    %559 = vmatpush1.bf16.msra.mxu0 0
    %560 = vmatprep.subr.bf16.mxu0 0
    %561 = vmatpush1.bf16.msra.mxu0 0
    %562 = vmatprep.subr.bf16.mxu0 0
    %563 = vmatpush1.bf16.msra.mxu0 0
    %564 = vmatprep.subr.bf16.mxu0 0
    %565 = vmatpush1.bf16.msra.mxu0 %v545
    %566 = vmatprep.subr.bf16.mxu0 0
    %567 = vmatpush2.bf16.msra.mxu0 0
    %568 = vmatprep.subr.bf16.mxu0 0
    %569 = vmatpush2.bf16.msra.mxu0 0
    %570 = vmatprep.subr.bf16.mxu0 0
    %571 = vmatpush2.bf16.msra.mxu0 0
    %572 = vmatprep.subr.bf16.mxu0 0
    %573 = vmatpush2.bf16.msra.mxu0 0
    %574 = vmatprep.subr.bf16.mxu0 0
    %575 = vmatpush2.bf16.msra.mxu0 0
    %576 = vmatprep.subr.bf16.mxu0 0
    %577 = vmatpush2.bf16.msra.mxu0 0
    %578 = vmatprep.subr.bf16.mxu0 0
    %579 = vmatpush2.bf16.msra.mxu0 0
    %580 = vmatprep.subr.bf16.mxu0 0
    %581 = vmatpush2.bf16.msra.mxu0 0
    %582 = vmatprep.mubr.bf16.mxu0 0
    %583 = vmatmul.mubr.bf16.gmra.mxu0 %v548
    %v584 = vpop.f32.mrf.mxu0
    %v585 = vadd.f32 0.0, %v584
    %v586 = vpop.f32.mrf.mxu0
    %v587 = vpop.f32.mrf.mxu0
    %v588 = vadd.f32 0.0, %v587
    %v589 = vpop.f32.mrf.mxu0
    %590 = vdwg.mxu0
    %591 = vrot.lane.b32.xlu0 %v348, 112
    %v592 = vpop.permute.xlu0 %591
    %593 = vrot.lane.b32.xlu0 %v348, 80
    %v594 = vpop.permute.xlu0 %593
    %v596 = vsel %vm212, %v592, 0
    %v599 = vsel %vm212, %v594, 0
    %601 = vmatprep.subr.bf16.mxu0 0
    %602 = vmatpush1.bf16.xpose.msra.mxu0 0
    %603 = vmatprep.subr.bf16.mxu0 0
    %604 = vmatpush1.bf16.xpose.msra.mxu0 0
    %605 = vmatprep.subr.bf16.mxu0 0
    %606 = vmatpush1.bf16.xpose.msra.mxu0 0
    %607 = vmatprep.subr.bf16.mxu0 0
    %608 = vmatpush1.bf16.xpose.msra.mxu0 0
    %609 = vmatprep.subr.bf16.mxu0 0
    %610 = vmatpush1.bf16.xpose.msra.mxu0 0
    %611 = vmatprep.subr.bf16.mxu0 0
    %612 = vmatpush1.bf16.xpose.msra.mxu0 0
    %613 = vmatprep.subr.bf16.mxu0 0
    %614 = vmatpush1.bf16.xpose.msra.mxu0 0
    %615 = vmatprep.subr.bf16.mxu0 0
    %616 = vmatpush1.bf16.xpose.msra.mxu0 %v599
    %617 = vmatprep.subr.bf16.mxu0 0
    %618 = vmatpush2.bf16.xpose.msra.mxu0 0
    %619 = vmatprep.subr.bf16.mxu0 0
    %620 = vmatpush2.bf16.xpose.msra.mxu0 0
    %621 = vmatprep.subr.bf16.mxu0 0
    %622 = vmatpush2.bf16.xpose.msra.mxu0 0
    %623 = vmatprep.subr.bf16.mxu0 0
    %624 = vmatpush2.bf16.xpose.msra.mxu0 0
    %625 = vmatprep.subr.bf16.mxu0 0
    %626 = vmatpush2.bf16.xpose.msra.mxu0 0
    %627 = vmatprep.subr.bf16.mxu0 0
    %628 = vmatpush2.bf16.xpose.msra.mxu0 0
    %629 = vmatprep.subr.bf16.mxu0 0
    %630 = vmatpush2.bf16.xpose.msra.mxu0 0
    %631 = vmatprep.subr.bf16.mxu0 0
    %632 = vmatpush2.bf16.xpose.msra.mxu0 0
    %633 = vmatprep.mubr.bf16.mxu0 0
    %634 = vmatmul.mubr.bf16.gmra.mxu0 %v596
    %v635 = vpop.f32.mrf.mxu0
    %v636 = vadd.f32 %v276, %v635
    %v637 = vpop.f32.mrf.mxu0
    %v638 = vpop.f32.mrf.mxu0
    %v639 = vadd.f32 %v277, %v638
    %v640 = vpop.f32.mrf.mxu0
    %641 = vdwg.mxu0
    %v642 = vsel %vm399, %v636, -inf
    %643 = vmax.xlane.f32.xlu0 %v642
    %v644 = vpop.xlane.xlu0 %643
    %v645 = vsel %vm399, %v639, -inf
    %646 = vmax.xlane.f32.xlu0 %v645
    %v647 = vpop.xlane.xlu0 %646
    %v648 = vsub.f32 %v636, %v644
    %v649 = vsub.f32 %v639, %v647
    %v650 = vmul.f32 %v648, 1.442695
    %v651 = vpow.pop %v650
    %v652 = vmul.f32 %v649, 1.442695
    %v653 = vpow.pop %v652
    %v654 = vsel %vm399, %v651, 0.0
    %655 = vadd.xlane.f32.xlu0 %v654
    %v656 = vpop.xlane.xlu0 %655
    %v657 = vsel %vm399, %v653, 0.0
    %658 = vadd.xlane.f32.xlu0 %v657
    %v659 = vpop.xlane.xlu0 %658
    %v660 = vrcp.pop %v656
    %v661 = vrcp.pop %v659
    %v662 = vmul.f32 %v651, %v660
    %v663 = vmul.f32 %v653, %v661
    %v664 = vpack.c.bf16 %v663, %v662
    %665 = vrot.lane.b32.xlu0 %v348, 48
    %v666 = vpop.permute.xlu0 %665
    %v669 = vsel %vm399, %v664, 0
    %671 = vmatprep.subr.bf16.mxu0 0
    %672 = vmatpush1.bf16.msra.mxu0 0
    %673 = vmatprep.subr.bf16.mxu0 0
    %674 = vmatpush1.bf16.msra.mxu0 0
    %675 = vmatprep.subr.bf16.mxu0 0
    %676 = vmatpush1.bf16.msra.mxu0 0
    %677 = vmatprep.subr.bf16.mxu0 0
    %678 = vmatpush1.bf16.msra.mxu0 0
    %679 = vmatprep.subr.bf16.mxu0 0
    %680 = vmatpush1.bf16.msra.mxu0 0
    %681 = vmatprep.subr.bf16.mxu0 0
    %682 = vmatpush1.bf16.msra.mxu0 0
    %683 = vmatprep.subr.bf16.mxu0 0
    %684 = vmatpush1.bf16.msra.mxu0 0
    %685 = vmatprep.subr.bf16.mxu0 0
    %686 = vmatpush1.bf16.msra.mxu0 %v666
    %687 = vmatprep.subr.bf16.mxu0 0
    %688 = vmatpush2.bf16.msra.mxu0 0
    %689 = vmatprep.subr.bf16.mxu0 0
    %690 = vmatpush2.bf16.msra.mxu0 0
    %691 = vmatprep.subr.bf16.mxu0 0
    %692 = vmatpush2.bf16.msra.mxu0 0
    %693 = vmatprep.subr.bf16.mxu0 0
    %694 = vmatpush2.bf16.msra.mxu0 0
    %695 = vmatprep.subr.bf16.mxu0 0
    %696 = vmatpush2.bf16.msra.mxu0 0
    %697 = vmatprep.subr.bf16.mxu0 0
    %698 = vmatpush2.bf16.msra.mxu0 0
    %699 = vmatprep.subr.bf16.mxu0 0
    %700 = vmatpush2.bf16.msra.mxu0 0
    %701 = vmatprep.subr.bf16.mxu0 0
    %702 = vmatpush2.bf16.msra.mxu0 0
    %703 = vmatprep.mubr.bf16.mxu0 0
    %704 = vmatmul.mubr.bf16.gmra.mxu0 %v669
    %v705 = vpop.f32.mrf.mxu0
    %v706 = vadd.f32 0.0, %v705
    %v707 = vpop.f32.mrf.mxu0
    %v708 = vpop.f32.mrf.mxu0
    %v709 = vadd.f32 0.0, %v708
    %v710 = vpop.f32.mrf.mxu0
    %711 = vdwg.mxu0
    %712 = vrot.lane.b32.xlu0 %v348, 104
    %v713 = vpop.permute.xlu0 %712
    %714 = vrot.lane.b32.xlu0 %v348, 72
    %v715 = vpop.permute.xlu0 %714
    %v717 = vsel %vm212, %v713, 0
    %v720 = vsel %vm212, %v715, 0
    %722 = vmatprep.subr.bf16.mxu0 0
    %723 = vmatpush1.bf16.xpose.msra.mxu0 0
    %724 = vmatprep.subr.bf16.mxu0 0
    %725 = vmatpush1.bf16.xpose.msra.mxu0 0
    %726 = vmatprep.subr.bf16.mxu0 0
    %727 = vmatpush1.bf16.xpose.msra.mxu0 0
    %728 = vmatprep.subr.bf16.mxu0 0
    %729 = vmatpush1.bf16.xpose.msra.mxu0 0
    %730 = vmatprep.subr.bf16.mxu0 0
    %731 = vmatpush1.bf16.xpose.msra.mxu0 0
    %732 = vmatprep.subr.bf16.mxu0 0
    %733 = vmatpush1.bf16.xpose.msra.mxu0 0
    %734 = vmatprep.subr.bf16.mxu0 0
    %735 = vmatpush1.bf16.xpose.msra.mxu0 0
    %736 = vmatprep.subr.bf16.mxu0 0
    %737 = vmatpush1.bf16.xpose.msra.mxu0 %v720
    %738 = vmatprep.subr.bf16.mxu0 0
    %739 = vmatpush2.bf16.xpose.msra.mxu0 0
    %740 = vmatprep.subr.bf16.mxu0 0
    %741 = vmatpush2.bf16.xpose.msra.mxu0 0
    %742 = vmatprep.subr.bf16.mxu0 0
    %743 = vmatpush2.bf16.xpose.msra.mxu0 0
    %744 = vmatprep.subr.bf16.mxu0 0
    %745 = vmatpush2.bf16.xpose.msra.mxu0 0
    %746 = vmatprep.subr.bf16.mxu0 0
    %747 = vmatpush2.bf16.xpose.msra.mxu0 0
    %748 = vmatprep.subr.bf16.mxu0 0
    %749 = vmatpush2.bf16.xpose.msra.mxu0 0
    %750 = vmatprep.subr.bf16.mxu0 0
    %751 = vmatpush2.bf16.xpose.msra.mxu0 0
    %752 = vmatprep.subr.bf16.mxu0 0
    %753 = vmatpush2.bf16.xpose.msra.mxu0 0
    %754 = vmatprep.mubr.bf16.mxu0 0
    %755 = vmatmul.mubr.bf16.gmra.mxu0 %v717
    %v756 = vpop.f32.mrf.mxu0
    %v757 = vadd.f32 %v276, %v756
    %v758 = vpop.f32.mrf.mxu0
    %v759 = vpop.f32.mrf.mxu0
    %v760 = vadd.f32 %v277, %v759
    %v761 = vpop.f32.mrf.mxu0
    %762 = vdwg.mxu0
    %v763 = vsel %vm399, %v757, -inf
    %764 = vmax.xlane.f32.xlu0 %v763
    %v765 = vpop.xlane.xlu0 %764
    %v766 = vsel %vm399, %v760, -inf
    %767 = vmax.xlane.f32.xlu0 %v766
    %v768 = vpop.xlane.xlu0 %767
    %v769 = vsub.f32 %v757, %v765
    %v770 = vsub.f32 %v760, %v768
    %v771 = vmul.f32 %v769, 1.442695
    %v772 = vpow.pop %v771
    %v773 = vmul.f32 %v770, 1.442695
    %v774 = vpow.pop %v773
    %v775 = vsel %vm399, %v772, 0.0
    %776 = vadd.xlane.f32.xlu0 %v775
    %v777 = vpop.xlane.xlu0 %776
    %v778 = vsel %vm399, %v774, 0.0
    %779 = vadd.xlane.f32.xlu0 %v778
    %v780 = vpop.xlane.xlu0 %779
    %v781 = vrcp.pop %v777
    %v782 = vrcp.pop %v780
    %v783 = vmul.f32 %v772, %v781
    %v784 = vmul.f32 %v774, %v782
    %v785 = vpack.c.bf16 %v784, %v783
    %786 = vrot.lane.b32.xlu0 %v348, 40
    %v787 = vpop.permute.xlu0 %786
    %v790 = vsel %vm399, %v785, 0
    %792 = vmatprep.subr.bf16.mxu0 0
    %793 = vmatpush1.bf16.msra.mxu0 0
    %794 = vmatprep.subr.bf16.mxu0 0
    %795 = vmatpush1.bf16.msra.mxu0 0
    %796 = vmatprep.subr.bf16.mxu0 0
    %797 = vmatpush1.bf16.msra.mxu0 0
    %798 = vmatprep.subr.bf16.mxu0 0
    %799 = vmatpush1.bf16.msra.mxu0 0
    %800 = vmatprep.subr.bf16.mxu0 0
    %801 = vmatpush1.bf16.msra.mxu0 0
    %802 = vmatprep.subr.bf16.mxu0 0
    %803 = vmatpush1.bf16.msra.mxu0 0
    %804 = vmatprep.subr.bf16.mxu0 0
    %805 = vmatpush1.bf16.msra.mxu0 0
    %806 = vmatprep.subr.bf16.mxu0 0
    %807 = vmatpush1.bf16.msra.mxu0 %v787
    %808 = vmatprep.subr.bf16.mxu0 0
    %809 = vmatpush2.bf16.msra.mxu0 0
    %810 = vmatprep.subr.bf16.mxu0 0
    %811 = vmatpush2.bf16.msra.mxu0 0
    %812 = vmatprep.subr.bf16.mxu0 0
    %813 = vmatpush2.bf16.msra.mxu0 0
    %814 = vmatprep.subr.bf16.mxu0 0
    %815 = vmatpush2.bf16.msra.mxu0 0
    %816 = vmatprep.subr.bf16.mxu0 0
    %817 = vmatpush2.bf16.msra.mxu0 0
    %818 = vmatprep.subr.bf16.mxu0 0
    %819 = vmatpush2.bf16.msra.mxu0 0
    %820 = vmatprep.subr.bf16.mxu0 0
    %821 = vmatpush2.bf16.msra.mxu0 0
    %822 = vmatprep.subr.bf16.mxu0 0
    %823 = vmatpush2.bf16.msra.mxu0 0
    %824 = vmatprep.mubr.bf16.mxu0 0
    %825 = vmatmul.mubr.bf16.gmra.mxu0 %v790
    %v826 = vpop.f32.mrf.mxu0
    %v827 = vadd.f32 0.0, %v826
    %v828 = vpop.f32.mrf.mxu0
    %v829 = vpop.f32.mrf.mxu0
    %v830 = vadd.f32 0.0, %v829
    %v831 = vpop.f32.mrf.mxu0
    %832 = vdwg.mxu0
    %835 = vrot.lane.b32.xlu0 %v585, 8
    %v836 = vpop.permute.xlu0 %835
    %837 = vrot.lane.b32.xlu0 %v588, 8
    %v838 = vpop.permute.xlu0 %837
    %843 = vrot.lane.b32.xlu0 %v706, 16
    %v844 = vpop.permute.xlu0 %843
    %845 = vrot.lane.b32.xlu0 %v709, 16
    %v846 = vpop.permute.xlu0 %845
    %851 = vrot.lane.b32.xlu0 %v827, 24
    %v852 = vpop.permute.xlu0 %851
    %853 = vrot.lane.b32.xlu0 %v830, 24
    %v854 = vpop.permute.xlu0 %853
    %v857 = vsel %vm212, %v464, %v836
    %v858 = vsel %vm212, %v467, %v838
    %v859 = vsel %vm399, %v857, %v844
    %v860 = vsel %vm399, %v858, %v846
    %vm861 = vcmask 195584
    %v862 = vsel %vm861, %v859, %v852
    %v863 = vsel %vm861, %v860, %v854
    %v864 = vpack.c.bf16 %v863, %v862
    %v865 = vld [vmem:[#allocation2 + $0x48] sm:$0xf]
    %v866 = vld [vmem:[#allocation2 + $0x4c] sm:$0xf]
    %v867 = vld [vmem:[#allocation2 + $0x50] sm:$0xf]
    %v868 = vld [vmem:[#allocation2 + $0x54] sm:$0xf]
    %v869 = vld [vmem:[%s3 + $0x2] sm:$0x1]
    %v870 = vlaneseq
    %v871 = vshrl.u32 %v870, 7
    %v872 = vsub.s32 0, %v871
    %v873 = vrot.slane %v869, %v872
    %v878 = vunpack.c.l.b16 %v865
    %v879 = vunpack.c.l.b16 %v866
    %v880 = vunpack.c.l.b16 %v867
    %v881 = vunpack.c.l.b16 %v868
    %v882 = vpack.c.b16 %v879, %v878
    %v883 = vpack.c.b16 %v881, %v880
    %v887 = vsel %vm80, %v864, 0
    %889 = vmatprep.subr.bf16.mxu0 0
    %890 = vmatpush1.bf16.msra.mxu0 0
    %891 = vmatprep.subr.bf16.mxu0 0
    %892 = vmatpush1.bf16.msra.mxu0 0
    %893 = vmatprep.subr.bf16.mxu0 0
    %894 = vmatpush1.bf16.msra.mxu0 0
    %895 = vmatprep.subr.bf16.mxu0 0
    %896 = vmatpush1.bf16.msra.mxu0 0
    %897 = vmatprep.subr.bf16.mxu0 0
    %898 = vmatpush1.bf16.msra.mxu0 0
    %899 = vmatprep.subr.bf16.mxu0 0
    %900 = vmatpush1.bf16.msra.mxu0 0
    %901 = vmatprep.subr.bf16.mxu0 0
    %902 = vmatpush1.bf16.msra.mxu0 %v883
    %903 = vmatprep.subr.bf16.mxu0 0
    %904 = vmatpush1.bf16.msra.mxu0 %v882
    %905 = vmatprep.subr.bf16.mxu0 0
    %906 = vmatpush2.bf16.msra.mxu0 0
    %907 = vmatprep.subr.bf16.mxu0 0
    %908 = vmatpush2.bf16.msra.mxu0 0
    %909 = vmatprep.subr.bf16.mxu0 0
    %910 = vmatpush2.bf16.msra.mxu0 0
    %911 = vmatprep.subr.bf16.mxu0 0
    %912 = vmatpush2.bf16.msra.mxu0 0
    %913 = vmatprep.subr.bf16.mxu0 0
    %914 = vmatpush2.bf16.msra.mxu0 0
    %915 = vmatprep.subr.bf16.mxu0 0
    %916 = vmatpush2.bf16.msra.mxu0 0
    %917 = vmatprep.subr.bf16.mxu0 0
    %918 = vmatpush2.bf16.msra.mxu0 0
    %919 = vmatprep.subr.bf16.mxu0 0
    %920 = vmatpush2.bf16.msra.mxu0 0
    %921 = vmatprep.mubr.bf16.mxu0 0
    %922 = vmatmul.mubr.bf16.gmra.mxu0 %v887
    %v923 = vpop.f32.mrf.mxu0
    %v924 = vadd.f32 %v873, %v923
    %v925 = vpop.f32.mrf.mxu0
    %v926 = vpop.f32.mrf.mxu0
    %v927 = vadd.f32 %v873, %v926
    %v928 = vpop.f32.mrf.mxu0
    %929 = vdwg.mxu0
    %v930 = vadd.f32 %v272, %v924
    %v931 = vadd.f32 %v273, %v927
    %v932 = vld [vmem:[%s3 + $0x3] sm:$0x1]
    %v933 = vld [vmem:[%s3 + $0x4] sm:$0x1]
    %v934 = vsel %vm80, %v930, 0.0
    %935 = vadd.xlane.f32.xlu0 %v934
    %v936 = vpop.xlane.xlu0 %935
    %v937 = vsel %vm80, %v931, 0.0
    %938 = vadd.xlane.f32.xlu0 %v937
    %v939 = vpop.xlane.xlu0 %938
    %v940 = vrcp.pop 32.0
    %v941 = vmul.f32 %v936, %v940
    %v942 = vmul.f32 %v939, %v940
    %v943 = vsub.f32 %v930, %v941
    %v944 = vsub.f32 %v931, %v942
    %v945 = vmul.f32 %v943, %v943
    %v946 = vmul.f32 %v944, %v944
    %v947 = vsel %vm80, %v945, 0.0
    %948 = vadd.xlane.f32.xlu0 %v947
    %v949 = vpop.xlane.xlu0 %948
    %v950 = vsel %vm80, %v946, 0.0
    %951 = vadd.xlane.f32.xlu0 %v950
    %v952 = vpop.xlane.xlu0 %951
    %v953 = vmul.f32 %v949, %v940
    %v954 = vmul.f32 %v952, %v940
    %v955 = vadd.f32 %v953, 1e-05
    %v956 = vadd.f32 %v954, 1e-05
    %v957 = vrsqrt.pop %v955
    %v958 = vrsqrt.pop %v956
    %v959 = vmul.f32 %v943, %v957
    %v960 = vmul.f32 %v944, %v958
    %v961 = vlaneseq
    %v962 = vshrl.u32 %v961, 7
    %v963 = vsub.s32 0, %v962
    %v964 = vrot.slane %v932, %v963
    %v965 = vmul.f32 %v959, %v964
    %v966 = vmul.f32 %v960, %v964
    %v967 = vlaneseq
    %v968 = vshrl.u32 %v967, 7
    %v969 = vsub.s32 0, %v968
    %v970 = vrot.slane %v933, %v969
    %v971 = vadd.f32 %v965, %v970
    %v972 = vadd.f32 %v966, %v970
    %v973 = vpack.c.bf16 %v972, %v971
    %v974 = vld [vmem:[#allocation2 + $0x58] sm:$0xf]
    %v975 = vld [vmem:[#allocation2 + $0x5c] sm:$0xf]
    %v976 = vld [vmem:[#allocation2 + $0x60] sm:$0xf]
    %v977 = vld [vmem:[#allocation2 + $0x64] sm:$0xf]
    %v978 = vld [vmem:[%s3 + $0x5] sm:$0x1]
    %v979 = vlaneseq
    %v980 = vshrl.u32 %v979, 7
    %v981 = vsub.s32 0, %v980
    %v982 = vrot.slane %v978, %v981
    %v987 = vunpack.c.l.b16 %v974
    %v988 = vunpack.c.l.b16 %v975
    %v989 = vunpack.c.l.b16 %v976
    %v990 = vunpack.c.l.b16 %v977
    %v991 = vpack.c.b16 %v988, %v987
    %v992 = vpack.c.b16 %v990, %v989
    %v996 = vsel %vm80, %v973, 0
    %998 = vmatprep.subr.bf16.mxu0 0
    %999 = vmatpush1.bf16.msra.mxu0 0
    %1000 = vmatprep.subr.bf16.mxu0 0
    %1001 = vmatpush1.bf16.msra.mxu0 0
    %1002 = vmatprep.subr.bf16.mxu0 0
    %1003 = vmatpush1.bf16.msra.mxu0 0
    %1004 = vmatprep.subr.bf16.mxu0 0
    %1005 = vmatpush1.bf16.msra.mxu0 0
    %1006 = vmatprep.subr.bf16.mxu0 0
    %1007 = vmatpush1.bf16.msra.mxu0 0
    %1008 = vmatprep.subr.bf16.mxu0 0
    %1009 = vmatpush1.bf16.msra.mxu0 0
    %1010 = vmatprep.subr.bf16.mxu0 0
    %1011 = vmatpush1.bf16.msra.mxu0 %v992
    %1012 = vmatprep.subr.bf16.mxu0 0
    %1013 = vmatpush1.bf16.msra.mxu0 %v991
    %1014 = vmatprep.subr.bf16.mxu0 0
    %1015 = vmatpush2.bf16.msra.mxu0 0
    %1016 = vmatprep.subr.bf16.mxu0 0
    %1017 = vmatpush2.bf16.msra.mxu0 0
    %1018 = vmatprep.subr.bf16.mxu0 0
    %1019 = vmatpush2.bf16.msra.mxu0 0
    %1020 = vmatprep.subr.bf16.mxu0 0
    %1021 = vmatpush2.bf16.msra.mxu0 0
    %1022 = vmatprep.subr.bf16.mxu0 0
    %1023 = vmatpush2.bf16.msra.mxu0 0
    %1024 = vmatprep.subr.bf16.mxu0 0
    %1025 = vmatpush2.bf16.msra.mxu0 0
    %1026 = vmatprep.subr.bf16.mxu0 0
    %1027 = vmatpush2.bf16.msra.mxu0 0
    %1028 = vmatprep.subr.bf16.mxu0 0
    %1029 = vmatpush2.bf16.msra.mxu0 0
    %1030 = vmatprep.mubr.bf16.mxu0 0
    %1031 = vmatmul.mubr.bf16.gmra.mxu0 %v996
    %v1032 = vpop.f32.mrf.mxu0
    %v1033 = vadd.f32 %v982, %v1032
    %v1034 = vpop.f32.mrf.mxu0
    %v1035 = vpop.f32.mrf.mxu0
    %v1036 = vadd.f32 %v982, %v1035
    %v1037 = vpop.f32.mrf.mxu0
    %1038 = vdwg.mxu0
    %v1039 = vmax.f32 %v1033, 0.0
    %v1040 = vmax.f32 %v1036, 0.0
    %v1041 = vpack.c.bf16 %v1040, %v1039
    %v1042 = vld [vmem:[#allocation2 + $0x68] sm:$0xf]
    %v1043 = vld [vmem:[#allocation2 + $0x6c] sm:$0xf]
    %v1044 = vld [vmem:[#allocation2 + $0x70] sm:$0xf]
    %v1045 = vld [vmem:[#allocation2 + $0x74] sm:$0xf]
    %v1046 = vld [vmem:[#allocation2 + $0x78] sm:$0xf]
    %v1047 = vld [vmem:[#allocation2 + $0x7c] sm:$0xf]
    %v1048 = vld [vmem:[#allocation2 + $0x80] sm:$0xf]
    %v1049 = vld [vmem:[#allocation2 + $0x84] sm:$0xf]
    %v1050 = vld [vmem:[%s3 + $0x6] sm:$0x1]
    %v1051 = vlaneseq
    %v1052 = vshrl.u32 %v1051, 7
    %v1053 = vsub.s32 0, %v1052
    %v1054 = vrot.slane %v1050, %v1053
    %v1063 = vunpack.c.l.b16 %v1042
    %v1064 = vunpack.c.l.b16 %v1043
    %v1065 = vunpack.c.l.b16 %v1044
    %v1066 = vunpack.c.l.b16 %v1045
    %v1067 = vunpack.c.l.b16 %v1046
    %v1068 = vunpack.c.l.b16 %v1047
    %v1069 = vunpack.c.l.b16 %v1048
    %v1070 = vunpack.c.l.b16 %v1049
    %v1071 = vpack.c.b16 %v1064, %v1063
    %v1072 = vpack.c.b16 %v1066, %v1065
    %v1073 = vpack.c.b16 %v1068, %v1067
    %v1074 = vpack.c.b16 %v1070, %v1069
    %vm1079 = vcmask 523264
    %v1081 = vsel %vm1079, %v1041, 0
    %1083 = vmatprep.subr.bf16.mxu0 0
    %1084 = vmatpush1.bf16.msra.mxu0 0
    %1085 = vmatprep.subr.bf16.mxu0 0
    %1086 = vmatpush1.bf16.msra.mxu0 0
    %1087 = vmatprep.subr.bf16.mxu0 0
    %1088 = vmatpush1.bf16.msra.mxu0 0
    %1089 = vmatprep.subr.bf16.mxu0 0
    %1090 = vmatpush1.bf16.msra.mxu0 0
    %1091 = vmatprep.subr.bf16.mxu0 0
    %1092 = vmatpush1.bf16.msra.mxu0 %v1074
    %1093 = vmatprep.subr.bf16.mxu0 0
    %1094 = vmatpush1.bf16.msra.mxu0 %v1073
    %1095 = vmatprep.subr.bf16.mxu0 0
    %1096 = vmatpush1.bf16.msra.mxu0 %v1072
    %1097 = vmatprep.subr.bf16.mxu0 0
    %1098 = vmatpush1.bf16.msra.mxu0 %v1071
    %1099 = vmatprep.subr.bf16.mxu0 0
    %1100 = vmatpush2.bf16.msra.mxu0 0
    %1101 = vmatprep.subr.bf16.mxu0 0
    %1102 = vmatpush2.bf16.msra.mxu0 0
    %1103 = vmatprep.subr.bf16.mxu0 0
    %1104 = vmatpush2.bf16.msra.mxu0 0
    %1105 = vmatprep.subr.bf16.mxu0 0
    %1106 = vmatpush2.bf16.msra.mxu0 0
    %1107 = vmatprep.subr.bf16.mxu0 0
    %1108 = vmatpush2.bf16.msra.mxu0 0
    %1109 = vmatprep.subr.bf16.mxu0 0
    %1110 = vmatpush2.bf16.msra.mxu0 0
    %1111 = vmatprep.subr.bf16.mxu0 0
    %1112 = vmatpush2.bf16.msra.mxu0 0
    %1113 = vmatprep.subr.bf16.mxu0 0
    %1114 = vmatpush2.bf16.msra.mxu0 0
    %1115 = vmatprep.mubr.bf16.mxu0 0
    %1116 = vmatmul.mubr.bf16.gmra.mxu0 %v1081
    %v1117 = vpop.f32.mrf.mxu0
    %v1118 = vadd.f32 %v1054, %v1117
    %v1119 = vpop.f32.mrf.mxu0
    %v1120 = vpop.f32.mrf.mxu0
    %v1121 = vadd.f32 %v1054, %v1120
    %v1122 = vpop.f32.mrf.mxu0
    %1123 = vdwg.mxu0
    %v1124 = vadd.f32 %v971, %v1118
    %v1125 = vadd.f32 %v972, %v1121
    %v1126 = vld [vmem:[%s3 + $0x7] sm:$0x1]
    %v1127 = vld [vmem:[%s3 + $0x8] sm:$0x1]
    %v1128 = vsel %vm80, %v1124, 0.0
    %1129 = vadd.xlane.f32.xlu0 %v1128
    %v1130 = vpop.xlane.xlu0 %1129
    %v1131 = vsel %vm80, %v1125, 0.0
    %1132 = vadd.xlane.f32.xlu0 %v1131
    %v1133 = vpop.xlane.xlu0 %1132
    %v1134 = vmul.f32 %v1130, %v940
    %v1135 = vmul.f32 %v1133, %v940
    %v1136 = vsub.f32 %v1124, %v1134
    %v1137 = vsub.f32 %v1125, %v1135
    %v1138 = vmul.f32 %v1136, %v1136
    %v1139 = vmul.f32 %v1137, %v1137
    %v1140 = vsel %vm80, %v1138, 0.0
    %1141 = vadd.xlane.f32.xlu0 %v1140
    %v1142 = vpop.xlane.xlu0 %1141
    %v1143 = vsel %vm80, %v1139, 0.0
    %1144 = vadd.xlane.f32.xlu0 %v1143
    %v1145 = vpop.xlane.xlu0 %1144
    %v1146 = vmul.f32 %v1142, %v940
    %v1147 = vmul.f32 %v1145, %v940
    %v1148 = vadd.f32 %v1146, 1e-05
    %v1149 = vadd.f32 %v1147, 1e-05
    %v1150 = vrsqrt.pop %v1148
    %v1151 = vrsqrt.pop %v1149
    %v1152 = vmul.f32 %v1136, %v1150
    %v1153 = vmul.f32 %v1137, %v1151
    %v1154 = vlaneseq
    %v1155 = vshrl.u32 %v1154, 7
    %v1156 = vsub.s32 0, %v1155
    %v1157 = vrot.slane %v1126, %v1156
    %v1158 = vmul.f32 %v1152, %v1157
    %v1159 = vmul.f32 %v1153, %v1157
    %v1160 = vlaneseq
    %v1161 = vshrl.u32 %v1160, 7
    %v1162 = vsub.s32 0, %v1161
    %v1163 = vrot.slane %v1127, %v1162
    %v1164 = vadd.f32 %v1158, %v1163
    %v1165 = vadd.f32 %v1159, %v1163
    %v1166 = vpack.c.bf16 %v1165, %v1164
    %v1167 = vld [vmem:[#allocation2 + $0x88] sm:$0xf]
    %v1168 = vld [vmem:[#allocation2 + $0x8c] sm:$0xf]
    %v1169 = vld [vmem:[#allocation2 + $0x90] sm:$0xf]
    %v1170 = vld [vmem:[#allocation2 + $0x94] sm:$0xf]
    %v1171 = vld [vmem:[%s3 + $0x9] sm:$0x1]
    %v1172 = vlaneseq
    %v1173 = vshrl.u32 %v1172, 7
    %v1174 = vsub.s32 0, %v1173
    %v1175 = vrot.slane %v1171, %v1174
    %v1180 = vunpack.c.l.b16 %v1167
    %v1181 = vunpack.c.l.b16 %v1168
    %v1182 = vunpack.c.l.b16 %v1169
    %v1183 = vunpack.c.l.b16 %v1170
    %v1184 = vpack.c.b16 %v1181, %v1180
    %v1185 = vpack.c.b16 %v1183, %v1182
    %v1189 = vsel %vm80, %v1166, 0
    %1191 = vmatprep.subr.bf16.mxu0 0
    %1192 = vmatpush1.bf16.msra.mxu0 0
    %1193 = vmatprep.subr.bf16.mxu0 0
    %1194 = vmatpush1.bf16.msra.mxu0 0
    %1195 = vmatprep.subr.bf16.mxu0 0
    %1196 = vmatpush1.bf16.msra.mxu0 0
    %1197 = vmatprep.subr.bf16.mxu0 0
    %1198 = vmatpush1.bf16.msra.mxu0 0
    %1199 = vmatprep.subr.bf16.mxu0 0
    %1200 = vmatpush1.bf16.msra.mxu0 0
    %1201 = vmatprep.subr.bf16.mxu0 0
    %1202 = vmatpush1.bf16.msra.mxu0 0
    %1203 = vmatprep.subr.bf16.mxu0 0
    %1204 = vmatpush1.bf16.msra.mxu0 %v1185
    %1205 = vmatprep.subr.bf16.mxu0 0
    %1206 = vmatpush1.bf16.msra.mxu0 %v1184
    %1207 = vmatprep.subr.bf16.mxu0 0
    %1208 = vmatpush2.bf16.msra.mxu0 0
    %1209 = vmatprep.subr.bf16.mxu0 0
    %1210 = vmatpush2.bf16.msra.mxu0 0
    %1211 = vmatprep.subr.bf16.mxu0 0
    %1212 = vmatpush2.bf16.msra.mxu0 0
    %1213 = vmatprep.subr.bf16.mxu0 0
    %1214 = vmatpush2.bf16.msra.mxu0 0
    %1215 = vmatprep.subr.bf16.mxu0 0
    %1216 = vmatpush2.bf16.msra.mxu0 0
    %1217 = vmatprep.subr.bf16.mxu0 0
    %1218 = vmatpush2.bf16.msra.mxu0 0
    %1219 = vmatprep.subr.bf16.mxu0 0
    %1220 = vmatpush2.bf16.msra.mxu0 0
    %1221 = vmatprep.subr.bf16.mxu0 0
    %1222 = vmatpush2.bf16.msra.mxu0 0
    %1223 = vmatprep.mubr.bf16.mxu0 0
    %1224 = vmatmul.mubr.bf16.gmra.mxu0 %v1189
    %v1225 = vpop.f32.mrf.mxu0
    %v1226 = vadd.f32 %v1175, %v1225
    %v1227 = vpop.f32.mrf.mxu0
    %v1228 = vpop.f32.mrf.mxu0
    %v1229 = vadd.f32 %v1175, %v1228
    %v1230 = vpop.f32.mrf.mxu0
    %1231 = vdwg.mxu0
    %v1232 = vpack.c.bf16 %v1229, %v1226
    %1234 = vrot.lane.b32.xlu0 %v1232, 96
    %v1235 = vpop.permute.xlu0 %1234
    %v1237 = vsel %vm212, %v1232, 0
    %v1240 = vsel %vm212, %v1235, 0
    %1242 = vmatprep.subr.bf16.mxu0 0
    %1243 = vmatpush1.bf16.xpose.msra.mxu0 0
    %1244 = vmatprep.subr.bf16.mxu0 0
    %1245 = vmatpush1.bf16.xpose.msra.mxu0 0
    %1246 = vmatprep.subr.bf16.mxu0 0
    %1247 = vmatpush1.bf16.xpose.msra.mxu0 0
    %1248 = vmatprep.subr.bf16.mxu0 0
    %1249 = vmatpush1.bf16.xpose.msra.mxu0 0
    %1250 = vmatprep.subr.bf16.mxu0 0
    %1251 = vmatpush1.bf16.xpose.msra.mxu0 0
    %1252 = vmatprep.subr.bf16.mxu0 0
    %1253 = vmatpush1.bf16.xpose.msra.mxu0 0
    %1254 = vmatprep.subr.bf16.mxu0 0
    %1255 = vmatpush1.bf16.xpose.msra.mxu0 0
    %1256 = vmatprep.subr.bf16.mxu0 0
    %1257 = vmatpush1.bf16.xpose.msra.mxu0 %v1240
    %1258 = vmatprep.subr.bf16.mxu0 0
    %1259 = vmatpush2.bf16.xpose.msra.mxu0 0
    %1260 = vmatprep.subr.bf16.mxu0 0
    %1261 = vmatpush2.bf16.xpose.msra.mxu0 0
    %1262 = vmatprep.subr.bf16.mxu0 0
    %1263 = vmatpush2.bf16.xpose.msra.mxu0 0
    %1264 = vmatprep.subr.bf16.mxu0 0
    %1265 = vmatpush2.bf16.xpose.msra.mxu0 0
    %1266 = vmatprep.subr.bf16.mxu0 0
    %1267 = vmatpush2.bf16.xpose.msra.mxu0 0
    %1268 = vmatprep.subr.bf16.mxu0 0
    %1269 = vmatpush2.bf16.xpose.msra.mxu0 0
    %1270 = vmatprep.subr.bf16.mxu0 0
    %1271 = vmatpush2.bf16.xpose.msra.mxu0 0
    %1272 = vmatprep.subr.bf16.mxu0 0
    %1273 = vmatpush2.bf16.xpose.msra.mxu0 0
    %1274 = vmatprep.mubr.bf16.mxu0 0
    %1275 = vmatmul.mubr.bf16.gmra.mxu0 %v1237
    %v1276 = vpop.f32.mrf.mxu0
    %v1277 = vadd.f32 %v276, %v1276
    %v1278 = vpop.f32.mrf.mxu0
    %v1279 = vpop.f32.mrf.mxu0
    %v1280 = vadd.f32 %v277, %v1279
    %v1281 = vpop.f32.mrf.mxu0
    %1282 = vdwg.mxu0
    %v1283 = vsel %vm399, %v1277, -inf
    %1284 = vmax.xlane.f32.xlu0 %v1283
    %v1285 = vpop.xlane.xlu0 %1284
    %v1286 = vsel %vm399, %v1280, -inf
    %1287 = vmax.xlane.f32.xlu0 %v1286
    %v1288 = vpop.xlane.xlu0 %1287
    %v1289 = vsub.f32 %v1277, %v1285
    %v1290 = vsub.f32 %v1280, %v1288
    %v1291 = vmul.f32 %v1289, 1.442695
    %v1292 = vpow.pop %v1291
    %v1293 = vmul.f32 %v1290, 1.442695
    %v1294 = vpow.pop %v1293
    %v1295 = vsel %vm399, %v1292, 0.0
    %1296 = vadd.xlane.f32.xlu0 %v1295
    %v1297 = vpop.xlane.xlu0 %1296
    %v1298 = vsel %vm399, %v1294, 0.0
    %1299 = vadd.xlane.f32.xlu0 %v1298
    %v1300 = vpop.xlane.xlu0 %1299
    %v1301 = vrcp.pop %v1297
    %v1302 = vrcp.pop %v1300
    %v1303 = vmul.f32 %v1292, %v1301
    %v1304 = vmul.f32 %v1294, %v1302
    %v1305 = vpack.c.bf16 %v1304, %v1303
    %1306 = vrot.lane.b32.xlu0 %v1232, 64
    %v1307 = vpop.permute.xlu0 %1306
    %v1310 = vsel %vm399, %v1305, 0
    %1312 = vmatprep.subr.bf16.mxu0 0
    %1313 = vmatpush1.bf16.msra.mxu0 0
    %1314 = vmatprep.subr.bf16.mxu0 0
    %1315 = vmatpush1.bf16.msra.mxu0 0
    %1316 = vmatprep.subr.bf16.mxu0 0
    %1317 = vmatpush1.bf16.msra.mxu0 0
    %1318 = vmatprep.subr.bf16.mxu0 0
    %1319 = vmatpush1.bf16.msra.mxu0 0
    %1320 = vmatprep.subr.bf16.mxu0 0
    %1321 = vmatpush1.bf16.msra.mxu0 0
    %1322 = vmatprep.subr.bf16.mxu0 0
    %1323 = vmatpush1.bf16.msra.mxu0 0
    %1324 = vmatprep.subr.bf16.mxu0 0
    %1325 = vmatpush1.bf16.msra.mxu0 0
    %1326 = vmatprep.subr.bf16.mxu0 0
    %1327 = vmatpush1.bf16.msra.mxu0 %v1307
    %1328 = vmatprep.subr.bf16.mxu0 0
    %1329 = vmatpush2.bf16.msra.mxu0 0
    %1330 = vmatprep.subr.bf16.mxu0 0
    %1331 = vmatpush2.bf16.msra.mxu0 0
    %1332 = vmatprep.subr.bf16.mxu0 0
    %1333 = vmatpush2.bf16.msra.mxu0 0
    %1334 = vmatprep.subr.bf16.mxu0 0
    %1335 = vmatpush2.bf16.msra.mxu0 0
    %1336 = vmatprep.subr.bf16.mxu0 0
    %1337 = vmatpush2.bf16.msra.mxu0 0
    %1338 = vmatprep.subr.bf16.mxu0 0
    %1339 = vmatpush2.bf16.msra.mxu0 0
    %1340 = vmatprep.subr.bf16.mxu0 0
    %1341 = vmatpush2.bf16.msra.mxu0 0
    %1342 = vmatprep.subr.bf16.mxu0 0
    %1343 = vmatpush2.bf16.msra.mxu0 0
    %1344 = vmatprep.mubr.bf16.mxu0 0
    %1345 = vmatmul.mubr.bf16.gmra.mxu0 %v1310
    %v1346 = vpop.f32.mrf.mxu0
    %v1347 = vadd.f32 0.0, %v1346
    %v1348 = vpop.f32.mrf.mxu0
    %v1349 = vpop.f32.mrf.mxu0
    %v1350 = vadd.f32 0.0, %v1349
    %v1351 = vpop.f32.mrf.mxu0
    %1352 = vdwg.mxu0
    %1353 = vrot.lane.b32.xlu0 %v1232, 120
    %v1354 = vpop.permute.xlu0 %1353
    %1355 = vrot.lane.b32.xlu0 %v1232, 88
    %v1356 = vpop.permute.xlu0 %1355
    %v1358 = vsel %vm212, %v1354, 0
    %v1361 = vsel %vm212, %v1356, 0
    %1363 = vmatprep.subr.bf16.mxu0 0
    %1364 = vmatpush1.bf16.xpose.msra.mxu0 0
    %1365 = vmatprep.subr.bf16.mxu0 0
    %1366 = vmatpush1.bf16.xpose.msra.mxu0 0
    %1367 = vmatprep.subr.bf16.mxu0 0
    %1368 = vmatpush1.bf16.xpose.msra.mxu0 0
    %1369 = vmatprep.subr.bf16.mxu0 0
    %1370 = vmatpush1.bf16.xpose.msra.mxu0 0
    %1371 = vmatprep.subr.bf16.mxu0 0
    %1372 = vmatpush1.bf16.xpose.msra.mxu0 0
    %1373 = vmatprep.subr.bf16.mxu0 0
    %1374 = vmatpush1.bf16.xpose.msra.mxu0 0
    %1375 = vmatprep.subr.bf16.mxu0 0
    %1376 = vmatpush1.bf16.xpose.msra.mxu0 0
    %1377 = vmatprep.subr.bf16.mxu0 0
    %1378 = vmatpush1.bf16.xpose.msra.mxu0 %v1361
    %1379 = vmatprep.subr.bf16.mxu0 0
    %1380 = vmatpush2.bf16.xpose.msra.mxu0 0
    %1381 = vmatprep.subr.bf16.mxu0 0
    %1382 = vmatpush2.bf16.xpose.msra.mxu0 0
    %1383 = vmatprep.subr.bf16.mxu0 0
    %1384 = vmatpush2.bf16.xpose.msra.mxu0 0
    %1385 = vmatprep.subr.bf16.mxu0 0
    %1386 = vmatpush2.bf16.xpose.msra.mxu0 0
    %1387 = vmatprep.subr.bf16.mxu0 0
    %1388 = vmatpush2.bf16.xpose.msra.mxu0 0
    %1389 = vmatprep.subr.bf16.mxu0 0
    %1390 = vmatpush2.bf16.xpose.msra.mxu0 0
    %1391 = vmatprep.subr.bf16.mxu0 0
    %1392 = vmatpush2.bf16.xpose.msra.mxu0 0
    %1393 = vmatprep.subr.bf16.mxu0 0
    %1394 = vmatpush2.bf16.xpose.msra.mxu0 0
    %1395 = vmatprep.mubr.bf16.mxu0 0
    %1396 = vmatmul.mubr.bf16.gmra.mxu0 %v1358
    %v1397 = vpop.f32.mrf.mxu0
    %v1398 = vadd.f32 %v276, %v1397
    %v1399 = vpop.f32.mrf.mxu0
    %v1400 = vpop.f32.mrf.mxu0
    %v1401 = vadd.f32 %v277, %v1400
    %v1402 = vpop.f32.mrf.mxu0
    %1403 = vdwg.mxu0
    %v1404 = vsel %vm399, %v1398, -inf
    %1405 = vmax.xlane.f32.xlu0 %v1404
    %v1406 = vpop.xlane.xlu0 %1405
    %v1407 = vsel %vm399, %v1401, -inf
    %1408 = vmax.xlane.f32.xlu0 %v1407
    %v1409 = vpop.xlane.xlu0 %1408
    %v1410 = vsub.f32 %v1398, %v1406
    %v1411 = vsub.f32 %v1401, %v1409
    %v1412 = vmul.f32 %v1410, 1.442695
    %v1413 = vpow.pop %v1412
    %v1414 = vmul.f32 %v1411, 1.442695
    %v1415 = vpow.pop %v1414
    %v1416 = vsel %vm399, %v1413, 0.0
    %1417 = vadd.xlane.f32.xlu0 %v1416
    %v1418 = vpop.xlane.xlu0 %1417
    %v1419 = vsel %vm399, %v1415, 0.0
    %1420 = vadd.xlane.f32.xlu0 %v1419
    %v1421 = vpop.xlane.xlu0 %1420
    %v1422 = vrcp.pop %v1418
    %v1423 = vrcp.pop %v1421
    %v1424 = vmul.f32 %v1413, %v1422
    %v1425 = vmul.f32 %v1415, %v1423
    %v1426 = vpack.c.bf16 %v1425, %v1424
    %1427 = vrot.lane.b32.xlu0 %v1232, 56
    %v1428 = vpop.permute.xlu0 %1427
    %v1431 = vsel %vm399, %v1426, 0
    %1433 = vmatprep.subr.bf16.mxu0 0
    %1434 = vmatpush1.bf16.msra.mxu0 0
    %1435 = vmatprep.subr.bf16.mxu0 0
    %1436 = vmatpush1.bf16.msra.mxu0 0
    %1437 = vmatprep.subr.bf16.mxu0 0
    %1438 = vmatpush1.bf16.msra.mxu0 0
    %1439 = vmatprep.subr.bf16.mxu0 0
    %1440 = vmatpush1.bf16.msra.mxu0 0
    %1441 = vmatprep.subr.bf16.mxu0 0
    %1442 = vmatpush1.bf16.msra.mxu0 0
    %1443 = vmatprep.subr.bf16.mxu0 0
    %1444 = vmatpush1.bf16.msra.mxu0 0
    %1445 = vmatprep.subr.bf16.mxu0 0
    %1446 = vmatpush1.bf16.msra.mxu0 0
    %1447 = vmatprep.subr.bf16.mxu0 0
    %1448 = vmatpush1.bf16.msra.mxu0 %v1428
    %1449 = vmatprep.subr.bf16.mxu0 0
    %1450 = vmatpush2.bf16.msra.mxu0 0
    %1451 = vmatprep.subr.bf16.mxu0 0
    %1452 = vmatpush2.bf16.msra.mxu0 0
    %1453 = vmatprep.subr.bf16.mxu0 0
    %1454 = vmatpush2.bf16.msra.mxu0 0
    %1455 = vmatprep.subr.bf16.mxu0 0
    %1456 = vmatpush2.bf16.msra.mxu0 0
    %1457 = vmatprep.subr.bf16.mxu0 0
    %1458 = vmatpush2.bf16.msra.mxu0 0
    %1459 = vmatprep.subr.bf16.mxu0 0
    %1460 = vmatpush2.bf16.msra.mxu0 0
    %1461 = vmatprep.subr.bf16.mxu0 0
    %1462 = vmatpush2.bf16.msra.mxu0 0
    %1463 = vmatprep.subr.bf16.mxu0 0
    %1464 = vmatpush2.bf16.msra.mxu0 0
    %1465 = vmatprep.mubr.bf16.mxu0 0
    %1466 = vmatmul.mubr.bf16.gmra.mxu0 %v1431
    %v1467 = vpop.f32.mrf.mxu0
    %v1468 = vadd.f32 0.0, %v1467
    %v1469 = vpop.f32.mrf.mxu0
    %v1470 = vpop.f32.mrf.mxu0
    %v1471 = vadd.f32 0.0, %v1470
    %v1472 = vpop.f32.mrf.mxu0
    %1473 = vdwg.mxu0
    %1474 = vrot.lane.b32.xlu0 %v1232, 112
    %v1475 = vpop.permute.xlu0 %1474
    %1476 = vrot.lane.b32.xlu0 %v1232, 80
    %v1477 = vpop.permute.xlu0 %1476
    %v1479 = vsel %vm212, %v1475, 0
    %v1482 = vsel %vm212, %v1477, 0
    %1484 = vmatprep.subr.bf16.mxu0 0
    %1485 = vmatpush1.bf16.xpose.msra.mxu0 0
    %1486 = vmatprep.subr.bf16.mxu0 0
    %1487 = vmatpush1.bf16.xpose.msra.mxu0 0
    %1488 = vmatprep.subr.bf16.mxu0 0
    %1489 = vmatpush1.bf16.xpose.msra.mxu0 0
    %1490 = vmatprep.subr.bf16.mxu0 0
    %1491 = vmatpush1.bf16.xpose.msra.mxu0 0
    %1492 = vmatprep.subr.bf16.mxu0 0
    %1493 = vmatpush1.bf16.xpose.msra.mxu0 0
    %1494 = vmatprep.subr.bf16.mxu0 0
    %1495 = vmatpush1.bf16.xpose.msra.mxu0 0
    %1496 = vmatprep.subr.bf16.mxu0 0
    %1497 = vmatpush1.bf16.xpose.msra.mxu0 0
    %1498 = vmatprep.subr.bf16.mxu0 0
    %1499 = vmatpush1.bf16.xpose.msra.mxu0 %v1482
    %1500 = vmatprep.subr.bf16.mxu0 0
    %1501 = vmatpush2.bf16.xpose.msra.mxu0 0
    %1502 = vmatprep.subr.bf16.mxu0 0
    %1503 = vmatpush2.bf16.xpose.msra.mxu0 0
    %1504 = vmatprep.subr.bf16.mxu0 0
    %1505 = vmatpush2.bf16.xpose.msra.mxu0 0
    %1506 = vmatprep.subr.bf16.mxu0 0
    %1507 = vmatpush2.bf16.xpose.msra.mxu0 0
    %1508 = vmatprep.subr.bf16.mxu0 0
    %1509 = vmatpush2.bf16.xpose.msra.mxu0 0
    %1510 = vmatprep.subr.bf16.mxu0 0
    %1511 = vmatpush2.bf16.xpose.msra.mxu0 0
    %1512 = vmatprep.subr.bf16.mxu0 0
    %1513 = vmatpush2.bf16.xpose.msra.mxu0 0
    %1514 = vmatprep.subr.bf16.mxu0 0
    %1515 = vmatpush2.bf16.xpose.msra.mxu0 0
    %1516 = vmatprep.mubr.bf16.mxu0 0
    %1517 = vmatmul.mubr.bf16.gmra.mxu0 %v1479
    %v1518 = vpop.f32.mrf.mxu0
    %v1519 = vadd.f32 %v276, %v1518
    %v1520 = vpop.f32.mrf.mxu0
    %v1521 = vpop.f32.mrf.mxu0
    %v1522 = vadd.f32 %v277, %v1521
    %v1523 = vpop.f32.mrf.mxu0
    %1524 = vdwg.mxu0
    %v1525 = vsel %vm399, %v1519, -inf
    %1526 = vmax.xlane.f32.xlu0 %v1525
    %v1527 = vpop.xlane.xlu0 %1526
    %v1528 = vsel %vm399, %v1522, -inf
    %1529 = vmax.xlane.f32.xlu0 %v1528
    %v1530 = vpop.xlane.xlu0 %1529
    %v1531 = vsub.f32 %v1519, %v1527
    %v1532 = vsub.f32 %v1522, %v1530
    %v1533 = vmul.f32 %v1531, 1.442695
    %v1534 = vpow.pop %v1533
    %v1535 = vmul.f32 %v1532, 1.442695
    %v1536 = vpow.pop %v1535
    %v1537 = vsel %vm399, %v1534, 0.0
    %1538 = vadd.xlane.f32.xlu0 %v1537
    %v1539 = vpop.xlane.xlu0 %1538
    %v1540 = vsel %vm399, %v1536, 0.0
    %1541 = vadd.xlane.f32.xlu0 %v1540
    %v1542 = vpop.xlane.xlu0 %1541
    %v1543 = vrcp.pop %v1539
    %v1544 = vrcp.pop %v1542
    %v1545 = vmul.f32 %v1534, %v1543
    %v1546 = vmul.f32 %v1536, %v1544
    %v1547 = vpack.c.bf16 %v1546, %v1545
    %1548 = vrot.lane.b32.xlu0 %v1232, 48
    %v1549 = vpop.permute.xlu0 %1548
    %v1552 = vsel %vm399, %v1547, 0
    %1554 = vmatprep.subr.bf16.mxu0 0
    %1555 = vmatpush1.bf16.msra.mxu0 0
    %1556 = vmatprep.subr.bf16.mxu0 0
    %1557 = vmatpush1.bf16.msra.mxu0 0
    %1558 = vmatprep.subr.bf16.mxu0 0
    %1559 = vmatpush1.bf16.msra.mxu0 0
    %1560 = vmatprep.subr.bf16.mxu0 0
    %1561 = vmatpush1.bf16.msra.mxu0 0
    %1562 = vmatprep.subr.bf16.mxu0 0
    %1563 = vmatpush1.bf16.msra.mxu0 0
    %1564 = vmatprep.subr.bf16.mxu0 0
    %1565 = vmatpush1.bf16.msra.mxu0 0
    %1566 = vmatprep.subr.bf16.mxu0 0
    %1567 = vmatpush1.bf16.msra.mxu0 0
    %1568 = vmatprep.subr.bf16.mxu0 0
    %1569 = vmatpush1.bf16.msra.mxu0 %v1549
    %1570 = vmatprep.subr.bf16.mxu0 0
    %1571 = vmatpush2.bf16.msra.mxu0 0
    %1572 = vmatprep.subr.bf16.mxu0 0
    %1573 = vmatpush2.bf16.msra.mxu0 0
    %1574 = vmatprep.subr.bf16.mxu0 0
    %1575 = vmatpush2.bf16.msra.mxu0 0
    %1576 = vmatprep.subr.bf16.mxu0 0
    %1577 = vmatpush2.bf16.msra.mxu0 0
    %1578 = vmatprep.subr.bf16.mxu0 0
    %1579 = vmatpush2.bf16.msra.mxu0 0
    %1580 = vmatprep.subr.bf16.mxu0 0
    %1581 = vmatpush2.bf16.msra.mxu0 0
    %1582 = vmatprep.subr.bf16.mxu0 0
    %1583 = vmatpush2.bf16.msra.mxu0 0
    %1584 = vmatprep.subr.bf16.mxu0 0
    %1585 = vmatpush2.bf16.msra.mxu0 0
    %1586 = vmatprep.mubr.bf16.mxu0 0
    %1587 = vmatmul.mubr.bf16.gmra.mxu0 %v1552
    %v1588 = vpop.f32.mrf.mxu0
    %v1589 = vadd.f32 0.0, %v1588
    %v1590 = vpop.f32.mrf.mxu0
    %v1591 = vpop.f32.mrf.mxu0
    %v1592 = vadd.f32 0.0, %v1591
    %v1593 = vpop.f32.mrf.mxu0
    %1594 = vdwg.mxu0
    %1595 = vrot.lane.b32.xlu0 %v1232, 104
    %v1596 = vpop.permute.xlu0 %1595
    %1597 = vrot.lane.b32.xlu0 %v1232, 72
    %v1598 = vpop.permute.xlu0 %1597
    %v1600 = vsel %vm212, %v1596, 0
    %v1603 = vsel %vm212, %v1598, 0
    %1605 = vmatprep.subr.bf16.mxu0 0
    %1606 = vmatpush1.bf16.xpose.msra.mxu0 0
    %1607 = vmatprep.subr.bf16.mxu0 0
    %1608 = vmatpush1.bf16.xpose.msra.mxu0 0
    %1609 = vmatprep.subr.bf16.mxu0 0
    %1610 = vmatpush1.bf16.xpose.msra.mxu0 0
    %1611 = vmatprep.subr.bf16.mxu0 0
    %1612 = vmatpush1.bf16.xpose.msra.mxu0 0
    %1613 = vmatprep.subr.bf16.mxu0 0
    %1614 = vmatpush1.bf16.xpose.msra.mxu0 0
    %1615 = vmatprep.subr.bf16.mxu0 0
    %1616 = vmatpush1.bf16.xpose.msra.mxu0 0
    %1617 = vmatprep.subr.bf16.mxu0 0
    %1618 = vmatpush1.bf16.xpose.msra.mxu0 0
    %1619 = vmatprep.subr.bf16.mxu0 0
    %1620 = vmatpush1.bf16.xpose.msra.mxu0 %v1603
    %1621 = vmatprep.subr.bf16.mxu0 0
    %1622 = vmatpush2.bf16.xpose.msra.mxu0 0
    %1623 = vmatprep.subr.bf16.mxu0 0
    %1624 = vmatpush2.bf16.xpose.msra.mxu0 0
    %1625 = vmatprep.subr.bf16.mxu0 0
    %1626 = vmatpush2.bf16.xpose.msra.mxu0 0
    %1627 = vmatprep.subr.bf16.mxu0 0
    %1628 = vmatpush2.bf16.xpose.msra.mxu0 0
    %1629 = vmatprep.subr.bf16.mxu0 0
    %1630 = vmatpush2.bf16.xpose.msra.mxu0 0
    %1631 = vmatprep.subr.bf16.mxu0 0
    %1632 = vmatpush2.bf16.xpose.msra.mxu0 0
    %1633 = vmatprep.subr.bf16.mxu0 0
    %1634 = vmatpush2.bf16.xpose.msra.mxu0 0
    %1635 = vmatprep.subr.bf16.mxu0 0
    %1636 = vmatpush2.bf16.xpose.msra.mxu0 0
    %1637 = vmatprep.mubr.bf16.mxu0 0
    %1638 = vmatmul.mubr.bf16.gmra.mxu0 %v1600
    %v1639 = vpop.f32.mrf.mxu0
    %v1640 = vadd.f32 %v276, %v1639
    %v1641 = vpop.f32.mrf.mxu0
    %v1642 = vpop.f32.mrf.mxu0
    %v1643 = vadd.f32 %v277, %v1642
    %v1644 = vpop.f32.mrf.mxu0
    %1645 = vdwg.mxu0
    %v1646 = vsel %vm399, %v1640, -inf
    %1647 = vmax.xlane.f32.xlu0 %v1646
    %v1648 = vpop.xlane.xlu0 %1647
    %v1649 = vsel %vm399, %v1643, -inf
    %1650 = vmax.xlane.f32.xlu0 %v1649
    %v1651 = vpop.xlane.xlu0 %1650
    %v1652 = vsub.f32 %v1640, %v1648
    %v1653 = vsub.f32 %v1643, %v1651
    %v1654 = vmul.f32 %v1652, 1.442695
    %v1655 = vpow.pop %v1654
    %v1656 = vmul.f32 %v1653, 1.442695
    %v1657 = vpow.pop %v1656
    %v1658 = vsel %vm399, %v1655, 0.0
    %1659 = vadd.xlane.f32.xlu0 %v1658
    %v1660 = vpop.xlane.xlu0 %1659
    %v1661 = vsel %vm399, %v1657, 0.0
    %1662 = vadd.xlane.f32.xlu0 %v1661
    %v1663 = vpop.xlane.xlu0 %1662
    %v1664 = vrcp.pop %v1660
    %v1665 = vrcp.pop %v1663
    %v1666 = vmul.f32 %v1655, %v1664
    %v1667 = vmul.f32 %v1657, %v1665
    %v1668 = vpack.c.bf16 %v1667, %v1666
    %1669 = vrot.lane.b32.xlu0 %v1232, 40
    %v1670 = vpop.permute.xlu0 %1669
    %v1673 = vsel %vm399, %v1668, 0
    %1675 = vmatprep.subr.bf16.mxu0 0
    %1676 = vmatpush1.bf16.msra.mxu0 0
    %1677 = vmatprep.subr.bf16.mxu0 0
    %1678 = vmatpush1.bf16.msra.mxu0 0
    %1679 = vmatprep.subr.bf16.mxu0 0
    %1680 = vmatpush1.bf16.msra.mxu0 0
    %1681 = vmatprep.subr.bf16.mxu0 0
    %1682 = vmatpush1.bf16.msra.mxu0 0
    %1683 = vmatprep.subr.bf16.mxu0 0
    %1684 = vmatpush1.bf16.msra.mxu0 0
    %1685 = vmatprep.subr.bf16.mxu0 0
    %1686 = vmatpush1.bf16.msra.mxu0 0
    %1687 = vmatprep.subr.bf16.mxu0 0
    %1688 = vmatpush1.bf16.msra.mxu0 0
    %1689 = vmatprep.subr.bf16.mxu0 0
    %1690 = vmatpush1.bf16.msra.mxu0 %v1670
    %1691 = vmatprep.subr.bf16.mxu0 0
    %1692 = vmatpush2.bf16.msra.mxu0 0
    %1693 = vmatprep.subr.bf16.mxu0 0
    %1694 = vmatpush2.bf16.msra.mxu0 0
    %1695 = vmatprep.subr.bf16.mxu0 0
    %1696 = vmatpush2.bf16.msra.mxu0 0
    %1697 = vmatprep.subr.bf16.mxu0 0
    %1698 = vmatpush2.bf16.msra.mxu0 0
    %1699 = vmatprep.subr.bf16.mxu0 0
    %1700 = vmatpush2.bf16.msra.mxu0 0
    %1701 = vmatprep.subr.bf16.mxu0 0
    %1702 = vmatpush2.bf16.msra.mxu0 0
    %1703 = vmatprep.subr.bf16.mxu0 0
    %1704 = vmatpush2.bf16.msra.mxu0 0
    %1705 = vmatprep.subr.bf16.mxu0 0
    %1706 = vmatpush2.bf16.msra.mxu0 0
    %1707 = vmatprep.mubr.bf16.mxu0 0
    %1708 = vmatmul.mubr.bf16.gmra.mxu0 %v1673
    %v1709 = vpop.f32.mrf.mxu0
    %v1710 = vadd.f32 0.0, %v1709
    %v1711 = vpop.f32.mrf.mxu0
    %v1712 = vpop.f32.mrf.mxu0
    %v1713 = vadd.f32 0.0, %v1712
    %v1714 = vpop.f32.mrf.mxu0
    %1715 = vdwg.mxu0
    %1718 = vrot.lane.b32.xlu0 %v1468, 8
    %v1719 = vpop.permute.xlu0 %1718
    %1720 = vrot.lane.b32.xlu0 %v1471, 8
    %v1721 = vpop.permute.xlu0 %1720
    %1726 = vrot.lane.b32.xlu0 %v1589, 16
    %v1727 = vpop.permute.xlu0 %1726
    %1728 = vrot.lane.b32.xlu0 %v1592, 16
    %v1729 = vpop.permute.xlu0 %1728
    %1734 = vrot.lane.b32.xlu0 %v1710, 24
    %v1735 = vpop.permute.xlu0 %1734
    %1736 = vrot.lane.b32.xlu0 %v1713, 24
    %v1737 = vpop.permute.xlu0 %1736
    %v1740 = vsel %vm212, %v1347, %v1719
    %v1741 = vsel %vm212, %v1350, %v1721
    %v1742 = vsel %vm399, %v1740, %v1727
    %v1743 = vsel %vm399, %v1741, %v1729
    %v1744 = vsel %vm861, %v1742, %v1735
    %v1745 = vsel %vm861, %v1743, %v1737
    %v1746 = vpack.c.bf16 %v1745, %v1744
    %v1747 = vld [vmem:[#allocation2 + $0x98] sm:$0xf]
    %v1748 = vld [vmem:[#allocation2 + $0x9c] sm:$0xf]
    %v1749 = vld [vmem:[#allocation2 + $0xa0] sm:$0xf]
    %v1750 = vld [vmem:[#allocation2 + $0xa4] sm:$0xf]
    %v1751 = vld [vmem:[%s3 + $0xa] sm:$0x1]
    %v1752 = vlaneseq
    %v1753 = vshrl.u32 %v1752, 7
    %v1754 = vsub.s32 0, %v1753
    %v1755 = vrot.slane %v1751, %v1754
    %v1760 = vunpack.c.l.b16 %v1747
    %v1761 = vunpack.c.l.b16 %v1748
    %v1762 = vunpack.c.l.b16 %v1749
    %v1763 = vunpack.c.l.b16 %v1750
    %v1764 = vpack.c.b16 %v1761, %v1760
    %v1765 = vpack.c.b16 %v1763, %v1762
    %v1769 = vsel %vm80, %v1746, 0
    %1771 = vmatprep.subr.bf16.mxu0 0
    %1772 = vmatpush1.bf16.msra.mxu0 0
    %1773 = vmatprep.subr.bf16.mxu0 0
    %1774 = vmatpush1.bf16.msra.mxu0 0
    %1775 = vmatprep.subr.bf16.mxu0 0
    %1776 = vmatpush1.bf16.msra.mxu0 0
    %1777 = vmatprep.subr.bf16.mxu0 0
    %1778 = vmatpush1.bf16.msra.mxu0 0
    %1779 = vmatprep.subr.bf16.mxu0 0
    %1780 = vmatpush1.bf16.msra.mxu0 0
    %1781 = vmatprep.subr.bf16.mxu0 0
    %1782 = vmatpush1.bf16.msra.mxu0 0
    %1783 = vmatprep.subr.bf16.mxu0 0
    %1784 = vmatpush1.bf16.msra.mxu0 %v1765
    %1785 = vmatprep.subr.bf16.mxu0 0
    %1786 = vmatpush1.bf16.msra.mxu0 %v1764
    %1787 = vmatprep.subr.bf16.mxu0 0
    %1788 = vmatpush2.bf16.msra.mxu0 0
    %1789 = vmatprep.subr.bf16.mxu0 0
    %1790 = vmatpush2.bf16.msra.mxu0 0
    %1791 = vmatprep.subr.bf16.mxu0 0
    %1792 = vmatpush2.bf16.msra.mxu0 0
    %1793 = vmatprep.subr.bf16.mxu0 0
    %1794 = vmatpush2.bf16.msra.mxu0 0
    %1795 = vmatprep.subr.bf16.mxu0 0
    %1796 = vmatpush2.bf16.msra.mxu0 0
    %1797 = vmatprep.subr.bf16.mxu0 0
    %1798 = vmatpush2.bf16.msra.mxu0 0
    %1799 = vmatprep.subr.bf16.mxu0 0
    %1800 = vmatpush2.bf16.msra.mxu0 0
    %1801 = vmatprep.subr.bf16.mxu0 0
    %1802 = vmatpush2.bf16.msra.mxu0 0
    %1803 = vmatprep.mubr.bf16.mxu0 0
    %1804 = vmatmul.mubr.bf16.gmra.mxu0 %v1769
    %v1805 = vpop.f32.mrf.mxu0
    %v1806 = vadd.f32 %v1755, %v1805
    %v1807 = vpop.f32.mrf.mxu0
    %v1808 = vpop.f32.mrf.mxu0
    %v1809 = vadd.f32 %v1755, %v1808
    %v1810 = vpop.f32.mrf.mxu0
    %1811 = vdwg.mxu0
    %v1812 = vadd.f32 %v1164, %v1806
    %v1813 = vadd.f32 %v1165, %v1809
    %v1814 = vld [vmem:[%s3 + $0xb] sm:$0x1]
    %v1815 = vld [vmem:[%s3 + $0xc] sm:$0x1]
    %v1816 = vsel %vm80, %v1812, 0.0
    %1817 = vadd.xlane.f32.xlu0 %v1816
    %v1818 = vpop.xlane.xlu0 %1817
    %v1819 = vsel %vm80, %v1813, 0.0
    %1820 = vadd.xlane.f32.xlu0 %v1819
    %v1821 = vpop.xlane.xlu0 %1820
    %v1822 = vmul.f32 %v1818, %v940
    %v1823 = vmul.f32 %v1821, %v940
    %v1824 = vsub.f32 %v1812, %v1822
    %v1825 = vsub.f32 %v1813, %v1823
    %v1826 = vmul.f32 %v1824, %v1824
    %v1827 = vmul.f32 %v1825, %v1825
    %v1828 = vsel %vm80, %v1826, 0.0
    %1829 = vadd.xlane.f32.xlu0 %v1828
    %v1830 = vpop.xlane.xlu0 %1829
    %v1831 = vsel %vm80, %v1827, 0.0
    %1832 = vadd.xlane.f32.xlu0 %v1831
    %v1833 = vpop.xlane.xlu0 %1832
    %v1834 = vmul.f32 %v1830, %v940
    %v1835 = vmul.f32 %v1833, %v940
    %v1836 = vadd.f32 %v1834, 1e-05
    %v1837 = vadd.f32 %v1835, 1e-05
    %v1838 = vrsqrt.pop %v1836
    %v1839 = vrsqrt.pop %v1837
    %v1840 = vmul.f32 %v1824, %v1838
    %v1841 = vmul.f32 %v1825, %v1839
    %v1842 = vlaneseq
    %v1843 = vshrl.u32 %v1842, 7
    %v1844 = vsub.s32 0, %v1843
    %v1845 = vrot.slane %v1814, %v1844
    %v1846 = vmul.f32 %v1840, %v1845
    %v1847 = vmul.f32 %v1841, %v1845
    %v1848 = vlaneseq
    %v1849 = vshrl.u32 %v1848, 7
    %v1850 = vsub.s32 0, %v1849
    %v1851 = vrot.slane %v1815, %v1850
    %v1852 = vadd.f32 %v1846, %v1851
    %v1853 = vadd.f32 %v1847, %v1851
    %v1854 = vpack.c.bf16 %v1853, %v1852
    %v1855 = vld [vmem:[#allocation2 + $0xa8] sm:$0xf]
    %v1856 = vld [vmem:[#allocation2 + $0xac] sm:$0xf]
    %v1857 = vld [vmem:[#allocation2 + $0xb0] sm:$0xf]
    %v1858 = vld [vmem:[#allocation2 + $0xb4] sm:$0xf]
    %v1859 = vld [vmem:[%s3 + $0xd] sm:$0x1]
    %v1860 = vlaneseq
    %v1861 = vshrl.u32 %v1860, 7
    %v1862 = vsub.s32 0, %v1861
    %v1863 = vrot.slane %v1859, %v1862
    %v1868 = vunpack.c.l.b16 %v1855
    %v1869 = vunpack.c.l.b16 %v1856
    %v1870 = vunpack.c.l.b16 %v1857
    %v1871 = vunpack.c.l.b16 %v1858
    %v1872 = vpack.c.b16 %v1869, %v1868
    %v1873 = vpack.c.b16 %v1871, %v1870
    %v1877 = vsel %vm80, %v1854, 0
    %1879 = vmatprep.subr.bf16.mxu0 0
    %1880 = vmatpush1.bf16.msra.mxu0 0
    %1881 = vmatprep.subr.bf16.mxu0 0
    %1882 = vmatpush1.bf16.msra.mxu0 0
    %1883 = vmatprep.subr.bf16.mxu0 0
    %1884 = vmatpush1.bf16.msra.mxu0 0
    %1885 = vmatprep.subr.bf16.mxu0 0
    %1886 = vmatpush1.bf16.msra.mxu0 0
    %1887 = vmatprep.subr.bf16.mxu0 0
    %1888 = vmatpush1.bf16.msra.mxu0 0
    %1889 = vmatprep.subr.bf16.mxu0 0
    %1890 = vmatpush1.bf16.msra.mxu0 0
    %1891 = vmatprep.subr.bf16.mxu0 0
    %1892 = vmatpush1.bf16.msra.mxu0 %v1873
    %1893 = vmatprep.subr.bf16.mxu0 0
    %1894 = vmatpush1.bf16.msra.mxu0 %v1872
    %1895 = vmatprep.subr.bf16.mxu0 0
    %1896 = vmatpush2.bf16.msra.mxu0 0
    %1897 = vmatprep.subr.bf16.mxu0 0
    %1898 = vmatpush2.bf16.msra.mxu0 0
    %1899 = vmatprep.subr.bf16.mxu0 0
    %1900 = vmatpush2.bf16.msra.mxu0 0
    %1901 = vmatprep.subr.bf16.mxu0 0
    %1902 = vmatpush2.bf16.msra.mxu0 0
    %1903 = vmatprep.subr.bf16.mxu0 0
    %1904 = vmatpush2.bf16.msra.mxu0 0
    %1905 = vmatprep.subr.bf16.mxu0 0
    %1906 = vmatpush2.bf16.msra.mxu0 0
    %1907 = vmatprep.subr.bf16.mxu0 0
    %1908 = vmatpush2.bf16.msra.mxu0 0
    %1909 = vmatprep.subr.bf16.mxu0 0
    %1910 = vmatpush2.bf16.msra.mxu0 0
    %1911 = vmatprep.mubr.bf16.mxu0 0
    %1912 = vmatmul.mubr.bf16.gmra.mxu0 %v1877
    %v1913 = vpop.f32.mrf.mxu0
    %v1914 = vadd.f32 %v1863, %v1913
    %v1915 = vpop.f32.mrf.mxu0
    %v1916 = vpop.f32.mrf.mxu0
    %v1917 = vadd.f32 %v1863, %v1916
    %v1918 = vpop.f32.mrf.mxu0
    %1919 = vdwg.mxu0
    %v1920 = vmax.f32 %v1914, 0.0
    %v1921 = vmax.f32 %v1917, 0.0
    %v1922 = vpack.c.bf16 %v1921, %v1920
    %v1923 = vld [vmem:[#allocation2 + $0xb8] sm:$0xf]
    %v1924 = vld [vmem:[#allocation2 + $0xbc] sm:$0xf]
    %v1925 = vld [vmem:[#allocation2 + $0xc0] sm:$0xf]
    %v1926 = vld [vmem:[#allocation2 + $0xc4] sm:$0xf]
    %v1927 = vld [vmem:[#allocation2 + $0xc8] sm:$0xf]
    %v1928 = vld [vmem:[#allocation2 + $0xcc] sm:$0xf]
    %v1929 = vld [vmem:[#allocation2 + $0xd0] sm:$0xf]
    %v1930 = vld [vmem:[#allocation2 + $0xd4] sm:$0xf]
    %v1931 = vld [vmem:[%s3 + $0xe] sm:$0x1]
    %v1932 = vlaneseq
    %v1933 = vshrl.u32 %v1932, 7
    %v1934 = vsub.s32 0, %v1933
    %v1935 = vrot.slane %v1931, %v1934
    %v1944 = vunpack.c.l.b16 %v1923
    %v1945 = vunpack.c.l.b16 %v1924
    %v1946 = vunpack.c.l.b16 %v1925
    %v1947 = vunpack.c.l.b16 %v1926
    %v1948 = vunpack.c.l.b16 %v1927
    %v1949 = vunpack.c.l.b16 %v1928
    %v1950 = vunpack.c.l.b16 %v1929
    %v1951 = vunpack.c.l.b16 %v1930
    %v1952 = vpack.c.b16 %v1945, %v1944
    %v1953 = vpack.c.b16 %v1947, %v1946
    %v1954 = vpack.c.b16 %v1949, %v1948
    %v1955 = vpack.c.b16 %v1951, %v1950
    %v1961 = vsel %vm1079, %v1922, 0
    %1963 = vmatprep.subr.bf16.mxu0 0
    %1964 = vmatpush1.bf16.msra.mxu0 0
    %1965 = vmatprep.subr.bf16.mxu0 0
    %1966 = vmatpush1.bf16.msra.mxu0 0
    %1967 = vmatprep.subr.bf16.mxu0 0
    %1968 = vmatpush1.bf16.msra.mxu0 0
    %1969 = vmatprep.subr.bf16.mxu0 0
    %1970 = vmatpush1.bf16.msra.mxu0 0
    %1971 = vmatprep.subr.bf16.mxu0 0
    %1972 = vmatpush1.bf16.msra.mxu0 %v1955
    %1973 = vmatprep.subr.bf16.mxu0 0
    %1974 = vmatpush1.bf16.msra.mxu0 %v1954
    %1975 = vmatprep.subr.bf16.mxu0 0
    %1976 = vmatpush1.bf16.msra.mxu0 %v1953
    %1977 = vmatprep.subr.bf16.mxu0 0
    %1978 = vmatpush1.bf16.msra.mxu0 %v1952
    %1979 = vmatprep.subr.bf16.mxu0 0
    %1980 = vmatpush2.bf16.msra.mxu0 0
    %1981 = vmatprep.subr.bf16.mxu0 0
    %1982 = vmatpush2.bf16.msra.mxu0 0
    %1983 = vmatprep.subr.bf16.mxu0 0
    %1984 = vmatpush2.bf16.msra.mxu0 0
    %1985 = vmatprep.subr.bf16.mxu0 0
    %1986 = vmatpush2.bf16.msra.mxu0 0
    %1987 = vmatprep.subr.bf16.mxu0 0
    %1988 = vmatpush2.bf16.msra.mxu0 0
    %1989 = vmatprep.subr.bf16.mxu0 0
    %1990 = vmatpush2.bf16.msra.mxu0 0
    %1991 = vmatprep.subr.bf16.mxu0 0
    %1992 = vmatpush2.bf16.msra.mxu0 0
    %1993 = vmatprep.subr.bf16.mxu0 0
    %1994 = vmatpush2.bf16.msra.mxu0 0
    %1995 = vmatprep.mubr.bf16.mxu0 0
    %1996 = vmatmul.mubr.bf16.gmra.mxu0 %v1961
    %v1997 = vpop.f32.mrf.mxu0
    %v1998 = vadd.f32 %v1935, %v1997
    %v1999 = vpop.f32.mrf.mxu0
    %v2000 = vpop.f32.mrf.mxu0
    %v2001 = vadd.f32 %v1935, %v2000
    %v2002 = vpop.f32.mrf.mxu0
    %2003 = vdwg.mxu0
    %v2004 = vadd.f32 %v1852, %v1998
    %v2005 = vadd.f32 %v1853, %v2001
    %v2006 = vld [vmem:[%s3 + $0xf] sm:$0x1]
    %v2007 = vld [vmem:[%s3 + $0x10] sm:$0x1]
    %v2008 = vsel %vm80, %v2004, 0.0
    %2009 = vadd.xlane.f32.xlu0 %v2008
    %v2010 = vpop.xlane.xlu0 %2009
    %v2011 = vsel %vm80, %v2005, 0.0
    %2012 = vadd.xlane.f32.xlu0 %v2011
    %v2013 = vpop.xlane.xlu0 %2012
    %v2014 = vmul.f32 %v2010, %v940
    %v2015 = vmul.f32 %v2013, %v940
    %v2016 = vsub.f32 %v2004, %v2014
    %v2017 = vsub.f32 %v2005, %v2015
    %v2018 = vmul.f32 %v2016, %v2016
    %v2019 = vmul.f32 %v2017, %v2017
    %v2020 = vsel %vm80, %v2018, 0.0
    %2021 = vadd.xlane.f32.xlu0 %v2020
    %v2022 = vpop.xlane.xlu0 %2021
    %v2023 = vsel %vm80, %v2019, 0.0
    %2024 = vadd.xlane.f32.xlu0 %v2023
    %v2025 = vpop.xlane.xlu0 %2024
    %v2026 = vmul.f32 %v2022, %v940
    %v2027 = vmul.f32 %v2025, %v940
    %v2028 = vadd.f32 %v2026, 1e-05
    %v2029 = vadd.f32 %v2027, 1e-05
    %v2030 = vrsqrt.pop %v2028
    %v2031 = vrsqrt.pop %v2029
    %v2032 = vmul.f32 %v2016, %v2030
    %v2033 = vmul.f32 %v2017, %v2031
    %v2034 = vlaneseq
    %v2035 = vshrl.u32 %v2034, 7
    %v2036 = vsub.s32 0, %v2035
    %v2037 = vrot.slane %v2006, %v2036
    %v2038 = vmul.f32 %v2032, %v2037
    %v2039 = vmul.f32 %v2033, %v2037
    %v2040 = vlaneseq
    %v2041 = vshrl.u32 %v2040, 7
    %v2042 = vsub.s32 0, %v2041
    %v2043 = vrot.slane %v2007, %v2042
    %v2044 = vadd.f32 %v2038, %v2043
    %v2045 = vadd.f32 %v2039, %v2043
    %v2046 = vpack.c.bf16 %v275, %v274
    %v2047 = vld [vmem:[#allocation2 + $0xd8] sm:$0xf]
    %v2048 = vld [vmem:[#allocation2 + $0xdc] sm:$0xf]
    %v2049 = vld [vmem:[#allocation2 + $0xe0] sm:$0xf]
    %v2050 = vld [vmem:[#allocation2 + $0xe4] sm:$0xf]
    %v2051 = vld [vmem:[%s3 + $0x11] sm:$0x1]
    %v2052 = vlaneseq
    %v2053 = vshrl.u32 %v2052, 7
    %v2054 = vsub.s32 0, %v2053
    %v2055 = vrot.slane %v2051, %v2054
    %v2060 = vunpack.c.l.b16 %v2047
    %v2061 = vunpack.c.l.b16 %v2048
    %v2062 = vunpack.c.l.b16 %v2049
    %v2063 = vunpack.c.l.b16 %v2050
    %v2064 = vpack.c.b16 %v2061, %v2060
    %v2065 = vpack.c.b16 %v2063, %v2062
    %v2069 = vsel %vm80, %v2046, 0
    %2071 = vmatprep.subr.bf16.mxu0 0
    %2072 = vmatpush1.bf16.msra.mxu0 0
    %2073 = vmatprep.subr.bf16.mxu0 0
    %2074 = vmatpush1.bf16.msra.mxu0 0
    %2075 = vmatprep.subr.bf16.mxu0 0
    %2076 = vmatpush1.bf16.msra.mxu0 0
    %2077 = vmatprep.subr.bf16.mxu0 0
    %2078 = vmatpush1.bf16.msra.mxu0 0
    %2079 = vmatprep.subr.bf16.mxu0 0
    %2080 = vmatpush1.bf16.msra.mxu0 0
    %2081 = vmatprep.subr.bf16.mxu0 0
    %2082 = vmatpush1.bf16.msra.mxu0 0
    %2083 = vmatprep.subr.bf16.mxu0 0
    %2084 = vmatpush1.bf16.msra.mxu0 %v2065
    %2085 = vmatprep.subr.bf16.mxu0 0
    %2086 = vmatpush1.bf16.msra.mxu0 %v2064
    %2087 = vmatprep.subr.bf16.mxu0 0
    %2088 = vmatpush2.bf16.msra.mxu0 0
    %2089 = vmatprep.subr.bf16.mxu0 0
    %2090 = vmatpush2.bf16.msra.mxu0 0
    %2091 = vmatprep.subr.bf16.mxu0 0
    %2092 = vmatpush2.bf16.msra.mxu0 0
    %2093 = vmatprep.subr.bf16.mxu0 0
    %2094 = vmatpush2.bf16.msra.mxu0 0
    %2095 = vmatprep.subr.bf16.mxu0 0
    %2096 = vmatpush2.bf16.msra.mxu0 0
    %2097 = vmatprep.subr.bf16.mxu0 0
    %2098 = vmatpush2.bf16.msra.mxu0 0
    %2099 = vmatprep.subr.bf16.mxu0 0
    %2100 = vmatpush2.bf16.msra.mxu0 0
    %2101 = vmatprep.subr.bf16.mxu0 0
    %2102 = vmatpush2.bf16.msra.mxu0 0
    %2103 = vmatprep.mubr.bf16.mxu0 0
    %2104 = vmatmul.mubr.bf16.gmra.mxu0 %v2069
    %v2105 = vpop.f32.mrf.mxu0
    %v2106 = vadd.f32 %v2055, %v2105
    %v2107 = vpop.f32.mrf.mxu0
    %v2108 = vpop.f32.mrf.mxu0
    %v2109 = vadd.f32 %v2055, %v2108
    %v2110 = vpop.f32.mrf.mxu0
    %2111 = vdwg.mxu0
    %v2112 = vpack.c.bf16 %v2109, %v2106
    %2114 = vrot.lane.b32.xlu0 %v2112, 96
    %v2115 = vpop.permute.xlu0 %2114
    %v2117 = vsel %vm212, %v2112, 0
    %v2120 = vsel %vm212, %v2115, 0
    %2122 = vmatprep.subr.bf16.mxu0 0
    %2123 = vmatpush1.bf16.xpose.msra.mxu0 0
    %2124 = vmatprep.subr.bf16.mxu0 0
    %2125 = vmatpush1.bf16.xpose.msra.mxu0 0
    %2126 = vmatprep.subr.bf16.mxu0 0
    %2127 = vmatpush1.bf16.xpose.msra.mxu0 0
    %2128 = vmatprep.subr.bf16.mxu0 0
    %2129 = vmatpush1.bf16.xpose.msra.mxu0 0
    %2130 = vmatprep.subr.bf16.mxu0 0
    %2131 = vmatpush1.bf16.xpose.msra.mxu0 0
    %2132 = vmatprep.subr.bf16.mxu0 0
    %2133 = vmatpush1.bf16.xpose.msra.mxu0 0
    %2134 = vmatprep.subr.bf16.mxu0 0
    %2135 = vmatpush1.bf16.xpose.msra.mxu0 0
    %2136 = vmatprep.subr.bf16.mxu0 0
    %2137 = vmatpush1.bf16.xpose.msra.mxu0 %v2120
    %2138 = vmatprep.subr.bf16.mxu0 0
    %2139 = vmatpush2.bf16.xpose.msra.mxu0 0
    %2140 = vmatprep.subr.bf16.mxu0 0
    %2141 = vmatpush2.bf16.xpose.msra.mxu0 0
    %2142 = vmatprep.subr.bf16.mxu0 0
    %2143 = vmatpush2.bf16.xpose.msra.mxu0 0
    %2144 = vmatprep.subr.bf16.mxu0 0
    %2145 = vmatpush2.bf16.xpose.msra.mxu0 0
    %2146 = vmatprep.subr.bf16.mxu0 0
    %2147 = vmatpush2.bf16.xpose.msra.mxu0 0
    %2148 = vmatprep.subr.bf16.mxu0 0
    %2149 = vmatpush2.bf16.xpose.msra.mxu0 0
    %2150 = vmatprep.subr.bf16.mxu0 0
    %2151 = vmatpush2.bf16.xpose.msra.mxu0 0
    %2152 = vmatprep.subr.bf16.mxu0 0
    %2153 = vmatpush2.bf16.xpose.msra.mxu0 0
    %2154 = vmatprep.mubr.bf16.mxu0 0
    %2155 = vmatmul.mubr.bf16.gmra.mxu0 %v2117
    %v2156 = vpop.f32.mrf.mxu0
    %v2157 = vadd.f32 %v278, %v2156
    %v2158 = vpop.f32.mrf.mxu0
    %v2159 = vpop.f32.mrf.mxu0
    %v2160 = vadd.f32 %v279, %v2159
    %v2161 = vpop.f32.mrf.mxu0
    %2162 = vdwg.mxu0
    %v2163 = vsel %vm399, %v2157, -inf
    %2164 = vmax.xlane.f32.xlu0 %v2163
    %v2165 = vpop.xlane.xlu0 %2164
    %v2166 = vsel %vm399, %v2160, -inf
    %2167 = vmax.xlane.f32.xlu0 %v2166
    %v2168 = vpop.xlane.xlu0 %2167
    %v2169 = vsub.f32 %v2157, %v2165
    %v2170 = vsub.f32 %v2160, %v2168
    %v2171 = vmul.f32 %v2169, 1.442695
    %v2172 = vpow.pop %v2171
    %v2173 = vmul.f32 %v2170, 1.442695
    %v2174 = vpow.pop %v2173
    %v2175 = vsel %vm399, %v2172, 0.0
    %2176 = vadd.xlane.f32.xlu0 %v2175
    %v2177 = vpop.xlane.xlu0 %2176
    %v2178 = vsel %vm399, %v2174, 0.0
    %2179 = vadd.xlane.f32.xlu0 %v2178
    %v2180 = vpop.xlane.xlu0 %2179
    %v2181 = vrcp.pop %v2177
    %v2182 = vrcp.pop %v2180
    %v2183 = vmul.f32 %v2172, %v2181
    %v2184 = vmul.f32 %v2174, %v2182
    %v2185 = vpack.c.bf16 %v2184, %v2183
    %2186 = vrot.lane.b32.xlu0 %v2112, 64
    %v2187 = vpop.permute.xlu0 %2186
    %v2190 = vsel %vm399, %v2185, 0
    %2192 = vmatprep.subr.bf16.mxu0 0
    %2193 = vmatpush1.bf16.msra.mxu0 0
    %2194 = vmatprep.subr.bf16.mxu0 0
    %2195 = vmatpush1.bf16.msra.mxu0 0
    %2196 = vmatprep.subr.bf16.mxu0 0
    %2197 = vmatpush1.bf16.msra.mxu0 0
    %2198 = vmatprep.subr.bf16.mxu0 0
    %2199 = vmatpush1.bf16.msra.mxu0 0
    %2200 = vmatprep.subr.bf16.mxu0 0
    %2201 = vmatpush1.bf16.msra.mxu0 0
    %2202 = vmatprep.subr.bf16.mxu0 0
    %2203 = vmatpush1.bf16.msra.mxu0 0
    %2204 = vmatprep.subr.bf16.mxu0 0
    %2205 = vmatpush1.bf16.msra.mxu0 0
    %2206 = vmatprep.subr.bf16.mxu0 0
    %2207 = vmatpush1.bf16.msra.mxu0 %v2187
    %2208 = vmatprep.subr.bf16.mxu0 0
    %2209 = vmatpush2.bf16.msra.mxu0 0
    %2210 = vmatprep.subr.bf16.mxu0 0
    %2211 = vmatpush2.bf16.msra.mxu0 0
    %2212 = vmatprep.subr.bf16.mxu0 0
    %2213 = vmatpush2.bf16.msra.mxu0 0
    %2214 = vmatprep.subr.bf16.mxu0 0
    %2215 = vmatpush2.bf16.msra.mxu0 0
    %2216 = vmatprep.subr.bf16.mxu0 0
    %2217 = vmatpush2.bf16.msra.mxu0 0
    %2218 = vmatprep.subr.bf16.mxu0 0
    %2219 = vmatpush2.bf16.msra.mxu0 0
    %2220 = vmatprep.subr.bf16.mxu0 0
    %2221 = vmatpush2.bf16.msra.mxu0 0
    %2222 = vmatprep.subr.bf16.mxu0 0
    %2223 = vmatpush2.bf16.msra.mxu0 0
    %2224 = vmatprep.mubr.bf16.mxu0 0
    %2225 = vmatmul.mubr.bf16.gmra.mxu0 %v2190
    %v2226 = vpop.f32.mrf.mxu0
    %v2227 = vadd.f32 0.0, %v2226
    %v2228 = vpop.f32.mrf.mxu0
    %v2229 = vpop.f32.mrf.mxu0
    %v2230 = vadd.f32 0.0, %v2229
    %v2231 = vpop.f32.mrf.mxu0
    %2232 = vdwg.mxu0
    %2233 = vrot.lane.b32.xlu0 %v2112, 120
    %v2234 = vpop.permute.xlu0 %2233
    %2235 = vrot.lane.b32.xlu0 %v2112, 88
    %v2236 = vpop.permute.xlu0 %2235
    %v2238 = vsel %vm212, %v2234, 0
    %v2241 = vsel %vm212, %v2236, 0
    %2243 = vmatprep.subr.bf16.mxu0 0
    %2244 = vmatpush1.bf16.xpose.msra.mxu0 0
    %2245 = vmatprep.subr.bf16.mxu0 0
    %2246 = vmatpush1.bf16.xpose.msra.mxu0 0
    %2247 = vmatprep.subr.bf16.mxu0 0
    %2248 = vmatpush1.bf16.xpose.msra.mxu0 0
    %2249 = vmatprep.subr.bf16.mxu0 0
    %2250 = vmatpush1.bf16.xpose.msra.mxu0 0
    %2251 = vmatprep.subr.bf16.mxu0 0
    %2252 = vmatpush1.bf16.xpose.msra.mxu0 0
    %2253 = vmatprep.subr.bf16.mxu0 0
    %2254 = vmatpush1.bf16.xpose.msra.mxu0 0
    %2255 = vmatprep.subr.bf16.mxu0 0
    %2256 = vmatpush1.bf16.xpose.msra.mxu0 0
    %2257 = vmatprep.subr.bf16.mxu0 0
    %2258 = vmatpush1.bf16.xpose.msra.mxu0 %v2241
    %2259 = vmatprep.subr.bf16.mxu0 0
    %2260 = vmatpush2.bf16.xpose.msra.mxu0 0
    %2261 = vmatprep.subr.bf16.mxu0 0
    %2262 = vmatpush2.bf16.xpose.msra.mxu0 0
    %2263 = vmatprep.subr.bf16.mxu0 0
    %2264 = vmatpush2.bf16.xpose.msra.mxu0 0
    %2265 = vmatprep.subr.bf16.mxu0 0
    %2266 = vmatpush2.bf16.xpose.msra.mxu0 0
    %2267 = vmatprep.subr.bf16.mxu0 0
    %2268 = vmatpush2.bf16.xpose.msra.mxu0 0
    %2269 = vmatprep.subr.bf16.mxu0 0
    %2270 = vmatpush2.bf16.xpose.msra.mxu0 0
    %2271 = vmatprep.subr.bf16.mxu0 0
    %2272 = vmatpush2.bf16.xpose.msra.mxu0 0
    %2273 = vmatprep.subr.bf16.mxu0 0
    %2274 = vmatpush2.bf16.xpose.msra.mxu0 0
    %2275 = vmatprep.mubr.bf16.mxu0 0
    %2276 = vmatmul.mubr.bf16.gmra.mxu0 %v2238
    %v2277 = vpop.f32.mrf.mxu0
    %v2278 = vadd.f32 %v278, %v2277
    %v2279 = vpop.f32.mrf.mxu0
    %v2280 = vpop.f32.mrf.mxu0
    %v2281 = vadd.f32 %v279, %v2280
    %v2282 = vpop.f32.mrf.mxu0
    %2283 = vdwg.mxu0
    %v2284 = vsel %vm399, %v2278, -inf
    %2285 = vmax.xlane.f32.xlu0 %v2284
    %v2286 = vpop.xlane.xlu0 %2285
    %v2287 = vsel %vm399, %v2281, -inf
    %2288 = vmax.xlane.f32.xlu0 %v2287
    %v2289 = vpop.xlane.xlu0 %2288
    %v2290 = vsub.f32 %v2278, %v2286
    %v2291 = vsub.f32 %v2281, %v2289
    %v2292 = vmul.f32 %v2290, 1.442695
    %v2293 = vpow.pop %v2292
    %v2294 = vmul.f32 %v2291, 1.442695
    %v2295 = vpow.pop %v2294
    %v2296 = vsel %vm399, %v2293, 0.0
    %2297 = vadd.xlane.f32.xlu0 %v2296
    %v2298 = vpop.xlane.xlu0 %2297
    %v2299 = vsel %vm399, %v2295, 0.0
    %2300 = vadd.xlane.f32.xlu0 %v2299
    %v2301 = vpop.xlane.xlu0 %2300
    %v2302 = vrcp.pop %v2298
    %v2303 = vrcp.pop %v2301
    %v2304 = vmul.f32 %v2293, %v2302
    %v2305 = vmul.f32 %v2295, %v2303
    %v2306 = vpack.c.bf16 %v2305, %v2304
    %2307 = vrot.lane.b32.xlu0 %v2112, 56
    %v2308 = vpop.permute.xlu0 %2307
    %v2311 = vsel %vm399, %v2306, 0
    %2313 = vmatprep.subr.bf16.mxu0 0
    %2314 = vmatpush1.bf16.msra.mxu0 0
    %2315 = vmatprep.subr.bf16.mxu0 0
    %2316 = vmatpush1.bf16.msra.mxu0 0
    %2317 = vmatprep.subr.bf16.mxu0 0
    %2318 = vmatpush1.bf16.msra.mxu0 0
    %2319 = vmatprep.subr.bf16.mxu0 0
    %2320 = vmatpush1.bf16.msra.mxu0 0
    %2321 = vmatprep.subr.bf16.mxu0 0
    %2322 = vmatpush1.bf16.msra.mxu0 0
    %2323 = vmatprep.subr.bf16.mxu0 0
    %2324 = vmatpush1.bf16.msra.mxu0 0
    %2325 = vmatprep.subr.bf16.mxu0 0
    %2326 = vmatpush1.bf16.msra.mxu0 0
    %2327 = vmatprep.subr.bf16.mxu0 0
    %2328 = vmatpush1.bf16.msra.mxu0 %v2308
    %2329 = vmatprep.subr.bf16.mxu0 0
    %2330 = vmatpush2.bf16.msra.mxu0 0
    %2331 = vmatprep.subr.bf16.mxu0 0
    %2332 = vmatpush2.bf16.msra.mxu0 0
    %2333 = vmatprep.subr.bf16.mxu0 0
    %2334 = vmatpush2.bf16.msra.mxu0 0
    %2335 = vmatprep.subr.bf16.mxu0 0
    %2336 = vmatpush2.bf16.msra.mxu0 0
    %2337 = vmatprep.subr.bf16.mxu0 0
    %2338 = vmatpush2.bf16.msra.mxu0 0
    %2339 = vmatprep.subr.bf16.mxu0 0
    %2340 = vmatpush2.bf16.msra.mxu0 0
    %2341 = vmatprep.subr.bf16.mxu0 0
    %2342 = vmatpush2.bf16.msra.mxu0 0
    %2343 = vmatprep.subr.bf16.mxu0 0
    %2344 = vmatpush2.bf16.msra.mxu0 0
    %2345 = vmatprep.mubr.bf16.mxu0 0
    %2346 = vmatmul.mubr.bf16.gmra.mxu0 %v2311
    %v2347 = vpop.f32.mrf.mxu0
    %v2348 = vadd.f32 0.0, %v2347
    %v2349 = vpop.f32.mrf.mxu0
    %v2350 = vpop.f32.mrf.mxu0
    %v2351 = vadd.f32 0.0, %v2350
    %v2352 = vpop.f32.mrf.mxu0
    %2353 = vdwg.mxu0
    %2354 = vrot.lane.b32.xlu0 %v2112, 112
    %v2355 = vpop.permute.xlu0 %2354
    %2356 = vrot.lane.b32.xlu0 %v2112, 80
    %v2357 = vpop.permute.xlu0 %2356
    %v2359 = vsel %vm212, %v2355, 0
    %v2362 = vsel %vm212, %v2357, 0
    %2364 = vmatprep.subr.bf16.mxu0 0
    %2365 = vmatpush1.bf16.xpose.msra.mxu0 0
    %2366 = vmatprep.subr.bf16.mxu0 0
    %2367 = vmatpush1.bf16.xpose.msra.mxu0 0
    %2368 = vmatprep.subr.bf16.mxu0 0
    %2369 = vmatpush1.bf16.xpose.msra.mxu0 0
    %2370 = vmatprep.subr.bf16.mxu0 0
    %2371 = vmatpush1.bf16.xpose.msra.mxu0 0
    %2372 = vmatprep.subr.bf16.mxu0 0
    %2373 = vmatpush1.bf16.xpose.msra.mxu0 0
    %2374 = vmatprep.subr.bf16.mxu0 0
    %2375 = vmatpush1.bf16.xpose.msra.mxu0 0
    %2376 = vmatprep.subr.bf16.mxu0 0
    %2377 = vmatpush1.bf16.xpose.msra.mxu0 0
    %2378 = vmatprep.subr.bf16.mxu0 0
    %2379 = vmatpush1.bf16.xpose.msra.mxu0 %v2362
    %2380 = vmatprep.subr.bf16.mxu0 0
    %2381 = vmatpush2.bf16.xpose.msra.mxu0 0
    %2382 = vmatprep.subr.bf16.mxu0 0
    %2383 = vmatpush2.bf16.xpose.msra.mxu0 0
    %2384 = vmatprep.subr.bf16.mxu0 0
    %2385 = vmatpush2.bf16.xpose.msra.mxu0 0
    %2386 = vmatprep.subr.bf16.mxu0 0
    %2387 = vmatpush2.bf16.xpose.msra.mxu0 0
    %2388 = vmatprep.subr.bf16.mxu0 0
    %2389 = vmatpush2.bf16.xpose.msra.mxu0 0
    %2390 = vmatprep.subr.bf16.mxu0 0
    %2391 = vmatpush2.bf16.xpose.msra.mxu0 0
    %2392 = vmatprep.subr.bf16.mxu0 0
    %2393 = vmatpush2.bf16.xpose.msra.mxu0 0
    %2394 = vmatprep.subr.bf16.mxu0 0
    %2395 = vmatpush2.bf16.xpose.msra.mxu0 0
    %2396 = vmatprep.mubr.bf16.mxu0 0
    %2397 = vmatmul.mubr.bf16.gmra.mxu0 %v2359
    %v2398 = vpop.f32.mrf.mxu0
    %v2399 = vadd.f32 %v278, %v2398
    %v2400 = vpop.f32.mrf.mxu0
    %v2401 = vpop.f32.mrf.mxu0
    %v2402 = vadd.f32 %v279, %v2401
    %v2403 = vpop.f32.mrf.mxu0
    %2404 = vdwg.mxu0
    %v2405 = vsel %vm399, %v2399, -inf
    %2406 = vmax.xlane.f32.xlu0 %v2405
    %v2407 = vpop.xlane.xlu0 %2406
    %v2408 = vsel %vm399, %v2402, -inf
    %2409 = vmax.xlane.f32.xlu0 %v2408
    %v2410 = vpop.xlane.xlu0 %2409
    %v2411 = vsub.f32 %v2399, %v2407
    %v2412 = vsub.f32 %v2402, %v2410
    %v2413 = vmul.f32 %v2411, 1.442695
    %v2414 = vpow.pop %v2413
    %v2415 = vmul.f32 %v2412, 1.442695
    %v2416 = vpow.pop %v2415
    %v2417 = vsel %vm399, %v2414, 0.0
    %2418 = vadd.xlane.f32.xlu0 %v2417
    %v2419 = vpop.xlane.xlu0 %2418
    %v2420 = vsel %vm399, %v2416, 0.0
    %2421 = vadd.xlane.f32.xlu0 %v2420
    %v2422 = vpop.xlane.xlu0 %2421
    %v2423 = vrcp.pop %v2419
    %v2424 = vrcp.pop %v2422
    %v2425 = vmul.f32 %v2414, %v2423
    %v2426 = vmul.f32 %v2416, %v2424
    %v2427 = vpack.c.bf16 %v2426, %v2425
    %2428 = vrot.lane.b32.xlu0 %v2112, 48
    %v2429 = vpop.permute.xlu0 %2428
    %v2432 = vsel %vm399, %v2427, 0
    %2434 = vmatprep.subr.bf16.mxu0 0
    %2435 = vmatpush1.bf16.msra.mxu0 0
    %2436 = vmatprep.subr.bf16.mxu0 0
    %2437 = vmatpush1.bf16.msra.mxu0 0
    %2438 = vmatprep.subr.bf16.mxu0 0
    %2439 = vmatpush1.bf16.msra.mxu0 0
    %2440 = vmatprep.subr.bf16.mxu0 0
    %2441 = vmatpush1.bf16.msra.mxu0 0
    %2442 = vmatprep.subr.bf16.mxu0 0
    %2443 = vmatpush1.bf16.msra.mxu0 0
    %2444 = vmatprep.subr.bf16.mxu0 0
    %2445 = vmatpush1.bf16.msra.mxu0 0
    %2446 = vmatprep.subr.bf16.mxu0 0
    %2447 = vmatpush1.bf16.msra.mxu0 0
    %2448 = vmatprep.subr.bf16.mxu0 0
    %2449 = vmatpush1.bf16.msra.mxu0 %v2429
    %2450 = vmatprep.subr.bf16.mxu0 0
    %2451 = vmatpush2.bf16.msra.mxu0 0
    %2452 = vmatprep.subr.bf16.mxu0 0
    %2453 = vmatpush2.bf16.msra.mxu0 0
    %2454 = vmatprep.subr.bf16.mxu0 0
    %2455 = vmatpush2.bf16.msra.mxu0 0
    %2456 = vmatprep.subr.bf16.mxu0 0
    %2457 = vmatpush2.bf16.msra.mxu0 0
    %2458 = vmatprep.subr.bf16.mxu0 0
    %2459 = vmatpush2.bf16.msra.mxu0 0
    %2460 = vmatprep.subr.bf16.mxu0 0
    %2461 = vmatpush2.bf16.msra.mxu0 0
    %2462 = vmatprep.subr.bf16.mxu0 0
    %2463 = vmatpush2.bf16.msra.mxu0 0
    %2464 = vmatprep.subr.bf16.mxu0 0
    %2465 = vmatpush2.bf16.msra.mxu0 0
    %2466 = vmatprep.mubr.bf16.mxu0 0
    %2467 = vmatmul.mubr.bf16.gmra.mxu0 %v2432
    %v2468 = vpop.f32.mrf.mxu0
    %v2469 = vadd.f32 0.0, %v2468
    %v2470 = vpop.f32.mrf.mxu0
    %v2471 = vpop.f32.mrf.mxu0
    %v2472 = vadd.f32 0.0, %v2471
    %v2473 = vpop.f32.mrf.mxu0
    %2474 = vdwg.mxu0
    %2475 = vrot.lane.b32.xlu0 %v2112, 104
    %v2476 = vpop.permute.xlu0 %2475
    %2477 = vrot.lane.b32.xlu0 %v2112, 72
    %v2478 = vpop.permute.xlu0 %2477
    %v2480 = vsel %vm212, %v2476, 0
    %v2483 = vsel %vm212, %v2478, 0
    %2485 = vmatprep.subr.bf16.mxu0 0
    %2486 = vmatpush1.bf16.xpose.msra.mxu0 0
    %2487 = vmatprep.subr.bf16.mxu0 0
    %2488 = vmatpush1.bf16.xpose.msra.mxu0 0
    %2489 = vmatprep.subr.bf16.mxu0 0
    %2490 = vmatpush1.bf16.xpose.msra.mxu0 0
    %2491 = vmatprep.subr.bf16.mxu0 0
    %2492 = vmatpush1.bf16.xpose.msra.mxu0 0
    %2493 = vmatprep.subr.bf16.mxu0 0
    %2494 = vmatpush1.bf16.xpose.msra.mxu0 0
    %2495 = vmatprep.subr.bf16.mxu0 0
    %2496 = vmatpush1.bf16.xpose.msra.mxu0 0
    %2497 = vmatprep.subr.bf16.mxu0 0
    %2498 = vmatpush1.bf16.xpose.msra.mxu0 0
    %2499 = vmatprep.subr.bf16.mxu0 0
    %2500 = vmatpush1.bf16.xpose.msra.mxu0 %v2483
    %2501 = vmatprep.subr.bf16.mxu0 0
    %2502 = vmatpush2.bf16.xpose.msra.mxu0 0
    %2503 = vmatprep.subr.bf16.mxu0 0
    %2504 = vmatpush2.bf16.xpose.msra.mxu0 0
    %2505 = vmatprep.subr.bf16.mxu0 0
    %2506 = vmatpush2.bf16.xpose.msra.mxu0 0
    %2507 = vmatprep.subr.bf16.mxu0 0
    %2508 = vmatpush2.bf16.xpose.msra.mxu0 0
    %2509 = vmatprep.subr.bf16.mxu0 0
    %2510 = vmatpush2.bf16.xpose.msra.mxu0 0
    %2511 = vmatprep.subr.bf16.mxu0 0
    %2512 = vmatpush2.bf16.xpose.msra.mxu0 0
    %2513 = vmatprep.subr.bf16.mxu0 0
    %2514 = vmatpush2.bf16.xpose.msra.mxu0 0
    %2515 = vmatprep.subr.bf16.mxu0 0
    %2516 = vmatpush2.bf16.xpose.msra.mxu0 0
    %2517 = vmatprep.mubr.bf16.mxu0 0
    %2518 = vmatmul.mubr.bf16.gmra.mxu0 %v2480
    %v2519 = vpop.f32.mrf.mxu0
    %v2520 = vadd.f32 %v278, %v2519
    %v2521 = vpop.f32.mrf.mxu0
    %v2522 = vpop.f32.mrf.mxu0
    %v2523 = vadd.f32 %v279, %v2522
    %v2524 = vpop.f32.mrf.mxu0
    %2525 = vdwg.mxu0
    %v2526 = vsel %vm399, %v2520, -inf
    %2527 = vmax.xlane.f32.xlu0 %v2526
    %v2528 = vpop.xlane.xlu0 %2527
    %v2529 = vsel %vm399, %v2523, -inf
    %2530 = vmax.xlane.f32.xlu0 %v2529
    %v2531 = vpop.xlane.xlu0 %2530
    %v2532 = vsub.f32 %v2520, %v2528
    %v2533 = vsub.f32 %v2523, %v2531
    %v2534 = vmul.f32 %v2532, 1.442695
    %v2535 = vpow.pop %v2534
    %v2536 = vmul.f32 %v2533, 1.442695
    %v2537 = vpow.pop %v2536
    %v2538 = vsel %vm399, %v2535, 0.0
    %2539 = vadd.xlane.f32.xlu0 %v2538
    %v2540 = vpop.xlane.xlu0 %2539
    %v2541 = vsel %vm399, %v2537, 0.0
    %2542 = vadd.xlane.f32.xlu0 %v2541
    %v2543 = vpop.xlane.xlu0 %2542
    %v2544 = vrcp.pop %v2540
    %v2545 = vrcp.pop %v2543
    %v2546 = vmul.f32 %v2535, %v2544
    %v2547 = vmul.f32 %v2537, %v2545
    %v2548 = vpack.c.bf16 %v2547, %v2546
    %2549 = vrot.lane.b32.xlu0 %v2112, 40
    %v2550 = vpop.permute.xlu0 %2549
    %v2553 = vsel %vm399, %v2548, 0
    %2555 = vmatprep.subr.bf16.mxu0 0
    %2556 = vmatpush1.bf16.msra.mxu0 0
    %2557 = vmatprep.subr.bf16.mxu0 0
    %2558 = vmatpush1.bf16.msra.mxu0 0
    %2559 = vmatprep.subr.bf16.mxu0 0
    %2560 = vmatpush1.bf16.msra.mxu0 0
    %2561 = vmatprep.subr.bf16.mxu0 0
    %2562 = vmatpush1.bf16.msra.mxu0 0
    %2563 = vmatprep.subr.bf16.mxu0 0
    %2564 = vmatpush1.bf16.msra.mxu0 0
    %2565 = vmatprep.subr.bf16.mxu0 0
    %2566 = vmatpush1.bf16.msra.mxu0 0
    %2567 = vmatprep.subr.bf16.mxu0 0
    %2568 = vmatpush1.bf16.msra.mxu0 0
    %2569 = vmatprep.subr.bf16.mxu0 0
    %2570 = vmatpush1.bf16.msra.mxu0 %v2550
    %2571 = vmatprep.subr.bf16.mxu0 0
    %2572 = vmatpush2.bf16.msra.mxu0 0
    %2573 = vmatprep.subr.bf16.mxu0 0
    %2574 = vmatpush2.bf16.msra.mxu0 0
    %2575 = vmatprep.subr.bf16.mxu0 0
    %2576 = vmatpush2.bf16.msra.mxu0 0
    %2577 = vmatprep.subr.bf16.mxu0 0
    %2578 = vmatpush2.bf16.msra.mxu0 0
    %2579 = vmatprep.subr.bf16.mxu0 0
    %2580 = vmatpush2.bf16.msra.mxu0 0
    %2581 = vmatprep.subr.bf16.mxu0 0
    %2582 = vmatpush2.bf16.msra.mxu0 0
    %2583 = vmatprep.subr.bf16.mxu0 0
    %2584 = vmatpush2.bf16.msra.mxu0 0
    %2585 = vmatprep.subr.bf16.mxu0 0
    %2586 = vmatpush2.bf16.msra.mxu0 0
    %2587 = vmatprep.mubr.bf16.mxu0 0
    %2588 = vmatmul.mubr.bf16.gmra.mxu0 %v2553
    %v2589 = vpop.f32.mrf.mxu0
    %v2590 = vadd.f32 0.0, %v2589
    %v2591 = vpop.f32.mrf.mxu0
    %v2592 = vpop.f32.mrf.mxu0
    %v2593 = vadd.f32 0.0, %v2592
    %v2594 = vpop.f32.mrf.mxu0
    %2595 = vdwg.mxu0
    %2598 = vrot.lane.b32.xlu0 %v2348, 8
    %v2599 = vpop.permute.xlu0 %2598
    %2600 = vrot.lane.b32.xlu0 %v2351, 8
    %v2601 = vpop.permute.xlu0 %2600
    %2606 = vrot.lane.b32.xlu0 %v2469, 16
    %v2607 = vpop.permute.xlu0 %2606
    %2608 = vrot.lane.b32.xlu0 %v2472, 16
    %v2609 = vpop.permute.xlu0 %2608
    %2614 = vrot.lane.b32.xlu0 %v2590, 24
    %v2615 = vpop.permute.xlu0 %2614
    %2616 = vrot.lane.b32.xlu0 %v2593, 24
    %v2617 = vpop.permute.xlu0 %2616
    %v2620 = vsel %vm212, %v2227, %v2599
    %v2621 = vsel %vm212, %v2230, %v2601
    %v2622 = vsel %vm399, %v2620, %v2607
    %v2623 = vsel %vm399, %v2621, %v2609
    %v2624 = vsel %vm861, %v2622, %v2615
    %v2625 = vsel %vm861, %v2623, %v2617
    %v2626 = vpack.c.bf16 %v2625, %v2624
    %v2627 = vld [vmem:[#allocation2 + $0xe8] sm:$0xf]
    %v2628 = vld [vmem:[#allocation2 + $0xec] sm:$0xf]
    %v2629 = vld [vmem:[#allocation2 + $0xf0] sm:$0xf]
    %v2630 = vld [vmem:[#allocation2 + $0xf4] sm:$0xf]
    %v2631 = vld [vmem:[%s3 + $0x12] sm:$0x1]
    %v2632 = vlaneseq
    %v2633 = vshrl.u32 %v2632, 7
    %v2634 = vsub.s32 0, %v2633
    %v2635 = vrot.slane %v2631, %v2634
    %v2640 = vunpack.c.l.b16 %v2627
    %v2641 = vunpack.c.l.b16 %v2628
    %v2642 = vunpack.c.l.b16 %v2629
    %v2643 = vunpack.c.l.b16 %v2630
    %v2644 = vpack.c.b16 %v2641, %v2640
    %v2645 = vpack.c.b16 %v2643, %v2642
    %v2649 = vsel %vm80, %v2626, 0
    %2651 = vmatprep.subr.bf16.mxu0 0
    %2652 = vmatpush1.bf16.msra.mxu0 0
    %2653 = vmatprep.subr.bf16.mxu0 0
    %2654 = vmatpush1.bf16.msra.mxu0 0
    %2655 = vmatprep.subr.bf16.mxu0 0
    %2656 = vmatpush1.bf16.msra.mxu0 0
    %2657 = vmatprep.subr.bf16.mxu0 0
    %2658 = vmatpush1.bf16.msra.mxu0 0
    %2659 = vmatprep.subr.bf16.mxu0 0
    %2660 = vmatpush1.bf16.msra.mxu0 0
    %2661 = vmatprep.subr.bf16.mxu0 0
    %2662 = vmatpush1.bf16.msra.mxu0 0
    %2663 = vmatprep.subr.bf16.mxu0 0
    %2664 = vmatpush1.bf16.msra.mxu0 %v2645
    %2665 = vmatprep.subr.bf16.mxu0 0
    %2666 = vmatpush1.bf16.msra.mxu0 %v2644
    %2667 = vmatprep.subr.bf16.mxu0 0
    %2668 = vmatpush2.bf16.msra.mxu0 0
    %2669 = vmatprep.subr.bf16.mxu0 0
    %2670 = vmatpush2.bf16.msra.mxu0 0
    %2671 = vmatprep.subr.bf16.mxu0 0
    %2672 = vmatpush2.bf16.msra.mxu0 0
    %2673 = vmatprep.subr.bf16.mxu0 0
    %2674 = vmatpush2.bf16.msra.mxu0 0
    %2675 = vmatprep.subr.bf16.mxu0 0
    %2676 = vmatpush2.bf16.msra.mxu0 0
    %2677 = vmatprep.subr.bf16.mxu0 0
    %2678 = vmatpush2.bf16.msra.mxu0 0
    %2679 = vmatprep.subr.bf16.mxu0 0
    %2680 = vmatpush2.bf16.msra.mxu0 0
    %2681 = vmatprep.subr.bf16.mxu0 0
    %2682 = vmatpush2.bf16.msra.mxu0 0
    %2683 = vmatprep.mubr.bf16.mxu0 0
    %2684 = vmatmul.mubr.bf16.gmra.mxu0 %v2649
    %v2685 = vpop.f32.mrf.mxu0
    %v2686 = vadd.f32 %v2635, %v2685
    %v2687 = vpop.f32.mrf.mxu0
    %v2688 = vpop.f32.mrf.mxu0
    %v2689 = vadd.f32 %v2635, %v2688
    %v2690 = vpop.f32.mrf.mxu0
    %2691 = vdwg.mxu0
    %v2692 = vadd.f32 %v274, %v2686
    %v2693 = vadd.f32 %v275, %v2689
    %v2694 = vld [vmem:[%s3 + $0x13] sm:$0x1]
    %v2695 = vld [vmem:[%s3 + $0x14] sm:$0x1]
    %v2696 = vsel %vm80, %v2692, 0.0
    %2697 = vadd.xlane.f32.xlu0 %v2696
    %v2698 = vpop.xlane.xlu0 %2697
    %v2699 = vsel %vm80, %v2693, 0.0
    %2700 = vadd.xlane.f32.xlu0 %v2699
    %v2701 = vpop.xlane.xlu0 %2700
    %v2702 = vmul.f32 %v2698, %v940
    %v2703 = vmul.f32 %v2701, %v940
    %v2704 = vsub.f32 %v2692, %v2702
    %v2705 = vsub.f32 %v2693, %v2703
    %v2706 = vmul.f32 %v2704, %v2704
    %v2707 = vmul.f32 %v2705, %v2705
    %v2708 = vsel %vm80, %v2706, 0.0
    %2709 = vadd.xlane.f32.xlu0 %v2708
    %v2710 = vpop.xlane.xlu0 %2709
    %v2711 = vsel %vm80, %v2707, 0.0
    %2712 = vadd.xlane.f32.xlu0 %v2711
    %v2713 = vpop.xlane.xlu0 %2712
    %v2714 = vmul.f32 %v2710, %v940
    %v2715 = vmul.f32 %v2713, %v940
    %v2716 = vadd.f32 %v2714, 1e-05
    %v2717 = vadd.f32 %v2715, 1e-05
    %v2718 = vrsqrt.pop %v2716
    %v2719 = vrsqrt.pop %v2717
    %v2720 = vmul.f32 %v2704, %v2718
    %v2721 = vmul.f32 %v2705, %v2719
    %v2722 = vlaneseq
    %v2723 = vshrl.u32 %v2722, 7
    %v2724 = vsub.s32 0, %v2723
    %v2725 = vrot.slane %v2694, %v2724
    %v2726 = vmul.f32 %v2720, %v2725
    %v2727 = vmul.f32 %v2721, %v2725
    %v2728 = vlaneseq
    %v2729 = vshrl.u32 %v2728, 7
    %v2730 = vsub.s32 0, %v2729
    %v2731 = vrot.slane %v2695, %v2730
    %v2732 = vadd.f32 %v2726, %v2731
    %v2733 = vadd.f32 %v2727, %v2731
    %v2734 = vpack.c.bf16 %v2733, %v2732
    %v2735 = vld [vmem:[#allocation2 + $0xf8] sm:$0xf]
    %v2736 = vld [vmem:[#allocation2 + $0xfc] sm:$0xf]
    %v2737 = vld [vmem:[#allocation2 + $0x100] sm:$0xf]
    %v2738 = vld [vmem:[#allocation2 + $0x104] sm:$0xf]
    %v2739 = vld [vmem:[%s3 + $0x15] sm:$0x1]
    %v2740 = vlaneseq
    %v2741 = vshrl.u32 %v2740, 7
    %v2742 = vsub.s32 0, %v2741
    %v2743 = vrot.slane %v2739, %v2742
    %v2748 = vunpack.c.l.b16 %v2735
    %v2749 = vunpack.c.l.b16 %v2736
    %v2750 = vunpack.c.l.b16 %v2737
    %v2751 = vunpack.c.l.b16 %v2738
    %v2752 = vpack.c.b16 %v2749, %v2748
    %v2753 = vpack.c.b16 %v2751, %v2750
    %v2757 = vsel %vm80, %v2734, 0
    %2759 = vmatprep.subr.bf16.mxu0 0
    %2760 = vmatpush1.bf16.msra.mxu0 0
    %2761 = vmatprep.subr.bf16.mxu0 0
    %2762 = vmatpush1.bf16.msra.mxu0 0
    %2763 = vmatprep.subr.bf16.mxu0 0
    %2764 = vmatpush1.bf16.msra.mxu0 0
    %2765 = vmatprep.subr.bf16.mxu0 0
    %2766 = vmatpush1.bf16.msra.mxu0 0
    %2767 = vmatprep.subr.bf16.mxu0 0
    %2768 = vmatpush1.bf16.msra.mxu0 0
    %2769 = vmatprep.subr.bf16.mxu0 0
    %2770 = vmatpush1.bf16.msra.mxu0 0
    %2771 = vmatprep.subr.bf16.mxu0 0
    %2772 = vmatpush1.bf16.msra.mxu0 %v2753
    %2773 = vmatprep.subr.bf16.mxu0 0
    %2774 = vmatpush1.bf16.msra.mxu0 %v2752
    %2775 = vmatprep.subr.bf16.mxu0 0
    %2776 = vmatpush2.bf16.msra.mxu0 0
    %2777 = vmatprep.subr.bf16.mxu0 0
    %2778 = vmatpush2.bf16.msra.mxu0 0
    %2779 = vmatprep.subr.bf16.mxu0 0
    %2780 = vmatpush2.bf16.msra.mxu0 0
    %2781 = vmatprep.subr.bf16.mxu0 0
    %2782 = vmatpush2.bf16.msra.mxu0 0
    %2783 = vmatprep.subr.bf16.mxu0 0
    %2784 = vmatpush2.bf16.msra.mxu0 0
    %2785 = vmatprep.subr.bf16.mxu0 0
    %2786 = vmatpush2.bf16.msra.mxu0 0
    %2787 = vmatprep.subr.bf16.mxu0 0
    %2788 = vmatpush2.bf16.msra.mxu0 0
    %2789 = vmatprep.subr.bf16.mxu0 0
    %2790 = vmatpush2.bf16.msra.mxu0 0
    %2791 = vmatprep.mubr.bf16.mxu0 0
    %2792 = vmatmul.mubr.bf16.gmra.mxu0 %v2757
    %v2793 = vpop.f32.mrf.mxu0
    %v2794 = vadd.f32 %v2743, %v2793
    %v2795 = vpop.f32.mrf.mxu0
    %v2796 = vpop.f32.mrf.mxu0
    %v2797 = vadd.f32 %v2743, %v2796
    %v2798 = vpop.f32.mrf.mxu0
    %2799 = vdwg.mxu0
    %v2800 = vpack.c.bf16 %v2045, %v2044
    %v2801 = vld [vmem:[#allocation2 + $0x108] sm:$0xf]
    %v2802 = vld [vmem:[#allocation2 + $0x10c] sm:$0xf]
    %v2803 = vld [vmem:[#allocation2 + $0x110] sm:$0xf]
    %v2804 = vld [vmem:[#allocation2 + $0x114] sm:$0xf]
    %v2805 = vld [vmem:[%s3 + $0x16] sm:$0x1]
    %v2806 = vlaneseq
    %v2807 = vshrl.u32 %v2806, 7
    %v2808 = vsub.s32 0, %v2807
    %v2809 = vrot.slane %v2805, %v2808
    %v2814 = vunpack.c.l.b16 %v2801
    %v2815 = vunpack.c.l.b16 %v2802
    %v2816 = vunpack.c.l.b16 %v2803
    %v2817 = vunpack.c.l.b16 %v2804
    %v2818 = vpack.c.b16 %v2815, %v2814
    %v2819 = vpack.c.b16 %v2817, %v2816
    %v2823 = vsel %vm80, %v2800, 0
    %2825 = vmatprep.subr.bf16.mxu0 0
    %2826 = vmatpush1.bf16.msra.mxu0 0
    %2827 = vmatprep.subr.bf16.mxu0 0
    %2828 = vmatpush1.bf16.msra.mxu0 0
    %2829 = vmatprep.subr.bf16.mxu0 0
    %2830 = vmatpush1.bf16.msra.mxu0 0
    %2831 = vmatprep.subr.bf16.mxu0 0
    %2832 = vmatpush1.bf16.msra.mxu0 0
    %2833 = vmatprep.subr.bf16.mxu0 0
    %2834 = vmatpush1.bf16.msra.mxu0 0
    %2835 = vmatprep.subr.bf16.mxu0 0
    %2836 = vmatpush1.bf16.msra.mxu0 0
    %2837 = vmatprep.subr.bf16.mxu0 0
    %2838 = vmatpush1.bf16.msra.mxu0 %v2819
    %2839 = vmatprep.subr.bf16.mxu0 0
    %2840 = vmatpush1.bf16.msra.mxu0 %v2818
    %2841 = vmatprep.subr.bf16.mxu0 0
    %2842 = vmatpush2.bf16.msra.mxu0 0
    %2843 = vmatprep.subr.bf16.mxu0 0
    %2844 = vmatpush2.bf16.msra.mxu0 0
    %2845 = vmatprep.subr.bf16.mxu0 0
    %2846 = vmatpush2.bf16.msra.mxu0 0
    %2847 = vmatprep.subr.bf16.mxu0 0
    %2848 = vmatpush2.bf16.msra.mxu0 0
    %2849 = vmatprep.subr.bf16.mxu0 0
    %2850 = vmatpush2.bf16.msra.mxu0 0
    %2851 = vmatprep.subr.bf16.mxu0 0
    %2852 = vmatpush2.bf16.msra.mxu0 0
    %2853 = vmatprep.subr.bf16.mxu0 0
    %2854 = vmatpush2.bf16.msra.mxu0 0
    %2855 = vmatprep.subr.bf16.mxu0 0
    %2856 = vmatpush2.bf16.msra.mxu0 0
    %2857 = vmatprep.mubr.bf16.mxu0 0
    %2858 = vmatmul.mubr.bf16.gmra.mxu0 %v2823
    %v2859 = vpop.f32.mrf.mxu0
    %v2860 = vadd.f32 %v2809, %v2859
    %v2861 = vpop.f32.mrf.mxu0
    %v2862 = vpop.f32.mrf.mxu0
    %v2863 = vadd.f32 %v2809, %v2862
    %v2864 = vpop.f32.mrf.mxu0
    %2865 = vdwg.mxu0
    %v2866 = vpack.c.bf16 %v2797, %v2794
    %v2867 = vpack.c.bf16 %v2863, %v2860
    %v2869 = vsel %vm212, %v2866, 0
    %v2872 = vsel %vm212, %v2867, 0
    %2874 = vmatprep.subr.bf16.mxu0 0
    %2875 = vmatpush1.bf16.xpose.msra.mxu0 0
    %2876 = vmatprep.subr.bf16.mxu0 0
    %2877 = vmatpush1.bf16.xpose.msra.mxu0 0
    %2878 = vmatprep.subr.bf16.mxu0 0
    %2879 = vmatpush1.bf16.xpose.msra.mxu0 0
    %2880 = vmatprep.subr.bf16.mxu0 0
    %2881 = vmatpush1.bf16.xpose.msra.mxu0 0
    %2882 = vmatprep.subr.bf16.mxu0 0
    %2883 = vmatpush1.bf16.xpose.msra.mxu0 0
    %2884 = vmatprep.subr.bf16.mxu0 0
    %2885 = vmatpush1.bf16.xpose.msra.mxu0 0
    %2886 = vmatprep.subr.bf16.mxu0 0
    %2887 = vmatpush1.bf16.xpose.msra.mxu0 0
    %2888 = vmatprep.subr.bf16.mxu0 0
    %2889 = vmatpush1.bf16.xpose.msra.mxu0 %v2872
    %2890 = vmatprep.subr.bf16.mxu0 0
    %2891 = vmatpush2.bf16.xpose.msra.mxu0 0
    %2892 = vmatprep.subr.bf16.mxu0 0
    %2893 = vmatpush2.bf16.xpose.msra.mxu0 0
    %2894 = vmatprep.subr.bf16.mxu0 0
    %2895 = vmatpush2.bf16.xpose.msra.mxu0 0
    %2896 = vmatprep.subr.bf16.mxu0 0
    %2897 = vmatpush2.bf16.xpose.msra.mxu0 0
    %2898 = vmatprep.subr.bf16.mxu0 0
    %2899 = vmatpush2.bf16.xpose.msra.mxu0 0
    %2900 = vmatprep.subr.bf16.mxu0 0
    %2901 = vmatpush2.bf16.xpose.msra.mxu0 0
    %2902 = vmatprep.subr.bf16.mxu0 0
    %2903 = vmatpush2.bf16.xpose.msra.mxu0 0
    %2904 = vmatprep.subr.bf16.mxu0 0
    %2905 = vmatpush2.bf16.xpose.msra.mxu0 0
    %2906 = vmatprep.mubr.bf16.mxu0 0
    %2907 = vmatmul.mubr.bf16.gmra.mxu0 %v2869
    %v2908 = vpop.f32.mrf.mxu0
    %v2909 = vadd.f32 %v280, %v2908
    %v2910 = vpop.f32.mrf.mxu0
    %v2911 = vpop.f32.mrf.mxu0
    %v2912 = vadd.f32 %v281, %v2911
    %v2913 = vpop.f32.mrf.mxu0
    %2914 = vdwg.mxu0
    %v2915 = vsel %vm399, %v2909, -inf
    %2916 = vmax.xlane.f32.xlu0 %v2915
    %v2917 = vpop.xlane.xlu0 %2916
    %v2918 = vsel %vm399, %v2912, -inf
    %2919 = vmax.xlane.f32.xlu0 %v2918
    %v2920 = vpop.xlane.xlu0 %2919
    %v2921 = vsub.f32 %v2909, %v2917
    %v2922 = vsub.f32 %v2912, %v2920
    %v2923 = vmul.f32 %v2921, 1.442695
    %v2924 = vpow.pop %v2923
    %v2925 = vmul.f32 %v2922, 1.442695
    %v2926 = vpow.pop %v2925
    %v2927 = vsel %vm399, %v2924, 0.0
    %2928 = vadd.xlane.f32.xlu0 %v2927
    %v2929 = vpop.xlane.xlu0 %2928
    %v2930 = vsel %vm399, %v2926, 0.0
    %2931 = vadd.xlane.f32.xlu0 %v2930
    %v2932 = vpop.xlane.xlu0 %2931
    %v2933 = vrcp.pop %v2929
    %v2934 = vrcp.pop %v2932
    %v2935 = vmul.f32 %v2924, %v2933
    %v2936 = vmul.f32 %v2926, %v2934
    %v2937 = vpack.c.bf16 %v2936, %v2935
    %2939 = vrot.lane.b32.xlu0 %v2867, 96
    %v2940 = vpop.permute.xlu0 %2939
    %v2943 = vsel %vm399, %v2937, 0
    %2945 = vmatprep.subr.bf16.mxu0 0
    %2946 = vmatpush1.bf16.msra.mxu0 0
    %2947 = vmatprep.subr.bf16.mxu0 0
    %2948 = vmatpush1.bf16.msra.mxu0 0
    %2949 = vmatprep.subr.bf16.mxu0 0
    %2950 = vmatpush1.bf16.msra.mxu0 0
    %2951 = vmatprep.subr.bf16.mxu0 0
    %2952 = vmatpush1.bf16.msra.mxu0 0
    %2953 = vmatprep.subr.bf16.mxu0 0
    %2954 = vmatpush1.bf16.msra.mxu0 0
    %2955 = vmatprep.subr.bf16.mxu0 0
    %2956 = vmatpush1.bf16.msra.mxu0 0
    %2957 = vmatprep.subr.bf16.mxu0 0
    %2958 = vmatpush1.bf16.msra.mxu0 0
    %2959 = vmatprep.subr.bf16.mxu0 0
    %2960 = vmatpush1.bf16.msra.mxu0 %v2940
    %2961 = vmatprep.subr.bf16.mxu0 0
    %2962 = vmatpush2.bf16.msra.mxu0 0
    %2963 = vmatprep.subr.bf16.mxu0 0
    %2964 = vmatpush2.bf16.msra.mxu0 0
    %2965 = vmatprep.subr.bf16.mxu0 0
    %2966 = vmatpush2.bf16.msra.mxu0 0
    %2967 = vmatprep.subr.bf16.mxu0 0
    %2968 = vmatpush2.bf16.msra.mxu0 0
    %2969 = vmatprep.subr.bf16.mxu0 0
    %2970 = vmatpush2.bf16.msra.mxu0 0
    %2971 = vmatprep.subr.bf16.mxu0 0
    %2972 = vmatpush2.bf16.msra.mxu0 0
    %2973 = vmatprep.subr.bf16.mxu0 0
    %2974 = vmatpush2.bf16.msra.mxu0 0
    %2975 = vmatprep.subr.bf16.mxu0 0
    %2976 = vmatpush2.bf16.msra.mxu0 0
    %2977 = vmatprep.mubr.bf16.mxu0 0
    %2978 = vmatmul.mubr.bf16.gmra.mxu0 %v2943
    %v2979 = vpop.f32.mrf.mxu0
    %v2980 = vadd.f32 0.0, %v2979
    %v2981 = vpop.f32.mrf.mxu0
    %v2982 = vpop.f32.mrf.mxu0
    %v2983 = vadd.f32 0.0, %v2982
    %v2984 = vpop.f32.mrf.mxu0
    %2985 = vdwg.mxu0
    %2987 = vrot.lane.b32.xlu0 %v2866, 120
    %v2988 = vpop.permute.xlu0 %2987
    %2989 = vrot.lane.b32.xlu0 %v2867, 120
    %v2990 = vpop.permute.xlu0 %2989
    %v2992 = vsel %vm212, %v2988, 0
    %v2995 = vsel %vm212, %v2990, 0
    %2997 = vmatprep.subr.bf16.mxu0 0
    %2998 = vmatpush1.bf16.xpose.msra.mxu0 0
    %2999 = vmatprep.subr.bf16.mxu0 0
    %3000 = vmatpush1.bf16.xpose.msra.mxu0 0
    %3001 = vmatprep.subr.bf16.mxu0 0
    %3002 = vmatpush1.bf16.xpose.msra.mxu0 0
    %3003 = vmatprep.subr.bf16.mxu0 0
    %3004 = vmatpush1.bf16.xpose.msra.mxu0 0
    %3005 = vmatprep.subr.bf16.mxu0 0
    %3006 = vmatpush1.bf16.xpose.msra.mxu0 0
    %3007 = vmatprep.subr.bf16.mxu0 0
    %3008 = vmatpush1.bf16.xpose.msra.mxu0 0
    %3009 = vmatprep.subr.bf16.mxu0 0
    %3010 = vmatpush1.bf16.xpose.msra.mxu0 0
    %3011 = vmatprep.subr.bf16.mxu0 0
    %3012 = vmatpush1.bf16.xpose.msra.mxu0 %v2995
    %3013 = vmatprep.subr.bf16.mxu0 0
    %3014 = vmatpush2.bf16.xpose.msra.mxu0 0
    %3015 = vmatprep.subr.bf16.mxu0 0
    %3016 = vmatpush2.bf16.xpose.msra.mxu0 0
    %3017 = vmatprep.subr.bf16.mxu0 0
    %3018 = vmatpush2.bf16.xpose.msra.mxu0 0
    %3019 = vmatprep.subr.bf16.mxu0 0
    %3020 = vmatpush2.bf16.xpose.msra.mxu0 0
    %3021 = vmatprep.subr.bf16.mxu0 0
    %3022 = vmatpush2.bf16.xpose.msra.mxu0 0
    %3023 = vmatprep.subr.bf16.mxu0 0
    %3024 = vmatpush2.bf16.xpose.msra.mxu0 0
    %3025 = vmatprep.subr.bf16.mxu0 0
    %3026 = vmatpush2.bf16.xpose.msra.mxu0 0
    %3027 = vmatprep.subr.bf16.mxu0 0
    %3028 = vmatpush2.bf16.xpose.msra.mxu0 0
    %3029 = vmatprep.mubr.bf16.mxu0 0
    %3030 = vmatmul.mubr.bf16.gmra.mxu0 %v2992
    %v3031 = vpop.f32.mrf.mxu0
    %v3032 = vadd.f32 %v280, %v3031
    %v3033 = vpop.f32.mrf.mxu0
    %v3034 = vpop.f32.mrf.mxu0
    %v3035 = vadd.f32 %v281, %v3034
    %v3036 = vpop.f32.mrf.mxu0
    %3037 = vdwg.mxu0
    %v3038 = vsel %vm399, %v3032, -inf
    %3039 = vmax.xlane.f32.xlu0 %v3038
    %v3040 = vpop.xlane.xlu0 %3039
    %v3041 = vsel %vm399, %v3035, -inf
    %3042 = vmax.xlane.f32.xlu0 %v3041
    %v3043 = vpop.xlane.xlu0 %3042
    %v3044 = vsub.f32 %v3032, %v3040
    %v3045 = vsub.f32 %v3035, %v3043
    %v3046 = vmul.f32 %v3044, 1.442695
    %v3047 = vpow.pop %v3046
    %v3048 = vmul.f32 %v3045, 1.442695
    %v3049 = vpow.pop %v3048
    %v3050 = vsel %vm399, %v3047, 0.0
    %3051 = vadd.xlane.f32.xlu0 %v3050
    %v3052 = vpop.xlane.xlu0 %3051
    %v3053 = vsel %vm399, %v3049, 0.0
    %3054 = vadd.xlane.f32.xlu0 %v3053
    %v3055 = vpop.xlane.xlu0 %3054
    %v3056 = vrcp.pop %v3052
    %v3057 = vrcp.pop %v3055
    %v3058 = vmul.f32 %v3047, %v3056
    %v3059 = vmul.f32 %v3049, %v3057
    %v3060 = vpack.c.bf16 %v3059, %v3058
    %3061 = vrot.lane.b32.xlu0 %v2867, 88
    %v3062 = vpop.permute.xlu0 %3061
    %v3065 = vsel %vm399, %v3060, 0
    %3067 = vmatprep.subr.bf16.mxu0 0
    %3068 = vmatpush1.bf16.msra.mxu0 0
    %3069 = vmatprep.subr.bf16.mxu0 0
    %3070 = vmatpush1.bf16.msra.mxu0 0
    %3071 = vmatprep.subr.bf16.mxu0 0
    %3072 = vmatpush1.bf16.msra.mxu0 0
    %3073 = vmatprep.subr.bf16.mxu0 0
    %3074 = vmatpush1.bf16.msra.mxu0 0
    %3075 = vmatprep.subr.bf16.mxu0 0
    %3076 = vmatpush1.bf16.msra.mxu0 0
    %3077 = vmatprep.subr.bf16.mxu0 0
    %3078 = vmatpush1.bf16.msra.mxu0 0
    %3079 = vmatprep.subr.bf16.mxu0 0
    %3080 = vmatpush1.bf16.msra.mxu0 0
    %3081 = vmatprep.subr.bf16.mxu0 0
    %3082 = vmatpush1.bf16.msra.mxu0 %v3062
    %3083 = vmatprep.subr.bf16.mxu0 0
    %3084 = vmatpush2.bf16.msra.mxu0 0
    %3085 = vmatprep.subr.bf16.mxu0 0
    %3086 = vmatpush2.bf16.msra.mxu0 0
    %3087 = vmatprep.subr.bf16.mxu0 0
    %3088 = vmatpush2.bf16.msra.mxu0 0
    %3089 = vmatprep.subr.bf16.mxu0 0
    %3090 = vmatpush2.bf16.msra.mxu0 0
    %3091 = vmatprep.subr.bf16.mxu0 0
    %3092 = vmatpush2.bf16.msra.mxu0 0
    %3093 = vmatprep.subr.bf16.mxu0 0
    %3094 = vmatpush2.bf16.msra.mxu0 0
    %3095 = vmatprep.subr.bf16.mxu0 0
    %3096 = vmatpush2.bf16.msra.mxu0 0
    %3097 = vmatprep.subr.bf16.mxu0 0
    %3098 = vmatpush2.bf16.msra.mxu0 0
    %3099 = vmatprep.mubr.bf16.mxu0 0
    %3100 = vmatmul.mubr.bf16.gmra.mxu0 %v3065
    %v3101 = vpop.f32.mrf.mxu0
    %v3102 = vadd.f32 0.0, %v3101
    %v3103 = vpop.f32.mrf.mxu0
    %v3104 = vpop.f32.mrf.mxu0
    %v3105 = vadd.f32 0.0, %v3104
    %v3106 = vpop.f32.mrf.mxu0
    %3107 = vdwg.mxu0
    %3108 = vrot.lane.b32.xlu0 %v2866, 112
    %v3109 = vpop.permute.xlu0 %3108
    %3110 = vrot.lane.b32.xlu0 %v2867, 112
    %v3111 = vpop.permute.xlu0 %3110
    %v3113 = vsel %vm212, %v3109, 0
    %v3116 = vsel %vm212, %v3111, 0
    %3118 = vmatprep.subr.bf16.mxu0 0
    %3119 = vmatpush1.bf16.xpose.msra.mxu0 0
    %3120 = vmatprep.subr.bf16.mxu0 0
    %3121 = vmatpush1.bf16.xpose.msra.mxu0 0
    %3122 = vmatprep.subr.bf16.mxu0 0
    %3123 = vmatpush1.bf16.xpose.msra.mxu0 0
    %3124 = vmatprep.subr.bf16.mxu0 0
    %3125 = vmatpush1.bf16.xpose.msra.mxu0 0
    %3126 = vmatprep.subr.bf16.mxu0 0
    %3127 = vmatpush1.bf16.xpose.msra.mxu0 0
    %3128 = vmatprep.subr.bf16.mxu0 0
    %3129 = vmatpush1.bf16.xpose.msra.mxu0 0
    %3130 = vmatprep.subr.bf16.mxu0 0
    %3131 = vmatpush1.bf16.xpose.msra.mxu0 0
    %3132 = vmatprep.subr.bf16.mxu0 0
    %3133 = vmatpush1.bf16.xpose.msra.mxu0 %v3116
    %3134 = vmatprep.subr.bf16.mxu0 0
    %3135 = vmatpush2.bf16.xpose.msra.mxu0 0
    %3136 = vmatprep.subr.bf16.mxu0 0
    %3137 = vmatpush2.bf16.xpose.msra.mxu0 0
    %3138 = vmatprep.subr.bf16.mxu0 0
    %3139 = vmatpush2.bf16.xpose.msra.mxu0 0
    %3140 = vmatprep.subr.bf16.mxu0 0
    %3141 = vmatpush2.bf16.xpose.msra.mxu0 0
    %3142 = vmatprep.subr.bf16.mxu0 0
    %3143 = vmatpush2.bf16.xpose.msra.mxu0 0
    %3144 = vmatprep.subr.bf16.mxu0 0
    %3145 = vmatpush2.bf16.xpose.msra.mxu0 0
    %3146 = vmatprep.subr.bf16.mxu0 0
    %3147 = vmatpush2.bf16.xpose.msra.mxu0 0
    %3148 = vmatprep.subr.bf16.mxu0 0
    %3149 = vmatpush2.bf16.xpose.msra.mxu0 0
    %3150 = vmatprep.mubr.bf16.mxu0 0
    %3151 = vmatmul.mubr.bf16.gmra.mxu0 %v3113
    %v3152 = vpop.f32.mrf.mxu0
    %v3153 = vadd.f32 %v280, %v3152
    %v3154 = vpop.f32.mrf.mxu0
    %v3155 = vpop.f32.mrf.mxu0
    %v3156 = vadd.f32 %v281, %v3155
    %v3157 = vpop.f32.mrf.mxu0
    %3158 = vdwg.mxu0
    %v3159 = vsel %vm399, %v3153, -inf
    %3160 = vmax.xlane.f32.xlu0 %v3159
    %v3161 = vpop.xlane.xlu0 %3160
    %v3162 = vsel %vm399, %v3156, -inf
    %3163 = vmax.xlane.f32.xlu0 %v3162
    %v3164 = vpop.xlane.xlu0 %3163
    %v3165 = vsub.f32 %v3153, %v3161
    %v3166 = vsub.f32 %v3156, %v3164
    %v3167 = vmul.f32 %v3165, 1.442695
    %v3168 = vpow.pop %v3167
    %v3169 = vmul.f32 %v3166, 1.442695
    %v3170 = vpow.pop %v3169
    %v3171 = vsel %vm399, %v3168, 0.0
    %3172 = vadd.xlane.f32.xlu0 %v3171
    %v3173 = vpop.xlane.xlu0 %3172
    %v3174 = vsel %vm399, %v3170, 0.0
    %3175 = vadd.xlane.f32.xlu0 %v3174
    %v3176 = vpop.xlane.xlu0 %3175
    %v3177 = vrcp.pop %v3173
    %v3178 = vrcp.pop %v3176
    %v3179 = vmul.f32 %v3168, %v3177
    %v3180 = vmul.f32 %v3170, %v3178
    %v3181 = vpack.c.bf16 %v3180, %v3179
    %3182 = vrot.lane.b32.xlu0 %v2867, 80
    %v3183 = vpop.permute.xlu0 %3182
    %v3186 = vsel %vm399, %v3181, 0
    %3188 = vmatprep.subr.bf16.mxu0 0
    %3189 = vmatpush1.bf16.msra.mxu0 0
    %3190 = vmatprep.subr.bf16.mxu0 0
    %3191 = vmatpush1.bf16.msra.mxu0 0
    %3192 = vmatprep.subr.bf16.mxu0 0
    %3193 = vmatpush1.bf16.msra.mxu0 0
    %3194 = vmatprep.subr.bf16.mxu0 0
    %3195 = vmatpush1.bf16.msra.mxu0 0
    %3196 = vmatprep.subr.bf16.mxu0 0
    %3197 = vmatpush1.bf16.msra.mxu0 0
    %3198 = vmatprep.subr.bf16.mxu0 0
    %3199 = vmatpush1.bf16.msra.mxu0 0
    %3200 = vmatprep.subr.bf16.mxu0 0
    %3201 = vmatpush1.bf16.msra.mxu0 0
    %3202 = vmatprep.subr.bf16.mxu0 0
    %3203 = vmatpush1.bf16.msra.mxu0 %v3183
    %3204 = vmatprep.subr.bf16.mxu0 0
    %3205 = vmatpush2.bf16.msra.mxu0 0
    %3206 = vmatprep.subr.bf16.mxu0 0
    %3207 = vmatpush2.bf16.msra.mxu0 0
    %3208 = vmatprep.subr.bf16.mxu0 0
    %3209 = vmatpush2.bf16.msra.mxu0 0
    %3210 = vmatprep.subr.bf16.mxu0 0
    %3211 = vmatpush2.bf16.msra.mxu0 0
    %3212 = vmatprep.subr.bf16.mxu0 0
    %3213 = vmatpush2.bf16.msra.mxu0 0
    %3214 = vmatprep.subr.bf16.mxu0 0
    %3215 = vmatpush2.bf16.msra.mxu0 0
    %3216 = vmatprep.subr.bf16.mxu0 0
    %3217 = vmatpush2.bf16.msra.mxu0 0
    %3218 = vmatprep.subr.bf16.mxu0 0
    %3219 = vmatpush2.bf16.msra.mxu0 0
    %3220 = vmatprep.mubr.bf16.mxu0 0
    %3221 = vmatmul.mubr.bf16.gmra.mxu0 %v3186
    %v3222 = vpop.f32.mrf.mxu0
    %v3223 = vadd.f32 0.0, %v3222
    %v3224 = vpop.f32.mrf.mxu0
    %v3225 = vpop.f32.mrf.mxu0
    %v3226 = vadd.f32 0.0, %v3225
    %v3227 = vpop.f32.mrf.mxu0
    %3228 = vdwg.mxu0
    %3229 = vrot.lane.b32.xlu0 %v2866, 104
    %v3230 = vpop.permute.xlu0 %3229
    %3231 = vrot.lane.b32.xlu0 %v2867, 104
    %v3232 = vpop.permute.xlu0 %3231
    %v3234 = vsel %vm212, %v3230, 0
    %v3237 = vsel %vm212, %v3232, 0
    %3239 = vmatprep.subr.bf16.mxu0 0
    %3240 = vmatpush1.bf16.xpose.msra.mxu0 0
    %3241 = vmatprep.subr.bf16.mxu0 0
    %3242 = vmatpush1.bf16.xpose.msra.mxu0 0
    %3243 = vmatprep.subr.bf16.mxu0 0
    %3244 = vmatpush1.bf16.xpose.msra.mxu0 0
    %3245 = vmatprep.subr.bf16.mxu0 0
    %3246 = vmatpush1.bf16.xpose.msra.mxu0 0
    %3247 = vmatprep.subr.bf16.mxu0 0
    %3248 = vmatpush1.bf16.xpose.msra.mxu0 0
    %3249 = vmatprep.subr.bf16.mxu0 0
    %3250 = vmatpush1.bf16.xpose.msra.mxu0 0
    %3251 = vmatprep.subr.bf16.mxu0 0
    %3252 = vmatpush1.bf16.xpose.msra.mxu0 0
    %3253 = vmatprep.subr.bf16.mxu0 0
    %3254 = vmatpush1.bf16.xpose.msra.mxu0 %v3237
    %3255 = vmatprep.subr.bf16.mxu0 0
    %3256 = vmatpush2.bf16.xpose.msra.mxu0 0
    %3257 = vmatprep.subr.bf16.mxu0 0
    %3258 = vmatpush2.bf16.xpose.msra.mxu0 0
    %3259 = vmatprep.subr.bf16.mxu0 0
    %3260 = vmatpush2.bf16.xpose.msra.mxu0 0
    %3261 = vmatprep.subr.bf16.mxu0 0
    %3262 = vmatpush2.bf16.xpose.msra.mxu0 0
    %3263 = vmatprep.subr.bf16.mxu0 0
    %3264 = vmatpush2.bf16.xpose.msra.mxu0 0
    %3265 = vmatprep.subr.bf16.mxu0 0
    %3266 = vmatpush2.bf16.xpose.msra.mxu0 0
    %3267 = vmatprep.subr.bf16.mxu0 0
    %3268 = vmatpush2.bf16.xpose.msra.mxu0 0
    %3269 = vmatprep.subr.bf16.mxu0 0
    %3270 = vmatpush2.bf16.xpose.msra.mxu0 0
    %3271 = vmatprep.mubr.bf16.mxu0 0
    %3272 = vmatmul.mubr.bf16.gmra.mxu0 %v3234
    %v3273 = vpop.f32.mrf.mxu0
    %v3274 = vadd.f32 %v280, %v3273
    %v3275 = vpop.f32.mrf.mxu0
    %v3276 = vpop.f32.mrf.mxu0
    %v3277 = vadd.f32 %v281, %v3276
    %v3278 = vpop.f32.mrf.mxu0
    %3279 = vdwg.mxu0
    %v3280 = vsel %vm399, %v3274, -inf
    %3281 = vmax.xlane.f32.xlu0 %v3280
    %v3282 = vpop.xlane.xlu0 %3281
    %v3283 = vsel %vm399, %v3277, -inf
    %3284 = vmax.xlane.f32.xlu0 %v3283
    %v3285 = vpop.xlane.xlu0 %3284
    %v3286 = vsub.f32 %v3274, %v3282
    %v3287 = vsub.f32 %v3277, %v3285
    %v3288 = vmul.f32 %v3286, 1.442695
    %v3289 = vpow.pop %v3288
    %v3290 = vmul.f32 %v3287, 1.442695
    %v3291 = vpow.pop %v3290
    %v3292 = vsel %vm399, %v3289, 0.0
    %3293 = vadd.xlane.f32.xlu0 %v3292
    %v3294 = vpop.xlane.xlu0 %3293
    %v3295 = vsel %vm399, %v3291, 0.0
    %3296 = vadd.xlane.f32.xlu0 %v3295
    %v3297 = vpop.xlane.xlu0 %3296
    %v3298 = vrcp.pop %v3294
    %v3299 = vrcp.pop %v3297
    %v3300 = vmul.f32 %v3289, %v3298
    %v3301 = vmul.f32 %v3291, %v3299
    %v3302 = vpack.c.bf16 %v3301, %v3300
    %3303 = vrot.lane.b32.xlu0 %v2867, 72
    %v3304 = vpop.permute.xlu0 %3303
    %v3307 = vsel %vm399, %v3302, 0
    %3309 = vmatprep.subr.bf16.mxu0 0
    %3310 = vmatpush1.bf16.msra.mxu0 0
    %3311 = vmatprep.subr.bf16.mxu0 0
    %3312 = vmatpush1.bf16.msra.mxu0 0
    %3313 = vmatprep.subr.bf16.mxu0 0
    %3314 = vmatpush1.bf16.msra.mxu0 0
    %3315 = vmatprep.subr.bf16.mxu0 0
    %3316 = vmatpush1.bf16.msra.mxu0 0
    %3317 = vmatprep.subr.bf16.mxu0 0
    %3318 = vmatpush1.bf16.msra.mxu0 0
    %3319 = vmatprep.subr.bf16.mxu0 0
    %3320 = vmatpush1.bf16.msra.mxu0 0
    %3321 = vmatprep.subr.bf16.mxu0 0
    %3322 = vmatpush1.bf16.msra.mxu0 0
    %3323 = vmatprep.subr.bf16.mxu0 0
    %3324 = vmatpush1.bf16.msra.mxu0 %v3304
    %3325 = vmatprep.subr.bf16.mxu0 0
    %3326 = vmatpush2.bf16.msra.mxu0 0
    %3327 = vmatprep.subr.bf16.mxu0 0
    %3328 = vmatpush2.bf16.msra.mxu0 0
    %3329 = vmatprep.subr.bf16.mxu0 0
    %3330 = vmatpush2.bf16.msra.mxu0 0
    %3331 = vmatprep.subr.bf16.mxu0 0
    %3332 = vmatpush2.bf16.msra.mxu0 0
    %3333 = vmatprep.subr.bf16.mxu0 0
    %3334 = vmatpush2.bf16.msra.mxu0 0
    %3335 = vmatprep.subr.bf16.mxu0 0
    %3336 = vmatpush2.bf16.msra.mxu0 0
    %3337 = vmatprep.subr.bf16.mxu0 0
    %3338 = vmatpush2.bf16.msra.mxu0 0
    %3339 = vmatprep.subr.bf16.mxu0 0
    %3340 = vmatpush2.bf16.msra.mxu0 0
    %3341 = vmatprep.mubr.bf16.mxu0 0
    %3342 = vmatmul.mubr.bf16.gmra.mxu0 %v3307
    %v3343 = vpop.f32.mrf.mxu0
    %v3344 = vadd.f32 0.0, %v3343
    %v3345 = vpop.f32.mrf.mxu0
    %v3346 = vpop.f32.mrf.mxu0
    %v3347 = vadd.f32 0.0, %v3346
    %v3348 = vpop.f32.mrf.mxu0
    %3349 = vdwg.mxu0
    %3352 = vrot.lane.b32.xlu0 %v3102, 8
    %v3353 = vpop.permute.xlu0 %3352
    %3354 = vrot.lane.b32.xlu0 %v3105, 8
    %v3355 = vpop.permute.xlu0 %3354
    %3360 = vrot.lane.b32.xlu0 %v3223, 16
    %v3361 = vpop.permute.xlu0 %3360
    %3362 = vrot.lane.b32.xlu0 %v3226, 16
    %v3363 = vpop.permute.xlu0 %3362
    %3368 = vrot.lane.b32.xlu0 %v3344, 24
    %v3369 = vpop.permute.xlu0 %3368
    %3370 = vrot.lane.b32.xlu0 %v3347, 24
    %v3371 = vpop.permute.xlu0 %3370
    %v3374 = vsel %vm212, %v2980, %v3353
    %v3375 = vsel %vm212, %v2983, %v3355
    %v3376 = vsel %vm399, %v3374, %v3361
    %v3377 = vsel %vm399, %v3375, %v3363
    %v3378 = vsel %vm861, %v3376, %v3369
    %v3379 = vsel %vm861, %v3377, %v3371
    %v3380 = vpack.c.bf16 %v3379, %v3378
    %v3381 = vld [vmem:[#allocation2 + $0x118] sm:$0xf]
    %v3382 = vld [vmem:[#allocation2 + $0x11c] sm:$0xf]
    %v3383 = vld [vmem:[#allocation2 + $0x120] sm:$0xf]
    %v3384 = vld [vmem:[#allocation2 + $0x124] sm:$0xf]
    %v3385 = vld [vmem:[%s3 + $0x17] sm:$0x1]
    %v3386 = vlaneseq
    %v3387 = vshrl.u32 %v3386, 7
    %v3388 = vsub.s32 0, %v3387
    %v3389 = vrot.slane %v3385, %v3388
    %v3394 = vunpack.c.l.b16 %v3381
    %v3395 = vunpack.c.l.b16 %v3382
    %v3396 = vunpack.c.l.b16 %v3383
    %v3397 = vunpack.c.l.b16 %v3384
    %v3398 = vpack.c.b16 %v3395, %v3394
    %v3399 = vpack.c.b16 %v3397, %v3396
    %v3403 = vsel %vm80, %v3380, 0
    %3405 = vmatprep.subr.bf16.mxu0 0
    %3406 = vmatpush1.bf16.msra.mxu0 0
    %3407 = vmatprep.subr.bf16.mxu0 0
    %3408 = vmatpush1.bf16.msra.mxu0 0
    %3409 = vmatprep.subr.bf16.mxu0 0
    %3410 = vmatpush1.bf16.msra.mxu0 0
    %3411 = vmatprep.subr.bf16.mxu0 0
    %3412 = vmatpush1.bf16.msra.mxu0 0
    %3413 = vmatprep.subr.bf16.mxu0 0
    %3414 = vmatpush1.bf16.msra.mxu0 0
    %3415 = vmatprep.subr.bf16.mxu0 0
    %3416 = vmatpush1.bf16.msra.mxu0 0
    %3417 = vmatprep.subr.bf16.mxu0 0
    %3418 = vmatpush1.bf16.msra.mxu0 %v3399
    %3419 = vmatprep.subr.bf16.mxu0 0
    %3420 = vmatpush1.bf16.msra.mxu0 %v3398
    %3421 = vmatprep.subr.bf16.mxu0 0
    %3422 = vmatpush2.bf16.msra.mxu0 0
    %3423 = vmatprep.subr.bf16.mxu0 0
    %3424 = vmatpush2.bf16.msra.mxu0 0
    %3425 = vmatprep.subr.bf16.mxu0 0
    %3426 = vmatpush2.bf16.msra.mxu0 0
    %3427 = vmatprep.subr.bf16.mxu0 0
    %3428 = vmatpush2.bf16.msra.mxu0 0
    %3429 = vmatprep.subr.bf16.mxu0 0
    %3430 = vmatpush2.bf16.msra.mxu0 0
    %3431 = vmatprep.subr.bf16.mxu0 0
    %3432 = vmatpush2.bf16.msra.mxu0 0
    %3433 = vmatprep.subr.bf16.mxu0 0
    %3434 = vmatpush2.bf16.msra.mxu0 0
    %3435 = vmatprep.subr.bf16.mxu0 0
    %3436 = vmatpush2.bf16.msra.mxu0 0
    %3437 = vmatprep.mubr.bf16.mxu0 0
    %3438 = vmatmul.mubr.bf16.gmra.mxu0 %v3403
    %v3439 = vpop.f32.mrf.mxu0
    %v3440 = vadd.f32 %v3389, %v3439
    %v3441 = vpop.f32.mrf.mxu0
    %v3442 = vpop.f32.mrf.mxu0
    %v3443 = vadd.f32 %v3389, %v3442
    %v3444 = vpop.f32.mrf.mxu0
    %3445 = vdwg.mxu0
    %v3446 = vadd.f32 %v2732, %v3440
    %v3447 = vadd.f32 %v2733, %v3443
    %v3448 = vld [vmem:[%s3 + $0x18] sm:$0x1]
    %v3449 = vld [vmem:[%s3 + $0x19] sm:$0x1]
    %v3450 = vsel %vm80, %v3446, 0.0
    %3451 = vadd.xlane.f32.xlu0 %v3450
    %v3452 = vpop.xlane.xlu0 %3451
    %v3453 = vsel %vm80, %v3447, 0.0
    %3454 = vadd.xlane.f32.xlu0 %v3453
    %v3455 = vpop.xlane.xlu0 %3454
    %v3456 = vmul.f32 %v3452, %v940
    %v3457 = vmul.f32 %v3455, %v940
    %v3458 = vsub.f32 %v3446, %v3456
    %v3459 = vsub.f32 %v3447, %v3457
    %v3460 = vmul.f32 %v3458, %v3458
    %v3461 = vmul.f32 %v3459, %v3459
    %v3462 = vsel %vm80, %v3460, 0.0
    %3463 = vadd.xlane.f32.xlu0 %v3462
    %v3464 = vpop.xlane.xlu0 %3463
    %v3465 = vsel %vm80, %v3461, 0.0
    %3466 = vadd.xlane.f32.xlu0 %v3465
    %v3467 = vpop.xlane.xlu0 %3466
    %v3468 = vmul.f32 %v3464, %v940
    %v3469 = vmul.f32 %v3467, %v940
    %v3470 = vadd.f32 %v3468, 1e-05
    %v3471 = vadd.f32 %v3469, 1e-05
    %v3472 = vrsqrt.pop %v3470
    %v3473 = vrsqrt.pop %v3471
    %v3474 = vmul.f32 %v3458, %v3472
    %v3475 = vmul.f32 %v3459, %v3473
    %v3476 = vlaneseq
    %v3477 = vshrl.u32 %v3476, 7
    %v3478 = vsub.s32 0, %v3477
    %v3479 = vrot.slane %v3448, %v3478
    %v3480 = vmul.f32 %v3474, %v3479
    %v3481 = vmul.f32 %v3475, %v3479
    %v3482 = vlaneseq
    %v3483 = vshrl.u32 %v3482, 7
    %v3484 = vsub.s32 0, %v3483
    %v3485 = vrot.slane %v3449, %v3484
    %v3486 = vadd.f32 %v3480, %v3485
    %v3487 = vadd.f32 %v3481, %v3485
    %v3488 = vpack.c.bf16 %v3487, %v3486
    %v3489 = vld [vmem:[#allocation2 + $0x128] sm:$0xf]
    %v3490 = vld [vmem:[#allocation2 + $0x12c] sm:$0xf]
    %v3491 = vld [vmem:[#allocation2 + $0x130] sm:$0xf]
    %v3492 = vld [vmem:[#allocation2 + $0x134] sm:$0xf]
    %v3493 = vld [vmem:[%s3 + $0x1a] sm:$0x1]
    %v3494 = vlaneseq
    %v3495 = vshrl.u32 %v3494, 7
    %v3496 = vsub.s32 0, %v3495
    %v3497 = vrot.slane %v3493, %v3496
    %v3502 = vunpack.c.l.b16 %v3489
    %v3503 = vunpack.c.l.b16 %v3490
    %v3504 = vunpack.c.l.b16 %v3491
    %v3505 = vunpack.c.l.b16 %v3492
    %v3506 = vpack.c.b16 %v3503, %v3502
    %v3507 = vpack.c.b16 %v3505, %v3504
    %v3511 = vsel %vm80, %v3488, 0
    %3513 = vmatprep.subr.bf16.mxu0 0
    %3514 = vmatpush1.bf16.msra.mxu0 0
    %3515 = vmatprep.subr.bf16.mxu0 0
    %3516 = vmatpush1.bf16.msra.mxu0 0
    %3517 = vmatprep.subr.bf16.mxu0 0
    %3518 = vmatpush1.bf16.msra.mxu0 0
    %3519 = vmatprep.subr.bf16.mxu0 0
    %3520 = vmatpush1.bf16.msra.mxu0 0
    %3521 = vmatprep.subr.bf16.mxu0 0
    %3522 = vmatpush1.bf16.msra.mxu0 0
    %3523 = vmatprep.subr.bf16.mxu0 0
    %3524 = vmatpush1.bf16.msra.mxu0 0
    %3525 = vmatprep.subr.bf16.mxu0 0
    %3526 = vmatpush1.bf16.msra.mxu0 %v3507
    %3527 = vmatprep.subr.bf16.mxu0 0
    %3528 = vmatpush1.bf16.msra.mxu0 %v3506
    %3529 = vmatprep.subr.bf16.mxu0 0
    %3530 = vmatpush2.bf16.msra.mxu0 0
    %3531 = vmatprep.subr.bf16.mxu0 0
    %3532 = vmatpush2.bf16.msra.mxu0 0
    %3533 = vmatprep.subr.bf16.mxu0 0
    %3534 = vmatpush2.bf16.msra.mxu0 0
    %3535 = vmatprep.subr.bf16.mxu0 0
    %3536 = vmatpush2.bf16.msra.mxu0 0
    %3537 = vmatprep.subr.bf16.mxu0 0
    %3538 = vmatpush2.bf16.msra.mxu0 0
    %3539 = vmatprep.subr.bf16.mxu0 0
    %3540 = vmatpush2.bf16.msra.mxu0 0
    %3541 = vmatprep.subr.bf16.mxu0 0
    %3542 = vmatpush2.bf16.msra.mxu0 0
    %3543 = vmatprep.subr.bf16.mxu0 0
    %3544 = vmatpush2.bf16.msra.mxu0 0
    %3545 = vmatprep.mubr.bf16.mxu0 0
    %3546 = vmatmul.mubr.bf16.gmra.mxu0 %v3511
    %v3547 = vpop.f32.mrf.mxu0
    %v3548 = vadd.f32 %v3497, %v3547
    %v3549 = vpop.f32.mrf.mxu0
    %v3550 = vpop.f32.mrf.mxu0
    %v3551 = vadd.f32 %v3497, %v3550
    %v3552 = vpop.f32.mrf.mxu0
    %3553 = vdwg.mxu0
    %v3554 = vmax.f32 %v3548, 0.0
    %v3555 = vmax.f32 %v3551, 0.0
    %v3556 = vpack.c.bf16 %v3555, %v3554
    %v3557 = vld [vmem:[#allocation2 + $0x138] sm:$0xf]
    %v3558 = vld [vmem:[#allocation2 + $0x13c] sm:$0xf]
    %v3559 = vld [vmem:[#allocation2 + $0x140] sm:$0xf]
    %v3560 = vld [vmem:[#allocation2 + $0x144] sm:$0xf]
    %v3561 = vld [vmem:[#allocation2 + $0x148] sm:$0xf]
    %v3562 = vld [vmem:[#allocation2 + $0x14c] sm:$0xf]
    %v3563 = vld [vmem:[#allocation2 + $0x150] sm:$0xf]
    %v3564 = vld [vmem:[#allocation2 + $0x154] sm:$0xf]
    %v3565 = vld [vmem:[%s3 + $0x1b] sm:$0x1]
    %v3566 = vlaneseq
    %v3567 = vshrl.u32 %v3566, 7
    %v3568 = vsub.s32 0, %v3567
    %v3569 = vrot.slane %v3565, %v3568
    %v3578 = vunpack.c.l.b16 %v3557
    %v3579 = vunpack.c.l.b16 %v3558
    %v3580 = vunpack.c.l.b16 %v3559
    %v3581 = vunpack.c.l.b16 %v3560
    %v3582 = vunpack.c.l.b16 %v3561
    %v3583 = vunpack.c.l.b16 %v3562
    %v3584 = vunpack.c.l.b16 %v3563
    %v3585 = vunpack.c.l.b16 %v3564
    %v3586 = vpack.c.b16 %v3579, %v3578
    %v3587 = vpack.c.b16 %v3581, %v3580
    %v3588 = vpack.c.b16 %v3583, %v3582
    %v3589 = vpack.c.b16 %v3585, %v3584
    %v3595 = vsel %vm1079, %v3556, 0
    %3597 = vmatprep.subr.bf16.mxu0 0
    %3598 = vmatpush1.bf16.msra.mxu0 0
    %3599 = vmatprep.subr.bf16.mxu0 0
    %3600 = vmatpush1.bf16.msra.mxu0 0
    %3601 = vmatprep.subr.bf16.mxu0 0
    %3602 = vmatpush1.bf16.msra.mxu0 0
    %3603 = vmatprep.subr.bf16.mxu0 0
    %3604 = vmatpush1.bf16.msra.mxu0 0
    %3605 = vmatprep.subr.bf16.mxu0 0
    %3606 = vmatpush1.bf16.msra.mxu0 %v3589
    %3607 = vmatprep.subr.bf16.mxu0 0
    %3608 = vmatpush1.bf16.msra.mxu0 %v3588
    %3609 = vmatprep.subr.bf16.mxu0 0
    %3610 = vmatpush1.bf16.msra.mxu0 %v3587
    %3611 = vmatprep.subr.bf16.mxu0 0
    %3612 = vmatpush1.bf16.msra.mxu0 %v3586
    %3613 = vmatprep.subr.bf16.mxu0 0
    %3614 = vmatpush2.bf16.msra.mxu0 0
    %3615 = vmatprep.subr.bf16.mxu0 0
    %3616 = vmatpush2.bf16.msra.mxu0 0
    %3617 = vmatprep.subr.bf16.mxu0 0
    %3618 = vmatpush2.bf16.msra.mxu0 0
    %3619 = vmatprep.subr.bf16.mxu0 0
    %3620 = vmatpush2.bf16.msra.mxu0 0
    %3621 = vmatprep.subr.bf16.mxu0 0
    %3622 = vmatpush2.bf16.msra.mxu0 0
    %3623 = vmatprep.subr.bf16.mxu0 0
    %3624 = vmatpush2.bf16.msra.mxu0 0
    %3625 = vmatprep.subr.bf16.mxu0 0
    %3626 = vmatpush2.bf16.msra.mxu0 0
    %3627 = vmatprep.subr.bf16.mxu0 0
    %3628 = vmatpush2.bf16.msra.mxu0 0
    %3629 = vmatprep.mubr.bf16.mxu0 0
    %3630 = vmatmul.mubr.bf16.gmra.mxu0 %v3595
    %v3631 = vpop.f32.mrf.mxu0
    %v3632 = vadd.f32 %v3569, %v3631
    %v3633 = vpop.f32.mrf.mxu0
    %v3634 = vpop.f32.mrf.mxu0
    %v3635 = vadd.f32 %v3569, %v3634
    %v3636 = vpop.f32.mrf.mxu0
    %3637 = vdwg.mxu0
    %v3638 = vadd.f32 %v3486, %v3632
    %v3639 = vadd.f32 %v3487, %v3635
    %v3640 = vld [vmem:[%s3 + $0x1c] sm:$0x1]
    %v3641 = vld [vmem:[%s3 + $0x1d] sm:$0x1]
    %v3642 = vsel %vm80, %v3638, 0.0
    %3643 = vadd.xlane.f32.xlu0 %v3642
    %v3644 = vpop.xlane.xlu0 %3643
    %v3645 = vsel %vm80, %v3639, 0.0
    %3646 = vadd.xlane.f32.xlu0 %v3645
    %v3647 = vpop.xlane.xlu0 %3646
    %v3648 = vmul.f32 %v3644, %v940
    %v3649 = vmul.f32 %v3647, %v940
    %v3650 = vsub.f32 %v3638, %v3648
    %v3651 = vsub.f32 %v3639, %v3649
    %v3652 = vmul.f32 %v3650, %v3650
    %v3653 = vmul.f32 %v3651, %v3651
    %v3654 = vsel %vm80, %v3652, 0.0
    %3655 = vadd.xlane.f32.xlu0 %v3654
    %v3656 = vpop.xlane.xlu0 %3655
    %v3657 = vsel %vm80, %v3653, 0.0
    %3658 = vadd.xlane.f32.xlu0 %v3657
    %v3659 = vpop.xlane.xlu0 %3658
    %v3660 = vmul.f32 %v3656, %v940
    %v3661 = vmul.f32 %v3659, %v940
    %v3662 = vadd.f32 %v3660, 1e-05
    %v3663 = vadd.f32 %v3661, 1e-05
    %v3664 = vrsqrt.pop %v3662
    %v3665 = vrsqrt.pop %v3663
    %v3666 = vmul.f32 %v3650, %v3664
    %v3667 = vmul.f32 %v3651, %v3665
    %v3668 = vlaneseq
    %v3669 = vshrl.u32 %v3668, 7
    %v3670 = vsub.s32 0, %v3669
    %v3671 = vrot.slane %v3640, %v3670
    %v3672 = vmul.f32 %v3666, %v3671
    %v3673 = vmul.f32 %v3667, %v3671
    %v3674 = vlaneseq
    %v3675 = vshrl.u32 %v3674, 7
    %v3676 = vsub.s32 0, %v3675
    %v3677 = vrot.slane %v3641, %v3676
    %v3678 = vadd.f32 %v3672, %v3677
    %v3679 = vadd.f32 %v3673, %v3677
    %v3680 = vpack.c.bf16 %v3679, %v3678
    %v3681 = vld [vmem:[#allocation2 + $0x158] sm:$0xf]
    %v3682 = vld [vmem:[#allocation2 + $0x15c] sm:$0xf]
    %v3683 = vld [vmem:[#allocation2 + $0x160] sm:$0xf]
    %v3684 = vld [vmem:[#allocation2 + $0x164] sm:$0xf]
    %v3685 = vld [vmem:[%s3 + $0x1e] sm:$0x1]
    %v3686 = vlaneseq
    %v3687 = vshrl.u32 %v3686, 7
    %v3688 = vsub.s32 0, %v3687
    %v3689 = vrot.slane %v3685, %v3688
    %v3694 = vunpack.c.l.b16 %v3681
    %v3695 = vunpack.c.l.b16 %v3682
    %v3696 = vunpack.c.l.b16 %v3683
    %v3697 = vunpack.c.l.b16 %v3684
    %v3698 = vpack.c.b16 %v3695, %v3694
    %v3699 = vpack.c.b16 %v3697, %v3696
    %v3703 = vsel %vm80, %v3680, 0
    %3705 = vmatprep.subr.bf16.mxu0 0
    %3706 = vmatpush1.bf16.msra.mxu0 0
    %3707 = vmatprep.subr.bf16.mxu0 0
    %3708 = vmatpush1.bf16.msra.mxu0 0
    %3709 = vmatprep.subr.bf16.mxu0 0
    %3710 = vmatpush1.bf16.msra.mxu0 0
    %3711 = vmatprep.subr.bf16.mxu0 0
    %3712 = vmatpush1.bf16.msra.mxu0 0
    %3713 = vmatprep.subr.bf16.mxu0 0
    %3714 = vmatpush1.bf16.msra.mxu0 0
    %3715 = vmatprep.subr.bf16.mxu0 0
    %3716 = vmatpush1.bf16.msra.mxu0 0
    %3717 = vmatprep.subr.bf16.mxu0 0
    %3718 = vmatpush1.bf16.msra.mxu0 %v3699
    %3719 = vmatprep.subr.bf16.mxu0 0
    %3720 = vmatpush1.bf16.msra.mxu0 %v3698
    %3721 = vmatprep.subr.bf16.mxu0 0
    %3722 = vmatpush2.bf16.msra.mxu0 0
    %3723 = vmatprep.subr.bf16.mxu0 0
    %3724 = vmatpush2.bf16.msra.mxu0 0
    %3725 = vmatprep.subr.bf16.mxu0 0
    %3726 = vmatpush2.bf16.msra.mxu0 0
    %3727 = vmatprep.subr.bf16.mxu0 0
    %3728 = vmatpush2.bf16.msra.mxu0 0
    %3729 = vmatprep.subr.bf16.mxu0 0
    %3730 = vmatpush2.bf16.msra.mxu0 0
    %3731 = vmatprep.subr.bf16.mxu0 0
    %3732 = vmatpush2.bf16.msra.mxu0 0
    %3733 = vmatprep.subr.bf16.mxu0 0
    %3734 = vmatpush2.bf16.msra.mxu0 0
    %3735 = vmatprep.subr.bf16.mxu0 0
    %3736 = vmatpush2.bf16.msra.mxu0 0
    %3737 = vmatprep.mubr.bf16.mxu0 0
    %3738 = vmatmul.mubr.bf16.gmra.mxu0 %v3703
    %v3739 = vpop.f32.mrf.mxu0
    %v3740 = vadd.f32 %v3689, %v3739
    %v3741 = vpop.f32.mrf.mxu0
    %v3742 = vpop.f32.mrf.mxu0
    %v3743 = vadd.f32 %v3689, %v3742
    %v3744 = vpop.f32.mrf.mxu0
    %3745 = vdwg.mxu0
    %v3746 = vpack.c.bf16 %v3743, %v3740
    %3748 = vrot.lane.b32.xlu0 %v3746, 96
    %v3749 = vpop.permute.xlu0 %3748
    %v3751 = vsel %vm212, %v3746, 0
    %v3754 = vsel %vm212, %v3749, 0
    %3756 = vmatprep.subr.bf16.mxu0 0
    %3757 = vmatpush1.bf16.xpose.msra.mxu0 0
    %3758 = vmatprep.subr.bf16.mxu0 0
    %3759 = vmatpush1.bf16.xpose.msra.mxu0 0
    %3760 = vmatprep.subr.bf16.mxu0 0
    %3761 = vmatpush1.bf16.xpose.msra.mxu0 0
    %3762 = vmatprep.subr.bf16.mxu0 0
    %3763 = vmatpush1.bf16.xpose.msra.mxu0 0
    %3764 = vmatprep.subr.bf16.mxu0 0
    %3765 = vmatpush1.bf16.xpose.msra.mxu0 0
    %3766 = vmatprep.subr.bf16.mxu0 0
    %3767 = vmatpush1.bf16.xpose.msra.mxu0 0
    %3768 = vmatprep.subr.bf16.mxu0 0
    %3769 = vmatpush1.bf16.xpose.msra.mxu0 0
    %3770 = vmatprep.subr.bf16.mxu0 0
    %3771 = vmatpush1.bf16.xpose.msra.mxu0 %v3754
    %3772 = vmatprep.subr.bf16.mxu0 0
    %3773 = vmatpush2.bf16.xpose.msra.mxu0 0
    %3774 = vmatprep.subr.bf16.mxu0 0
    %3775 = vmatpush2.bf16.xpose.msra.mxu0 0
    %3776 = vmatprep.subr.bf16.mxu0 0
    %3777 = vmatpush2.bf16.xpose.msra.mxu0 0
    %3778 = vmatprep.subr.bf16.mxu0 0
    %3779 = vmatpush2.bf16.xpose.msra.mxu0 0
    %3780 = vmatprep.subr.bf16.mxu0 0
    %3781 = vmatpush2.bf16.xpose.msra.mxu0 0
    %3782 = vmatprep.subr.bf16.mxu0 0
    %3783 = vmatpush2.bf16.xpose.msra.mxu0 0
    %3784 = vmatprep.subr.bf16.mxu0 0
    %3785 = vmatpush2.bf16.xpose.msra.mxu0 0
    %3786 = vmatprep.subr.bf16.mxu0 0
    %3787 = vmatpush2.bf16.xpose.msra.mxu0 0
    %3788 = vmatprep.mubr.bf16.mxu0 0
    %3789 = vmatmul.mubr.bf16.gmra.mxu0 %v3751
    %v3790 = vpop.f32.mrf.mxu0
    %v3791 = vadd.f32 %v278, %v3790
    %v3792 = vpop.f32.mrf.mxu0
    %v3793 = vpop.f32.mrf.mxu0
    %v3794 = vadd.f32 %v279, %v3793
    %v3795 = vpop.f32.mrf.mxu0
    %3796 = vdwg.mxu0
    %v3797 = vsel %vm399, %v3791, -inf
    %3798 = vmax.xlane.f32.xlu0 %v3797
    %v3799 = vpop.xlane.xlu0 %3798
    %v3800 = vsel %vm399, %v3794, -inf
    %3801 = vmax.xlane.f32.xlu0 %v3800
    %v3802 = vpop.xlane.xlu0 %3801
    %v3803 = vsub.f32 %v3791, %v3799
    %v3804 = vsub.f32 %v3794, %v3802
    %v3805 = vmul.f32 %v3803, 1.442695
    %v3806 = vpow.pop %v3805
    %v3807 = vmul.f32 %v3804, 1.442695
    %v3808 = vpow.pop %v3807
    %v3809 = vsel %vm399, %v3806, 0.0
    %3810 = vadd.xlane.f32.xlu0 %v3809
    %v3811 = vpop.xlane.xlu0 %3810
    %v3812 = vsel %vm399, %v3808, 0.0
    %3813 = vadd.xlane.f32.xlu0 %v3812
    %v3814 = vpop.xlane.xlu0 %3813
    %v3815 = vrcp.pop %v3811
    %v3816 = vrcp.pop %v3814
    %v3817 = vmul.f32 %v3806, %v3815
    %v3818 = vmul.f32 %v3808, %v3816
    %v3819 = vpack.c.bf16 %v3818, %v3817
    %3820 = vrot.lane.b32.xlu0 %v3746, 64
    %v3821 = vpop.permute.xlu0 %3820
    %v3824 = vsel %vm399, %v3819, 0
    %3826 = vmatprep.subr.bf16.mxu0 0
    %3827 = vmatpush1.bf16.msra.mxu0 0
    %3828 = vmatprep.subr.bf16.mxu0 0
    %3829 = vmatpush1.bf16.msra.mxu0 0
    %3830 = vmatprep.subr.bf16.mxu0 0
    %3831 = vmatpush1.bf16.msra.mxu0 0
    %3832 = vmatprep.subr.bf16.mxu0 0
    %3833 = vmatpush1.bf16.msra.mxu0 0
    %3834 = vmatprep.subr.bf16.mxu0 0
    %3835 = vmatpush1.bf16.msra.mxu0 0
    %3836 = vmatprep.subr.bf16.mxu0 0
    %3837 = vmatpush1.bf16.msra.mxu0 0
    %3838 = vmatprep.subr.bf16.mxu0 0
    %3839 = vmatpush1.bf16.msra.mxu0 0
    %3840 = vmatprep.subr.bf16.mxu0 0
    %3841 = vmatpush1.bf16.msra.mxu0 %v3821
    %3842 = vmatprep.subr.bf16.mxu0 0
    %3843 = vmatpush2.bf16.msra.mxu0 0
    %3844 = vmatprep.subr.bf16.mxu0 0
    %3845 = vmatpush2.bf16.msra.mxu0 0
    %3846 = vmatprep.subr.bf16.mxu0 0
    %3847 = vmatpush2.bf16.msra.mxu0 0
    %3848 = vmatprep.subr.bf16.mxu0 0
    %3849 = vmatpush2.bf16.msra.mxu0 0
    %3850 = vmatprep.subr.bf16.mxu0 0
    %3851 = vmatpush2.bf16.msra.mxu0 0
    %3852 = vmatprep.subr.bf16.mxu0 0
    %3853 = vmatpush2.bf16.msra.mxu0 0
    %3854 = vmatprep.subr.bf16.mxu0 0
    %3855 = vmatpush2.bf16.msra.mxu0 0
    %3856 = vmatprep.subr.bf16.mxu0 0
    %3857 = vmatpush2.bf16.msra.mxu0 0
    %3858 = vmatprep.mubr.bf16.mxu0 0
    %3859 = vmatmul.mubr.bf16.gmra.mxu0 %v3824
    %v3860 = vpop.f32.mrf.mxu0
    %v3861 = vadd.f32 0.0, %v3860
    %v3862 = vpop.f32.mrf.mxu0
    %v3863 = vpop.f32.mrf.mxu0
    %v3864 = vadd.f32 0.0, %v3863
    %v3865 = vpop.f32.mrf.mxu0
    %3866 = vdwg.mxu0
    %3867 = vrot.lane.b32.xlu0 %v3746, 120
    %v3868 = vpop.permute.xlu0 %3867
    %3869 = vrot.lane.b32.xlu0 %v3746, 88
    %v3870 = vpop.permute.xlu0 %3869
    %v3872 = vsel %vm212, %v3868, 0
    %v3875 = vsel %vm212, %v3870, 0
    %3877 = vmatprep.subr.bf16.mxu0 0
    %3878 = vmatpush1.bf16.xpose.msra.mxu0 0
    %3879 = vmatprep.subr.bf16.mxu0 0
    %3880 = vmatpush1.bf16.xpose.msra.mxu0 0
    %3881 = vmatprep.subr.bf16.mxu0 0
    %3882 = vmatpush1.bf16.xpose.msra.mxu0 0
    %3883 = vmatprep.subr.bf16.mxu0 0
    %3884 = vmatpush1.bf16.xpose.msra.mxu0 0
    %3885 = vmatprep.subr.bf16.mxu0 0
    %3886 = vmatpush1.bf16.xpose.msra.mxu0 0
    %3887 = vmatprep.subr.bf16.mxu0 0
    %3888 = vmatpush1.bf16.xpose.msra.mxu0 0
    %3889 = vmatprep.subr.bf16.mxu0 0
    %3890 = vmatpush1.bf16.xpose.msra.mxu0 0
    %3891 = vmatprep.subr.bf16.mxu0 0
    %3892 = vmatpush1.bf16.xpose.msra.mxu0 %v3875
    %3893 = vmatprep.subr.bf16.mxu0 0
    %3894 = vmatpush2.bf16.xpose.msra.mxu0 0
    %3895 = vmatprep.subr.bf16.mxu0 0
    %3896 = vmatpush2.bf16.xpose.msra.mxu0 0
    %3897 = vmatprep.subr.bf16.mxu0 0
    %3898 = vmatpush2.bf16.xpose.msra.mxu0 0
    %3899 = vmatprep.subr.bf16.mxu0 0
    %3900 = vmatpush2.bf16.xpose.msra.mxu0 0
    %3901 = vmatprep.subr.bf16.mxu0 0
    %3902 = vmatpush2.bf16.xpose.msra.mxu0 0
    %3903 = vmatprep.subr.bf16.mxu0 0
    %3904 = vmatpush2.bf16.xpose.msra.mxu0 0
    %3905 = vmatprep.subr.bf16.mxu0 0
    %3906 = vmatpush2.bf16.xpose.msra.mxu0 0
    %3907 = vmatprep.subr.bf16.mxu0 0
    %3908 = vmatpush2.bf16.xpose.msra.mxu0 0
    %3909 = vmatprep.mubr.bf16.mxu0 0
    %3910 = vmatmul.mubr.bf16.gmra.mxu0 %v3872
    %v3911 = vpop.f32.mrf.mxu0
    %v3912 = vadd.f32 %v278, %v3911
    %v3913 = vpop.f32.mrf.mxu0
    %v3914 = vpop.f32.mrf.mxu0
    %v3915 = vadd.f32 %v279, %v3914
    %v3916 = vpop.f32.mrf.mxu0
    %3917 = vdwg.mxu0
    %v3918 = vsel %vm399, %v3912, -inf
    %3919 = vmax.xlane.f32.xlu0 %v3918
    %v3920 = vpop.xlane.xlu0 %3919
    %v3921 = vsel %vm399, %v3915, -inf
    %3922 = vmax.xlane.f32.xlu0 %v3921
    %v3923 = vpop.xlane.xlu0 %3922
    %v3924 = vsub.f32 %v3912, %v3920
    %v3925 = vsub.f32 %v3915, %v3923
    %v3926 = vmul.f32 %v3924, 1.442695
    %v3927 = vpow.pop %v3926
    %v3928 = vmul.f32 %v3925, 1.442695
    %v3929 = vpow.pop %v3928
    %v3930 = vsel %vm399, %v3927, 0.0
    %3931 = vadd.xlane.f32.xlu0 %v3930
    %v3932 = vpop.xlane.xlu0 %3931
    %v3933 = vsel %vm399, %v3929, 0.0
    %3934 = vadd.xlane.f32.xlu0 %v3933
    %v3935 = vpop.xlane.xlu0 %3934
    %v3936 = vrcp.pop %v3932
    %v3937 = vrcp.pop %v3935
    %v3938 = vmul.f32 %v3927, %v3936
    %v3939 = vmul.f32 %v3929, %v3937
    %v3940 = vpack.c.bf16 %v3939, %v3938
    %3941 = vrot.lane.b32.xlu0 %v3746, 56
    %v3942 = vpop.permute.xlu0 %3941
    %v3945 = vsel %vm399, %v3940, 0
    %3947 = vmatprep.subr.bf16.mxu0 0
    %3948 = vmatpush1.bf16.msra.mxu0 0
    %3949 = vmatprep.subr.bf16.mxu0 0
    %3950 = vmatpush1.bf16.msra.mxu0 0
    %3951 = vmatprep.subr.bf16.mxu0 0
    %3952 = vmatpush1.bf16.msra.mxu0 0
    %3953 = vmatprep.subr.bf16.mxu0 0
    %3954 = vmatpush1.bf16.msra.mxu0 0
    %3955 = vmatprep.subr.bf16.mxu0 0
    %3956 = vmatpush1.bf16.msra.mxu0 0
    %3957 = vmatprep.subr.bf16.mxu0 0
    %3958 = vmatpush1.bf16.msra.mxu0 0
    %3959 = vmatprep.subr.bf16.mxu0 0
    %3960 = vmatpush1.bf16.msra.mxu0 0
    %3961 = vmatprep.subr.bf16.mxu0 0
    %3962 = vmatpush1.bf16.msra.mxu0 %v3942
    %3963 = vmatprep.subr.bf16.mxu0 0
    %3964 = vmatpush2.bf16.msra.mxu0 0
    %3965 = vmatprep.subr.bf16.mxu0 0
    %3966 = vmatpush2.bf16.msra.mxu0 0
    %3967 = vmatprep.subr.bf16.mxu0 0
    %3968 = vmatpush2.bf16.msra.mxu0 0
    %3969 = vmatprep.subr.bf16.mxu0 0
    %3970 = vmatpush2.bf16.msra.mxu0 0
    %3971 = vmatprep.subr.bf16.mxu0 0
    %3972 = vmatpush2.bf16.msra.mxu0 0
    %3973 = vmatprep.subr.bf16.mxu0 0
    %3974 = vmatpush2.bf16.msra.mxu0 0
    %3975 = vmatprep.subr.bf16.mxu0 0
    %3976 = vmatpush2.bf16.msra.mxu0 0
    %3977 = vmatprep.subr.bf16.mxu0 0
    %3978 = vmatpush2.bf16.msra.mxu0 0
    %3979 = vmatprep.mubr.bf16.mxu0 0
    %3980 = vmatmul.mubr.bf16.gmra.mxu0 %v3945
    %v3981 = vpop.f32.mrf.mxu0
    %v3982 = vadd.f32 0.0, %v3981
    %v3983 = vpop.f32.mrf.mxu0
    %v3984 = vpop.f32.mrf.mxu0
    %v3985 = vadd.f32 0.0, %v3984
    %v3986 = vpop.f32.mrf.mxu0
    %3987 = vdwg.mxu0
    %3988 = vrot.lane.b32.xlu0 %v3746, 112
    %v3989 = vpop.permute.xlu0 %3988
    %3990 = vrot.lane.b32.xlu0 %v3746, 80
    %v3991 = vpop.permute.xlu0 %3990
    %v3993 = vsel %vm212, %v3989, 0
    %v3996 = vsel %vm212, %v3991, 0
    %3998 = vmatprep.subr.bf16.mxu0 0
    %3999 = vmatpush1.bf16.xpose.msra.mxu0 0
    %4000 = vmatprep.subr.bf16.mxu0 0
    %4001 = vmatpush1.bf16.xpose.msra.mxu0 0
    %4002 = vmatprep.subr.bf16.mxu0 0
    %4003 = vmatpush1.bf16.xpose.msra.mxu0 0
    %4004 = vmatprep.subr.bf16.mxu0 0
    %4005 = vmatpush1.bf16.xpose.msra.mxu0 0
    %4006 = vmatprep.subr.bf16.mxu0 0
    %4007 = vmatpush1.bf16.xpose.msra.mxu0 0
    %4008 = vmatprep.subr.bf16.mxu0 0
    %4009 = vmatpush1.bf16.xpose.msra.mxu0 0
    %4010 = vmatprep.subr.bf16.mxu0 0
    %4011 = vmatpush1.bf16.xpose.msra.mxu0 0
    %4012 = vmatprep.subr.bf16.mxu0 0
    %4013 = vmatpush1.bf16.xpose.msra.mxu0 %v3996
    %4014 = vmatprep.subr.bf16.mxu0 0
    %4015 = vmatpush2.bf16.xpose.msra.mxu0 0
    %4016 = vmatprep.subr.bf16.mxu0 0
    %4017 = vmatpush2.bf16.xpose.msra.mxu0 0
    %4018 = vmatprep.subr.bf16.mxu0 0
    %4019 = vmatpush2.bf16.xpose.msra.mxu0 0
    %4020 = vmatprep.subr.bf16.mxu0 0
    %4021 = vmatpush2.bf16.xpose.msra.mxu0 0
    %4022 = vmatprep.subr.bf16.mxu0 0
    %4023 = vmatpush2.bf16.xpose.msra.mxu0 0
    %4024 = vmatprep.subr.bf16.mxu0 0
    %4025 = vmatpush2.bf16.xpose.msra.mxu0 0
    %4026 = vmatprep.subr.bf16.mxu0 0
    %4027 = vmatpush2.bf16.xpose.msra.mxu0 0
    %4028 = vmatprep.subr.bf16.mxu0 0
    %4029 = vmatpush2.bf16.xpose.msra.mxu0 0
    %4030 = vmatprep.mubr.bf16.mxu0 0
    %4031 = vmatmul.mubr.bf16.gmra.mxu0 %v3993
    %v4032 = vpop.f32.mrf.mxu0
    %v4033 = vadd.f32 %v278, %v4032
    %v4034 = vpop.f32.mrf.mxu0
    %v4035 = vpop.f32.mrf.mxu0
    %v4036 = vadd.f32 %v279, %v4035
    %v4037 = vpop.f32.mrf.mxu0
    %4038 = vdwg.mxu0
    %v4039 = vsel %vm399, %v4033, -inf
    %4040 = vmax.xlane.f32.xlu0 %v4039
    %v4041 = vpop.xlane.xlu0 %4040
    %v4042 = vsel %vm399, %v4036, -inf
    %4043 = vmax.xlane.f32.xlu0 %v4042
    %v4044 = vpop.xlane.xlu0 %4043
    %v4045 = vsub.f32 %v4033, %v4041
    %v4046 = vsub.f32 %v4036, %v4044
    %v4047 = vmul.f32 %v4045, 1.442695
    %v4048 = vpow.pop %v4047
    %v4049 = vmul.f32 %v4046, 1.442695
    %v4050 = vpow.pop %v4049
    %v4051 = vsel %vm399, %v4048, 0.0
    %4052 = vadd.xlane.f32.xlu0 %v4051
    %v4053 = vpop.xlane.xlu0 %4052
    %v4054 = vsel %vm399, %v4050, 0.0
    %4055 = vadd.xlane.f32.xlu0 %v4054
    %v4056 = vpop.xlane.xlu0 %4055
    %v4057 = vrcp.pop %v4053
    %v4058 = vrcp.pop %v4056
    %v4059 = vmul.f32 %v4048, %v4057
    %v4060 = vmul.f32 %v4050, %v4058
    %v4061 = vpack.c.bf16 %v4060, %v4059
    %4062 = vrot.lane.b32.xlu0 %v3746, 48
    %v4063 = vpop.permute.xlu0 %4062
    %v4066 = vsel %vm399, %v4061, 0
    %4068 = vmatprep.subr.bf16.mxu0 0
    %4069 = vmatpush1.bf16.msra.mxu0 0
    %4070 = vmatprep.subr.bf16.mxu0 0
    %4071 = vmatpush1.bf16.msra.mxu0 0
    %4072 = vmatprep.subr.bf16.mxu0 0
    %4073 = vmatpush1.bf16.msra.mxu0 0
    %4074 = vmatprep.subr.bf16.mxu0 0
    %4075 = vmatpush1.bf16.msra.mxu0 0
    %4076 = vmatprep.subr.bf16.mxu0 0
    %4077 = vmatpush1.bf16.msra.mxu0 0
    %4078 = vmatprep.subr.bf16.mxu0 0
    %4079 = vmatpush1.bf16.msra.mxu0 0
    %4080 = vmatprep.subr.bf16.mxu0 0
    %4081 = vmatpush1.bf16.msra.mxu0 0
    %4082 = vmatprep.subr.bf16.mxu0 0
    %4083 = vmatpush1.bf16.msra.mxu0 %v4063
    %4084 = vmatprep.subr.bf16.mxu0 0
    %4085 = vmatpush2.bf16.msra.mxu0 0
    %4086 = vmatprep.subr.bf16.mxu0 0
    %4087 = vmatpush2.bf16.msra.mxu0 0
    %4088 = vmatprep.subr.bf16.mxu0 0
    %4089 = vmatpush2.bf16.msra.mxu0 0
    %4090 = vmatprep.subr.bf16.mxu0 0
    %4091 = vmatpush2.bf16.msra.mxu0 0
    %4092 = vmatprep.subr.bf16.mxu0 0
    %4093 = vmatpush2.bf16.msra.mxu0 0
    %4094 = vmatprep.subr.bf16.mxu0 0
    %4095 = vmatpush2.bf16.msra.mxu0 0
    %4096 = vmatprep.subr.bf16.mxu0 0
    %4097 = vmatpush2.bf16.msra.mxu0 0
    %4098 = vmatprep.subr.bf16.mxu0 0
    %4099 = vmatpush2.bf16.msra.mxu0 0
    %4100 = vmatprep.mubr.bf16.mxu0 0
    %4101 = vmatmul.mubr.bf16.gmra.mxu0 %v4066
    %v4102 = vpop.f32.mrf.mxu0
    %v4103 = vadd.f32 0.0, %v4102
    %v4104 = vpop.f32.mrf.mxu0
    %v4105 = vpop.f32.mrf.mxu0
    %v4106 = vadd.f32 0.0, %v4105
    %v4107 = vpop.f32.mrf.mxu0
    %4108 = vdwg.mxu0
    %4109 = vrot.lane.b32.xlu0 %v3746, 104
    %v4110 = vpop.permute.xlu0 %4109
    %4111 = vrot.lane.b32.xlu0 %v3746, 72
    %v4112 = vpop.permute.xlu0 %4111
    %v4114 = vsel %vm212, %v4110, 0
    %v4117 = vsel %vm212, %v4112, 0
    %4119 = vmatprep.subr.bf16.mxu0 0
    %4120 = vmatpush1.bf16.xpose.msra.mxu0 0
    %4121 = vmatprep.subr.bf16.mxu0 0
    %4122 = vmatpush1.bf16.xpose.msra.mxu0 0
    %4123 = vmatprep.subr.bf16.mxu0 0
    %4124 = vmatpush1.bf16.xpose.msra.mxu0 0
    %4125 = vmatprep.subr.bf16.mxu0 0
    %4126 = vmatpush1.bf16.xpose.msra.mxu0 0
    %4127 = vmatprep.subr.bf16.mxu0 0
    %4128 = vmatpush1.bf16.xpose.msra.mxu0 0
    %4129 = vmatprep.subr.bf16.mxu0 0
    %4130 = vmatpush1.bf16.xpose.msra.mxu0 0
    %4131 = vmatprep.subr.bf16.mxu0 0
    %4132 = vmatpush1.bf16.xpose.msra.mxu0 0
    %4133 = vmatprep.subr.bf16.mxu0 0
    %4134 = vmatpush1.bf16.xpose.msra.mxu0 %v4117
    %4135 = vmatprep.subr.bf16.mxu0 0
    %4136 = vmatpush2.bf16.xpose.msra.mxu0 0
    %4137 = vmatprep.subr.bf16.mxu0 0
    %4138 = vmatpush2.bf16.xpose.msra.mxu0 0
    %4139 = vmatprep.subr.bf16.mxu0 0
    %4140 = vmatpush2.bf16.xpose.msra.mxu0 0
    %4141 = vmatprep.subr.bf16.mxu0 0
    %4142 = vmatpush2.bf16.xpose.msra.mxu0 0
    %4143 = vmatprep.subr.bf16.mxu0 0
    %4144 = vmatpush2.bf16.xpose.msra.mxu0 0
    %4145 = vmatprep.subr.bf16.mxu0 0
    %4146 = vmatpush2.bf16.xpose.msra.mxu0 0
    %4147 = vmatprep.subr.bf16.mxu0 0
    %4148 = vmatpush2.bf16.xpose.msra.mxu0 0
    %4149 = vmatprep.subr.bf16.mxu0 0
    %4150 = vmatpush2.bf16.xpose.msra.mxu0 0
    %4151 = vmatprep.mubr.bf16.mxu0 0
    %4152 = vmatmul.mubr.bf16.gmra.mxu0 %v4114
    %v4153 = vpop.f32.mrf.mxu0
    %v4154 = vadd.f32 %v278, %v4153
    %v4155 = vpop.f32.mrf.mxu0
    %v4156 = vpop.f32.mrf.mxu0
    %v4157 = vadd.f32 %v279, %v4156
    %v4158 = vpop.f32.mrf.mxu0
    %4159 = vdwg.mxu0
    %v4160 = vsel %vm399, %v4154, -inf
    %4161 = vmax.xlane.f32.xlu0 %v4160
    %v4162 = vpop.xlane.xlu0 %4161
    %v4163 = vsel %vm399, %v4157, -inf
    %4164 = vmax.xlane.f32.xlu0 %v4163
    %v4165 = vpop.xlane.xlu0 %4164
    %v4166 = vsub.f32 %v4154, %v4162
    %v4167 = vsub.f32 %v4157, %v4165
    %v4168 = vmul.f32 %v4166, 1.442695
    %v4169 = vpow.pop %v4168
    %v4170 = vmul.f32 %v4167, 1.442695
    %v4171 = vpow.pop %v4170
    %v4172 = vsel %vm399, %v4169, 0.0
    %4173 = vadd.xlane.f32.xlu0 %v4172
    %v4174 = vpop.xlane.xlu0 %4173
    %v4175 = vsel %vm399, %v4171, 0.0
    %4176 = vadd.xlane.f32.xlu0 %v4175
    %v4177 = vpop.xlane.xlu0 %4176
    %v4178 = vrcp.pop %v4174
    %v4179 = vrcp.pop %v4177
    %v4180 = vmul.f32 %v4169, %v4178
    %v4181 = vmul.f32 %v4171, %v4179
    %v4182 = vpack.c.bf16 %v4181, %v4180
    %4183 = vrot.lane.b32.xlu0 %v3746, 40
    %v4184 = vpop.permute.xlu0 %4183
    %v4187 = vsel %vm399, %v4182, 0
    %4189 = vmatprep.subr.bf16.mxu0 0
    %4190 = vmatpush1.bf16.msra.mxu0 0
    %4191 = vmatprep.subr.bf16.mxu0 0
    %4192 = vmatpush1.bf16.msra.mxu0 0
    %4193 = vmatprep.subr.bf16.mxu0 0
    %4194 = vmatpush1.bf16.msra.mxu0 0
    %4195 = vmatprep.subr.bf16.mxu0 0
    %4196 = vmatpush1.bf16.msra.mxu0 0
    %4197 = vmatprep.subr.bf16.mxu0 0
    %4198 = vmatpush1.bf16.msra.mxu0 0
    %4199 = vmatprep.subr.bf16.mxu0 0
    %4200 = vmatpush1.bf16.msra.mxu0 0
    %4201 = vmatprep.subr.bf16.mxu0 0
    %4202 = vmatpush1.bf16.msra.mxu0 0
    %4203 = vmatprep.subr.bf16.mxu0 0
    %4204 = vmatpush1.bf16.msra.mxu0 %v4184
    %4205 = vmatprep.subr.bf16.mxu0 0
    %4206 = vmatpush2.bf16.msra.mxu0 0
    %4207 = vmatprep.subr.bf16.mxu0 0
    %4208 = vmatpush2.bf16.msra.mxu0 0
    %4209 = vmatprep.subr.bf16.mxu0 0
    %4210 = vmatpush2.bf16.msra.mxu0 0
    %4211 = vmatprep.subr.bf16.mxu0 0
    %4212 = vmatpush2.bf16.msra.mxu0 0
    %4213 = vmatprep.subr.bf16.mxu0 0
    %4214 = vmatpush2.bf16.msra.mxu0 0
    %4215 = vmatprep.subr.bf16.mxu0 0
    %4216 = vmatpush2.bf16.msra.mxu0 0
    %4217 = vmatprep.subr.bf16.mxu0 0
    %4218 = vmatpush2.bf16.msra.mxu0 0
    %4219 = vmatprep.subr.bf16.mxu0 0
    %4220 = vmatpush2.bf16.msra.mxu0 0
    %4221 = vmatprep.mubr.bf16.mxu0 0
    %4222 = vmatmul.mubr.bf16.gmra.mxu0 %v4187
    %v4223 = vpop.f32.mrf.mxu0
    %v4224 = vadd.f32 0.0, %v4223
    %v4225 = vpop.f32.mrf.mxu0
    %v4226 = vpop.f32.mrf.mxu0
    %v4227 = vadd.f32 0.0, %v4226
    %v4228 = vpop.f32.mrf.mxu0
    %4229 = vdwg.mxu0
    %4232 = vrot.lane.b32.xlu0 %v3982, 8
    %v4233 = vpop.permute.xlu0 %4232
    %4234 = vrot.lane.b32.xlu0 %v3985, 8
    %v4235 = vpop.permute.xlu0 %4234
    %4240 = vrot.lane.b32.xlu0 %v4103, 16
    %v4241 = vpop.permute.xlu0 %4240
    %4242 = vrot.lane.b32.xlu0 %v4106, 16
    %v4243 = vpop.permute.xlu0 %4242
    %4248 = vrot.lane.b32.xlu0 %v4224, 24
    %v4249 = vpop.permute.xlu0 %4248
    %4250 = vrot.lane.b32.xlu0 %v4227, 24
    %v4251 = vpop.permute.xlu0 %4250
    %v4254 = vsel %vm212, %v3861, %v4233
    %v4255 = vsel %vm212, %v3864, %v4235
    %v4256 = vsel %vm399, %v4254, %v4241
    %v4257 = vsel %vm399, %v4255, %v4243
    %v4258 = vsel %vm861, %v4256, %v4249
    %v4259 = vsel %vm861, %v4257, %v4251
    %v4260 = vpack.c.bf16 %v4259, %v4258
    %v4261 = vld [vmem:[#allocation2 + $0x168] sm:$0xf]
    %v4262 = vld [vmem:[#allocation2 + $0x16c] sm:$0xf]
    %v4263 = vld [vmem:[#allocation2 + $0x170] sm:$0xf]
    %v4264 = vld [vmem:[#allocation2 + $0x174] sm:$0xf]
    %v4265 = vld [vmem:[%s3 + $0x1f] sm:$0x1]
    %v4266 = vlaneseq
    %v4267 = vshrl.u32 %v4266, 7
    %v4268 = vsub.s32 0, %v4267
    %v4269 = vrot.slane %v4265, %v4268
    %v4274 = vunpack.c.l.b16 %v4261
    %v4275 = vunpack.c.l.b16 %v4262
    %v4276 = vunpack.c.l.b16 %v4263
    %v4277 = vunpack.c.l.b16 %v4264
    %v4278 = vpack.c.b16 %v4275, %v4274
    %v4279 = vpack.c.b16 %v4277, %v4276
    %v4283 = vsel %vm80, %v4260, 0
    %4285 = vmatprep.subr.bf16.mxu0 0
    %4286 = vmatpush1.bf16.msra.mxu0 0
    %4287 = vmatprep.subr.bf16.mxu0 0
    %4288 = vmatpush1.bf16.msra.mxu0 0
    %4289 = vmatprep.subr.bf16.mxu0 0
    %4290 = vmatpush1.bf16.msra.mxu0 0
    %4291 = vmatprep.subr.bf16.mxu0 0
    %4292 = vmatpush1.bf16.msra.mxu0 0
    %4293 = vmatprep.subr.bf16.mxu0 0
    %4294 = vmatpush1.bf16.msra.mxu0 0
    %4295 = vmatprep.subr.bf16.mxu0 0
    %4296 = vmatpush1.bf16.msra.mxu0 0
    %4297 = vmatprep.subr.bf16.mxu0 0
    %4298 = vmatpush1.bf16.msra.mxu0 %v4279
    %4299 = vmatprep.subr.bf16.mxu0 0
    %4300 = vmatpush1.bf16.msra.mxu0 %v4278
    %4301 = vmatprep.subr.bf16.mxu0 0
    %4302 = vmatpush2.bf16.msra.mxu0 0
    %4303 = vmatprep.subr.bf16.mxu0 0
    %4304 = vmatpush2.bf16.msra.mxu0 0
    %4305 = vmatprep.subr.bf16.mxu0 0
    %4306 = vmatpush2.bf16.msra.mxu0 0
    %4307 = vmatprep.subr.bf16.mxu0 0
    %4308 = vmatpush2.bf16.msra.mxu0 0
    %4309 = vmatprep.subr.bf16.mxu0 0
    %4310 = vmatpush2.bf16.msra.mxu0 0
    %4311 = vmatprep.subr.bf16.mxu0 0
    %4312 = vmatpush2.bf16.msra.mxu0 0
    %4313 = vmatprep.subr.bf16.mxu0 0
    %4314 = vmatpush2.bf16.msra.mxu0 0
    %4315 = vmatprep.subr.bf16.mxu0 0
    %4316 = vmatpush2.bf16.msra.mxu0 0
    %4317 = vmatprep.mubr.bf16.mxu0 0
    %4318 = vmatmul.mubr.bf16.gmra.mxu0 %v4283
    %v4319 = vpop.f32.mrf.mxu0
    %v4320 = vadd.f32 %v4269, %v4319
    %v4321 = vpop.f32.mrf.mxu0
    %v4322 = vpop.f32.mrf.mxu0
    %v4323 = vadd.f32 %v4269, %v4322
    %v4324 = vpop.f32.mrf.mxu0
    %4325 = vdwg.mxu0
    %v4326 = vadd.f32 %v3678, %v4320
    %v4327 = vadd.f32 %v3679, %v4323
    %v4328 = vld [vmem:[%s3 + $0x20] sm:$0x1]
    %v4329 = vld [vmem:[%s3 + $0x21] sm:$0x1]
    %v4330 = vsel %vm80, %v4326, 0.0
    %4331 = vadd.xlane.f32.xlu0 %v4330
    %v4332 = vpop.xlane.xlu0 %4331
    %v4333 = vsel %vm80, %v4327, 0.0
    %4334 = vadd.xlane.f32.xlu0 %v4333
    %v4335 = vpop.xlane.xlu0 %4334
    %v4336 = vmul.f32 %v4332, %v940
    %v4337 = vmul.f32 %v4335, %v940
    %v4338 = vsub.f32 %v4326, %v4336
    %v4339 = vsub.f32 %v4327, %v4337
    %v4340 = vmul.f32 %v4338, %v4338
    %v4341 = vmul.f32 %v4339, %v4339
    %v4342 = vsel %vm80, %v4340, 0.0
    %4343 = vadd.xlane.f32.xlu0 %v4342
    %v4344 = vpop.xlane.xlu0 %4343
    %v4345 = vsel %vm80, %v4341, 0.0
    %4346 = vadd.xlane.f32.xlu0 %v4345
    %v4347 = vpop.xlane.xlu0 %4346
    %v4348 = vmul.f32 %v4344, %v940
    %v4349 = vmul.f32 %v4347, %v940
    %v4350 = vadd.f32 %v4348, 1e-05
    %v4351 = vadd.f32 %v4349, 1e-05
    %v4352 = vrsqrt.pop %v4350
    %v4353 = vrsqrt.pop %v4351
    %v4354 = vmul.f32 %v4338, %v4352
    %v4355 = vmul.f32 %v4339, %v4353
    %v4356 = vlaneseq
    %v4357 = vshrl.u32 %v4356, 7
    %v4358 = vsub.s32 0, %v4357
    %v4359 = vrot.slane %v4328, %v4358
    %v4360 = vmul.f32 %v4354, %v4359
    %v4361 = vmul.f32 %v4355, %v4359
    %v4362 = vlaneseq
    %v4363 = vshrl.u32 %v4362, 7
    %v4364 = vsub.s32 0, %v4363
    %v4365 = vrot.slane %v4329, %v4364
    %v4366 = vadd.f32 %v4360, %v4365
    %v4367 = vadd.f32 %v4361, %v4365
    %v4368 = vpack.c.bf16 %v4367, %v4366
    %v4369 = vld [vmem:[#allocation2 + $0x178] sm:$0xf]
    %v4370 = vld [vmem:[#allocation2 + $0x17c] sm:$0xf]
    %v4371 = vld [vmem:[#allocation2 + $0x180] sm:$0xf]
    %v4372 = vld [vmem:[#allocation2 + $0x184] sm:$0xf]
    %v4373 = vld [vmem:[%s3 + $0x22] sm:$0x1]
    %v4374 = vlaneseq
    %v4375 = vshrl.u32 %v4374, 7
    %v4376 = vsub.s32 0, %v4375
    %v4377 = vrot.slane %v4373, %v4376
    %v4382 = vunpack.c.l.b16 %v4369
    %v4383 = vunpack.c.l.b16 %v4370
    %v4384 = vunpack.c.l.b16 %v4371
    %v4385 = vunpack.c.l.b16 %v4372
    %v4386 = vpack.c.b16 %v4383, %v4382
    %v4387 = vpack.c.b16 %v4385, %v4384
    %v4391 = vsel %vm80, %v4368, 0
    %4393 = vmatprep.subr.bf16.mxu0 0
    %4394 = vmatpush1.bf16.msra.mxu0 0
    %4395 = vmatprep.subr.bf16.mxu0 0
    %4396 = vmatpush1.bf16.msra.mxu0 0
    %4397 = vmatprep.subr.bf16.mxu0 0
    %4398 = vmatpush1.bf16.msra.mxu0 0
    %4399 = vmatprep.subr.bf16.mxu0 0
    %4400 = vmatpush1.bf16.msra.mxu0 0
    %4401 = vmatprep.subr.bf16.mxu0 0
    %4402 = vmatpush1.bf16.msra.mxu0 0
    %4403 = vmatprep.subr.bf16.mxu0 0
    %4404 = vmatpush1.bf16.msra.mxu0 0
    %4405 = vmatprep.subr.bf16.mxu0 0
    %4406 = vmatpush1.bf16.msra.mxu0 %v4387
    %4407 = vmatprep.subr.bf16.mxu0 0
    %4408 = vmatpush1.bf16.msra.mxu0 %v4386
    %4409 = vmatprep.subr.bf16.mxu0 0
    %4410 = vmatpush2.bf16.msra.mxu0 0
    %4411 = vmatprep.subr.bf16.mxu0 0
    %4412 = vmatpush2.bf16.msra.mxu0 0
    %4413 = vmatprep.subr.bf16.mxu0 0
    %4414 = vmatpush2.bf16.msra.mxu0 0
    %4415 = vmatprep.subr.bf16.mxu0 0
    %4416 = vmatpush2.bf16.msra.mxu0 0
    %4417 = vmatprep.subr.bf16.mxu0 0
    %4418 = vmatpush2.bf16.msra.mxu0 0
    %4419 = vmatprep.subr.bf16.mxu0 0
    %4420 = vmatpush2.bf16.msra.mxu0 0
    %4421 = vmatprep.subr.bf16.mxu0 0
    %4422 = vmatpush2.bf16.msra.mxu0 0
    %4423 = vmatprep.subr.bf16.mxu0 0
    %4424 = vmatpush2.bf16.msra.mxu0 0
    %4425 = vmatprep.mubr.bf16.mxu0 0
    %4426 = vmatmul.mubr.bf16.gmra.mxu0 %v4391
    %v4427 = vpop.f32.mrf.mxu0
    %v4428 = vadd.f32 %v4377, %v4427
    %v4429 = vpop.f32.mrf.mxu0
    %v4430 = vpop.f32.mrf.mxu0
    %v4431 = vadd.f32 %v4377, %v4430
    %v4432 = vpop.f32.mrf.mxu0
    %4433 = vdwg.mxu0
    %v4434 = vld [vmem:[#allocation2 + $0x188] sm:$0xf]
    %v4435 = vld [vmem:[#allocation2 + $0x18c] sm:$0xf]
    %v4436 = vld [vmem:[#allocation2 + $0x190] sm:$0xf]
    %v4437 = vld [vmem:[#allocation2 + $0x194] sm:$0xf]
    %v4438 = vld [vmem:[%s3 + $0x23] sm:$0x1]
    %v4439 = vlaneseq
    %v4440 = vshrl.u32 %v4439, 7
    %v4441 = vsub.s32 0, %v4440
    %v4442 = vrot.slane %v4438, %v4441
    %v4447 = vunpack.c.l.b16 %v4434
    %v4448 = vunpack.c.l.b16 %v4435
    %v4449 = vunpack.c.l.b16 %v4436
    %v4450 = vunpack.c.l.b16 %v4437
    %v4451 = vpack.c.b16 %v4448, %v4447
    %v4452 = vpack.c.b16 %v4450, %v4449
    %4455 = vmatprep.subr.bf16.mxu0 0
    %4456 = vmatpush1.bf16.msra.mxu0 0
    %4457 = vmatprep.subr.bf16.mxu0 0
    %4458 = vmatpush1.bf16.msra.mxu0 0
    %4459 = vmatprep.subr.bf16.mxu0 0
    %4460 = vmatpush1.bf16.msra.mxu0 0
    %4461 = vmatprep.subr.bf16.mxu0 0
    %4462 = vmatpush1.bf16.msra.mxu0 0
    %4463 = vmatprep.subr.bf16.mxu0 0
    %4464 = vmatpush1.bf16.msra.mxu0 0
    %4465 = vmatprep.subr.bf16.mxu0 0
    %4466 = vmatpush1.bf16.msra.mxu0 0
    %4467 = vmatprep.subr.bf16.mxu0 0
    %4468 = vmatpush1.bf16.msra.mxu0 %v4452
    %4469 = vmatprep.subr.bf16.mxu0 0
    %4470 = vmatpush1.bf16.msra.mxu0 %v4451
    %4471 = vmatprep.subr.bf16.mxu0 0
    %4472 = vmatpush2.bf16.msra.mxu0 0
    %4473 = vmatprep.subr.bf16.mxu0 0
    %4474 = vmatpush2.bf16.msra.mxu0 0
    %4475 = vmatprep.subr.bf16.mxu0 0
    %4476 = vmatpush2.bf16.msra.mxu0 0
    %4477 = vmatprep.subr.bf16.mxu0 0
    %4478 = vmatpush2.bf16.msra.mxu0 0
    %4479 = vmatprep.subr.bf16.mxu0 0
    %4480 = vmatpush2.bf16.msra.mxu0 0
    %4481 = vmatprep.subr.bf16.mxu0 0
    %4482 = vmatpush2.bf16.msra.mxu0 0
    %4483 = vmatprep.subr.bf16.mxu0 0
    %4484 = vmatpush2.bf16.msra.mxu0 0
    %4485 = vmatprep.subr.bf16.mxu0 0
    %4486 = vmatpush2.bf16.msra.mxu0 0
    %4487 = vmatprep.mubr.bf16.mxu0 0
    %4488 = vmatmul.mubr.bf16.gmra.mxu0 %v2823
    %v4489 = vpop.f32.mrf.mxu0
    %v4490 = vadd.f32 %v4442, %v4489
    %v4491 = vpop.f32.mrf.mxu0
    %v4492 = vpop.f32.mrf.mxu0
    %v4493 = vadd.f32 %v4442, %v4492
    %v4494 = vpop.f32.mrf.mxu0
    %4495 = vdwg.mxu0
    %v4496 = vpack.c.bf16 %v4431, %v4428
    %v4497 = vpack.c.bf16 %v4493, %v4490
    %v4499 = vsel %vm212, %v4496, 0
    %v4502 = vsel %vm212, %v4497, 0
    %4504 = vmatprep.subr.bf16.mxu0 0
    %4505 = vmatpush1.bf16.xpose.msra.mxu0 0
    %4506 = vmatprep.subr.bf16.mxu0 0
    %4507 = vmatpush1.bf16.xpose.msra.mxu0 0
    %4508 = vmatprep.subr.bf16.mxu0 0
    %4509 = vmatpush1.bf16.xpose.msra.mxu0 0
    %4510 = vmatprep.subr.bf16.mxu0 0
    %4511 = vmatpush1.bf16.xpose.msra.mxu0 0
    %4512 = vmatprep.subr.bf16.mxu0 0
    %4513 = vmatpush1.bf16.xpose.msra.mxu0 0
    %4514 = vmatprep.subr.bf16.mxu0 0
    %4515 = vmatpush1.bf16.xpose.msra.mxu0 0
    %4516 = vmatprep.subr.bf16.mxu0 0
    %4517 = vmatpush1.bf16.xpose.msra.mxu0 0
    %4518 = vmatprep.subr.bf16.mxu0 0
    %4519 = vmatpush1.bf16.xpose.msra.mxu0 %v4502
    %4520 = vmatprep.subr.bf16.mxu0 0
    %4521 = vmatpush2.bf16.xpose.msra.mxu0 0
    %4522 = vmatprep.subr.bf16.mxu0 0
    %4523 = vmatpush2.bf16.xpose.msra.mxu0 0
    %4524 = vmatprep.subr.bf16.mxu0 0
    %4525 = vmatpush2.bf16.xpose.msra.mxu0 0
    %4526 = vmatprep.subr.bf16.mxu0 0
    %4527 = vmatpush2.bf16.xpose.msra.mxu0 0
    %4528 = vmatprep.subr.bf16.mxu0 0
    %4529 = vmatpush2.bf16.xpose.msra.mxu0 0
    %4530 = vmatprep.subr.bf16.mxu0 0
    %4531 = vmatpush2.bf16.xpose.msra.mxu0 0
    %4532 = vmatprep.subr.bf16.mxu0 0
    %4533 = vmatpush2.bf16.xpose.msra.mxu0 0
    %4534 = vmatprep.subr.bf16.mxu0 0
    %4535 = vmatpush2.bf16.xpose.msra.mxu0 0
    %4536 = vmatprep.mubr.bf16.mxu0 0
    %4537 = vmatmul.mubr.bf16.gmra.mxu0 %v4499
    %v4538 = vpop.f32.mrf.mxu0
    %v4539 = vadd.f32 %v280, %v4538
    %v4540 = vpop.f32.mrf.mxu0
    %v4541 = vpop.f32.mrf.mxu0
    %v4542 = vadd.f32 %v281, %v4541
    %v4543 = vpop.f32.mrf.mxu0
    %4544 = vdwg.mxu0
    %v4545 = vsel %vm399, %v4539, -inf
    %4546 = vmax.xlane.f32.xlu0 %v4545
    %v4547 = vpop.xlane.xlu0 %4546
    %v4548 = vsel %vm399, %v4542, -inf
    %4549 = vmax.xlane.f32.xlu0 %v4548
    %v4550 = vpop.xlane.xlu0 %4549
    %v4551 = vsub.f32 %v4539, %v4547
    %v4552 = vsub.f32 %v4542, %v4550
    %v4553 = vmul.f32 %v4551, 1.442695
    %v4554 = vpow.pop %v4553
    %v4555 = vmul.f32 %v4552, 1.442695
    %v4556 = vpow.pop %v4555
    %v4557 = vsel %vm399, %v4554, 0.0
    %4558 = vadd.xlane.f32.xlu0 %v4557
    %v4559 = vpop.xlane.xlu0 %4558
    %v4560 = vsel %vm399, %v4556, 0.0
    %4561 = vadd.xlane.f32.xlu0 %v4560
    %v4562 = vpop.xlane.xlu0 %4561
    %v4563 = vrcp.pop %v4559
    %v4564 = vrcp.pop %v4562
    %v4565 = vmul.f32 %v4554, %v4563
    %v4566 = vmul.f32 %v4556, %v4564
    %v4567 = vpack.c.bf16 %v4566, %v4565
    %4569 = vrot.lane.b32.xlu0 %v4497, 96
    %v4570 = vpop.permute.xlu0 %4569
    %v4573 = vsel %vm399, %v4567, 0
    %4575 = vmatprep.subr.bf16.mxu0 0
    %4576 = vmatpush1.bf16.msra.mxu0 0
    %4577 = vmatprep.subr.bf16.mxu0 0
    %4578 = vmatpush1.bf16.msra.mxu0 0
    %4579 = vmatprep.subr.bf16.mxu0 0
    %4580 = vmatpush1.bf16.msra.mxu0 0
    %4581 = vmatprep.subr.bf16.mxu0 0
    %4582 = vmatpush1.bf16.msra.mxu0 0
    %4583 = vmatprep.subr.bf16.mxu0 0
    %4584 = vmatpush1.bf16.msra.mxu0 0
    %4585 = vmatprep.subr.bf16.mxu0 0
    %4586 = vmatpush1.bf16.msra.mxu0 0
    %4587 = vmatprep.subr.bf16.mxu0 0
    %4588 = vmatpush1.bf16.msra.mxu0 0
    %4589 = vmatprep.subr.bf16.mxu0 0
    %4590 = vmatpush1.bf16.msra.mxu0 %v4570
    %4591 = vmatprep.subr.bf16.mxu0 0
    %4592 = vmatpush2.bf16.msra.mxu0 0
    %4593 = vmatprep.subr.bf16.mxu0 0
    %4594 = vmatpush2.bf16.msra.mxu0 0
    %4595 = vmatprep.subr.bf16.mxu0 0
    %4596 = vmatpush2.bf16.msra.mxu0 0
    %4597 = vmatprep.subr.bf16.mxu0 0
    %4598 = vmatpush2.bf16.msra.mxu0 0
    %4599 = vmatprep.subr.bf16.mxu0 0
    %4600 = vmatpush2.bf16.msra.mxu0 0
    %4601 = vmatprep.subr.bf16.mxu0 0
    %4602 = vmatpush2.bf16.msra.mxu0 0
    %4603 = vmatprep.subr.bf16.mxu0 0
    %4604 = vmatpush2.bf16.msra.mxu0 0
    %4605 = vmatprep.subr.bf16.mxu0 0
    %4606 = vmatpush2.bf16.msra.mxu0 0
    %4607 = vmatprep.mubr.bf16.mxu0 0
    %4608 = vmatmul.mubr.bf16.gmra.mxu0 %v4573
    %v4609 = vpop.f32.mrf.mxu0
    %v4610 = vadd.f32 0.0, %v4609
    %v4611 = vpop.f32.mrf.mxu0
    %v4612 = vpop.f32.mrf.mxu0
    %v4613 = vadd.f32 0.0, %v4612
    %v4614 = vpop.f32.mrf.mxu0
    %4615 = vdwg.mxu0
    %4617 = vrot.lane.b32.xlu0 %v4496, 120
    %v4618 = vpop.permute.xlu0 %4617
    %4619 = vrot.lane.b32.xlu0 %v4497, 120
    %v4620 = vpop.permute.xlu0 %4619
    %v4622 = vsel %vm212, %v4618, 0
    %v4625 = vsel %vm212, %v4620, 0
    %4627 = vmatprep.subr.bf16.mxu0 0
    %4628 = vmatpush1.bf16.xpose.msra.mxu0 0
    %4629 = vmatprep.subr.bf16.mxu0 0
    %4630 = vmatpush1.bf16.xpose.msra.mxu0 0
    %4631 = vmatprep.subr.bf16.mxu0 0
    %4632 = vmatpush1.bf16.xpose.msra.mxu0 0
    %4633 = vmatprep.subr.bf16.mxu0 0
    %4634 = vmatpush1.bf16.xpose.msra.mxu0 0
    %4635 = vmatprep.subr.bf16.mxu0 0
    %4636 = vmatpush1.bf16.xpose.msra.mxu0 0
    %4637 = vmatprep.subr.bf16.mxu0 0
    %4638 = vmatpush1.bf16.xpose.msra.mxu0 0
    %4639 = vmatprep.subr.bf16.mxu0 0
    %4640 = vmatpush1.bf16.xpose.msra.mxu0 0
    %4641 = vmatprep.subr.bf16.mxu0 0
    %4642 = vmatpush1.bf16.xpose.msra.mxu0 %v4625
    %4643 = vmatprep.subr.bf16.mxu0 0
    %4644 = vmatpush2.bf16.xpose.msra.mxu0 0
    %4645 = vmatprep.subr.bf16.mxu0 0
    %4646 = vmatpush2.bf16.xpose.msra.mxu0 0
    %4647 = vmatprep.subr.bf16.mxu0 0
    %4648 = vmatpush2.bf16.xpose.msra.mxu0 0
    %4649 = vmatprep.subr.bf16.mxu0 0
    %4650 = vmatpush2.bf16.xpose.msra.mxu0 0
    %4651 = vmatprep.subr.bf16.mxu0 0
    %4652 = vmatpush2.bf16.xpose.msra.mxu0 0
    %4653 = vmatprep.subr.bf16.mxu0 0
    %4654 = vmatpush2.bf16.xpose.msra.mxu0 0
    %4655 = vmatprep.subr.bf16.mxu0 0
    %4656 = vmatpush2.bf16.xpose.msra.mxu0 0
    %4657 = vmatprep.subr.bf16.mxu0 0
    %4658 = vmatpush2.bf16.xpose.msra.mxu0 0
    %4659 = vmatprep.mubr.bf16.mxu0 0
    %4660 = vmatmul.mubr.bf16.gmra.mxu0 %v4622
    %v4661 = vpop.f32.mrf.mxu0
    %v4662 = vadd.f32 %v280, %v4661
    %v4663 = vpop.f32.mrf.mxu0
    %v4664 = vpop.f32.mrf.mxu0
    %v4665 = vadd.f32 %v281, %v4664
    %v4666 = vpop.f32.mrf.mxu0
    %4667 = vdwg.mxu0
    %v4668 = vsel %vm399, %v4662, -inf
    %4669 = vmax.xlane.f32.xlu0 %v4668
    %v4670 = vpop.xlane.xlu0 %4669
    %v4671 = vsel %vm399, %v4665, -inf
    %4672 = vmax.xlane.f32.xlu0 %v4671
    %v4673 = vpop.xlane.xlu0 %4672
    %v4674 = vsub.f32 %v4662, %v4670
    %v4675 = vsub.f32 %v4665, %v4673
    %v4676 = vmul.f32 %v4674, 1.442695
    %v4677 = vpow.pop %v4676
    %v4678 = vmul.f32 %v4675, 1.442695
    %v4679 = vpow.pop %v4678
    %v4680 = vsel %vm399, %v4677, 0.0
    %4681 = vadd.xlane.f32.xlu0 %v4680
    %v4682 = vpop.xlane.xlu0 %4681
    %v4683 = vsel %vm399, %v4679, 0.0
    %4684 = vadd.xlane.f32.xlu0 %v4683
    %v4685 = vpop.xlane.xlu0 %4684
    %v4686 = vrcp.pop %v4682
    %v4687 = vrcp.pop %v4685
    %v4688 = vmul.f32 %v4677, %v4686
    %v4689 = vmul.f32 %v4679, %v4687
    %v4690 = vpack.c.bf16 %v4689, %v4688
    %4691 = vrot.lane.b32.xlu0 %v4497, 88
    %v4692 = vpop.permute.xlu0 %4691
    %v4695 = vsel %vm399, %v4690, 0
    %4697 = vmatprep.subr.bf16.mxu0 0
    %4698 = vmatpush1.bf16.msra.mxu0 0
    %4699 = vmatprep.subr.bf16.mxu0 0
    %4700 = vmatpush1.bf16.msra.mxu0 0
    %4701 = vmatprep.subr.bf16.mxu0 0
    %4702 = vmatpush1.bf16.msra.mxu0 0
    %4703 = vmatprep.subr.bf16.mxu0 0
    %4704 = vmatpush1.bf16.msra.mxu0 0
    %4705 = vmatprep.subr.bf16.mxu0 0
    %4706 = vmatpush1.bf16.msra.mxu0 0
    %4707 = vmatprep.subr.bf16.mxu0 0
    %4708 = vmatpush1.bf16.msra.mxu0 0
    %4709 = vmatprep.subr.bf16.mxu0 0
    %4710 = vmatpush1.bf16.msra.mxu0 0
    %4711 = vmatprep.subr.bf16.mxu0 0
    %4712 = vmatpush1.bf16.msra.mxu0 %v4692
    %4713 = vmatprep.subr.bf16.mxu0 0
    %4714 = vmatpush2.bf16.msra.mxu0 0
    %4715 = vmatprep.subr.bf16.mxu0 0
    %4716 = vmatpush2.bf16.msra.mxu0 0
    %4717 = vmatprep.subr.bf16.mxu0 0
    %4718 = vmatpush2.bf16.msra.mxu0 0
    %4719 = vmatprep.subr.bf16.mxu0 0
    %4720 = vmatpush2.bf16.msra.mxu0 0
    %4721 = vmatprep.subr.bf16.mxu0 0
    %4722 = vmatpush2.bf16.msra.mxu0 0
    %4723 = vmatprep.subr.bf16.mxu0 0
    %4724 = vmatpush2.bf16.msra.mxu0 0
    %4725 = vmatprep.subr.bf16.mxu0 0
    %4726 = vmatpush2.bf16.msra.mxu0 0
    %4727 = vmatprep.subr.bf16.mxu0 0
    %4728 = vmatpush2.bf16.msra.mxu0 0
    %4729 = vmatprep.mubr.bf16.mxu0 0
    %4730 = vmatmul.mubr.bf16.gmra.mxu0 %v4695
    %v4731 = vpop.f32.mrf.mxu0
    %v4732 = vadd.f32 0.0, %v4731
    %v4733 = vpop.f32.mrf.mxu0
    %v4734 = vpop.f32.mrf.mxu0
    %v4735 = vadd.f32 0.0, %v4734
    %v4736 = vpop.f32.mrf.mxu0
    %4737 = vdwg.mxu0
    %4738 = vrot.lane.b32.xlu0 %v4496, 112
    %v4739 = vpop.permute.xlu0 %4738
    %4740 = vrot.lane.b32.xlu0 %v4497, 112
    %v4741 = vpop.permute.xlu0 %4740
    %v4743 = vsel %vm212, %v4739, 0
    %v4746 = vsel %vm212, %v4741, 0
    %4748 = vmatprep.subr.bf16.mxu0 0
    %4749 = vmatpush1.bf16.xpose.msra.mxu0 0
    %4750 = vmatprep.subr.bf16.mxu0 0
    %4751 = vmatpush1.bf16.xpose.msra.mxu0 0
    %4752 = vmatprep.subr.bf16.mxu0 0
    %4753 = vmatpush1.bf16.xpose.msra.mxu0 0
    %4754 = vmatprep.subr.bf16.mxu0 0
    %4755 = vmatpush1.bf16.xpose.msra.mxu0 0
    %4756 = vmatprep.subr.bf16.mxu0 0
    %4757 = vmatpush1.bf16.xpose.msra.mxu0 0
    %4758 = vmatprep.subr.bf16.mxu0 0
    %4759 = vmatpush1.bf16.xpose.msra.mxu0 0
    %4760 = vmatprep.subr.bf16.mxu0 0
    %4761 = vmatpush1.bf16.xpose.msra.mxu0 0
    %4762 = vmatprep.subr.bf16.mxu0 0
    %4763 = vmatpush1.bf16.xpose.msra.mxu0 %v4746
    %4764 = vmatprep.subr.bf16.mxu0 0
    %4765 = vmatpush2.bf16.xpose.msra.mxu0 0
    %4766 = vmatprep.subr.bf16.mxu0 0
    %4767 = vmatpush2.bf16.xpose.msra.mxu0 0
    %4768 = vmatprep.subr.bf16.mxu0 0
    %4769 = vmatpush2.bf16.xpose.msra.mxu0 0
    %4770 = vmatprep.subr.bf16.mxu0 0
    %4771 = vmatpush2.bf16.xpose.msra.mxu0 0
    %4772 = vmatprep.subr.bf16.mxu0 0
    %4773 = vmatpush2.bf16.xpose.msra.mxu0 0
    %4774 = vmatprep.subr.bf16.mxu0 0
    %4775 = vmatpush2.bf16.xpose.msra.mxu0 0
    %4776 = vmatprep.subr.bf16.mxu0 0
    %4777 = vmatpush2.bf16.xpose.msra.mxu0 0
    %4778 = vmatprep.subr.bf16.mxu0 0
    %4779 = vmatpush2.bf16.xpose.msra.mxu0 0
    %4780 = vmatprep.mubr.bf16.mxu0 0
    %4781 = vmatmul.mubr.bf16.gmra.mxu0 %v4743
    %v4782 = vpop.f32.mrf.mxu0
    %v4783 = vadd.f32 %v280, %v4782
    %v4784 = vpop.f32.mrf.mxu0
    %v4785 = vpop.f32.mrf.mxu0
    %v4786 = vadd.f32 %v281, %v4785
    %v4787 = vpop.f32.mrf.mxu0
    %4788 = vdwg.mxu0
    %v4789 = vsel %vm399, %v4783, -inf
    %4790 = vmax.xlane.f32.xlu0 %v4789
    %v4791 = vpop.xlane.xlu0 %4790
    %v4792 = vsel %vm399, %v4786, -inf
    %4793 = vmax.xlane.f32.xlu0 %v4792
    %v4794 = vpop.xlane.xlu0 %4793
    %v4795 = vsub.f32 %v4783, %v4791
    %v4796 = vsub.f32 %v4786, %v4794
    %v4797 = vmul.f32 %v4795, 1.442695
    %v4798 = vpow.pop %v4797
    %v4799 = vmul.f32 %v4796, 1.442695
    %v4800 = vpow.pop %v4799
    %v4801 = vsel %vm399, %v4798, 0.0
    %4802 = vadd.xlane.f32.xlu0 %v4801
    %v4803 = vpop.xlane.xlu0 %4802
    %v4804 = vsel %vm399, %v4800, 0.0
    %4805 = vadd.xlane.f32.xlu0 %v4804
    %v4806 = vpop.xlane.xlu0 %4805
    %v4807 = vrcp.pop %v4803
    %v4808 = vrcp.pop %v4806
    %v4809 = vmul.f32 %v4798, %v4807
    %v4810 = vmul.f32 %v4800, %v4808
    %v4811 = vpack.c.bf16 %v4810, %v4809
    %4812 = vrot.lane.b32.xlu0 %v4497, 80
    %v4813 = vpop.permute.xlu0 %4812
    %v4816 = vsel %vm399, %v4811, 0
    %4818 = vmatprep.subr.bf16.mxu0 0
    %4819 = vmatpush1.bf16.msra.mxu0 0
    %4820 = vmatprep.subr.bf16.mxu0 0
    %4821 = vmatpush1.bf16.msra.mxu0 0
    %4822 = vmatprep.subr.bf16.mxu0 0
    %4823 = vmatpush1.bf16.msra.mxu0 0
    %4824 = vmatprep.subr.bf16.mxu0 0
    %4825 = vmatpush1.bf16.msra.mxu0 0
    %4826 = vmatprep.subr.bf16.mxu0 0
    %4827 = vmatpush1.bf16.msra.mxu0 0
    %4828 = vmatprep.subr.bf16.mxu0 0
    %4829 = vmatpush1.bf16.msra.mxu0 0
    %4830 = vmatprep.subr.bf16.mxu0 0
    %4831 = vmatpush1.bf16.msra.mxu0 0
    %4832 = vmatprep.subr.bf16.mxu0 0
    %4833 = vmatpush1.bf16.msra.mxu0 %v4813
    %4834 = vmatprep.subr.bf16.mxu0 0
    %4835 = vmatpush2.bf16.msra.mxu0 0
    %4836 = vmatprep.subr.bf16.mxu0 0
    %4837 = vmatpush2.bf16.msra.mxu0 0
    %4838 = vmatprep.subr.bf16.mxu0 0
    %4839 = vmatpush2.bf16.msra.mxu0 0
    %4840 = vmatprep.subr.bf16.mxu0 0
    %4841 = vmatpush2.bf16.msra.mxu0 0
    %4842 = vmatprep.subr.bf16.mxu0 0
    %4843 = vmatpush2.bf16.msra.mxu0 0
    %4844 = vmatprep.subr.bf16.mxu0 0
    %4845 = vmatpush2.bf16.msra.mxu0 0
    %4846 = vmatprep.subr.bf16.mxu0 0
    %4847 = vmatpush2.bf16.msra.mxu0 0
    %4848 = vmatprep.subr.bf16.mxu0 0
    %4849 = vmatpush2.bf16.msra.mxu0 0
    %4850 = vmatprep.mubr.bf16.mxu0 0
    %4851 = vmatmul.mubr.bf16.gmra.mxu0 %v4816
    %v4852 = vpop.f32.mrf.mxu0
    %v4853 = vadd.f32 0.0, %v4852
    %v4854 = vpop.f32.mrf.mxu0
    %v4855 = vpop.f32.mrf.mxu0
    %v4856 = vadd.f32 0.0, %v4855
    %v4857 = vpop.f32.mrf.mxu0
    %4858 = vdwg.mxu0
    %4859 = vrot.lane.b32.xlu0 %v4496, 104
    %v4860 = vpop.permute.xlu0 %4859
    %4861 = vrot.lane.b32.xlu0 %v4497, 104
    %v4862 = vpop.permute.xlu0 %4861
    %v4864 = vsel %vm212, %v4860, 0
    %v4867 = vsel %vm212, %v4862, 0
    %4869 = vmatprep.subr.bf16.mxu0 0
    %4870 = vmatpush1.bf16.xpose.msra.mxu0 0
    %4871 = vmatprep.subr.bf16.mxu0 0
    %4872 = vmatpush1.bf16.xpose.msra.mxu0 0
    %4873 = vmatprep.subr.bf16.mxu0 0
    %4874 = vmatpush1.bf16.xpose.msra.mxu0 0
    %4875 = vmatprep.subr.bf16.mxu0 0
    %4876 = vmatpush1.bf16.xpose.msra.mxu0 0
    %4877 = vmatprep.subr.bf16.mxu0 0
    %4878 = vmatpush1.bf16.xpose.msra.mxu0 0
    %4879 = vmatprep.subr.bf16.mxu0 0
    %4880 = vmatpush1.bf16.xpose.msra.mxu0 0
    %4881 = vmatprep.subr.bf16.mxu0 0
    %4882 = vmatpush1.bf16.xpose.msra.mxu0 0
    %4883 = vmatprep.subr.bf16.mxu0 0
    %4884 = vmatpush1.bf16.xpose.msra.mxu0 %v4867
    %4885 = vmatprep.subr.bf16.mxu0 0
    %4886 = vmatpush2.bf16.xpose.msra.mxu0 0
    %4887 = vmatprep.subr.bf16.mxu0 0
    %4888 = vmatpush2.bf16.xpose.msra.mxu0 0
    %4889 = vmatprep.subr.bf16.mxu0 0
    %4890 = vmatpush2.bf16.xpose.msra.mxu0 0
    %4891 = vmatprep.subr.bf16.mxu0 0
    %4892 = vmatpush2.bf16.xpose.msra.mxu0 0
    %4893 = vmatprep.subr.bf16.mxu0 0
    %4894 = vmatpush2.bf16.xpose.msra.mxu0 0
    %4895 = vmatprep.subr.bf16.mxu0 0
    %4896 = vmatpush2.bf16.xpose.msra.mxu0 0
    %4897 = vmatprep.subr.bf16.mxu0 0
    %4898 = vmatpush2.bf16.xpose.msra.mxu0 0
    %4899 = vmatprep.subr.bf16.mxu0 0
    %4900 = vmatpush2.bf16.xpose.msra.mxu0 0
    %4901 = vmatprep.mubr.bf16.mxu0 0
    %4902 = vmatmul.mubr.bf16.gmra.mxu0 %v4864
    %v4903 = vpop.f32.mrf.mxu0
    %v4904 = vadd.f32 %v280, %v4903
    %v4905 = vpop.f32.mrf.mxu0
    %v4906 = vpop.f32.mrf.mxu0
    %v4907 = vadd.f32 %v281, %v4906
    %v4908 = vpop.f32.mrf.mxu0
    %4909 = vdwg.mxu0
    %v4910 = vsel %vm399, %v4904, -inf
    %4911 = vmax.xlane.f32.xlu0 %v4910
    %v4912 = vpop.xlane.xlu0 %4911
    %v4913 = vsel %vm399, %v4907, -inf
    %4914 = vmax.xlane.f32.xlu0 %v4913
    %v4915 = vpop.xlane.xlu0 %4914
    %v4916 = vsub.f32 %v4904, %v4912
    %v4917 = vsub.f32 %v4907, %v4915
    %v4918 = vmul.f32 %v4916, 1.442695
    %v4919 = vpow.pop %v4918
    %v4920 = vmul.f32 %v4917, 1.442695
    %v4921 = vpow.pop %v4920
    %v4922 = vsel %vm399, %v4919, 0.0
    %4923 = vadd.xlane.f32.xlu0 %v4922
    %v4924 = vpop.xlane.xlu0 %4923
    %v4925 = vsel %vm399, %v4921, 0.0
    %4926 = vadd.xlane.f32.xlu0 %v4925
    %v4927 = vpop.xlane.xlu0 %4926
    %v4928 = vrcp.pop %v4924
    %v4929 = vrcp.pop %v4927
    %v4930 = vmul.f32 %v4919, %v4928
    %v4931 = vmul.f32 %v4921, %v4929
    %v4932 = vpack.c.bf16 %v4931, %v4930
    %4933 = vrot.lane.b32.xlu0 %v4497, 72
    %v4934 = vpop.permute.xlu0 %4933
    %v4937 = vsel %vm399, %v4932, 0
    %4939 = vmatprep.subr.bf16.mxu0 0
    %4940 = vmatpush1.bf16.msra.mxu0 0
    %4941 = vmatprep.subr.bf16.mxu0 0
    %4942 = vmatpush1.bf16.msra.mxu0 0
    %4943 = vmatprep.subr.bf16.mxu0 0
    %4944 = vmatpush1.bf16.msra.mxu0 0
    %4945 = vmatprep.subr.bf16.mxu0 0
    %4946 = vmatpush1.bf16.msra.mxu0 0
    %4947 = vmatprep.subr.bf16.mxu0 0
    %4948 = vmatpush1.bf16.msra.mxu0 0
    %4949 = vmatprep.subr.bf16.mxu0 0
    %4950 = vmatpush1.bf16.msra.mxu0 0
    %4951 = vmatprep.subr.bf16.mxu0 0
    %4952 = vmatpush1.bf16.msra.mxu0 0
    %4953 = vmatprep.subr.bf16.mxu0 0
    %4954 = vmatpush1.bf16.msra.mxu0 %v4934
    %4955 = vmatprep.subr.bf16.mxu0 0
    %4956 = vmatpush2.bf16.msra.mxu0 0
    %4957 = vmatprep.subr.bf16.mxu0 0
    %4958 = vmatpush2.bf16.msra.mxu0 0
    %4959 = vmatprep.subr.bf16.mxu0 0
    %4960 = vmatpush2.bf16.msra.mxu0 0
    %4961 = vmatprep.subr.bf16.mxu0 0
    %4962 = vmatpush2.bf16.msra.mxu0 0
    %4963 = vmatprep.subr.bf16.mxu0 0
    %4964 = vmatpush2.bf16.msra.mxu0 0
    %4965 = vmatprep.subr.bf16.mxu0 0
    %4966 = vmatpush2.bf16.msra.mxu0 0
    %4967 = vmatprep.subr.bf16.mxu0 0
    %4968 = vmatpush2.bf16.msra.mxu0 0
    %4969 = vmatprep.subr.bf16.mxu0 0
    %4970 = vmatpush2.bf16.msra.mxu0 0
    %4971 = vmatprep.mubr.bf16.mxu0 0
    %4972 = vmatmul.mubr.bf16.gmra.mxu0 %v4937
    %v4973 = vpop.f32.mrf.mxu0
    %v4974 = vadd.f32 0.0, %v4973
    %v4975 = vpop.f32.mrf.mxu0
    %v4976 = vpop.f32.mrf.mxu0
    %v4977 = vadd.f32 0.0, %v4976
    %v4978 = vpop.f32.mrf.mxu0
    %4979 = vdwg.mxu0
    %4982 = vrot.lane.b32.xlu0 %v4732, 8
    %v4983 = vpop.permute.xlu0 %4982
    %4984 = vrot.lane.b32.xlu0 %v4735, 8
    %v4985 = vpop.permute.xlu0 %4984
    %4990 = vrot.lane.b32.xlu0 %v4853, 16
    %v4991 = vpop.permute.xlu0 %4990
    %4992 = vrot.lane.b32.xlu0 %v4856, 16
    %v4993 = vpop.permute.xlu0 %4992
    %4998 = vrot.lane.b32.xlu0 %v4974, 24
    %v4999 = vpop.permute.xlu0 %4998
    %5000 = vrot.lane.b32.xlu0 %v4977, 24
    %v5001 = vpop.permute.xlu0 %5000
    %v5004 = vsel %vm212, %v4610, %v4983
    %v5005 = vsel %vm212, %v4613, %v4985
    %v5006 = vsel %vm399, %v5004, %v4991
    %v5007 = vsel %vm399, %v5005, %v4993
    %v5008 = vsel %vm861, %v5006, %v4999
    %v5009 = vsel %vm861, %v5007, %v5001
    %v5010 = vpack.c.bf16 %v5009, %v5008
    %v5011 = vld [vmem:[#allocation2 + $0x198] sm:$0xf]
    %v5012 = vld [vmem:[#allocation2 + $0x19c] sm:$0xf]
    %v5013 = vld [vmem:[#allocation2 + $0x1a0] sm:$0xf]
    %v5014 = vld [vmem:[#allocation2 + $0x1a4] sm:$0xf]
    %v5015 = vld [vmem:[%s3 + $0x24] sm:$0x1]
    %v5016 = vlaneseq
    %v5017 = vshrl.u32 %v5016, 7
    %v5018 = vsub.s32 0, %v5017
    %v5019 = vrot.slane %v5015, %v5018
    %v5024 = vunpack.c.l.b16 %v5011
    %v5025 = vunpack.c.l.b16 %v5012
    %v5026 = vunpack.c.l.b16 %v5013
    %v5027 = vunpack.c.l.b16 %v5014
    %v5028 = vpack.c.b16 %v5025, %v5024
    %v5029 = vpack.c.b16 %v5027, %v5026
    %v5033 = vsel %vm80, %v5010, 0
    %5035 = vmatprep.subr.bf16.mxu0 0
    %5036 = vmatpush1.bf16.msra.mxu0 0
    %5037 = vmatprep.subr.bf16.mxu0 0
    %5038 = vmatpush1.bf16.msra.mxu0 0
    %5039 = vmatprep.subr.bf16.mxu0 0
    %5040 = vmatpush1.bf16.msra.mxu0 0
    %5041 = vmatprep.subr.bf16.mxu0 0
    %5042 = vmatpush1.bf16.msra.mxu0 0
    %5043 = vmatprep.subr.bf16.mxu0 0
    %5044 = vmatpush1.bf16.msra.mxu0 0
    %5045 = vmatprep.subr.bf16.mxu0 0
    %5046 = vmatpush1.bf16.msra.mxu0 0
    %5047 = vmatprep.subr.bf16.mxu0 0
    %5048 = vmatpush1.bf16.msra.mxu0 %v5029
    %5049 = vmatprep.subr.bf16.mxu0 0
    %5050 = vmatpush1.bf16.msra.mxu0 %v5028
    %5051 = vmatprep.subr.bf16.mxu0 0
    %5052 = vmatpush2.bf16.msra.mxu0 0
    %5053 = vmatprep.subr.bf16.mxu0 0
    %5054 = vmatpush2.bf16.msra.mxu0 0
    %5055 = vmatprep.subr.bf16.mxu0 0
    %5056 = vmatpush2.bf16.msra.mxu0 0
    %5057 = vmatprep.subr.bf16.mxu0 0
    %5058 = vmatpush2.bf16.msra.mxu0 0
    %5059 = vmatprep.subr.bf16.mxu0 0
    %5060 = vmatpush2.bf16.msra.mxu0 0
    %5061 = vmatprep.subr.bf16.mxu0 0
    %5062 = vmatpush2.bf16.msra.mxu0 0
    %5063 = vmatprep.subr.bf16.mxu0 0
    %5064 = vmatpush2.bf16.msra.mxu0 0
    %5065 = vmatprep.subr.bf16.mxu0 0
    %5066 = vmatpush2.bf16.msra.mxu0 0
    %5067 = vmatprep.mubr.bf16.mxu0 0
    %5068 = vmatmul.mubr.bf16.gmra.mxu0 %v5033
    %v5069 = vpop.f32.mrf.mxu0
    %v5070 = vadd.f32 %v5019, %v5069
    %v5071 = vpop.f32.mrf.mxu0
    %v5072 = vpop.f32.mrf.mxu0
    %v5073 = vadd.f32 %v5019, %v5072
    %v5074 = vpop.f32.mrf.mxu0
    %5075 = vdwg.mxu0
    %v5076 = vadd.f32 %v4366, %v5070
    %v5077 = vadd.f32 %v4367, %v5073
    %v5078 = vld [vmem:[%s3 + $0x25] sm:$0x1]
    %v5079 = vld [vmem:[%s3 + $0x26] sm:$0x1]
    %v5080 = vsel %vm80, %v5076, 0.0
    %5081 = vadd.xlane.f32.xlu0 %v5080
    %v5082 = vpop.xlane.xlu0 %5081
    %v5083 = vsel %vm80, %v5077, 0.0
    %5084 = vadd.xlane.f32.xlu0 %v5083
    %v5085 = vpop.xlane.xlu0 %5084
    %v5086 = vmul.f32 %v5082, %v940
    %v5087 = vmul.f32 %v5085, %v940
    %v5088 = vsub.f32 %v5076, %v5086
    %v5089 = vsub.f32 %v5077, %v5087
    %v5090 = vmul.f32 %v5088, %v5088
    %v5091 = vmul.f32 %v5089, %v5089
    %v5092 = vsel %vm80, %v5090, 0.0
    %5093 = vadd.xlane.f32.xlu0 %v5092
    %v5094 = vpop.xlane.xlu0 %5093
    %v5095 = vsel %vm80, %v5091, 0.0
    %5096 = vadd.xlane.f32.xlu0 %v5095
    %v5097 = vpop.xlane.xlu0 %5096
    %v5098 = vmul.f32 %v5094, %v940
    %v5099 = vmul.f32 %v5097, %v940
    %v5100 = vadd.f32 %v5098, 1e-05
    %v5101 = vadd.f32 %v5099, 1e-05
    %v5102 = vrsqrt.pop %v5100
    %v5103 = vrsqrt.pop %v5101
    %v5104 = vmul.f32 %v5088, %v5102
    %v5105 = vmul.f32 %v5089, %v5103
    %v5106 = vlaneseq
    %v5107 = vshrl.u32 %v5106, 7
    %v5108 = vsub.s32 0, %v5107
    %v5109 = vrot.slane %v5078, %v5108
    %v5110 = vmul.f32 %v5104, %v5109
    %v5111 = vmul.f32 %v5105, %v5109
    %v5112 = vlaneseq
    %v5113 = vshrl.u32 %v5112, 7
    %v5114 = vsub.s32 0, %v5113
    %v5115 = vrot.slane %v5079, %v5114
    %v5116 = vadd.f32 %v5110, %v5115
    %v5117 = vadd.f32 %v5111, %v5115
    %v5118 = vpack.c.bf16 %v5117, %v5116
    %v5119 = vld [vmem:[#allocation2 + $0x1a8] sm:$0xf]
    %v5120 = vld [vmem:[#allocation2 + $0x1ac] sm:$0xf]
    %v5121 = vld [vmem:[#allocation2 + $0x1b0] sm:$0xf]
    %v5122 = vld [vmem:[#allocation2 + $0x1b4] sm:$0xf]
    %v5123 = vld [vmem:[%s3 + $0x27] sm:$0x1]
    %v5124 = vlaneseq
    %v5125 = vshrl.u32 %v5124, 7
    %v5126 = vsub.s32 0, %v5125
    %v5127 = vrot.slane %v5123, %v5126
    %v5132 = vunpack.c.l.b16 %v5119
    %v5133 = vunpack.c.l.b16 %v5120
    %v5134 = vunpack.c.l.b16 %v5121
    %v5135 = vunpack.c.l.b16 %v5122
    %v5136 = vpack.c.b16 %v5133, %v5132
    %v5137 = vpack.c.b16 %v5135, %v5134
    %v5141 = vsel %vm80, %v5118, 0
    %5143 = vmatprep.subr.bf16.mxu0 0
    %5144 = vmatpush1.bf16.msra.mxu0 0
    %5145 = vmatprep.subr.bf16.mxu0 0
    %5146 = vmatpush1.bf16.msra.mxu0 0
    %5147 = vmatprep.subr.bf16.mxu0 0
    %5148 = vmatpush1.bf16.msra.mxu0 0
    %5149 = vmatprep.subr.bf16.mxu0 0
    %5150 = vmatpush1.bf16.msra.mxu0 0
    %5151 = vmatprep.subr.bf16.mxu0 0
    %5152 = vmatpush1.bf16.msra.mxu0 0
    %5153 = vmatprep.subr.bf16.mxu0 0
    %5154 = vmatpush1.bf16.msra.mxu0 0
    %5155 = vmatprep.subr.bf16.mxu0 0
    %5156 = vmatpush1.bf16.msra.mxu0 %v5137
    %5157 = vmatprep.subr.bf16.mxu0 0
    %5158 = vmatpush1.bf16.msra.mxu0 %v5136
    %5159 = vmatprep.subr.bf16.mxu0 0
    %5160 = vmatpush2.bf16.msra.mxu0 0
    %5161 = vmatprep.subr.bf16.mxu0 0
    %5162 = vmatpush2.bf16.msra.mxu0 0
    %5163 = vmatprep.subr.bf16.mxu0 0
    %5164 = vmatpush2.bf16.msra.mxu0 0
    %5165 = vmatprep.subr.bf16.mxu0 0
    %5166 = vmatpush2.bf16.msra.mxu0 0
    %5167 = vmatprep.subr.bf16.mxu0 0
    %5168 = vmatpush2.bf16.msra.mxu0 0
    %5169 = vmatprep.subr.bf16.mxu0 0
    %5170 = vmatpush2.bf16.msra.mxu0 0
    %5171 = vmatprep.subr.bf16.mxu0 0
    %5172 = vmatpush2.bf16.msra.mxu0 0
    %5173 = vmatprep.subr.bf16.mxu0 0
    %5174 = vmatpush2.bf16.msra.mxu0 0
    %5175 = vmatprep.mubr.bf16.mxu0 0
    %5176 = vmatmul.mubr.bf16.gmra.mxu0 %v5141
    %v5177 = vpop.f32.mrf.mxu0
    %v5178 = vadd.f32 %v5127, %v5177
    %v5179 = vpop.f32.mrf.mxu0
    %v5180 = vpop.f32.mrf.mxu0
    %v5181 = vadd.f32 %v5127, %v5180
    %v5182 = vpop.f32.mrf.mxu0
    %5183 = vdwg.mxu0
    %v5184 = vmax.f32 %v5178, 0.0
    %v5185 = vmax.f32 %v5181, 0.0
    %v5186 = vpack.c.bf16 %v5185, %v5184
    %v5187 = vld [vmem:[#allocation2 + $0x1b8] sm:$0xf]
    %v5188 = vld [vmem:[#allocation2 + $0x1bc] sm:$0xf]
    %v5189 = vld [vmem:[#allocation2 + $0x1c0] sm:$0xf]
    %v5190 = vld [vmem:[#allocation2 + $0x1c4] sm:$0xf]
    %v5191 = vld [vmem:[#allocation2 + $0x1c8] sm:$0xf]
    %v5192 = vld [vmem:[#allocation2 + $0x1cc] sm:$0xf]
    %v5193 = vld [vmem:[#allocation2 + $0x1d0] sm:$0xf]
    %v5194 = vld [vmem:[#allocation2 + $0x1d4] sm:$0xf]
    %v5195 = vld [vmem:[%s3 + $0x28] sm:$0x1]
    %v5196 = vlaneseq
    %v5197 = vshrl.u32 %v5196, 7
    %v5198 = vsub.s32 0, %v5197
    %v5199 = vrot.slane %v5195, %v5198
    %v5208 = vunpack.c.l.b16 %v5187
    %v5209 = vunpack.c.l.b16 %v5188
    %v5210 = vunpack.c.l.b16 %v5189
    %v5211 = vunpack.c.l.b16 %v5190
    %v5212 = vunpack.c.l.b16 %v5191
    %v5213 = vunpack.c.l.b16 %v5192
    %v5214 = vunpack.c.l.b16 %v5193
    %v5215 = vunpack.c.l.b16 %v5194
    %v5216 = vpack.c.b16 %v5209, %v5208
    %v5217 = vpack.c.b16 %v5211, %v5210
    %v5218 = vpack.c.b16 %v5213, %v5212
    %v5219 = vpack.c.b16 %v5215, %v5214
    %v5225 = vsel %vm1079, %v5186, 0
    %5227 = vmatprep.subr.bf16.mxu0 0
    %5228 = vmatpush1.bf16.msra.mxu0 0
    %5229 = vmatprep.subr.bf16.mxu0 0
    %5230 = vmatpush1.bf16.msra.mxu0 0
    %5231 = vmatprep.subr.bf16.mxu0 0
    %5232 = vmatpush1.bf16.msra.mxu0 0
    %5233 = vmatprep.subr.bf16.mxu0 0
    %5234 = vmatpush1.bf16.msra.mxu0 0
    %5235 = vmatprep.subr.bf16.mxu0 0
    %5236 = vmatpush1.bf16.msra.mxu0 %v5219
    %5237 = vmatprep.subr.bf16.mxu0 0
    %5238 = vmatpush1.bf16.msra.mxu0 %v5218
    %5239 = vmatprep.subr.bf16.mxu0 0
    %5240 = vmatpush1.bf16.msra.mxu0 %v5217
    %5241 = vmatprep.subr.bf16.mxu0 0
    %5242 = vmatpush1.bf16.msra.mxu0 %v5216
    %5243 = vmatprep.subr.bf16.mxu0 0
    %5244 = vmatpush2.bf16.msra.mxu0 0
    %5245 = vmatprep.subr.bf16.mxu0 0
    %5246 = vmatpush2.bf16.msra.mxu0 0
    %5247 = vmatprep.subr.bf16.mxu0 0
    %5248 = vmatpush2.bf16.msra.mxu0 0
    %5249 = vmatprep.subr.bf16.mxu0 0
    %5250 = vmatpush2.bf16.msra.mxu0 0
    %5251 = vmatprep.subr.bf16.mxu0 0
    %5252 = vmatpush2.bf16.msra.mxu0 0
    %5253 = vmatprep.subr.bf16.mxu0 0
    %5254 = vmatpush2.bf16.msra.mxu0 0
    %5255 = vmatprep.subr.bf16.mxu0 0
    %5256 = vmatpush2.bf16.msra.mxu0 0
    %5257 = vmatprep.subr.bf16.mxu0 0
    %5258 = vmatpush2.bf16.msra.mxu0 0
    %5259 = vmatprep.mubr.bf16.mxu0 0
    %5260 = vmatmul.mubr.bf16.gmra.mxu0 %v5225
    %v5261 = vpop.f32.mrf.mxu0
    %v5262 = vadd.f32 %v5199, %v5261
    %v5263 = vpop.f32.mrf.mxu0
    %v5264 = vpop.f32.mrf.mxu0
    %v5265 = vadd.f32 %v5199, %v5264
    %v5266 = vpop.f32.mrf.mxu0
    %5267 = vdwg.mxu0
    %v5268 = vadd.f32 %v5116, %v5262
    %v5269 = vadd.f32 %v5117, %v5265
    %v5270 = vld [vmem:[%s3 + $0x29] sm:$0x1]
    %v5271 = vld [vmem:[%s3 + $0x2a] sm:$0x1]
    %v5272 = vsel %vm80, %v5268, 0.0
    %5273 = vadd.xlane.f32.xlu0 %v5272
    %v5274 = vpop.xlane.xlu0 %5273
    %v5275 = vsel %vm80, %v5269, 0.0
    %5276 = vadd.xlane.f32.xlu0 %v5275
    %v5277 = vpop.xlane.xlu0 %5276
    %v5278 = vmul.f32 %v5274, %v940
    %v5279 = vmul.f32 %v5277, %v940
    %v5280 = vsub.f32 %v5268, %v5278
    %v5281 = vsub.f32 %v5269, %v5279
    %v5282 = vmul.f32 %v5280, %v5280
    %v5283 = vmul.f32 %v5281, %v5281
    %v5284 = vsel %vm80, %v5282, 0.0
    %5285 = vadd.xlane.f32.xlu0 %v5284
    %v5286 = vpop.xlane.xlu0 %5285
    %v5287 = vsel %vm80, %v5283, 0.0
    %5288 = vadd.xlane.f32.xlu0 %v5287
    %v5289 = vpop.xlane.xlu0 %5288
    %v5290 = vmul.f32 %v5286, %v940
    %v5291 = vmul.f32 %v5289, %v940
    %v5292 = vadd.f32 %v5290, 1e-05
    %v5293 = vadd.f32 %v5291, 1e-05
    %v5294 = vrsqrt.pop %v5292
    %v5295 = vrsqrt.pop %v5293
    %v5296 = vmul.f32 %v5280, %v5294
    %v5297 = vmul.f32 %v5281, %v5295
    %v5298 = vlaneseq
    %v5299 = vshrl.u32 %v5298, 7
    %v5300 = vsub.s32 0, %v5299
    %v5301 = vrot.slane %v5270, %v5300
    %v5302 = vmul.f32 %v5296, %v5301
    %v5303 = vmul.f32 %v5297, %v5301
    %v5304 = vlaneseq
    %v5305 = vshrl.u32 %v5304, 7
    %v5306 = vsub.s32 0, %v5305
    %v5307 = vrot.slane %v5271, %v5306
    %v5308 = vadd.f32 %v5302, %v5307
    %v5309 = vadd.f32 %v5303, %v5307
    %v5310 = vpack.c.bf16 %v5309, %v5308
    %v5311 = vld [vmem:[#allocation2 + $0x28] sm:$0xf]
    %v5312 = vld [vmem:[#allocation2 + $0x2c] sm:$0xf]
    %v5313 = vld [vmem:[#allocation2 + $0x30] sm:$0xf]
    %v5314 = vld [vmem:[#allocation2 + $0x34] sm:$0xf]
    %v5315 = vld [vmem:[%s3] sm:$0x1]
    %v5316 = vlaneseq
    %v5317 = vshrl.u32 %v5316, 7
    %v5318 = vsub.s32 0, %v5317
    %v5319 = vrot.slane %v5315, %v5318
    %v5324 = vunpack.c.l.b16 %v5311
    %v5325 = vunpack.c.l.b16 %v5312
    %v5326 = vunpack.c.l.b16 %v5313
    %v5327 = vunpack.c.l.b16 %v5314
    %v5328 = vpack.c.b16 %v5325, %v5324
    %v5329 = vpack.c.b16 %v5327, %v5326
    %v5333 = vsel %vm80, %v5310, 0
    %5335 = vmatprep.subr.bf16.mxu0 0
    %5336 = vmatpush1.bf16.msra.mxu0 0
    %5337 = vmatprep.subr.bf16.mxu0 0
    %5338 = vmatpush1.bf16.msra.mxu0 0
    %5339 = vmatprep.subr.bf16.mxu0 0
    %5340 = vmatpush1.bf16.msra.mxu0 0
    %5341 = vmatprep.subr.bf16.mxu0 0
    %5342 = vmatpush1.bf16.msra.mxu0 0
    %5343 = vmatprep.subr.bf16.mxu0 0
    %5344 = vmatpush1.bf16.msra.mxu0 0
    %5345 = vmatprep.subr.bf16.mxu0 0
    %5346 = vmatpush1.bf16.msra.mxu0 0
    %5347 = vmatprep.subr.bf16.mxu0 0
    %5348 = vmatpush1.bf16.msra.mxu0 %v5329
    %5349 = vmatprep.subr.bf16.mxu0 0
    %5350 = vmatpush1.bf16.msra.mxu0 %v5328
    %5351 = vmatprep.subr.bf16.mxu0 0
    %5352 = vmatpush2.bf16.msra.mxu0 0
    %5353 = vmatprep.subr.bf16.mxu0 0
    %5354 = vmatpush2.bf16.msra.mxu0 0
    %5355 = vmatprep.subr.bf16.mxu0 0
    %5356 = vmatpush2.bf16.msra.mxu0 0
    %5357 = vmatprep.subr.bf16.mxu0 0
    %5358 = vmatpush2.bf16.msra.mxu0 0
    %5359 = vmatprep.subr.bf16.mxu0 0
    %5360 = vmatpush2.bf16.msra.mxu0 0
    %5361 = vmatprep.subr.bf16.mxu0 0
    %5362 = vmatpush2.bf16.msra.mxu0 0
    %5363 = vmatprep.subr.bf16.mxu0 0
    %5364 = vmatpush2.bf16.msra.mxu0 0
    %5365 = vmatprep.subr.bf16.mxu0 0
    %5366 = vmatpush2.bf16.msra.mxu0 0
    %5367 = vmatprep.mubr.bf16.mxu0 0
    %5368 = vmatmul.mubr.bf16.gmra.mxu0 %v5333
    %v5369 = vpop.f32.mrf.mxu0
    %v5370 = vadd.f32 %v5319, %v5369
    %v5371 = vpop.f32.mrf.mxu0
    %v5372 = vpop.f32.mrf.mxu0
    %v5373 = vadd.f32 %v5319, %v5372
    %v5374 = vpop.f32.mrf.mxu0
    %5375 = vdwg.mxu0
    %5376 = vst [vmem:[%s4] sm:$0xff] %v5370
    %5377 = vst [vmem:[%s4 + $0x8] sm:$0xff] %v5373
    // Predicated region
    $region22: #{forward.1} parent=1 // pred_check
      _
    $region23: #{forward.1} parent=1 // pred_check_branch
      %5379 = sbr.rel (0) target = $region25
    $region24: #{forward.1} parent=1 // pred_region
      _
    $region25: #{forward.1} parent=1 // pred_fallthru
      _
    // Predicated region
    $region26: #{forward.1} parent=1 // pred_check
      _
    $region27: #{forward.1} parent=1 // pred_check_branch
      %5381 = sbr.rel (0) target = $region29
    $region28: #{forward.1} parent=1 // pred_region
      _
    $region29: #{forward.1} parent=1 // pred_fallthru
      _
    %5382 = vsyncpa [#allocation3], 1

</llo_original>
